<compile_context>
chip_gen: v6e
topology: v6e:2x2x1
jax: 0.10.0
libtpu: 0.0.40
codegen_flags: <defaults>
</compile_context>

<pallas_src>
import math

import jax
import jax.numpy as jnp
from jax.experimental import pallas as pl
from jax.experimental.pallas import tpu as pltpu  # noqa: F401  (TPU backend namespace)

# ---------------------------------------------------------------------------
# Config (scaled-down GH_CNN)
# ---------------------------------------------------------------------------
IMG = 32
IN_CH = 3
VGG_CFG = [4, 4, "M", 8, 8, "M", 16, 16, 16, "M", 32, 32, 32, "M", 32, 32, 32, "M"]
NUM_C = 5          # coarse classes
NUM_CLASSES = 18   # fine classes (4+4+4+3+3)
COARSE_HIDDEN = 64
FINE_HIDDEN = 128
FINAL_CH = 32
FINAL_SPATIAL = IMG // 32          # 5 maxpools -> /32
FLAT_DIM = FINAL_CH * FINAL_SPATIAL * FINAL_SPATIAL


# ---------------------------------------------------------------------------
# Pallas kernels
# ---------------------------------------------------------------------------
def conv_relu_kernel(t_ref, w_ref, b_ref, o_ref):
    """3x3 same conv as ONE tap-GEMM, fused bias + ReLU, channel-major output.

    t_ref: (9*Cin, M)      shifted-tap matrix, M = N*H*W on the lane axis
    w_ref: (Cout, 9*Cin)   weight matrix
    b_ref: (Cout, 1)
    o_ref: (Cout, M)
    """
    y = jnp.dot(w_ref[...], t_ref[...], preferred_element_type=jnp.float32)
    o_ref[...] = jnp.maximum(y + b_ref[...], 0.0)


def conv_relu_pool_kernel(t_ref, w_ref, b_ref, o_ref):
    """Fused 3x3 conv + ReLU + 2x2/stride-2 maxpool.

    t_ref: (4, 9*Cin, M2)  tap matrices for the 4 pooling corners, M2 = N*H/2*W/2
    w_ref: (Cout, 9*Cin)
    b_ref: (Cout, 1)
    o_ref: (Cout, M2)

    max_c(relu(y_c + b)) == relu(max_c(y_c) + b) since b is constant across the
    window and relu is monotone, so the max runs on the raw GEMM outputs.
    """
    w = w_ref[...]
    y = jnp.dot(w, t_ref[0], preferred_element_type=jnp.float32)
    for c in range(1, 4):
        y = jnp.maximum(y, jnp.dot(w, t_ref[c], preferred_element_type=jnp.float32))
    o_ref[...] = jnp.maximum(y + b_ref[...], 0.0)


def heads_kernel(x_ref,
                 cw1, cb1, cw2, cb2, cw3, cb3,
                 fw1, fb1, fw2, fb2, fw3, fb3,
                 z1_ref, z2_ref):
    """Both classifier heads (6 linear layers) fused in one kernel.

    x_ref: (B, FLAT_DIM); weights (Din, Dout); biases (1, Dout).
    Dropout layers are identity at inference.
    """
    def ff(inp, w_ref, b_ref, relu):
        y = jnp.dot(inp, w_ref[...], preferred_element_type=jnp.float32) + b_ref[...]
        return jnp.maximum(y, 0.0) if relu else y

    x = x_ref[...]
    h = ff(x, cw1, cb1, True)
    h = ff(h, cw2, cb2, True)
    z1_ref[...] = ff(h, cw3, cb3, False)

    g = ff(x, fw1, fb1, True)
    g = ff(g, fw2, fb2, True)
    z2_ref[...] = ff(g, fw3, fb3, False)


# ---------------------------------------------------------------------------
# Pallas-call wrappers
# ---------------------------------------------------------------------------
def _full_spec(shape):
    """Whole-array block (grid=(1,)) — block_shape equals the array shape."""
    n = len(shape)
    return pl.BlockSpec(shape, lambda i, _n=n: (0,) * _n)


def conv3x3_relu(x_cm, w, b):
    """x_cm: (Cin, N, H, W) channel-major; w: (3,3,Cin,Cout); b: (Cout,)."""
    Cin, N, H, W = x_cm.shape
    Cout = w.shape[-1]
    M = N * H * W
    xp = jnp.pad(x_cm, ((0, 0), (0, 0), (1, 1), (1, 1)))
    # Glue: 9 shifted taps stacked over the contraction axis -> (9*Cin, M).
    taps = jnp.stack(
        [xp[:, :, di:di + H, dj:dj + W] for di in range(3) for dj in range(3)],
        axis=0,
    ).reshape(9 * Cin, M)
    wm = w.reshape(9 * Cin, Cout).T          # (Cout, 9*Cin)
    bm = b.reshape(Cout, 1)

    out = pl.pallas_call(
        conv_relu_kernel,
        out_shape=jax.ShapeDtypeStruct((Cout, M), jnp.float32),
        grid=(1,),
        in_specs=[_full_spec((9 * Cin, M)),
                  _full_spec((Cout, 9 * Cin)),
                  _full_spec((Cout, 1))],
        out_specs=_full_spec((Cout, M)),
    )(taps, wm, bm)
    return out.reshape(Cout, N, H, W)


def conv3x3_relu_pool(x_cm, w, b):
    """Fused conv3x3 + ReLU + 2x2 maxpool.  x_cm: (Cin, N, H, W) -> (Cout, N, H/2, W/2)."""
    Cin, N, H, W = x_cm.shape
    Cout = w.shape[-1]
    H2, W2 = H // 2, W // 2
    M2 = N * H2 * W2
    xp = jnp.pad(x_cm, ((0, 0), (0, 0), (1, 1), (1, 1)))
    # Glue: for each pooling corner (di2, dj2), build its 9-tap matrix with
    # stride-2 slices; total bytes identical to the un-pooled tap matrix.
    corners = []
    for di2 in range(2):
        for dj2 in range(2):
            taps = jnp.stack(
                [xp[:, :,
                    di2 + di: di2 + di + 2 * H2 - 1: 2,
                    dj2 + dj: dj2 + dj + 2 * W2 - 1: 2]
                 for di in range(3) for dj in range(3)],
                axis=0,
            ).reshape(9 * Cin, M2)
            corners.append(taps)
    taps4 = jnp.stack(corners, axis=0)        # (4, 9*Cin, M2)
    wm = w.reshape(9 * Cin, Cout).T
    bm = b.reshape(Cout, 1)

    out = pl.pallas_call(
        conv_relu_pool_kernel,
        out_shape=jax.ShapeDtypeStruct((Cout, M2), jnp.float32),
        grid=(1,),
        in_specs=[_full_spec((4, 9 * Cin, M2)),
                  _full_spec((Cout, 9 * Cin)),
                  _full_spec((Cout, 1))],
        out_specs=_full_spec((Cout, M2)),
    )(taps4, wm, bm)
    return out.reshape(Cout, N, H2, W2)


def classifier_heads(flat, coarse_params, fine_params):
    """Both heads in one pallas_call.  flat: (B, FLAT_DIM) -> (B, NUM_C), (B, NUM_CLASSES)."""
    B = flat.shape[0]
    (cw1, cb1), (cw2, cb2), (cw3, cb3) = coarse_params
    (fw1, fb1), (fw2, fb2), (fw3, fb3) = fine_params
    args = [flat,
            cw1, cb1.reshape(1, -1), cw2, cb2.reshape(1, -1), cw3, cb3.reshape(1, -1),
            fw1, fb1.reshape(1, -1), fw2, fb2.reshape(1, -1), fw3, fb3.reshape(1, -1)]

    z_1, z_2 = pl.pallas_call(
        heads_kernel,
        out_shape=(jax.ShapeDtypeStruct((B, NUM_C), jnp.float32),
                   jax.ShapeDtypeStruct((B, NUM_CLASSES), jnp.float32)),
        grid=(1,),
        in_specs=[_full_spec(a.shape) for a in args],
        out_specs=[_full_spec((B, NUM_C)), _full_spec((B, NUM_CLASSES))],
    )(*args)
    return z_1, z_2


# ---------------------------------------------------------------------------
# Parameter init (deterministic, synthetic — no checkpoint load)
# ---------------------------------------------------------------------------
def init_params(key):
    params = {"features": [], "coarse": [], "fine": []}
    n_conv = sum(1 for v in VGG_CFG if v != "M")
    keys = list(jax.random.split(key, n_conv + 6))
    ki = 0

    cin = IN_CH
    for v in VGG_CFG:
        if v == "M":
            continue
        fan_in = 9 * cin
        w = jax.random.normal(keys[ki], (3, 3, cin, v), jnp.float32) / math.sqrt(fan_in)
        b = jnp.zeros((v,), jnp.float32)
        params["features"].append((w, b))
        cin = v
        ki += 1

    def lin(k, din, dout):
        w = jax.random.normal(k, (din, dout), jnp.float32) / math.sqrt(din)
        b = jnp.zeros((dout,), jnp.float32)
        return (w, b)

    params["coarse"] = [
        lin(keys[ki + 0], FLAT_DIM, COARSE_HIDDEN),
        lin(keys[ki + 1], COARSE_HIDDEN, COARSE_HIDDEN),
        lin(keys[ki + 2], COARSE_HIDDEN, NUM_C),
    ]
    params["fine"] = [
        lin(keys[ki + 3], FLAT_DIM, FINE_HIDDEN),
        lin(keys[ki + 4], FINE_HIDDEN, FINE_HIDDEN),
        lin(keys[ki + 5], FINE_HIDDEN, NUM_CLASSES),
    ]
    return params


# ---------------------------------------------------------------------------
# GH_CNN forward (head='classification'; hierarchy_method unused in forward)
# ---------------------------------------------------------------------------
@jax.jit
def gh_cnn_forward(params, images_nchw, true_coarse):
    del true_coarse  # unused by the reference forward()
    # NCHW (PyTorch) -> channel-major (C, N, H, W) so lanes carry N*H*W.
    x = jnp.transpose(images_nchw, (1, 0, 2, 3)).astype(jnp.float32)

    ci = 0
    for li, v in enumerate(VGG_CFG):
        if v == "M":
            continue  # pooling is fused into the preceding conv kernel
        w, b = params["features"][ci]
        ci += 1
        if li + 1 < len(VGG_CFG) and VGG_CFG[li + 1] == "M":
            x = conv3x3_relu_pool(x, w, b)
        else:
            x = conv3x3_relu(x, w, b)

    # Match torch's x.reshape(B, -1) on an NCHW tensor (channel-major flatten).
    flat = jnp.transpose(x, (1, 0, 2, 3)).reshape(x.shape[1], -1)

    # Both classifier heads fused (Dropout = identity at inference).
    # TODO(synk): training-mode Dropout(0.5) not implemented (inference forward).
    z_1, z_2 = classifier_heads(flat, params["coarse"], params["fine"])
    return z_1, z_2


# ---------------------------------------------------------------------------
if __name__ == "__main__":
    key = jax.random.PRNGKey(0)
    k_img, k_coarse, k_param = jax.random.split(key, 3)

    images = jax.random.normal(k_img, (2, IN_CH, IMG, IMG), jnp.float32)  # NCHW, as in PyTorch
    true_coarse = jax.nn.one_hot(
        jax.random.randint(k_coarse, (2,), 0, NUM_C), NUM_C, dtype=jnp.float32
    )

    params = init_params(k_param)
    z_1, z_2 = gh_cnn_forward(params, images, true_coarse)
    jax.block_until_ready((z_1, z_2))

    assert z_1.shape == (2, NUM_C), z_1.shape
    assert z_2.shape == (2, NUM_CLASSES), z_2.shape
    assert bool(jnp.all(jnp.isfinite(z_1))) and bool(jnp.all(jnp.isfinite(z_2)))

    print("KERNEL_OK")
</pallas_src>

<mosaic_0001>
module attributes {stable_mosaic.version = 11 : i64} {
  func.func @conv_relu_kernel(%arg0: i32, %arg1: memref<27x2048xf32, #tpu.memory_space<vmem>>, %arg2: memref<4x27xf32, #tpu.memory_space<vmem>>, %arg3: memref<4x1xf32, #tpu.memory_space<vmem>>, %arg4: memref<4x2048xf32, #tpu.memory_space<vmem>>) attributes {dimension_semantics = [#tpu.dimension_semantics<arbitrary>], iteration_bounds = array<i64: 1>, scalar_prefetch = 0 : i64, scratch_operands = 0 : i64, tpu.core_type = #tpu.core_type<tc>, window_params = [{pipeline_mode = #tpu.pipeline_mode<synchronous>, transform_indices = @transform_0, window_bounds = array<i64: 27, 2048>}, {pipeline_mode = #tpu.pipeline_mode<synchronous>, transform_indices = @transform_1, window_bounds = array<i64: 4, 27>}, {pipeline_mode = #tpu.pipeline_mode<synchronous>, transform_indices = @transform_2, window_bounds = array<i64: 4, 1>}, {pipeline_mode = #tpu.pipeline_mode<synchronous>, transform_indices = @transform_3, window_bounds = array<i64: 4, 2048>}]} {
    %c0 = arith.constant 0 : index
    %c0_0 = arith.constant 0 : index
    %0 = vector.load %arg2[%c0, %c0_0] : memref<4x27xf32, #tpu.memory_space<vmem>>, vector<4x27xf32>
    %c0_1 = arith.constant 0 : index
    %c0_2 = arith.constant 0 : index
    %1 = vector.load %arg1[%c0_1, %c0_2] : memref<27x2048xf32, #tpu.memory_space<vmem>>, vector<27x2048xf32>
    %cst = arith.constant dense<0.000000e+00> : vector<4x2048xf32>
    %2 = tpu.matmul %0, %1, %cst {dimension_numbers = #tpu.dot_dimension_numbers<[1], [0], [0], [1], [0, 0, 1, 1], [], []>} : vector<4x27xf32>, vector<27x2048xf32>, vector<4x2048xf32> -> vector<4x2048xf32>
    %c0_3 = arith.constant 0 : index
    %c0_4 = arith.constant 0 : index
    %3 = vector.load %arg3[%c0_3, %c0_4] : memref<4x1xf32, #tpu.memory_space<vmem>>, vector<4x1xf32>
    %4 = vector.broadcast %3 : vector<4x1xf32> to vector<4x2048xf32>
    %5 = arith.addf %2, %4 : vector<4x2048xf32>
    %cst_5 = arith.constant 0.000000e+00 : f32
    %6 = vector.broadcast %cst_5 : f32 to vector<4x2048xf32>
    %7 = arith.maximumf %5, %6 : vector<4x2048xf32>
    %c0_6 = arith.constant 0 : index
    %c0_7 = arith.constant 0 : index
    %8 = vector.load %arg4[%c0_6, %c0_7] : memref<4x2048xf32, #tpu.memory_space<vmem>>, vector<4x2048xf32>
    tpu.vector_store %arg4[%c0_6, %c0_7], %7 {strides = array<i32>} : memref<4x2048xf32, #tpu.memory_space<vmem>>, vector<4x2048xf32>,
    return
  }
  func.func @transform_0(%arg0: i32) -> (i32, i32) {
    %c0_i32 = arith.constant 0 : i32
    %c0_i32_0 = arith.constant 0 : i32
    %c0_i32_1 = arith.constant 0 : i32
    return %c0_i32, %c0_i32_0 : i32, i32
  }
  func.func @transform_1(%arg0: i32) -> (i32, i32) {
    %c0_i32 = arith.constant 0 : i32
    %c0_i32_0 = arith.constant 0 : i32
    %c0_i32_1 = arith.constant 0 : i32
    return %c0_i32, %c0_i32_0 : i32, i32
  }
  func.func @transform_2(%arg0: i32) -> (i32, i32) {
    %c0_i32 = arith.constant 0 : i32
    %c0_i32_0 = arith.constant 0 : i32
    %c0_i32_1 = arith.constant 0 : i32
    return %c0_i32, %c0_i32_0 : i32, i32
  }
  func.func @transform_3(%arg0: i32) -> (i32, i32) {
    %c0_i32 = arith.constant 0 : i32
    %c0_i32_0 = arith.constant 0 : i32
    %c0_i32_1 = arith.constant 0 : i32
    return %c0_i32, %c0_i32_0 : i32, i32
  }
}

module attributes {stable_mosaic.version = 11 : i64} {
  func.func @conv_relu_pool_kernel(%arg0: i32, %arg1: memref<4x36x512xf32, #tpu.memory_space<vmem>>, %arg2: memref<4x36xf32, #tpu.memory_space<vmem>>, %arg3: memref<4x1xf32, #tpu.memory_space<vmem>>, %arg4: memref<4x512xf32, #tpu.memory_space<vmem>>) attributes {dimension_semantics = [#tpu.dimension_semantics<arbitrary>], iteration_bounds = array<i64: 1>, scalar_prefetch = 0 : i64, scratch_operands = 0 : i64, tpu.core_type = #tpu.core_type<tc>, window_params = [{pipeline_mode = #tpu.pipeline_mode<synchronous>, transform_indices = @transform_0, window_bounds = array<i64: 4, 36, 512>}, {pipeline_mode = #tpu.pipeline_mode<synchronous>, transform_indices = @transform_1, window_bounds = array<i64: 4, 36>}, {pipeline_mode = #tpu.pipeline_mode<synchronous>, transform_indices = @transform_2, window_bounds = array<i64: 4, 1>}, {pipeline_mode = #tpu.pipeline_mode<synchronous>, transform_indices = @transform_3, window_bounds = array<i64: 4, 512>}]} {
    %c0 = arith.constant 0 : index
    %c0_0 = arith.constant 0 : index
    %0 = vector.load %arg2[%c0, %c0_0] : memref<4x36xf32, #tpu.memory_space<vmem>>, vector<4x36xf32>
    %c0_1 = arith.constant 0 : index
    %c0_2 = arith.constant 0 : index
    %c0_3 = arith.constant 0 : index
    %1 = vector.load %arg1[%c0_1, %c0_2, %c0_3] : memref<4x36x512xf32, #tpu.memory_space<vmem>>, vector<1x36x512xf32>
    %2 = vector.shape_cast %1 : vector<1x36x512xf32> to vector<36x512xf32>
    %cst = arith.constant dense<0.000000e+00> : vector<4x512xf32>
    %3 = tpu.matmul %0, %2, %cst {dimension_numbers = #tpu.dot_dimension_numbers<[1], [0], [0], [1], [0, 0, 1, 1], [], []>} : vector<4x36xf32>, vector<36x512xf32>, vector<4x512xf32> -> vector<4x512xf32>
    %c1 = arith.constant 1 : index
    %c0_4 = arith.constant 0 : index
    %c0_5 = arith.constant 0 : index
    %4 = vector.load %arg1[%c1, %c0_4, %c0_5] : memref<4x36x512xf32, #tpu.memory_space<vmem>>, vector<1x36x512xf32>
    %5 = vector.shape_cast %4 : vector<1x36x512xf32> to vector<36x512xf32>
    %cst_6 = arith.constant dense<0.000000e+00> : vector<4x512xf32>
    %6 = tpu.matmul %0, %5, %cst_6 {dimension_numbers = #tpu.dot_dimension_numbers<[1], [0], [0], [1], [0, 0, 1, 1], [], []>} : vector<4x36xf32>, vector<36x512xf32>, vector<4x512xf32> -> vector<4x512xf32>
    %7 = arith.maximumf %3, %6 : vector<4x512xf32>
    %c2 = arith.constant 2 : index
    %c0_7 = arith.constant 0 : index
    %c0_8 = arith.constant 0 : index
    %8 = vector.load %arg1[%c2, %c0_7, %c0_8] : memref<4x36x512xf32, #tpu.memory_space<vmem>>, vector<1x36x512xf32>
    %9 = vector.shape_cast %8 : vector<1x36x512xf32> to vector<36x512xf32>
    %cst_9 = arith.constant dense<0.000000e+00> : vector<4x512xf32>
    %10 = tpu.matmul %0, %9, %cst_9 {dimension_numbers = #tpu.dot_dimension_numbers<[1], [0], [0], [1], [0, 0, 1, 1], [], []>} : vector<4x36xf32>, vector<36x512xf32>, vector<4x512xf32> -> vector<4x512xf32>
    %11 = arith.maximumf %7, %10 : vector<4x512xf32>
    %c3 = arith.constant 3 : index
    %c0_10 = arith.constant 0 : index
    %c0_11 = arith.constant 0 : index
    %12 = vector.load %arg1[%c3, %c0_10, %c0_11] : memref<4x36x512xf32, #tpu.memory_space<vmem>>, vector<1x36x512xf32>
    %13 = vector.shape_cast %12 : vector<1x36x512xf32> to vector<36x512xf32>
    %cst_12 = arith.constant dense<0.000000e+00> : vector<4x512xf32>
    %14 = tpu.matmul %0, %13, %cst_12 {dimension_numbers = #tpu.dot_dimension_numbers<[1], [0], [0], [1], [0, 0, 1, 1], [], []>} : vector<4x36xf32>, vector<36x512xf32>, vector<4x512xf32> -> vector<4x512xf32>
    %15 = arith.maximumf %11, %14 : vector<4x512xf32>
    %c0_13 = arith.constant 0 : index
    %c0_14 = arith.constant 0 : index
    %16 = vector.load %arg3[%c0_13, %c0_14] : memref<4x1xf32, #tpu.memory_space<vmem>>, vector<4x1xf32>
    %17 = vector.broadcast %16 : vector<4x1xf32> to vector<4x512xf32>
    %18 = arith.addf %15, %17 : vector<4x512xf32>
    %cst_15 = arith.constant 0.000000e+00 : f32
    %19 = vector.broadcast %cst_15 : f32 to vector<4x512xf32>
    %20 = arith.maximumf %18, %19 : vector<4x512xf32>
    %c0_16 = arith.constant 0 : index
    %c0_17 = arith.constant 0 : index
    %21 = vector.load %arg4[%c0_16, %c0_17] : memref<4x512xf32, #tpu.memory_space<vmem>>, vector<4x512xf32>
    tpu.vector_store %arg4[%c0_16, %c0_17], %20 {strides = array<i32>} : memref<4x512xf32, #tpu.memory_space<vmem>>, vector<4x512xf32>,
    return
  }
  func.func @transform_0(%arg0: i32) -> (i32, i32, i32) {
    %c0_i32 = arith.constant 0 : i32
    %c0_i32_0 = arith.constant 0 : i32
    %c0_i32_1 = arith.constant 0 : i32
    %c0_i32_2 = arith.constant 0 : i32
    return %c0_i32, %c0_i32_0, %c0_i32_1 : i32, i32, i32
  }
  func.func @transform_1(%arg0: i32) -> (i32, i32) {
    %c0_i32 = arith.constant 0 : i32
    %c0_i32_0 = arith.constant 0 : i32
    %c0_i32_1 = arith.constant 0 : i32
    return %c0_i32, %c0_i32_0 : i32, i32
  }
  func.func @transform_2(%arg0: i32) -> (i32, i32) {
    %c0_i32 = arith.constant 0 : i32
    %c0_i32_0 = arith.constant 0 : i32
    %c0_i32_1 = arith.constant 0 : i32
    return %c0_i32, %c0_i32_0 : i32, i32
  }
  func.func @transform_3(%arg0: i32) -> (i32, i32) {
    %c0_i32 = arith.constant 0 : i32
    %c0_i32_0 = arith.constant 0 : i32
    %c0_i32_1 = arith.constant 0 : i32
    return %c0_i32, %c0_i32_0 : i32, i32
  }
}

module attributes {stable_mosaic.version = 11 : i64} {
  func.func @conv_relu_kernel(%arg0: i32, %arg1: memref<36x512xf32, #tpu.memory_space<vmem>>, %arg2: memref<8x36xf32, #tpu.memory_space<vmem>>, %arg3: memref<8x1xf32, #tpu.memory_space<vmem>>, %arg4: memref<8x512xf32, #tpu.memory_space<vmem>>) attributes {dimension_semantics = [#tpu.dimension_semantics<arbitrary>], iteration_bounds = array<i64: 1>, scalar_prefetch = 0 : i64, scratch_operands = 0 : i64, tpu.core_type = #tpu.core_type<tc>, window_params = [{pipeline_mode = #tpu.pipeline_mode<synchronous>, transform_indices = @transform_0, window_bounds = array<i64: 36, 512>}, {pipeline_mode = #tpu.pipeline_mode<synchronous>, transform_indices = @transform_1, window_bounds = array<i64: 8, 36>}, {pipeline_mode = #tpu.pipeline_mode<synchronous>, transform_indices = @transform_2, window_bounds = array<i64: 8, 1>}, {pipeline_mode = #tpu.pipeline_mode<synchronous>, transform_indices = @transform_3, window_bounds = array<i64: 8, 512>}]} {
    %c0 = arith.constant 0 : index
    %c0_0 = arith.constant 0 : index
    %0 = vector.load %arg2[%c0, %c0_0] : memref<8x36xf32, #tpu.memory_space<vmem>>, vector<8x36xf32>
    %c0_1 = arith.constant 0 : index
    %c0_2 = arith.constant 0 : index
    %1 = vector.load %arg1[%c0_1, %c0_2] : memref<36x512xf32, #tpu.memory_space<vmem>>, vector<36x512xf32>
    %cst = arith.constant dense<0.000000e+00> : vector<8x512xf32>
    %2 = tpu.matmul %0, %1, %cst {dimension_numbers = #tpu.dot_dimension_numbers<[1], [0], [0], [1], [0, 0, 1, 1], [], []>} : vector<8x36xf32>, vector<36x512xf32>, vector<8x512xf32> -> vector<8x512xf32>
    %c0_3 = arith.constant 0 : index
    %c0_4 = arith.constant 0 : index
    %3 = vector.load %arg3[%c0_3, %c0_4] : memref<8x1xf32, #tpu.memory_space<vmem>>, vector<8x1xf32>
    %4 = vector.broadcast %3 : vector<8x1xf32> to vector<8x512xf32>
    %5 = arith.addf %2, %4 : vector<8x512xf32>
    %cst_5 = arith.constant 0.000000e+00 : f32
    %6 = vector.broadcast %cst_5 : f32 to vector<8x512xf32>
    %7 = arith.maximumf %5, %6 : vector<8x512xf32>
    %c0_6 = arith.constant 0 : index
    %c0_7 = arith.constant 0 : index
    %8 = vector.load %arg4[%c0_6, %c0_7] : memref<8x512xf32, #tpu.memory_space<vmem>>, vector<8x512xf32>
    tpu.vector_store %arg4[%c0_6, %c0_7], %7 {strides = array<i32>} : memref<8x512xf32, #tpu.memory_space<vmem>>, vector<8x512xf32>,
    return
  }
  func.func @transform_0(%arg0: i32) -> (i32, i32) {
    %c0_i32 = arith.constant 0 : i32
    %c0_i32_0 = arith.constant 0 : i32
    %c0_i32_1 = arith.constant 0 : i32
    return %c0_i32, %c0_i32_0 : i32, i32
  }
  func.func @transform_1(%arg0: i32) -> (i32, i32) {
    %c0_i32 = arith.constant 0 : i32
    %c0_i32_0 = arith.constant 0 : i32
    %c0_i32_1 = arith.constant 0 : i32
    return %c0_i32, %c0_i32_0 : i32, i32
  }
  func.func @transform_2(%arg0: i32) -> (i32, i32) {
    %c0_i32 = arith.constant 0 : i32
    %c0_i32_0 = arith.constant 0 : i32
    %c0_i32_1 = arith.constant 0 : i32
    return %c0_i32, %c0_i32_0 : i32, i32
  }
  func.func @transform_3(%arg0: i32) -> (i32, i32) {
    %c0_i32 = arith.constant 0 : i32
    %c0_i32_0 = arith.constant 0 : i32
    %c0_i32_1 = arith.constant 0 : i32
    return %c0_i32, %c0_i32_0 : i32, i32
  }
}

module attributes {stable_mosaic.version = 11 : i64} {
  func.func @conv_relu_pool_kernel(%arg0: i32, %arg1: memref<4x72x128xf32, #tpu.memory_space<vmem>>, %arg2: memref<8x72xf32, #tpu.memory_space<vmem>>, %arg3: memref<8x1xf32, #tpu.memory_space<vmem>>, %arg4: memref<8x128xf32, #tpu.memory_space<vmem>>) attributes {dimension_semantics = [#tpu.dimension_semantics<arbitrary>], iteration_bounds = array<i64: 1>, scalar_prefetch = 0 : i64, scratch_operands = 0 : i64, tpu.core_type = #tpu.core_type<tc>, window_params = [{pipeline_mode = #tpu.pipeline_mode<synchronous>, transform_indices = @transform_0, window_bounds = array<i64: 4, 72, 128>}, {pipeline_mode = #tpu.pipeline_mode<synchronous>, transform_indices = @transform_1, window_bounds = array<i64: 8, 72>}, {pipeline_mode = #tpu.pipeline_mode<synchronous>, transform_indices = @transform_2, window_bounds = array<i64: 8, 1>}, {pipeline_mode = #tpu.pipeline_mode<synchronous>, transform_indices = @transform_3, window_bounds = array<i64: 8, 128>}]} {
    %c0 = arith.constant 0 : index
    %c0_0 = arith.constant 0 : index
    %0 = vector.load %arg2[%c0, %c0_0] : memref<8x72xf32, #tpu.memory_space<vmem>>, vector<8x72xf32>
    %c0_1 = arith.constant 0 : index
    %c0_2 = arith.constant 0 : index
    %c0_3 = arith.constant 0 : index
    %1 = vector.load %arg1[%c0_1, %c0_2, %c0_3] : memref<4x72x128xf32, #tpu.memory_space<vmem>>, vector<1x72x128xf32>
    %2 = vector.shape_cast %1 : vector<1x72x128xf32> to vector<72x128xf32>
    %cst = arith.constant dense<0.000000e+00> : vector<8x128xf32>
    %3 = tpu.matmul %0, %2, %cst {dimension_numbers = #tpu.dot_dimension_numbers<[1], [0], [0], [1], [0, 0, 1, 1], [], []>} : vector<8x72xf32>, vector<72x128xf32>, vector<8x128xf32> -> vector<8x128xf32>
    %c1 = arith.constant 1 : index
    %c0_4 = arith.constant 0 : index
    %c0_5 = arith.constant 0 : index
    %4 = vector.load %arg1[%c1, %c0_4, %c0_5] : memref<4x72x128xf32, #tpu.memory_space<vmem>>, vector<1x72x128xf32>
    %5 = vector.shape_cast %4 : vector<1x72x128xf32> to vector<72x128xf32>
    %cst_6 = arith.constant dense<0.000000e+00> : vector<8x128xf32>
    %6 = tpu.matmul %0, %5, %cst_6 {dimension_numbers = #tpu.dot_dimension_numbers<[1], [0], [0], [1], [0, 0, 1, 1], [], []>} : vector<8x72xf32>, vector<72x128xf32>, vector<8x128xf32> -> vector<8x128xf32>
    %7 = arith.maximumf %3, %6 : vector<8x128xf32>
    %c2 = arith.constant 2 : index
    %c0_7 = arith.constant 0 : index
    %c0_8 = arith.constant 0 : index
    %8 = vector.load %arg1[%c2, %c0_7, %c0_8] : memref<4x72x128xf32, #tpu.memory_space<vmem>>, vector<1x72x128xf32>
    %9 = vector.shape_cast %8 : vector<1x72x128xf32> to vector<72x128xf32>
    %cst_9 = arith.constant dense<0.000000e+00> : vector<8x128xf32>
    %10 = tpu.matmul %0, %9, %cst_9 {dimension_numbers = #tpu.dot_dimension_numbers<[1], [0], [0], [1], [0, 0, 1, 1], [], []>} : vector<8x72xf32>, vector<72x128xf32>, vector<8x128xf32> -> vector<8x128xf32>
    %11 = arith.maximumf %7, %10 : vector<8x128xf32>
    %c3 = arith.constant 3 : index
    %c0_10 = arith.constant 0 : index
    %c0_11 = arith.constant 0 : index
    %12 = vector.load %arg1[%c3, %c0_10, %c0_11] : memref<4x72x128xf32, #tpu.memory_space<vmem>>, vector<1x72x128xf32>
    %13 = vector.shape_cast %12 : vector<1x72x128xf32> to vector<72x128xf32>
    %cst_12 = arith.constant dense<0.000000e+00> : vector<8x128xf32>
    %14 = tpu.matmul %0, %13, %cst_12 {dimension_numbers = #tpu.dot_dimension_numbers<[1], [0], [0], [1], [0, 0, 1, 1], [], []>} : vector<8x72xf32>, vector<72x128xf32>, vector<8x128xf32> -> vector<8x128xf32>
    %15 = arith.maximumf %11, %14 : vector<8x128xf32>
    %c0_13 = arith.constant 0 : index
    %c0_14 = arith.constant 0 : index
    %16 = vector.load %arg3[%c0_13, %c0_14] : memref<8x1xf32, #tpu.memory_space<vmem>>, vector<8x1xf32>
    %17 = vector.broadcast %16 : vector<8x1xf32> to vector<8x128xf32>
    %18 = arith.addf %15, %17 : vector<8x128xf32>
    %cst_15 = arith.constant 0.000000e+00 : f32
    %19 = vector.broadcast %cst_15 : f32 to vector<8x128xf32>
    %20 = arith.maximumf %18, %19 : vector<8x128xf32>
    %c0_16 = arith.constant 0 : index
    %c0_17 = arith.constant 0 : index
    %21 = vector.load %arg4[%c0_16, %c0_17] : memref<8x128xf32, #tpu.memory_space<vmem>>, vector<8x128xf32>
    tpu.vector_store %arg4[%c0_16, %c0_17], %20 {strides = array<i32>} : memref<8x128xf32, #tpu.memory_space<vmem>>, vector<8x128xf32>,
    return
  }
  func.func @transform_0(%arg0: i32) -> (i32, i32, i32) {
    %c0_i32 = arith.constant 0 : i32
    %c0_i32_0 = arith.constant 0 : i32
    %c0_i32_1 = arith.constant 0 : i32
    %c0_i32_2 = arith.constant 0 : i32
    return %c0_i32, %c0_i32_0, %c0_i32_1 : i32, i32, i32
  }
  func.func @transform_1(%arg0: i32) -> (i32, i32) {
    %c0_i32 = arith.constant 0 : i32
    %c0_i32_0 = arith.constant 0 : i32
    %c0_i32_1 = arith.constant 0 : i32
    return %c0_i32, %c0_i32_0 : i32, i32
  }
  func.func @transform_2(%arg0: i32) -> (i32, i32) {
    %c0_i32 = arith.constant 0 : i32
    %c0_i32_0 = arith.constant 0 : i32
    %c0_i32_1 = arith.constant 0 : i32
    return %c0_i32, %c0_i32_0 : i32, i32
  }
  func.func @transform_3(%arg0: i32) -> (i32, i32) {
    %c0_i32 = arith.constant 0 : i32
    %c0_i32_0 = arith.constant 0 : i32
    %c0_i32_1 = arith.constant 0 : i32
    return %c0_i32, %c0_i32_0 : i32, i32
  }
}

module attributes {stable_mosaic.version = 11 : i64} {
  func.func @conv_relu_kernel(%arg0: i32, %arg1: memref<72x128xf32, #tpu.memory_space<vmem>>, %arg2: memref<16x72xf32, #tpu.memory_space<vmem>>, %arg3: memref<16x1xf32, #tpu.memory_space<vmem>>, %arg4: memref<16x128xf32, #tpu.memory_space<vmem>>) attributes {dimension_semantics = [#tpu.dimension_semantics<arbitrary>], iteration_bounds = array<i64: 1>, scalar_prefetch = 0 : i64, scratch_operands = 0 : i64, tpu.core_type = #tpu.core_type<tc>, window_params = [{pipeline_mode = #tpu.pipeline_mode<synchronous>, transform_indices = @transform_0, window_bounds = array<i64: 72, 128>}, {pipeline_mode = #tpu.pipeline_mode<synchronous>, transform_indices = @transform_1, window_bounds = array<i64: 16, 72>}, {pipeline_mode = #tpu.pipeline_mode<synchronous>, transform_indices = @transform_2, window_bounds = array<i64: 16, 1>}, {pipeline_mode = #tpu.pipeline_mode<synchronous>, transform_indices = @transform_3, window_bounds = array<i64: 16, 128>}]} {
    %c0 = arith.constant 0 : index
    %c0_0 = arith.constant 0 : index
    %0 = vector.load %arg2[%c0, %c0_0] : memref<16x72xf32, #tpu.memory_space<vmem>>, vector<16x72xf32>
    %c0_1 = arith.constant 0 : index
    %c0_2 = arith.constant 0 : index
    %1 = vector.load %arg1[%c0_1, %c0_2] : memref<72x128xf32, #tpu.memory_space<vmem>>, vector<72x128xf32>
    %cst = arith.constant dense<0.000000e+00> : vector<16x128xf32>
    %2 = tpu.matmul %0, %1, %cst {dimension_numbers = #tpu.dot_dimension_numbers<[1], [0], [0], [1], [0, 0, 1, 1], [], []>} : vector<16x72xf32>, vector<72x128xf32>, vector<16x128xf32> -> vector<16x128xf32>
    %c0_3 = arith.constant 0 : index
    %c0_4 = arith.constant 0 : index
    %3 = vector.load %arg3[%c0_3, %c0_4] : memref<16x1xf32, #tpu.memory_space<vmem>>, vector<16x1xf32>
    %4 = vector.broadcast %3 : vector<16x1xf32> to vector<16x128xf32>
    %5 = arith.addf %2, %4 : vector<16x128xf32>
    %cst_5 = arith.constant 0.000000e+00 : f32
    %6 = vector.broadcast %cst_5 : f32 to vector<16x128xf32>
    %7 = arith.maximumf %5, %6 : vector<16x128xf32>
    %c0_6 = arith.constant 0 : index
    %c0_7 = arith.constant 0 : index
    %8 = vector.load %arg4[%c0_6, %c0_7] : memref<16x128xf32, #tpu.memory_space<vmem>>, vector<16x128xf32>
    tpu.vector_store %arg4[%c0_6, %c0_7], %7 {strides = array<i32>} : memref<16x128xf32, #tpu.memory_space<vmem>>, vector<16x128xf32>,
    return
  }
  func.func @transform_0(%arg0: i32) -> (i32, i32) {
    %c0_i32 = arith.constant 0 : i32
    %c0_i32_0 = arith.constant 0 : i32
    %c0_i32_1 = arith.constant 0 : i32
    return %c0_i32, %c0_i32_0 : i32, i32
  }
  func.func @transform_1(%arg0: i32) -> (i32, i32) {
    %c0_i32 = arith.constant 0 : i32
    %c0_i32_0 = arith.constant 0 : i32
    %c0_i32_1 = arith.constant 0 : i32
    return %c0_i32, %c0_i32_0 : i32, i32
  }
  func.func @transform_2(%arg0: i32) -> (i32, i32) {
    %c0_i32 = arith.constant 0 : i32
    %c0_i32_0 = arith.constant 0 : i32
    %c0_i32_1 = arith.constant 0 : i32
    return %c0_i32, %c0_i32_0 : i32, i32
  }
  func.func @transform_3(%arg0: i32) -> (i32, i32) {
    %c0_i32 = arith.constant 0 : i32
    %c0_i32_0 = arith.constant 0 : i32
    %c0_i32_1 = arith.constant 0 : i32
    return %c0_i32, %c0_i32_0 : i32, i32
  }
}

module attributes {stable_mosaic.version = 11 : i64} {
  func.func @conv_relu_kernel(%arg0: i32, %arg1: memref<144x128xf32, #tpu.memory_space<vmem>>, %arg2: memref<16x144xf32, #tpu.memory_space<vmem>>, %arg3: memref<16x1xf32, #tpu.memory_space<vmem>>, %arg4: memref<16x128xf32, #tpu.memory_space<vmem>>) attributes {dimension_semantics = [#tpu.dimension_semantics<arbitrary>], iteration_bounds = array<i64: 1>, scalar_prefetch = 0 : i64, scratch_operands = 0 : i64, tpu.core_type = #tpu.core_type<tc>, window_params = [{pipeline_mode = #tpu.pipeline_mode<synchronous>, transform_indices = @transform_0, window_bounds = array<i64: 144, 128>}, {pipeline_mode = #tpu.pipeline_mode<synchronous>, transform_indices = @transform_1, window_bounds = array<i64: 16, 144>}, {pipeline_mode = #tpu.pipeline_mode<synchronous>, transform_indices = @transform_2, window_bounds = array<i64: 16, 1>}, {pipeline_mode = #tpu.pipeline_mode<synchronous>, transform_indices = @transform_3, window_bounds = array<i64: 16, 128>}]} {
    %c0 = arith.constant 0 : index
    %c0_0 = arith.constant 0 : index
    %0 = vector.load %arg2[%c0, %c0_0] : memref<16x144xf32, #tpu.memory_space<vmem>>, vector<16x144xf32>
    %c0_1 = arith.constant 0 : index
    %c0_2 = arith.constant 0 : index
    %1 = vector.load %arg1[%c0_1, %c0_2] : memref<144x128xf32, #tpu.memory_space<vmem>>, vector<144x128xf32>
    %cst = arith.constant dense<0.000000e+00> : vector<16x128xf32>
    %2 = tpu.matmul %0, %1, %cst {dimension_numbers = #tpu.dot_dimension_numbers<[1], [0], [0], [1], [0, 0, 1, 1], [], []>} : vector<16x144xf32>, vector<144x128xf32>, vector<16x128xf32> -> vector<16x128xf32>
    %c0_3 = arith.constant 0 : index
    %c0_4 = arith.constant 0 : index
    %3 = vector.load %arg3[%c0_3, %c0_4] : memref<16x1xf32, #tpu.memory_space<vmem>>, vector<16x1xf32>
    %4 = vector.broadcast %3 : vector<16x1xf32> to vector<16x128xf32>
    %5 = arith.addf %2, %4 : vector<16x128xf32>
    %cst_5 = arith.constant 0.000000e+00 : f32
    %6 = vector.broadcast %cst_5 : f32 to vector<16x128xf32>
    %7 = arith.maximumf %5, %6 : vector<16x128xf32>
    %c0_6 = arith.constant 0 : index
    %c0_7 = arith.constant 0 : index
    %8 = vector.load %arg4[%c0_6, %c0_7] : memref<16x128xf32, #tpu.memory_space<vmem>>, vector<16x128xf32>
    tpu.vector_store %arg4[%c0_6, %c0_7], %7 {strides = array<i32>} : memref<16x128xf32, #tpu.memory_space<vmem>>, vector<16x128xf32>,
    return
  }
  func.func @transform_0(%arg0: i32) -> (i32, i32) {
    %c0_i32 = arith.constant 0 : i32
    %c0_i32_0 = arith.constant 0 : i32
    %c0_i32_1 = arith.constant 0 : i32
    return %c0_i32, %c0_i32_0 : i32, i32
  }
  func.func @transform_1(%arg0: i32) -> (i32, i32) {
    %c0_i32 = arith.constant 0 : i32
    %c0_i32_0 = arith.constant 0 : i32
    %c0_i32_1 = arith.constant 0 : i32
    return %c0_i32, %c0_i32_0 : i32, i32
  }
  func.func @transform_2(%arg0: i32) -> (i32, i32) {
    %c0_i32 = arith.constant 0 : i32
    %c0_i32_0 = arith.constant 0 : i32
    %c0_i32_1 = arith.constant 0 : i32
    return %c0_i32, %c0_i32_0 : i32, i32
  }
  func.func @transform_3(%arg0: i32) -> (i32, i32) {
    %c0_i32 = arith.constant 0 : i32
    %c0_i32_0 = arith.constant 0 : i32
    %c0_i32_1 = arith.constant 0 : i32
    return %c0_i32, %c0_i32_0 : i32, i32
  }
}

module attributes {stable_mosaic.version = 11 : i64} {
  func.func @conv_relu_pool_kernel(%arg0: i32, %arg1: memref<4x144x32xf32, #tpu.memory_space<vmem>>, %arg2: memref<16x144xf32, #tpu.memory_space<vmem>>, %arg3: memref<16x1xf32, #tpu.memory_space<vmem>>, %arg4: memref<16x32xf32, #tpu.memory_space<vmem>>) attributes {dimension_semantics = [#tpu.dimension_semantics<arbitrary>], iteration_bounds = array<i64: 1>, scalar_prefetch = 0 : i64, scratch_operands = 0 : i64, tpu.core_type = #tpu.core_type<tc>, window_params = [{pipeline_mode = #tpu.pipeline_mode<synchronous>, transform_indices = @transform_0, window_bounds = array<i64: 4, 144, 32>}, {pipeline_mode = #tpu.pipeline_mode<synchronous>, transform_indices = @transform_1, window_bounds = array<i64: 16, 144>}, {pipeline_mode = #tpu.pipeline_mode<synchronous>, transform_indices = @transform_2, window_bounds = array<i64: 16, 1>}, {pipeline_mode = #tpu.pipeline_mode<synchronous>, transform_indices = @transform_3, window_bounds = array<i64: 16, 32>}]} {
    %c0 = arith.constant 0 : index
    %c0_0 = arith.constant 0 : index
    %0 = vector.load %arg2[%c0, %c0_0] : memref<16x144xf32, #tpu.memory_space<vmem>>, vector<16x144xf32>
    %c0_1 = arith.constant 0 : index
    %c0_2 = arith.constant 0 : index
    %c0_3 = arith.constant 0 : index
    %1 = vector.load %arg1[%c0_1, %c0_2, %c0_3] : memref<4x144x32xf32, #tpu.memory_space<vmem>>, vector<1x144x32xf32>
    %2 = vector.shape_cast %1 : vector<1x144x32xf32> to vector<144x32xf32>
    %cst = arith.constant dense<0.000000e+00> : vector<16x32xf32>
    %3 = tpu.matmul %0, %2, %cst {dimension_numbers = #tpu.dot_dimension_numbers<[1], [0], [0], [1], [0, 0, 1, 1], [], []>} : vector<16x144xf32>, vector<144x32xf32>, vector<16x32xf32> -> vector<16x32xf32>
    %c1 = arith.constant 1 : index
    %c0_4 = arith.constant 0 : index
    %c0_5 = arith.constant 0 : index
    %4 = vector.load %arg1[%c1, %c0_4, %c0_5] : memref<4x144x32xf32, #tpu.memory_space<vmem>>, vector<1x144x32xf32>
    %5 = vector.shape_cast %4 : vector<1x144x32xf32> to vector<144x32xf32>
    %cst_6 = arith.constant dense<0.000000e+00> : vector<16x32xf32>
    %6 = tpu.matmul %0, %5, %cst_6 {dimension_numbers = #tpu.dot_dimension_numbers<[1], [0], [0], [1], [0, 0, 1, 1], [], []>} : vector<16x144xf32>, vector<144x32xf32>, vector<16x32xf32> -> vector<16x32xf32>
    %7 = arith.maximumf %3, %6 : vector<16x32xf32>
    %c2 = arith.constant 2 : index
    %c0_7 = arith.constant 0 : index
    %c0_8 = arith.constant 0 : index
    %8 = vector.load %arg1[%c2, %c0_7, %c0_8] : memref<4x144x32xf32, #tpu.memory_space<vmem>>, vector<1x144x32xf32>
    %9 = vector.shape_cast %8 : vector<1x144x32xf32> to vector<144x32xf32>
    %cst_9 = arith.constant dense<0.000000e+00> : vector<16x32xf32>
    %10 = tpu.matmul %0, %9, %cst_9 {dimension_numbers = #tpu.dot_dimension_numbers<[1], [0], [0], [1], [0, 0, 1, 1], [], []>} : vector<16x144xf32>, vector<144x32xf32>, vector<16x32xf32> -> vector<16x32xf32>
    %11 = arith.maximumf %7, %10 : vector<16x32xf32>
    %c3 = arith.constant 3 : index
    %c0_10 = arith.constant 0 : index
    %c0_11 = arith.constant 0 : index
    %12 = vector.load %arg1[%c3, %c0_10, %c0_11] : memref<4x144x32xf32, #tpu.memory_space<vmem>>, vector<1x144x32xf32>
    %13 = vector.shape_cast %12 : vector<1x144x32xf32> to vector<144x32xf32>
    %cst_12 = arith.constant dense<0.000000e+00> : vector<16x32xf32>
    %14 = tpu.matmul %0, %13, %cst_12 {dimension_numbers = #tpu.dot_dimension_numbers<[1], [0], [0], [1], [0, 0, 1, 1], [], []>} : vector<16x144xf32>, vector<144x32xf32>, vector<16x32xf32> -> vector<16x32xf32>
    %15 = arith.maximumf %11, %14 : vector<16x32xf32>
    %c0_13 = arith.constant 0 : index
    %c0_14 = arith.constant 0 : index
    %16 = vector.load %arg3[%c0_13, %c0_14] : memref<16x1xf32, #tpu.memory_space<vmem>>, vector<16x1xf32>
    %17 = vector.broadcast %16 : vector<16x1xf32> to vector<16x32xf32>
    %18 = arith.addf %15, %17 : vector<16x32xf32>
    %cst_15 = arith.constant 0.000000e+00 : f32
    %19 = vector.broadcast %cst_15 : f32 to vector<16x32xf32>
    %20 = arith.maximumf %18, %19 : vector<16x32xf32>
    %c0_16 = arith.constant 0 : index
    %c0_17 = arith.constant 0 : index
    %21 = vector.load %arg4[%c0_16, %c0_17] : memref<16x32xf32, #tpu.memory_space<vmem>>, vector<16x32xf32>
    tpu.vector_store %arg4[%c0_16, %c0_17], %20 {strides = array<i32>} : memref<16x32xf32, #tpu.memory_space<vmem>>, vector<16x32xf32>,
    return
  }
  func.func @transform_0(%arg0: i32) -> (i32, i32, i32) {
    %c0_i32 = arith.constant 0 : i32
    %c0_i32_0 = arith.constant 0 : i32
    %c0_i32_1 = arith.constant 0 : i32
    %c0_i32_2 = arith.constant 0 : i32
    return %c0_i32, %c0_i32_0, %c0_i32_1 : i32, i32, i32
  }
  func.func @transform_1(%arg0: i32) -> (i32, i32) {
    %c0_i32 = arith.constant 0 : i32
    %c0_i32_0 = arith.constant 0 : i32
    %c0_i32_1 = arith.constant 0 : i32
    return %c0_i32, %c0_i32_0 : i32, i32
  }
  func.func @transform_2(%arg0: i32) -> (i32, i32) {
    %c0_i32 = arith.constant 0 : i32
    %c0_i32_0 = arith.constant 0 : i32
    %c0_i32_1 = arith.constant 0 : i32
    return %c0_i32, %c0_i32_0 : i32, i32
  }
  func.func @transform_3(%arg0: i32) -> (i32, i32) {
    %c0_i32 = arith.constant 0 : i32
    %c0_i32_0 = arith.constant 0 : i32
    %c0_i32_1 = arith.constant 0 : i32
    return %c0_i32, %c0_i32_0 : i32, i32
  }
}

module attributes {stable_mosaic.version = 11 : i64} {
  func.func @conv_relu_kernel(%arg0: i32, %arg1: memref<144x32xf32, #tpu.memory_space<vmem>>, %arg2: memref<32x144xf32, #tpu.memory_space<vmem>>, %arg3: memref<32x1xf32, #tpu.memory_space<vmem>>, %arg4: memref<32x32xf32, #tpu.memory_space<vmem>>) attributes {dimension_semantics = [#tpu.dimension_semantics<arbitrary>], iteration_bounds = array<i64: 1>, scalar_prefetch = 0 : i64, scratch_operands = 0 : i64, tpu.core_type = #tpu.core_type<tc>, window_params = [{pipeline_mode = #tpu.pipeline_mode<synchronous>, transform_indices = @transform_0, window_bounds = array<i64: 144, 32>}, {pipeline_mode = #tpu.pipeline_mode<synchronous>, transform_indices = @transform_1, window_bounds = array<i64: 32, 144>}, {pipeline_mode = #tpu.pipeline_mode<synchronous>, transform_indices = @transform_2, window_bounds = array<i64: 32, 1>}, {pipeline_mode = #tpu.pipeline_mode<synchronous>, transform_indices = @transform_3, window_bounds = array<i64: 32, 32>}]} {
    %c0 = arith.constant 0 : index
    %c0_0 = arith.constant 0 : index
    %0 = vector.load %arg2[%c0, %c0_0] : memref<32x144xf32, #tpu.memory_space<vmem>>, vector<32x144xf32>
    %c0_1 = arith.constant 0 : index
    %c0_2 = arith.constant 0 : index
    %1 = vector.load %arg1[%c0_1, %c0_2] : memref<144x32xf32, #tpu.memory_space<vmem>>, vector<144x32xf32>
    %cst = arith.constant dense<0.000000e+00> : vector<32x32xf32>
    %2 = tpu.matmul %0, %1, %cst {dimension_numbers = #tpu.dot_dimension_numbers<[1], [0], [0], [1], [0, 0, 1, 1], [], []>} : vector<32x144xf32>, vector<144x32xf32>, vector<32x32xf32> -> vector<32x32xf32>
    %c0_3 = arith.constant 0 : index
    %c0_4 = arith.constant 0 : index
    %3 = vector.load %arg3[%c0_3, %c0_4] : memref<32x1xf32, #tpu.memory_space<vmem>>, vector<32x1xf32>
    %4 = vector.broadcast %3 : vector<32x1xf32> to vector<32x32xf32>
    %5 = arith.addf %2, %4 : vector<32x32xf32>
    %cst_5 = arith.constant 0.000000e+00 : f32
    %6 = vector.broadcast %cst_5 : f32 to vector<32x32xf32>
    %7 = arith.maximumf %5, %6 : vector<32x32xf32>
    %c0_6 = arith.constant 0 : index
    %c0_7 = arith.constant 0 : index
    %8 = vector.load %arg4[%c0_6, %c0_7] : memref<32x32xf32, #tpu.memory_space<vmem>>, vector<32x32xf32>
    tpu.vector_store %arg4[%c0_6, %c0_7], %7 {strides = array<i32>} : memref<32x32xf32, #tpu.memory_space<vmem>>, vector<32x32xf32>,
    return
  }
  func.func @transform_0(%arg0: i32) -> (i32, i32) {
    %c0_i32 = arith.constant 0 : i32
    %c0_i32_0 = arith.constant 0 : i32
    %c0_i32_1 = arith.constant 0 : i32
    return %c0_i32, %c0_i32_0 : i32, i32
  }
  func.func @transform_1(%arg0: i32) -> (i32, i32) {
    %c0_i32 = arith.constant 0 : i32
    %c0_i32_0 = arith.constant 0 : i32
    %c0_i32_1 = arith.constant 0 : i32
    return %c0_i32, %c0_i32_0 : i32, i32
  }
  func.func @transform_2(%arg0: i32) -> (i32, i32) {
    %c0_i32 = arith.constant 0 : i32
    %c0_i32_0 = arith.constant 0 : i32
    %c0_i32_1 = arith.constant 0 : i32
    return %c0_i32, %c0_i32_0 : i32, i32
  }
  func.func @transform_3(%arg0: i32) -> (i32, i32) {
    %c0_i32 = arith.constant 0 : i32
    %c0_i32_0 = arith.constant 0 : i32
    %c0_i32_1 = arith.constant 0 : i32
    return %c0_i32, %c0_i32_0 : i32, i32
  }
}

module attributes {stable_mosaic.version = 11 : i64} {
  func.func @conv_relu_kernel(%arg0: i32, %arg1: memref<288x32xf32, #tpu.memory_space<vmem>>, %arg2: memref<32x288xf32, #tpu.memory_space<vmem>>, %arg3: memref<32x1xf32, #tpu.memory_space<vmem>>, %arg4: memref<32x32xf32, #tpu.memory_space<vmem>>) attributes {dimension_semantics = [#tpu.dimension_semantics<arbitrary>], iteration_bounds = array<i64: 1>, scalar_prefetch = 0 : i64, scratch_operands = 0 : i64, tpu.core_type = #tpu.core_type<tc>, window_params = [{pipeline_mode = #tpu.pipeline_mode<synchronous>, transform_indices = @transform_0, window_bounds = array<i64: 288, 32>}, {pipeline_mode = #tpu.pipeline_mode<synchronous>, transform_indices = @transform_1, window_bounds = array<i64: 32, 288>}, {pipeline_mode = #tpu.pipeline_mode<synchronous>, transform_indices = @transform_2, window_bounds = array<i64: 32, 1>}, {pipeline_mode = #tpu.pipeline_mode<synchronous>, transform_indices = @transform_3, window_bounds = array<i64: 32, 32>}]} {
    %c0 = arith.constant 0 : index
    %c0_0 = arith.constant 0 : index
    %0 = vector.load %arg2[%c0, %c0_0] : memref<32x288xf32, #tpu.memory_space<vmem>>, vector<32x288xf32>
    %c0_1 = arith.constant 0 : index
    %c0_2 = arith.constant 0 : index
    %1 = vector.load %arg1[%c0_1, %c0_2] : memref<288x32xf32, #tpu.memory_space<vmem>>, vector<288x32xf32>
    %cst = arith.constant dense<0.000000e+00> : vector<32x32xf32>
    %2 = tpu.matmul %0, %1, %cst {dimension_numbers = #tpu.dot_dimension_numbers<[1], [0], [0], [1], [0, 0, 1, 1], [], []>} : vector<32x288xf32>, vector<288x32xf32>, vector<32x32xf32> -> vector<32x32xf32>
    %c0_3 = arith.constant 0 : index
    %c0_4 = arith.constant 0 : index
    %3 = vector.load %arg3[%c0_3, %c0_4] : memref<32x1xf32, #tpu.memory_space<vmem>>, vector<32x1xf32>
    %4 = vector.broadcast %3 : vector<32x1xf32> to vector<32x32xf32>
    %5 = arith.addf %2, %4 : vector<32x32xf32>
    %cst_5 = arith.constant 0.000000e+00 : f32
    %6 = vector.broadcast %cst_5 : f32 to vector<32x32xf32>
    %7 = arith.maximumf %5, %6 : vector<32x32xf32>
    %c0_6 = arith.constant 0 : index
    %c0_7 = arith.constant 0 : index
    %8 = vector.load %arg4[%c0_6, %c0_7] : memref<32x32xf32, #tpu.memory_space<vmem>>, vector<32x32xf32>
    tpu.vector_store %arg4[%c0_6, %c0_7], %7 {strides = array<i32>} : memref<32x32xf32, #tpu.memory_space<vmem>>, vector<32x32xf32>,
    return
  }
  func.func @transform_0(%arg0: i32) -> (i32, i32) {
    %c0_i32 = arith.constant 0 : i32
    %c0_i32_0 = arith.constant 0 : i32
    %c0_i32_1 = arith.constant 0 : i32
    return %c0_i32, %c0_i32_0 : i32, i32
  }
  func.func @transform_1(%arg0: i32) -> (i32, i32) {
    %c0_i32 = arith.constant 0 : i32
    %c0_i32_0 = arith.constant 0 : i32
    %c0_i32_1 = arith.constant 0 : i32
    return %c0_i32, %c0_i32_0 : i32, i32
  }
  func.func @transform_2(%arg0: i32) -> (i32, i32) {
    %c0_i32 = arith.constant 0 : i32
    %c0_i32_0 = arith.constant 0 : i32
    %c0_i32_1 = arith.constant 0 : i32
    return %c0_i32, %c0_i32_0 : i32, i32
  }
  func.func @transform_3(%arg0: i32) -> (i32, i32) {
    %c0_i32 = arith.constant 0 : i32
    %c0_i32_0 = arith.constant 0 : i32
    %c0_i32_1 = arith.constant 0 : i32
    return %c0_i32, %c0_i32_0 : i32, i32
  }
}

module attributes {stable_mosaic.version = 11 : i64} {
  func.func @conv_relu_pool_kernel(%arg0: i32, %arg1: memref<4x288x8xf32, #tpu.memory_space<vmem>>, %arg2: memref<32x288xf32, #tpu.memory_space<vmem>>, %arg3: memref<32x1xf32, #tpu.memory_space<vmem>>, %arg4: memref<32x8xf32, #tpu.memory_space<vmem>>) attributes {dimension_semantics = [#tpu.dimension_semantics<arbitrary>], iteration_bounds = array<i64: 1>, scalar_prefetch = 0 : i64, scratch_operands = 0 : i64, tpu.core_type = #tpu.core_type<tc>, window_params = [{pipeline_mode = #tpu.pipeline_mode<synchronous>, transform_indices = @transform_0, window_bounds = array<i64: 4, 288, 8>}, {pipeline_mode = #tpu.pipeline_mode<synchronous>, transform_indices = @transform_1, window_bounds = array<i64: 32, 288>}, {pipeline_mode = #tpu.pipeline_mode<synchronous>, transform_indices = @transform_2, window_bounds = array<i64: 32, 1>}, {pipeline_mode = #tpu.pipeline_mode<synchronous>, transform_indices = @transform_3, window_bounds = array<i64: 32, 8>}]} {
    %c0 = arith.constant 0 : index
    %c0_0 = arith.constant 0 : index
    %0 = vector.load %arg2[%c0, %c0_0] : memref<32x288xf32, #tpu.memory_space<vmem>>, vector<32x288xf32>
    %c0_1 = arith.constant 0 : index
    %c0_2 = arith.constant 0 : index
    %c0_3 = arith.constant 0 : index
    %1 = vector.load %arg1[%c0_1, %c0_2, %c0_3] : memref<4x288x8xf32, #tpu.memory_space<vmem>>, vector<1x288x8xf32>
    %2 = vector.shape_cast %1 : vector<1x288x8xf32> to vector<288x8xf32>
    %cst = arith.constant dense<0.000000e+00> : vector<32x8xf32>
    %3 = tpu.matmul %0, %2, %cst {dimension_numbers = #tpu.dot_dimension_numbers<[1], [0], [0], [1], [0, 0, 1, 1], [], []>} : vector<32x288xf32>, vector<288x8xf32>, vector<32x8xf32> -> vector<32x8xf32>
    %c1 = arith.constant 1 : index
    %c0_4 = arith.constant 0 : index
    %c0_5 = arith.constant 0 : index
    %4 = vector.load %arg1[%c1, %c0_4, %c0_5] : memref<4x288x8xf32, #tpu.memory_space<vmem>>, vector<1x288x8xf32>
    %5 = vector.shape_cast %4 : vector<1x288x8xf32> to vector<288x8xf32>
    %cst_6 = arith.constant dense<0.000000e+00> : vector<32x8xf32>
    %6 = tpu.matmul %0, %5, %cst_6 {dimension_numbers = #tpu.dot_dimension_numbers<[1], [0], [0], [1], [0, 0, 1, 1], [], []>} : vector<32x288xf32>, vector<288x8xf32>, vector<32x8xf32> -> vector<32x8xf32>
    %7 = arith.maximumf %3, %6 : vector<32x8xf32>
    %c2 = arith.constant 2 : index
    %c0_7 = arith.constant 0 : index
    %c0_8 = arith.constant 0 : index
    %8 = vector.load %arg1[%c2, %c0_7, %c0_8] : memref<4x288x8xf32, #tpu.memory_space<vmem>>, vector<1x288x8xf32>
    %9 = vector.shape_cast %8 : vector<1x288x8xf32> to vector<288x8xf32>
    %cst_9 = arith.constant dense<0.000000e+00> : vector<32x8xf32>
    %10 = tpu.matmul %0, %9, %cst_9 {dimension_numbers = #tpu.dot_dimension_numbers<[1], [0], [0], [1], [0, 0, 1, 1], [], []>} : vector<32x288xf32>, vector<288x8xf32>, vector<32x8xf32> -> vector<32x8xf32>
    %11 = arith.maximumf %7, %10 : vector<32x8xf32>
    %c3 = arith.constant 3 : index
    %c0_10 = arith.constant 0 : index
    %c0_11 = arith.constant 0 : index
    %12 = vector.load %arg1[%c3, %c0_10, %c0_11] : memref<4x288x8xf32, #tpu.memory_space<vmem>>, vector<1x288x8xf32>
    %13 = vector.shape_cast %12 : vector<1x288x8xf32> to vector<288x8xf32>
    %cst_12 = arith.constant dense<0.000000e+00> : vector<32x8xf32>
    %14 = tpu.matmul %0, %13, %cst_12 {dimension_numbers = #tpu.dot_dimension_numbers<[1], [0], [0], [1], [0, 0, 1, 1], [], []>} : vector<32x288xf32>, vector<288x8xf32>, vector<32x8xf32> -> vector<32x8xf32>
    %15 = arith.maximumf %11, %14 : vector<32x8xf32>
    %c0_13 = arith.constant 0 : index
    %c0_14 = arith.constant 0 : index
    %16 = vector.load %arg3[%c0_13, %c0_14] : memref<32x1xf32, #tpu.memory_space<vmem>>, vector<32x1xf32>
    %17 = vector.broadcast %16 : vector<32x1xf32> to vector<32x8xf32>
    %18 = arith.addf %15, %17 : vector<32x8xf32>
    %cst_15 = arith.constant 0.000000e+00 : f32
    %19 = vector.broadcast %cst_15 : f32 to vector<32x8xf32>
    %20 = arith.maximumf %18, %19 : vector<32x8xf32>
    %c0_16 = arith.constant 0 : index
    %c0_17 = arith.constant 0 : index
    %21 = vector.load %arg4[%c0_16, %c0_17] : memref<32x8xf32, #tpu.memory_space<vmem>>, vector<32x8xf32>
    tpu.vector_store %arg4[%c0_16, %c0_17], %20 {strides = array<i32>} : memref<32x8xf32, #tpu.memory_space<vmem>>, vector<32x8xf32>,
    return
  }
  func.func @transform_0(%arg0: i32) -> (i32, i32, i32) {
    %c0_i32 = arith.constant 0 : i32
    %c0_i32_0 = arith.constant 0 : i32
    %c0_i32_1 = arith.constant 0 : i32
    %c0_i32_2 = arith.constant 0 : i32
    return %c0_i32, %c0_i32_0, %c0_i32_1 : i32, i32, i32
  }
  func.func @transform_1(%arg0: i32) -> (i32, i32) {
    %c0_i32 = arith.constant 0 : i32
    %c0_i32_0 = arith.constant 0 : i32
    %c0_i32_1 = arith.constant 0 : i32
    return %c0_i32, %c0_i32_0 : i32, i32
  }
  func.func @transform_2(%arg0: i32) -> (i32, i32) {
    %c0_i32 = arith.constant 0 : i32
    %c0_i32_0 = arith.constant 0 : i32
    %c0_i32_1 = arith.constant 0 : i32
    return %c0_i32, %c0_i32_0 : i32, i32
  }
  func.func @transform_3(%arg0: i32) -> (i32, i32) {
    %c0_i32 = arith.constant 0 : i32
    %c0_i32_0 = arith.constant 0 : i32
    %c0_i32_1 = arith.constant 0 : i32
    return %c0_i32, %c0_i32_0 : i32, i32
  }
}

module attributes {stable_mosaic.version = 11 : i64} {
  func.func @conv_relu_kernel(%arg0: i32, %arg1: memref<288x8xf32, #tpu.memory_space<vmem>>, %arg2: memref<32x288xf32, #tpu.memory_space<vmem>>, %arg3: memref<32x1xf32, #tpu.memory_space<vmem>>, %arg4: memref<32x8xf32, #tpu.memory_space<vmem>>) attributes {dimension_semantics = [#tpu.dimension_semantics<arbitrary>], iteration_bounds = array<i64: 1>, scalar_prefetch = 0 : i64, scratch_operands = 0 : i64, tpu.core_type = #tpu.core_type<tc>, window_params = [{pipeline_mode = #tpu.pipeline_mode<synchronous>, transform_indices = @transform_0, window_bounds = array<i64: 288, 8>}, {pipeline_mode = #tpu.pipeline_mode<synchronous>, transform_indices = @transform_1, window_bounds = array<i64: 32, 288>}, {pipeline_mode = #tpu.pipeline_mode<synchronous>, transform_indices = @transform_2, window_bounds = array<i64: 32, 1>}, {pipeline_mode = #tpu.pipeline_mode<synchronous>, transform_indices = @transform_3, window_bounds = array<i64: 32, 8>}]} {
    %c0 = arith.constant 0 : index
    %c0_0 = arith.constant 0 : index
    %0 = vector.load %arg2[%c0, %c0_0] : memref<32x288xf32, #tpu.memory_space<vmem>>, vector<32x288xf32>
    %c0_1 = arith.constant 0 : index
    %c0_2 = arith.constant 0 : index
    %1 = vector.load %arg1[%c0_1, %c0_2] : memref<288x8xf32, #tpu.memory_space<vmem>>, vector<288x8xf32>
    %cst = arith.constant dense<0.000000e+00> : vector<32x8xf32>
    %2 = tpu.matmul %0, %1, %cst {dimension_numbers = #tpu.dot_dimension_numbers<[1], [0], [0], [1], [0, 0, 1, 1], [], []>} : vector<32x288xf32>, vector<288x8xf32>, vector<32x8xf32> -> vector<32x8xf32>
    %c0_3 = arith.constant 0 : index
    %c0_4 = arith.constant 0 : index
    %3 = vector.load %arg3[%c0_3, %c0_4] : memref<32x1xf32, #tpu.memory_space<vmem>>, vector<32x1xf32>
    %4 = vector.broadcast %3 : vector<32x1xf32> to vector<32x8xf32>
    %5 = arith.addf %2, %4 : vector<32x8xf32>
    %cst_5 = arith.constant 0.000000e+00 : f32
    %6 = vector.broadcast %cst_5 : f32 to vector<32x8xf32>
    %7 = arith.maximumf %5, %6 : vector<32x8xf32>
    %c0_6 = arith.constant 0 : index
    %c0_7 = arith.constant 0 : index
    %8 = vector.load %arg4[%c0_6, %c0_7] : memref<32x8xf32, #tpu.memory_space<vmem>>, vector<32x8xf32>
    tpu.vector_store %arg4[%c0_6, %c0_7], %7 {strides = array<i32>} : memref<32x8xf32, #tpu.memory_space<vmem>>, vector<32x8xf32>,
    return
  }
  func.func @transform_0(%arg0: i32) -> (i32, i32) {
    %c0_i32 = arith.constant 0 : i32
    %c0_i32_0 = arith.constant 0 : i32
    %c0_i32_1 = arith.constant 0 : i32
    return %c0_i32, %c0_i32_0 : i32, i32
  }
  func.func @transform_1(%arg0: i32) -> (i32, i32) {
    %c0_i32 = arith.constant 0 : i32
    %c0_i32_0 = arith.constant 0 : i32
    %c0_i32_1 = arith.constant 0 : i32
    return %c0_i32, %c0_i32_0 : i32, i32
  }
  func.func @transform_2(%arg0: i32) -> (i32, i32) {
    %c0_i32 = arith.constant 0 : i32
    %c0_i32_0 = arith.constant 0 : i32
    %c0_i32_1 = arith.constant 0 : i32
    return %c0_i32, %c0_i32_0 : i32, i32
  }
  func.func @transform_3(%arg0: i32) -> (i32, i32) {
    %c0_i32 = arith.constant 0 : i32
    %c0_i32_0 = arith.constant 0 : i32
    %c0_i32_1 = arith.constant 0 : i32
    return %c0_i32, %c0_i32_0 : i32, i32
  }
}

module attributes {stable_mosaic.version = 11 : i64} {
  func.func @conv_relu_pool_kernel(%arg0: i32, %arg1: memref<4x288x2xf32, #tpu.memory_space<vmem>>, %arg2: memref<32x288xf32, #tpu.memory_space<vmem>>, %arg3: memref<32x1xf32, #tpu.memory_space<vmem>>, %arg4: memref<32x2xf32, #tpu.memory_space<vmem>>) attributes {dimension_semantics = [#tpu.dimension_semantics<arbitrary>], iteration_bounds = array<i64: 1>, scalar_prefetch = 0 : i64, scratch_operands = 0 : i64, tpu.core_type = #tpu.core_type<tc>, window_params = [{pipeline_mode = #tpu.pipeline_mode<synchronous>, transform_indices = @transform_0, window_bounds = array<i64: 4, 288, 2>}, {pipeline_mode = #tpu.pipeline_mode<synchronous>, transform_indices = @transform_1, window_bounds = array<i64: 32, 288>}, {pipeline_mode = #tpu.pipeline_mode<synchronous>, transform_indices = @transform_2, window_bounds = array<i64: 32, 1>}, {pipeline_mode = #tpu.pipeline_mode<synchronous>, transform_indices = @transform_3, window_bounds = array<i64: 32, 2>}]} {
    %c0 = arith.constant 0 : index
    %c0_0 = arith.constant 0 : index
    %0 = vector.load %arg2[%c0, %c0_0] : memref<32x288xf32, #tpu.memory_space<vmem>>, vector<32x288xf32>
    %c0_1 = arith.constant 0 : index
    %c0_2 = arith.constant 0 : index
    %c0_3 = arith.constant 0 : index
    %1 = vector.load %arg1[%c0_1, %c0_2, %c0_3] : memref<4x288x2xf32, #tpu.memory_space<vmem>>, vector<1x288x2xf32>
    %2 = vector.shape_cast %1 : vector<1x288x2xf32> to vector<288x2xf32>
    %cst = arith.constant dense<0.000000e+00> : vector<32x2xf32>
    %3 = tpu.matmul %0, %2, %cst {dimension_numbers = #tpu.dot_dimension_numbers<[1], [0], [0], [1], [0, 0, 1, 1], [], []>} : vector<32x288xf32>, vector<288x2xf32>, vector<32x2xf32> -> vector<32x2xf32>
    %c1 = arith.constant 1 : index
    %c0_4 = arith.constant 0 : index
    %c0_5 = arith.constant 0 : index
    %4 = vector.load %arg1[%c1, %c0_4, %c0_5] : memref<4x288x2xf32, #tpu.memory_space<vmem>>, vector<1x288x2xf32>
    %5 = vector.shape_cast %4 : vector<1x288x2xf32> to vector<288x2xf32>
    %cst_6 = arith.constant dense<0.000000e+00> : vector<32x2xf32>
    %6 = tpu.matmul %0, %5, %cst_6 {dimension_numbers = #tpu.dot_dimension_numbers<[1], [0], [0], [1], [0, 0, 1, 1], [], []>} : vector<32x288xf32>, vector<288x2xf32>, vector<32x2xf32> -> vector<32x2xf32>
    %7 = arith.maximumf %3, %6 : vector<32x2xf32>
    %c2 = arith.constant 2 : index
    %c0_7 = arith.constant 0 : index
    %c0_8 = arith.constant 0 : index
    %8 = vector.load %arg1[%c2, %c0_7, %c0_8] : memref<4x288x2xf32, #tpu.memory_space<vmem>>, vector<1x288x2xf32>
    %9 = vector.shape_cast %8 : vector<1x288x2xf32> to vector<288x2xf32>
    %cst_9 = arith.constant dense<0.000000e+00> : vector<32x2xf32>
    %10 = tpu.matmul %0, %9, %cst_9 {dimension_numbers = #tpu.dot_dimension_numbers<[1], [0], [0], [1], [0, 0, 1, 1], [], []>} : vector<32x288xf32>, vector<288x2xf32>, vector<32x2xf32> -> vector<32x2xf32>
    %11 = arith.maximumf %7, %10 : vector<32x2xf32>
    %c3 = arith.constant 3 : index
    %c0_10 = arith.constant 0 : index
    %c0_11 = arith.constant 0 : index
    %12 = vector.load %arg1[%c3, %c0_10, %c0_11] : memref<4x288x2xf32, #tpu.memory_space<vmem>>, vector<1x288x2xf32>
    %13 = vector.shape_cast %12 : vector<1x288x2xf32> to vector<288x2xf32>
    %cst_12 = arith.constant dense<0.000000e+00> : vector<32x2xf32>
    %14 = tpu.matmul %0, %13, %cst_12 {dimension_numbers = #tpu.dot_dimension_numbers<[1], [0], [0], [1], [0, 0, 1, 1], [], []>} : vector<32x288xf32>, vector<288x2xf32>, vector<32x2xf32> -> vector<32x2xf32>
    %15 = arith.maximumf %11, %14 : vector<32x2xf32>
    %c0_13 = arith.constant 0 : index
    %c0_14 = arith.constant 0 : index
    %16 = vector.load %arg3[%c0_13, %c0_14] : memref<32x1xf32, #tpu.memory_space<vmem>>, vector<32x1xf32>
    %17 = vector.broadcast %16 : vector<32x1xf32> to vector<32x2xf32>
    %18 = arith.addf %15, %17 : vector<32x2xf32>
    %cst_15 = arith.constant 0.000000e+00 : f32
    %19 = vector.broadcast %cst_15 : f32 to vector<32x2xf32>
    %20 = arith.maximumf %18, %19 : vector<32x2xf32>
    %c0_16 = arith.constant 0 : index
    %c0_17 = arith.constant 0 : index
    %21 = vector.load %arg4[%c0_16, %c0_17] : memref<32x2xf32, #tpu.memory_space<vmem>>, vector<32x2xf32>
    tpu.vector_store %arg4[%c0_16, %c0_17], %20 {strides = array<i32>} : memref<32x2xf32, #tpu.memory_space<vmem>>, vector<32x2xf32>,
    return
  }
  func.func @transform_0(%arg0: i32) -> (i32, i32, i32) {
    %c0_i32 = arith.constant 0 : i32
    %c0_i32_0 = arith.constant 0 : i32
    %c0_i32_1 = arith.constant 0 : i32
    %c0_i32_2 = arith.constant 0 : i32
    return %c0_i32, %c0_i32_0, %c0_i32_1 : i32, i32, i32
  }
  func.func @transform_1(%arg0: i32) -> (i32, i32) {
    %c0_i32 = arith.constant 0 : i32
    %c0_i32_0 = arith.constant 0 : i32
    %c0_i32_1 = arith.constant 0 : i32
    return %c0_i32, %c0_i32_0 : i32, i32
  }
  func.func @transform_2(%arg0: i32) -> (i32, i32) {
    %c0_i32 = arith.constant 0 : i32
    %c0_i32_0 = arith.constant 0 : i32
    %c0_i32_1 = arith.constant 0 : i32
    return %c0_i32, %c0_i32_0 : i32, i32
  }
  func.func @transform_3(%arg0: i32) -> (i32, i32) {
    %c0_i32 = arith.constant 0 : i32
    %c0_i32_0 = arith.constant 0 : i32
    %c0_i32_1 = arith.constant 0 : i32
    return %c0_i32, %c0_i32_0 : i32, i32
  }
}

module attributes {stable_mosaic.version = 11 : i64} {
  func.func @heads_kernel(%arg0: i32, %arg1: memref<2x32xf32, #tpu.memory_space<vmem>>, %arg2: memref<32x64xf32, #tpu.memory_space<vmem>>, %arg3: memref<1x64xf32, #tpu.memory_space<vmem>>, %arg4: memref<64x64xf32, #tpu.memory_space<vmem>>, %arg5: memref<1x64xf32, #tpu.memory_space<vmem>>, %arg6: memref<64x5xf32, #tpu.memory_space<vmem>>, %arg7: memref<1x5xf32, #tpu.memory_space<vmem>>, %arg8: memref<32x128xf32, #tpu.memory_space<vmem>>, %arg9: memref<1x128xf32, #tpu.memory_space<vmem>>, %arg10: memref<128x128xf32, #tpu.memory_space<vmem>>, %arg11: memref<1x128xf32, #tpu.memory_space<vmem>>, %arg12: memref<128x18xf32, #tpu.memory_space<vmem>>, %arg13: memref<1x18xf32, #tpu.memory_space<vmem>>, %arg14: memref<2x5xf32, #tpu.memory_space<vmem>>, %arg15: memref<2x18xf32, #tpu.memory_space<vmem>>) attributes {dimension_semantics = [#tpu.dimension_semantics<arbitrary>], iteration_bounds = array<i64: 1>, scalar_prefetch = 0 : i64, scratch_operands = 0 : i64, tpu.core_type = #tpu.core_type<tc>, window_params = [{pipeline_mode = #tpu.pipeline_mode<synchronous>, transform_indices = @transform_0, window_bounds = array<i64: 2, 32>}, {pipeline_mode = #tpu.pipeline_mode<synchronous>, transform_indices = @transform_1, window_bounds = array<i64: 32, 64>}, {pipeline_mode = #tpu.pipeline_mode<synchronous>, transform_indices = @transform_2, window_bounds = array<i64: 1, 64>}, {pipeline_mode = #tpu.pipeline_mode<synchronous>, transform_indices = @transform_3, window_bounds = array<i64: 64, 64>}, {pipeline_mode = #tpu.pipeline_mode<synchronous>, transform_indices = @transform_4, window_bounds = array<i64: 1, 64>}, {pipeline_mode = #tpu.pipeline_mode<synchronous>, transform_indices = @transform_5, window_bounds = array<i64: 64, 5>}, {pipeline_mode = #tpu.pipeline_mode<synchronous>, transform_indices = @transform_6, window_bounds = array<i64: 1, 5>}, {pipeline_mode = #tpu.pipeline_mode<synchronous>, transform_indices = @transform_7, window_bounds = array<i64: 32, 128>}, {pipeline_mode = #tpu.pipeline_mode<synchronous>, transform_indices = @transform_8, window_bounds = array<i64: 1, 128>}, {pipeline_mode = #tpu.pipeline_mode<synchronous>, transform_indices = @transform_9, window_bounds = array<i64: 128, 128>}, {pipeline_mode = #tpu.pipeline_mode<synchronous>, transform_indices = @transform_10, window_bounds = array<i64: 1, 128>}, {pipeline_mode = #tpu.pipeline_mode<synchronous>, transform_indices = @transform_11, window_bounds = array<i64: 128, 18>}, {pipeline_mode = #tpu.pipeline_mode<synchronous>, transform_indices = @transform_12, window_bounds = array<i64: 1, 18>}, {pipeline_mode = #tpu.pipeline_mode<synchronous>, transform_indices = @transform_13, window_bounds = array<i64: 2, 5>}, {pipeline_mode = #tpu.pipeline_mode<synchronous>, transform_indices = @transform_14, window_bounds = array<i64: 2, 18>}]} {
    %c0 = arith.constant 0 : index
    %c0_0 = arith.constant 0 : index
    %0 = vector.load %arg1[%c0, %c0_0] : memref<2x32xf32, #tpu.memory_space<vmem>>, vector<2x32xf32>
    %c0_1 = arith.constant 0 : index
    %c0_2 = arith.constant 0 : index
    %1 = vector.load %arg2[%c0_1, %c0_2] : memref<32x64xf32, #tpu.memory_space<vmem>>, vector<32x64xf32>
    %cst = arith.constant dense<0.000000e+00> : vector<2x64xf32>
    %2 = tpu.matmul %0, %1, %cst {dimension_numbers = #tpu.dot_dimension_numbers<[1], [0], [0], [1], [0, 0, 1, 1], [], []>} : vector<2x32xf32>, vector<32x64xf32>, vector<2x64xf32> -> vector<2x64xf32>
    %c0_3 = arith.constant 0 : index
    %c0_4 = arith.constant 0 : index
    %3 = vector.load %arg3[%c0_3, %c0_4] : memref<1x64xf32, #tpu.memory_space<vmem>>, vector<1x64xf32>
    %4 = vector.broadcast %3 : vector<1x64xf32> to vector<2x64xf32>
    %5 = arith.addf %2, %4 : vector<2x64xf32>
    %cst_5 = arith.constant 0.000000e+00 : f32
    %6 = vector.broadcast %cst_5 : f32 to vector<2x64xf32>
    %7 = arith.maximumf %5, %6 : vector<2x64xf32>
    %c0_6 = arith.constant 0 : index
    %c0_7 = arith.constant 0 : index
    %8 = vector.load %arg4[%c0_6, %c0_7] : memref<64x64xf32, #tpu.memory_space<vmem>>, vector<64x64xf32>
    %cst_8 = arith.constant dense<0.000000e+00> : vector<2x64xf32>
    %9 = tpu.matmul %7, %8, %cst_8 {dimension_numbers = #tpu.dot_dimension_numbers<[1], [0], [0], [1], [0, 0, 1, 1], [], []>} : vector<2x64xf32>, vector<64x64xf32>, vector<2x64xf32> -> vector<2x64xf32>
    %c0_9 = arith.constant 0 : index
    %c0_10 = arith.constant 0 : index
    %10 = vector.load %arg5[%c0_9, %c0_10] : memref<1x64xf32, #tpu.memory_space<vmem>>, vector<1x64xf32>
    %11 = vector.broadcast %10 : vector<1x64xf32> to vector<2x64xf32>
    %12 = arith.addf %9, %11 : vector<2x64xf32>
    %cst_11 = arith.constant 0.000000e+00 : f32
    %13 = vector.broadcast %cst_11 : f32 to vector<2x64xf32>
    %14 = arith.maximumf %12, %13 : vector<2x64xf32>
    %c0_12 = arith.constant 0 : index
    %c0_13 = arith.constant 0 : index
    %15 = vector.load %arg6[%c0_12, %c0_13] : memref<64x5xf32, #tpu.memory_space<vmem>>, vector<64x5xf32>
    %cst_14 = arith.constant dense<0.000000e+00> : vector<2x5xf32>
    %16 = tpu.matmul %14, %15, %cst_14 {dimension_numbers = #tpu.dot_dimension_numbers<[1], [0], [0], [1], [0, 0, 1, 1], [], []>} : vector<2x64xf32>, vector<64x5xf32>, vector<2x5xf32> -> vector<2x5xf32>
    %c0_15 = arith.constant 0 : index
    %c0_16 = arith.constant 0 : index
    %17 = vector.load %arg7[%c0_15, %c0_16] : memref<1x5xf32, #tpu.memory_space<vmem>>, vector<1x5xf32>
    %18 = vector.broadcast %17 : vector<1x5xf32> to vector<2x5xf32>
    %19 = arith.addf %16, %18 : vector<2x5xf32>
    %c0_17 = arith.constant 0 : index
    %c0_18 = arith.constant 0 : index
    %20 = vector.load %arg14[%c0_17, %c0_18] : memref<2x5xf32, #tpu.memory_space<vmem>>, vector<2x5xf32>
    tpu.vector_store %arg14[%c0_17, %c0_18], %19 {strides = array<i32>} : memref<2x5xf32, #tpu.memory_space<vmem>>, vector<2x5xf32>,
    %c0_19 = arith.constant 0 : index
    %c0_20 = arith.constant 0 : index
    %21 = vector.load %arg8[%c0_19, %c0_20] : memref<32x128xf32, #tpu.memory_space<vmem>>, vector<32x128xf32>
    %cst_21 = arith.constant dense<0.000000e+00> : vector<2x128xf32>
    %22 = tpu.matmul %0, %21, %cst_21 {dimension_numbers = #tpu.dot_dimension_numbers<[1], [0], [0], [1], [0, 0, 1, 1], [], []>} : vector<2x32xf32>, vector<32x128xf32>, vector<2x128xf32> -> vector<2x128xf32>
    %c0_22 = arith.constant 0 : index
    %c0_23 = arith.constant 0 : index
    %23 = vector.load %arg9[%c0_22, %c0_23] : memref<1x128xf32, #tpu.memory_space<vmem>>, vector<1x128xf32>
    %24 = vector.broadcast %23 : vector<1x128xf32> to vector<2x128xf32>
    %25 = arith.addf %22, %24 : vector<2x128xf32>
    %cst_24 = arith.constant 0.000000e+00 : f32
    %26 = vector.broadcast %cst_24 : f32 to vector<2x128xf32>
    %27 = arith.maximumf %25, %26 : vector<2x128xf32>
    %c0_25 = arith.constant 0 : index
    %c0_26 = arith.constant 0 : index
    %28 = vector.load %arg10[%c0_25, %c0_26] : memref<128x128xf32, #tpu.memory_space<vmem>>, vector<128x128xf32>
    %cst_27 = arith.constant dense<0.000000e+00> : vector<2x128xf32>
    %29 = tpu.matmul %27, %28, %cst_27 {dimension_numbers = #tpu.dot_dimension_numbers<[1], [0], [0], [1], [0, 0, 1, 1], [], []>} : vector<2x128xf32>, vector<128x128xf32>, vector<2x128xf32> -> vector<2x128xf32>
    %c0_28 = arith.constant 0 : index
    %c0_29 = arith.constant 0 : index
    %30 = vector.load %arg11[%c0_28, %c0_29] : memref<1x128xf32, #tpu.memory_space<vmem>>, vector<1x128xf32>
    %31 = vector.broadcast %30 : vector<1x128xf32> to vector<2x128xf32>
    %32 = arith.addf %29, %31 : vector<2x128xf32>
    %cst_30 = arith.constant 0.000000e+00 : f32
    %33 = vector.broadcast %cst_30 : f32 to vector<2x128xf32>
    %34 = arith.maximumf %32, %33 : vector<2x128xf32>
    %c0_31 = arith.constant 0 : index
    %c0_32 = arith.constant 0 : index
    %35 = vector.load %arg12[%c0_31, %c0_32] : memref<128x18xf32, #tpu.memory_space<vmem>>, vector<128x18xf32>
    %cst_33 = arith.constant dense<0.000000e+00> : vector<2x18xf32>
    %36 = tpu.matmul %34, %35, %cst_33 {dimension_numbers = #tpu.dot_dimension_numbers<[1], [0], [0], [1], [0, 0, 1, 1], [], []>} : vector<2x128xf32>, vector<128x18xf32>, vector<2x18xf32> -> vector<2x18xf32>
    %c0_34 = arith.constant 0 : index
    %c0_35 = arith.constant 0 : index
    %37 = vector.load %arg13[%c0_34, %c0_35] : memref<1x18xf32, #tpu.memory_space<vmem>>, vector<1x18xf32>
    %38 = vector.broadcast %37 : vector<1x18xf32> to vector<2x18xf32>
    %39 = arith.addf %36, %38 : vector<2x18xf32>
    %c0_36 = arith.constant 0 : index
    %c0_37 = arith.constant 0 : index
    %40 = vector.load %arg15[%c0_36, %c0_37] : memref<2x18xf32, #tpu.memory_space<vmem>>, vector<2x18xf32>
    tpu.vector_store %arg15[%c0_36, %c0_37], %39 {strides = array<i32>} : memref<2x18xf32, #tpu.memory_space<vmem>>, vector<2x18xf32>,
    return
  }
  func.func @transform_0(%arg0: i32) -> (i32, i32) {
    %c0_i32 = arith.constant 0 : i32
    %c0_i32_0 = arith.constant 0 : i32
    %c0_i32_1 = arith.constant 0 : i32
    return %c0_i32, %c0_i32_0 : i32, i32
  }
  func.func @transform_1(%arg0: i32) -> (i32, i32) {
    %c0_i32 = arith.constant 0 : i32
    %c0_i32_0 = arith.constant 0 : i32
    %c0_i32_1 = arith.constant 0 : i32
    return %c0_i32, %c0_i32_0 : i32, i32
  }
  func.func @transform_2(%arg0: i32) -> (i32, i32) {
    %c0_i32 = arith.constant 0 : i32
    %c0_i32_0 = arith.constant 0 : i32
    %c0_i32_1 = arith.constant 0 : i32
    return %c0_i32, %c0_i32_0 : i32, i32
  }
  func.func @transform_3(%arg0: i32) -> (i32, i32) {
    %c0_i32 = arith.constant 0 : i32
    %c0_i32_0 = arith.constant 0 : i32
    %c0_i32_1 = arith.constant 0 : i32
    return %c0_i32, %c0_i32_0 : i32, i32
  }
  func.func @transform_4(%arg0: i32) -> (i32, i32) {
    %c0_i32 = arith.constant 0 : i32
    %c0_i32_0 = arith.constant 0 : i32
    %c0_i32_1 = arith.constant 0 : i32
    return %c0_i32, %c0_i32_0 : i32, i32
  }
  func.func @transform_5(%arg0: i32) -> (i32, i32) {
    %c0_i32 = arith.constant 0 : i32
    %c0_i32_0 = arith.constant 0 : i32
    %c0_i32_1 = arith.constant 0 : i32
    return %c0_i32, %c0_i32_0 : i32, i32
  }
  func.func @transform_6(%arg0: i32) -> (i32, i32) {
    %c0_i32 = arith.constant 0 : i32
    %c0_i32_0 = arith.constant 0 : i32
    %c0_i32_1 = arith.constant 0 : i32
    return %c0_i32, %c0_i32_0 : i32, i32
  }
  func.func @transform_7(%arg0: i32) -> (i32, i32) {
    %c0_i32 = arith.constant 0 : i32
    %c0_i32_0 = arith.constant 0 : i32
    %c0_i32_1 = arith.constant 0 : i32
    return %c0_i32, %c0_i32_0 : i32, i32
  }
  func.func @transform_8(%arg0: i32) -> (i32, i32) {
    %c0_i32 = arith.constant 0 : i32
    %c0_i32_0 = arith.constant 0 : i32
    %c0_i32_1 = arith.constant 0 : i32
    return %c0_i32, %c0_i32_0 : i32, i32
  }
  func.func @transform_9(%arg0: i32) -> (i32, i32) {
    %c0_i32 = arith.constant 0 : i32
    %c0_i32_0 = arith.constant 0 : i32
    %c0_i32_1 = arith.constant 0 : i32
    return %c0_i32, %c0_i32_0 : i32, i32
  }
  func.func @transform_10(%arg0: i32) -> (i32, i32) {
    %c0_i32 = arith.constant 0 : i32
    %c0_i32_0 = arith.constant 0 : i32
    %c0_i32_1 = arith.constant 0 : i32
    return %c0_i32, %c0_i32_0 : i32, i32
  }
  func.func @transform_11(%arg0: i32) -> (i32, i32) {
    %c0_i32 = arith.constant 0 : i32
    %c0_i32_0 = arith.constant 0 : i32
    %c0_i32_1 = arith.constant 0 : i32
    return %c0_i32, %c0_i32_0 : i32, i32
  }
  func.func @transform_12(%arg0: i32) -> (i32, i32) {
    %c0_i32 = arith.constant 0 : i32
    %c0_i32_0 = arith.constant 0 : i32
    %c0_i32_1 = arith.constant 0 : i32
    return %c0_i32, %c0_i32_0 : i32, i32
  }
  func.func @transform_13(%arg0: i32) -> (i32, i32) {
    %c0_i32 = arith.constant 0 : i32
    %c0_i32_0 = arith.constant 0 : i32
    %c0_i32_1 = arith.constant 0 : i32
    return %c0_i32, %c0_i32_0 : i32, i32
  }
  func.func @transform_14(%arg0: i32) -> (i32, i32) {
    %c0_i32 = arith.constant 0 : i32
    %c0_i32_0 = arith.constant 0 : i32
    %c0_i32_1 = arith.constant 0 : i32
    return %c0_i32, %c0_i32_0 : i32, i32
  }
}

</mosaic_0001>

<llo_original>
// kernel: gh_cnn_forward.14
$region0: #{gh_cnn_forward.14}
  #allocation0 [shape = 'u32[]', space=smem, size = 0x4, offset = 0x4, fixed_abs, tag = 'smem constant byte address 0x4 - core index']
  #allocation1 [shape = 'u32[144,128]{1,0:T(1,128)}', space=vmem, size = 0x12000, scoped, tag = 'internal scratch']
  %s0 = inlined_call_operand.vmem [shape: f32[27,2048], index: 0, kind: input, shape index: {}]
  %s1 = inlined_call_operand.vmem [shape: f32[4,27], index: 1, kind: input, shape index: {}]
  %s2 = inlined_call_operand.vmem [shape: f32[4,1], index: 2, kind: input, shape index: {}]
  %s3 = inlined_call_operand.vmem [shape: f32[4,2048], index: 3, kind: output, shape index: {}]
  %s4 = sld [smem:[#allocation0]]
  $region22: #{gh_cnn_forward.14} parent=0
    _
  %s6 = ssub.s32 1, %s4
  %s7 = scalar_select 0, %s6, %s4
  // Predicated region
  $region2: #{gh_cnn_forward.14} parent=0 // pred_check
    _
  $region3: #{gh_cnn_forward.14} parent=0 // pred_check_branch
    %9 = sbr.rel (0) target = $region5
  $region4: #{gh_cnn_forward.14} parent=0 // pred_region
    _
  $region5: #{gh_cnn_forward.14} parent=0 // pred_fallthru
    _
  // Predicated region
  $region6: #{gh_cnn_forward.14} parent=0 // pred_check
    _
  $region7: #{gh_cnn_forward.14} parent=0 // pred_check_branch
    %11 = sbr.rel (0) target = $region9
  $region8: #{gh_cnn_forward.14} parent=0 // pred_region
    _
  $region9: #{gh_cnn_forward.14} parent=0 // pred_fallthru
    _
  // Predicated region
  $region10: #{gh_cnn_forward.14} parent=0 // pred_check
    _
  $region11: #{gh_cnn_forward.14} parent=0 // pred_check_branch
    %13 = sbr.rel (0) target = $region13
  $region12: #{gh_cnn_forward.14} parent=0 // pred_region
    _
  $region13: #{gh_cnn_forward.14} parent=0 // pred_fallthru
    _
  %v14 = vld [vmem:[%s1] sm:$0xf]
  %v15 = vld [vmem:[%s0] sm:$0xff]
  %v16 = vld [vmem:[%s0 + $0x8] sm:$0xff]
  %v17 = vld [vmem:[%s0 + $0x10] sm:$0xff]
  %v18 = vld [vmem:[%s0 + $0x18] sm:$0xff]
  %v19 = vld [vmem:[%s0 + $0x20] sm:$0xff]
  %v20 = vld [vmem:[%s0 + $0x28] sm:$0xff]
  %v21 = vld [vmem:[%s0 + $0x30] sm:$0xff]
  %v22 = vld [vmem:[%s0 + $0x38] sm:$0xff]
  %v23 = vld [vmem:[%s0 + $0x40] sm:$0xff]
  %v24 = vld [vmem:[%s0 + $0x48] sm:$0xff]
  %v25 = vld [vmem:[%s0 + $0x50] sm:$0xff]
  %v26 = vld [vmem:[%s0 + $0x58] sm:$0xff]
  %v27 = vld [vmem:[%s0 + $0x60] sm:$0xff]
  %v28 = vld [vmem:[%s0 + $0x68] sm:$0xff]
  %v29 = vld [vmem:[%s0 + $0x70] sm:$0xff]
  %v30 = vld [vmem:[%s0 + $0x78] sm:$0xff]
  %v31 = vld [vmem:[%s0 + $0x80] sm:$0xff]
  %v32 = vld [vmem:[%s0 + $0x88] sm:$0xff]
  %v33 = vld [vmem:[%s0 + $0x90] sm:$0xff]
  %v34 = vld [vmem:[%s0 + $0x98] sm:$0xff]
  %v35 = vld [vmem:[%s0 + $0xa0] sm:$0xff]
  %v36 = vld [vmem:[%s0 + $0xa8] sm:$0xff]
  %v37 = vld [vmem:[%s0 + $0xb0] sm:$0xff]
  %v38 = vld [vmem:[%s0 + $0xb8] sm:$0xff]
  %v39 = vld [vmem:[%s0 + $0xc0] sm:$0xff]
  %v40 = vld [vmem:[%s0 + $0xc8] sm:$0xff]
  %v41 = vld [vmem:[%s0 + $0xd0] sm:$0xff]
  %v42 = vld [vmem:[%s0 + $0xd8] sm:$0xff]
  %v43 = vld [vmem:[%s0 + $0xe0] sm:$0xff]
  %v44 = vld [vmem:[%s0 + $0xe8] sm:$0xff]
  %v45 = vld [vmem:[%s0 + $0xf0] sm:$0xff]
  %v46 = vld [vmem:[%s0 + $0xf8] sm:$0xff]
  %v47 = vld [vmem:[%s0 + $0x100] sm:$0xff]
  %v48 = vld [vmem:[%s0 + $0x108] sm:$0xff]
  %v49 = vld [vmem:[%s0 + $0x110] sm:$0xff]
  %v50 = vld [vmem:[%s0 + $0x118] sm:$0xff]
  %v51 = vld [vmem:[%s0 + $0x120] sm:$0xff]
  %v52 = vld [vmem:[%s0 + $0x128] sm:$0xff]
  %v53 = vld [vmem:[%s0 + $0x130] sm:$0xff]
  %v54 = vld [vmem:[%s0 + $0x138] sm:$0xff]
  %v55 = vld [vmem:[%s0 + $0x140] sm:$0xff]
  %v56 = vld [vmem:[%s0 + $0x148] sm:$0xff]
  %v57 = vld [vmem:[%s0 + $0x150] sm:$0xff]
  %v58 = vld [vmem:[%s0 + $0x158] sm:$0xff]
  %v59 = vld [vmem:[%s0 + $0x160] sm:$0xff]
  %v60 = vld [vmem:[%s0 + $0x168] sm:$0xff]
  %v61 = vld [vmem:[%s0 + $0x170] sm:$0xff]
  %v62 = vld [vmem:[%s0 + $0x178] sm:$0xff]
  %v63 = vld [vmem:[%s0 + $0x180] sm:$0x7]
  %v64 = vld [vmem:[%s0 + $0x188] sm:$0x7]
  %v65 = vld [vmem:[%s0 + $0x190] sm:$0x7]
  %v66 = vld [vmem:[%s0 + $0x198] sm:$0x7]
  %v67 = vld [vmem:[%s0 + $0x1a0] sm:$0x7]
  %v68 = vld [vmem:[%s0 + $0x1a8] sm:$0x7]
  %v69 = vld [vmem:[%s0 + $0x1b0] sm:$0x7]
  %v70 = vld [vmem:[%s0 + $0x1b8] sm:$0x7]
  %v71 = vld [vmem:[%s0 + $0x1c0] sm:$0x7]
  %v72 = vld [vmem:[%s0 + $0x1c8] sm:$0x7]
  %v73 = vld [vmem:[%s0 + $0x1d0] sm:$0x7]
  %v74 = vld [vmem:[%s0 + $0x1d8] sm:$0x7]
  %v75 = vld [vmem:[%s0 + $0x1e0] sm:$0x7]
  %v76 = vld [vmem:[%s0 + $0x1e8] sm:$0x7]
  %v77 = vld [vmem:[%s0 + $0x1f0] sm:$0x7]
  %v78 = vld [vmem:[%s0 + $0x1f8] sm:$0x7]
  %v79 = vld [vmem:[%s2] sm:$0xf]
  %81 = vset.pattern.permute.xlu0 0
  %82 = vperm.xlu0 %81, %v79
  %v83 = vpop.permute.xlu0 %82
  %vm85 = vcmask 220160
  %v87 = vsel %vm85, %v14, 0
  %vm89 = vcmask 1042432
  %v91 = vsel %vm89, %v63, 0
  %v94 = vsel %vm89, %v64, 0
  %v97 = vsel %vm89, %v65, 0
  %v100 = vsel %vm89, %v66, 0
  %v103 = vsel %vm89, %v67, 0
  %v106 = vsel %vm89, %v68, 0
  %v109 = vsel %vm89, %v69, 0
  %v112 = vsel %vm89, %v70, 0
  %v115 = vsel %vm89, %v71, 0
  %v118 = vsel %vm89, %v72, 0
  %v121 = vsel %vm89, %v73, 0
  %v124 = vsel %vm89, %v74, 0
  %v127 = vsel %vm89, %v75, 0
  %v130 = vsel %vm89, %v76, 0
  %v133 = vsel %vm89, %v77, 0
  %v136 = vsel %vm89, %v78, 0
  %138 = vmatprep.subr.mxu0 0.0
  %139 = vmatpush1.msra.mxu0 0.0
  %140 = vmatprep.subr.mxu0 0.0
  %141 = vmatpush1.msra.mxu0 0.0
  %142 = vmatprep.subr.mxu0 0.0
  %143 = vmatpush1.msra.mxu0 0.0
  %144 = vmatprep.subr.mxu0 0.0
  %145 = vmatpush1.msra.mxu0 0.0
  %146 = vmatprep.subr.mxu0 0.0
  %147 = vmatpush1.msra.mxu0 0.0
  %148 = vmatprep.subr.mxu0 0.0
  %149 = vmatpush1.msra.mxu0 0.0
  %150 = vmatprep.subr.mxu0 0.0
  %151 = vmatpush1.msra.mxu0 0.0
  %152 = vmatprep.subr.mxu0 0.0
  %153 = vmatpush1.msra.mxu0 0.0
  %154 = vmatprep.subr.mxu0 0.0
  %155 = vmatpush1.msra.mxu0 0.0
  %156 = vmatprep.subr.mxu0 0.0
  %157 = vmatpush1.msra.mxu0 0.0
  %158 = vmatprep.subr.mxu0 0.0
  %159 = vmatpush1.msra.mxu0 0.0
  %160 = vmatprep.subr.mxu0 0.0
  %161 = vmatpush1.msra.mxu0 0.0
  %162 = vmatprep.subr.mxu0 %v94
  %163 = vmatpush1.msra.mxu0 %v91
  %164 = vmatprep.subr.mxu0 %v48
  %165 = vmatpush1.msra.mxu0 %v47
  %166 = vmatprep.subr.mxu0 %v32
  %167 = vmatpush1.msra.mxu0 %v31
  %168 = vmatprep.subr.mxu0 %v16
  %169 = vmatpush1.msra.mxu0 %v15
  %170 = vmatprep.subr.mxu0 0.0
  %171 = vmatpush2.msra.mxu0 0.0
  %172 = vmatprep.subr.mxu0 0.0
  %173 = vmatpush2.msra.mxu0 0.0
  %174 = vmatprep.subr.mxu0 0.0
  %175 = vmatpush2.msra.mxu0 0.0
  %176 = vmatprep.subr.mxu0 0.0
  %177 = vmatpush2.msra.mxu0 0.0
  %178 = vmatprep.subr.mxu0 0.0
  %179 = vmatpush2.msra.mxu0 0.0
  %180 = vmatprep.subr.mxu0 0.0
  %181 = vmatpush2.msra.mxu0 0.0
  %182 = vmatprep.subr.mxu0 0.0
  %183 = vmatpush2.msra.mxu0 0.0
  %184 = vmatprep.subr.mxu0 0.0
  %185 = vmatpush2.msra.mxu0 0.0
  %186 = vmatprep.subr.mxu0 0.0
  %187 = vmatpush2.msra.mxu0 0.0
  %188 = vmatprep.subr.mxu0 0.0
  %189 = vmatpush2.msra.mxu0 0.0
  %190 = vmatprep.subr.mxu0 0.0
  %191 = vmatpush2.msra.mxu0 0.0
  %192 = vmatprep.subr.mxu0 0.0
  %193 = vmatpush2.msra.mxu0 0.0
  %194 = vmatprep.subr.mxu0 0.0
  %195 = vmatpush2.msra.mxu0 0.0
  %196 = vmatprep.subr.mxu0 0.0
  %197 = vmatpush2.msra.mxu0 0.0
  %198 = vmatprep.subr.mxu0 0.0
  %199 = vmatpush2.msra.mxu0 0.0
  %200 = vmatprep.subr.mxu0 0.0
  %201 = vmatpush2.msra.mxu0 0.0
  %202 = vmatprep.mubr.f32.mxu0 0.0
  %203 = vmatmul.mubr.f32.gmra.mxu0 %v87
  %v204 = vpop.f32.mrf.mxu0
  %v205 = vadd.f32 %v83, %v204
  %v206 = vpop.f32.mrf.mxu0
  %v207 = vadd.f32 %v83, %v206
  %208 = vdwg.mxu0
  %209 = vmatprep.subr.mxu0 0.0
  %210 = vmatpush1.msra.mxu0 0.0
  %211 = vmatprep.subr.mxu0 0.0
  %212 = vmatpush1.msra.mxu0 0.0
  %213 = vmatprep.subr.mxu0 0.0
  %214 = vmatpush1.msra.mxu0 0.0
  %215 = vmatprep.subr.mxu0 0.0
  %216 = vmatpush1.msra.mxu0 0.0
  %217 = vmatprep.subr.mxu0 0.0
  %218 = vmatpush1.msra.mxu0 0.0
  %219 = vmatprep.subr.mxu0 0.0
  %220 = vmatpush1.msra.mxu0 0.0
  %221 = vmatprep.subr.mxu0 0.0
  %222 = vmatpush1.msra.mxu0 0.0
  %223 = vmatprep.subr.mxu0 0.0
  %224 = vmatpush1.msra.mxu0 0.0
  %225 = vmatprep.subr.mxu0 0.0
  %226 = vmatpush1.msra.mxu0 0.0
  %227 = vmatprep.subr.mxu0 0.0
  %228 = vmatpush1.msra.mxu0 0.0
  %229 = vmatprep.subr.mxu0 0.0
  %230 = vmatpush1.msra.mxu0 0.0
  %231 = vmatprep.subr.mxu0 0.0
  %232 = vmatpush1.msra.mxu0 0.0
  %233 = vmatprep.subr.mxu0 %v100
  %234 = vmatpush1.msra.mxu0 %v97
  %235 = vmatprep.subr.mxu0 %v50
  %236 = vmatpush1.msra.mxu0 %v49
  %237 = vmatprep.subr.mxu0 %v34
  %238 = vmatpush1.msra.mxu0 %v33
  %239 = vmatprep.subr.mxu0 %v18
  %240 = vmatpush1.msra.mxu0 %v17
  %241 = vmatprep.subr.mxu0 0.0
  %242 = vmatpush2.msra.mxu0 0.0
  %243 = vmatprep.subr.mxu0 0.0
  %244 = vmatpush2.msra.mxu0 0.0
  %245 = vmatprep.subr.mxu0 0.0
  %246 = vmatpush2.msra.mxu0 0.0
  %247 = vmatprep.subr.mxu0 0.0
  %248 = vmatpush2.msra.mxu0 0.0
  %249 = vmatprep.subr.mxu0 0.0
  %250 = vmatpush2.msra.mxu0 0.0
  %251 = vmatprep.subr.mxu0 0.0
  %252 = vmatpush2.msra.mxu0 0.0
  %253 = vmatprep.subr.mxu0 0.0
  %254 = vmatpush2.msra.mxu0 0.0
  %255 = vmatprep.subr.mxu0 0.0
  %256 = vmatpush2.msra.mxu0 0.0
  %257 = vmatprep.subr.mxu0 0.0
  %258 = vmatpush2.msra.mxu0 0.0
  %259 = vmatprep.subr.mxu0 0.0
  %260 = vmatpush2.msra.mxu0 0.0
  %261 = vmatprep.subr.mxu0 0.0
  %262 = vmatpush2.msra.mxu0 0.0
  %263 = vmatprep.subr.mxu0 0.0
  %264 = vmatpush2.msra.mxu0 0.0
  %265 = vmatprep.subr.mxu0 0.0
  %266 = vmatpush2.msra.mxu0 0.0
  %267 = vmatprep.subr.mxu0 0.0
  %268 = vmatpush2.msra.mxu0 0.0
  %269 = vmatprep.subr.mxu0 0.0
  %270 = vmatpush2.msra.mxu0 0.0
  %271 = vmatprep.subr.mxu0 0.0
  %272 = vmatpush2.msra.mxu0 0.0
  %273 = vmatprep.mubr.f32.mxu0 0.0
  %274 = vmatmul.mubr.f32.gmra.mxu0 %v87
  %v275 = vpop.f32.mrf.mxu0
  %v276 = vadd.f32 %v83, %v275
  %v277 = vpop.f32.mrf.mxu0
  %v278 = vadd.f32 %v83, %v277
  %279 = vdwg.mxu0
  %280 = vmatprep.subr.mxu0 0.0
  %281 = vmatpush1.msra.mxu0 0.0
  %282 = vmatprep.subr.mxu0 0.0
  %283 = vmatpush1.msra.mxu0 0.0
  %284 = vmatprep.subr.mxu0 0.0
  %285 = vmatpush1.msra.mxu0 0.0
  %286 = vmatprep.subr.mxu0 0.0
  %287 = vmatpush1.msra.mxu0 0.0
  %288 = vmatprep.subr.mxu0 0.0
  %289 = vmatpush1.msra.mxu0 0.0
  %290 = vmatprep.subr.mxu0 0.0
  %291 = vmatpush1.msra.mxu0 0.0
  %292 = vmatprep.subr.mxu0 0.0
  %293 = vmatpush1.msra.mxu0 0.0
  %294 = vmatprep.subr.mxu0 0.0
  %295 = vmatpush1.msra.mxu0 0.0
  %296 = vmatprep.subr.mxu0 0.0
  %297 = vmatpush1.msra.mxu0 0.0
  %298 = vmatprep.subr.mxu0 0.0
  %299 = vmatpush1.msra.mxu0 0.0
  %300 = vmatprep.subr.mxu0 0.0
  %301 = vmatpush1.msra.mxu0 0.0
  %302 = vmatprep.subr.mxu0 0.0
  %303 = vmatpush1.msra.mxu0 0.0
  %304 = vmatprep.subr.mxu0 %v106
  %305 = vmatpush1.msra.mxu0 %v103
  %306 = vmatprep.subr.mxu0 %v52
  %307 = vmatpush1.msra.mxu0 %v51
  %308 = vmatprep.subr.mxu0 %v36
  %309 = vmatpush1.msra.mxu0 %v35
  %310 = vmatprep.subr.mxu0 %v20
  %311 = vmatpush1.msra.mxu0 %v19
  %312 = vmatprep.subr.mxu0 0.0
  %313 = vmatpush2.msra.mxu0 0.0
  %314 = vmatprep.subr.mxu0 0.0
  %315 = vmatpush2.msra.mxu0 0.0
  %316 = vmatprep.subr.mxu0 0.0
  %317 = vmatpush2.msra.mxu0 0.0
  %318 = vmatprep.subr.mxu0 0.0
  %319 = vmatpush2.msra.mxu0 0.0
  %320 = vmatprep.subr.mxu0 0.0
  %321 = vmatpush2.msra.mxu0 0.0
  %322 = vmatprep.subr.mxu0 0.0
  %323 = vmatpush2.msra.mxu0 0.0
  %324 = vmatprep.subr.mxu0 0.0
  %325 = vmatpush2.msra.mxu0 0.0
  %326 = vmatprep.subr.mxu0 0.0
  %327 = vmatpush2.msra.mxu0 0.0
  %328 = vmatprep.subr.mxu0 0.0
  %329 = vmatpush2.msra.mxu0 0.0
  %330 = vmatprep.subr.mxu0 0.0
  %331 = vmatpush2.msra.mxu0 0.0
  %332 = vmatprep.subr.mxu0 0.0
  %333 = vmatpush2.msra.mxu0 0.0
  %334 = vmatprep.subr.mxu0 0.0
  %335 = vmatpush2.msra.mxu0 0.0
  %336 = vmatprep.subr.mxu0 0.0
  %337 = vmatpush2.msra.mxu0 0.0
  %338 = vmatprep.subr.mxu0 0.0
  %339 = vmatpush2.msra.mxu0 0.0
  %340 = vmatprep.subr.mxu0 0.0
  %341 = vmatpush2.msra.mxu0 0.0
  %342 = vmatprep.subr.mxu0 0.0
  %343 = vmatpush2.msra.mxu0 0.0
  %344 = vmatprep.mubr.f32.mxu0 0.0
  %345 = vmatmul.mubr.f32.gmra.mxu0 %v87
  %v346 = vpop.f32.mrf.mxu0
  %v347 = vadd.f32 %v83, %v346
  %v348 = vpop.f32.mrf.mxu0
  %v349 = vadd.f32 %v83, %v348
  %350 = vdwg.mxu0
  %351 = vmatprep.subr.mxu0 0.0
  %352 = vmatpush1.msra.mxu0 0.0
  %353 = vmatprep.subr.mxu0 0.0
  %354 = vmatpush1.msra.mxu0 0.0
  %355 = vmatprep.subr.mxu0 0.0
  %356 = vmatpush1.msra.mxu0 0.0
  %357 = vmatprep.subr.mxu0 0.0
  %358 = vmatpush1.msra.mxu0 0.0
  %359 = vmatprep.subr.mxu0 0.0
  %360 = vmatpush1.msra.mxu0 0.0
  %361 = vmatprep.subr.mxu0 0.0
  %362 = vmatpush1.msra.mxu0 0.0
  %363 = vmatprep.subr.mxu0 0.0
  %364 = vmatpush1.msra.mxu0 0.0
  %365 = vmatprep.subr.mxu0 0.0
  %366 = vmatpush1.msra.mxu0 0.0
  %367 = vmatprep.subr.mxu0 0.0
  %368 = vmatpush1.msra.mxu0 0.0
  %369 = vmatprep.subr.mxu0 0.0
  %370 = vmatpush1.msra.mxu0 0.0
  %371 = vmatprep.subr.mxu0 0.0
  %372 = vmatpush1.msra.mxu0 0.0
  %373 = vmatprep.subr.mxu0 0.0
  %374 = vmatpush1.msra.mxu0 0.0
  %375 = vmatprep.subr.mxu0 %v112
  %376 = vmatpush1.msra.mxu0 %v109
  %377 = vmatprep.subr.mxu0 %v54
  %378 = vmatpush1.msra.mxu0 %v53
  %379 = vmatprep.subr.mxu0 %v38
  %380 = vmatpush1.msra.mxu0 %v37
  %381 = vmatprep.subr.mxu0 %v22
  %382 = vmatpush1.msra.mxu0 %v21
  %383 = vmatprep.subr.mxu0 0.0
  %384 = vmatpush2.msra.mxu0 0.0
  %385 = vmatprep.subr.mxu0 0.0
  %386 = vmatpush2.msra.mxu0 0.0
  %387 = vmatprep.subr.mxu0 0.0
  %388 = vmatpush2.msra.mxu0 0.0
  %389 = vmatprep.subr.mxu0 0.0
  %390 = vmatpush2.msra.mxu0 0.0
  %391 = vmatprep.subr.mxu0 0.0
  %392 = vmatpush2.msra.mxu0 0.0
  %393 = vmatprep.subr.mxu0 0.0
  %394 = vmatpush2.msra.mxu0 0.0
  %395 = vmatprep.subr.mxu0 0.0
  %396 = vmatpush2.msra.mxu0 0.0
  %397 = vmatprep.subr.mxu0 0.0
  %398 = vmatpush2.msra.mxu0 0.0
  %399 = vmatprep.subr.mxu0 0.0
  %400 = vmatpush2.msra.mxu0 0.0
  %401 = vmatprep.subr.mxu0 0.0
  %402 = vmatpush2.msra.mxu0 0.0
  %403 = vmatprep.subr.mxu0 0.0
  %404 = vmatpush2.msra.mxu0 0.0
  %405 = vmatprep.subr.mxu0 0.0
  %406 = vmatpush2.msra.mxu0 0.0
  %407 = vmatprep.subr.mxu0 0.0
  %408 = vmatpush2.msra.mxu0 0.0
  %409 = vmatprep.subr.mxu0 0.0
  %410 = vmatpush2.msra.mxu0 0.0
  %411 = vmatprep.subr.mxu0 0.0
  %412 = vmatpush2.msra.mxu0 0.0
  %413 = vmatprep.subr.mxu0 0.0
  %414 = vmatpush2.msra.mxu0 0.0
  %415 = vmatprep.mubr.f32.mxu0 0.0
  %416 = vmatmul.mubr.f32.gmra.mxu0 %v87
  %v417 = vpop.f32.mrf.mxu0
  %v418 = vadd.f32 %v83, %v417
  %v419 = vpop.f32.mrf.mxu0
  %v420 = vadd.f32 %v83, %v419
  %421 = vdwg.mxu0
  %422 = vmatprep.subr.mxu0 0.0
  %423 = vmatpush1.msra.mxu0 0.0
  %424 = vmatprep.subr.mxu0 0.0
  %425 = vmatpush1.msra.mxu0 0.0
  %426 = vmatprep.subr.mxu0 0.0
  %427 = vmatpush1.msra.mxu0 0.0
  %428 = vmatprep.subr.mxu0 0.0
  %429 = vmatpush1.msra.mxu0 0.0
  %430 = vmatprep.subr.mxu0 0.0
  %431 = vmatpush1.msra.mxu0 0.0
  %432 = vmatprep.subr.mxu0 0.0
  %433 = vmatpush1.msra.mxu0 0.0
  %434 = vmatprep.subr.mxu0 0.0
  %435 = vmatpush1.msra.mxu0 0.0
  %436 = vmatprep.subr.mxu0 0.0
  %437 = vmatpush1.msra.mxu0 0.0
  %438 = vmatprep.subr.mxu0 0.0
  %439 = vmatpush1.msra.mxu0 0.0
  %440 = vmatprep.subr.mxu0 0.0
  %441 = vmatpush1.msra.mxu0 0.0
  %442 = vmatprep.subr.mxu0 0.0
  %443 = vmatpush1.msra.mxu0 0.0
  %444 = vmatprep.subr.mxu0 0.0
  %445 = vmatpush1.msra.mxu0 0.0
  %446 = vmatprep.subr.mxu0 %v118
  %447 = vmatpush1.msra.mxu0 %v115
  %448 = vmatprep.subr.mxu0 %v56
  %449 = vmatpush1.msra.mxu0 %v55
  %450 = vmatprep.subr.mxu0 %v40
  %451 = vmatpush1.msra.mxu0 %v39
  %452 = vmatprep.subr.mxu0 %v24
  %453 = vmatpush1.msra.mxu0 %v23
  %454 = vmatprep.subr.mxu0 0.0
  %455 = vmatpush2.msra.mxu0 0.0
  %456 = vmatprep.subr.mxu0 0.0
  %457 = vmatpush2.msra.mxu0 0.0
  %458 = vmatprep.subr.mxu0 0.0
  %459 = vmatpush2.msra.mxu0 0.0
  %460 = vmatprep.subr.mxu0 0.0
  %461 = vmatpush2.msra.mxu0 0.0
  %462 = vmatprep.subr.mxu0 0.0
  %463 = vmatpush2.msra.mxu0 0.0
  %464 = vmatprep.subr.mxu0 0.0
  %465 = vmatpush2.msra.mxu0 0.0
  %466 = vmatprep.subr.mxu0 0.0
  %467 = vmatpush2.msra.mxu0 0.0
  %468 = vmatprep.subr.mxu0 0.0
  %469 = vmatpush2.msra.mxu0 0.0
  %470 = vmatprep.subr.mxu0 0.0
  %471 = vmatpush2.msra.mxu0 0.0
  %472 = vmatprep.subr.mxu0 0.0
  %473 = vmatpush2.msra.mxu0 0.0
  %474 = vmatprep.subr.mxu0 0.0
  %475 = vmatpush2.msra.mxu0 0.0
  %476 = vmatprep.subr.mxu0 0.0
  %477 = vmatpush2.msra.mxu0 0.0
  %478 = vmatprep.subr.mxu0 0.0
  %479 = vmatpush2.msra.mxu0 0.0
  %480 = vmatprep.subr.mxu0 0.0
  %481 = vmatpush2.msra.mxu0 0.0
  %482 = vmatprep.subr.mxu0 0.0
  %483 = vmatpush2.msra.mxu0 0.0
  %484 = vmatprep.subr.mxu0 0.0
  %485 = vmatpush2.msra.mxu0 0.0
  %486 = vmatprep.mubr.f32.mxu0 0.0
  %487 = vmatmul.mubr.f32.gmra.mxu0 %v87
  %v488 = vpop.f32.mrf.mxu0
  %v489 = vadd.f32 %v83, %v488
  %v490 = vpop.f32.mrf.mxu0
  %v491 = vadd.f32 %v83, %v490
  %492 = vdwg.mxu0
  %493 = vmatprep.subr.mxu0 0.0
  %494 = vmatpush1.msra.mxu0 0.0
  %495 = vmatprep.subr.mxu0 0.0
  %496 = vmatpush1.msra.mxu0 0.0
  %497 = vmatprep.subr.mxu0 0.0
  %498 = vmatpush1.msra.mxu0 0.0
  %499 = vmatprep.subr.mxu0 0.0
  %500 = vmatpush1.msra.mxu0 0.0
  %501 = vmatprep.subr.mxu0 0.0
  %502 = vmatpush1.msra.mxu0 0.0
  %503 = vmatprep.subr.mxu0 0.0
  %504 = vmatpush1.msra.mxu0 0.0
  %505 = vmatprep.subr.mxu0 0.0
  %506 = vmatpush1.msra.mxu0 0.0
  %507 = vmatprep.subr.mxu0 0.0
  %508 = vmatpush1.msra.mxu0 0.0
  %509 = vmatprep.subr.mxu0 0.0
  %510 = vmatpush1.msra.mxu0 0.0
  %511 = vmatprep.subr.mxu0 0.0
  %512 = vmatpush1.msra.mxu0 0.0
  %513 = vmatprep.subr.mxu0 0.0
  %514 = vmatpush1.msra.mxu0 0.0
  %515 = vmatprep.subr.mxu0 0.0
  %516 = vmatpush1.msra.mxu0 0.0
  %517 = vmatprep.subr.mxu0 %v124
  %518 = vmatpush1.msra.mxu0 %v121
  %519 = vmatprep.subr.mxu0 %v58
  %520 = vmatpush1.msra.mxu0 %v57
  %521 = vmatprep.subr.mxu0 %v42
  %522 = vmatpush1.msra.mxu0 %v41
  %523 = vmatprep.subr.mxu0 %v26
  %524 = vmatpush1.msra.mxu0 %v25
  %525 = vmatprep.subr.mxu0 0.0
  %526 = vmatpush2.msra.mxu0 0.0
  %527 = vmatprep.subr.mxu0 0.0
  %528 = vmatpush2.msra.mxu0 0.0
  %529 = vmatprep.subr.mxu0 0.0
  %530 = vmatpush2.msra.mxu0 0.0
  %531 = vmatprep.subr.mxu0 0.0
  %532 = vmatpush2.msra.mxu0 0.0
  %533 = vmatprep.subr.mxu0 0.0
  %534 = vmatpush2.msra.mxu0 0.0
  %535 = vmatprep.subr.mxu0 0.0
  %536 = vmatpush2.msra.mxu0 0.0
  %537 = vmatprep.subr.mxu0 0.0
  %538 = vmatpush2.msra.mxu0 0.0
  %539 = vmatprep.subr.mxu0 0.0
  %540 = vmatpush2.msra.mxu0 0.0
  %541 = vmatprep.subr.mxu0 0.0
  %542 = vmatpush2.msra.mxu0 0.0
  %543 = vmatprep.subr.mxu0 0.0
  %544 = vmatpush2.msra.mxu0 0.0
  %545 = vmatprep.subr.mxu0 0.0
  %546 = vmatpush2.msra.mxu0 0.0
  %547 = vmatprep.subr.mxu0 0.0
  %548 = vmatpush2.msra.mxu0 0.0
  %549 = vmatprep.subr.mxu0 0.0
  %550 = vmatpush2.msra.mxu0 0.0
  %551 = vmatprep.subr.mxu0 0.0
  %552 = vmatpush2.msra.mxu0 0.0
  %553 = vmatprep.subr.mxu0 0.0
  %554 = vmatpush2.msra.mxu0 0.0
  %555 = vmatprep.subr.mxu0 0.0
  %556 = vmatpush2.msra.mxu0 0.0
  %557 = vmatprep.mubr.f32.mxu0 0.0
  %558 = vmatmul.mubr.f32.gmra.mxu0 %v87
  %v559 = vpop.f32.mrf.mxu0
  %v560 = vadd.f32 %v83, %v559
  %v561 = vpop.f32.mrf.mxu0
  %v562 = vadd.f32 %v83, %v561
  %563 = vdwg.mxu0
  %564 = vmatprep.subr.mxu0 0.0
  %565 = vmatpush1.msra.mxu0 0.0
  %566 = vmatprep.subr.mxu0 0.0
  %567 = vmatpush1.msra.mxu0 0.0
  %568 = vmatprep.subr.mxu0 0.0
  %569 = vmatpush1.msra.mxu0 0.0
  %570 = vmatprep.subr.mxu0 0.0
  %571 = vmatpush1.msra.mxu0 0.0
  %572 = vmatprep.subr.mxu0 0.0
  %573 = vmatpush1.msra.mxu0 0.0
  %574 = vmatprep.subr.mxu0 0.0
  %575 = vmatpush1.msra.mxu0 0.0
  %576 = vmatprep.subr.mxu0 0.0
  %577 = vmatpush1.msra.mxu0 0.0
  %578 = vmatprep.subr.mxu0 0.0
  %579 = vmatpush1.msra.mxu0 0.0
  %580 = vmatprep.subr.mxu0 0.0
  %581 = vmatpush1.msra.mxu0 0.0
  %582 = vmatprep.subr.mxu0 0.0
  %583 = vmatpush1.msra.mxu0 0.0
  %584 = vmatprep.subr.mxu0 0.0
  %585 = vmatpush1.msra.mxu0 0.0
  %586 = vmatprep.subr.mxu0 0.0
  %587 = vmatpush1.msra.mxu0 0.0
  %588 = vmatprep.subr.mxu0 %v130
  %589 = vmatpush1.msra.mxu0 %v127
  %590 = vmatprep.subr.mxu0 %v60
  %591 = vmatpush1.msra.mxu0 %v59
  %592 = vmatprep.subr.mxu0 %v44
  %593 = vmatpush1.msra.mxu0 %v43
  %594 = vmatprep.subr.mxu0 %v28
  %595 = vmatpush1.msra.mxu0 %v27
  %596 = vmatprep.subr.mxu0 0.0
  %597 = vmatpush2.msra.mxu0 0.0
  %598 = vmatprep.subr.mxu0 0.0
  %599 = vmatpush2.msra.mxu0 0.0
  %600 = vmatprep.subr.mxu0 0.0
  %601 = vmatpush2.msra.mxu0 0.0
  %602 = vmatprep.subr.mxu0 0.0
  %603 = vmatpush2.msra.mxu0 0.0
  %604 = vmatprep.subr.mxu0 0.0
  %605 = vmatpush2.msra.mxu0 0.0
  %606 = vmatprep.subr.mxu0 0.0
  %607 = vmatpush2.msra.mxu0 0.0
  %608 = vmatprep.subr.mxu0 0.0
  %609 = vmatpush2.msra.mxu0 0.0
  %610 = vmatprep.subr.mxu0 0.0
  %611 = vmatpush2.msra.mxu0 0.0
  %612 = vmatprep.subr.mxu0 0.0
  %613 = vmatpush2.msra.mxu0 0.0
  %614 = vmatprep.subr.mxu0 0.0
  %615 = vmatpush2.msra.mxu0 0.0
  %616 = vmatprep.subr.mxu0 0.0
  %617 = vmatpush2.msra.mxu0 0.0
  %618 = vmatprep.subr.mxu0 0.0
  %619 = vmatpush2.msra.mxu0 0.0
  %620 = vmatprep.subr.mxu0 0.0
  %621 = vmatpush2.msra.mxu0 0.0
  %622 = vmatprep.subr.mxu0 0.0
  %623 = vmatpush2.msra.mxu0 0.0
  %624 = vmatprep.subr.mxu0 0.0
  %625 = vmatpush2.msra.mxu0 0.0
  %626 = vmatprep.subr.mxu0 0.0
  %627 = vmatpush2.msra.mxu0 0.0
  %628 = vmatprep.mubr.f32.mxu0 0.0
  %629 = vmatmul.mubr.f32.gmra.mxu0 %v87
  %v630 = vpop.f32.mrf.mxu0
  %v631 = vadd.f32 %v83, %v630
  %v632 = vpop.f32.mrf.mxu0
  %v633 = vadd.f32 %v83, %v632
  %634 = vdwg.mxu0
  %635 = vmatprep.subr.mxu0 0.0
  %636 = vmatpush1.msra.mxu0 0.0
  %637 = vmatprep.subr.mxu0 0.0
  %638 = vmatpush1.msra.mxu0 0.0
  %639 = vmatprep.subr.mxu0 0.0
  %640 = vmatpush1.msra.mxu0 0.0
  %641 = vmatprep.subr.mxu0 0.0
  %642 = vmatpush1.msra.mxu0 0.0
  %643 = vmatprep.subr.mxu0 0.0
  %644 = vmatpush1.msra.mxu0 0.0
  %645 = vmatprep.subr.mxu0 0.0
  %646 = vmatpush1.msra.mxu0 0.0
  %647 = vmatprep.subr.mxu0 0.0
  %648 = vmatpush1.msra.mxu0 0.0
  %649 = vmatprep.subr.mxu0 0.0
  %650 = vmatpush1.msra.mxu0 0.0
  %651 = vmatprep.subr.mxu0 0.0
  %652 = vmatpush1.msra.mxu0 0.0
  %653 = vmatprep.subr.mxu0 0.0
  %654 = vmatpush1.msra.mxu0 0.0
  %655 = vmatprep.subr.mxu0 0.0
  %656 = vmatpush1.msra.mxu0 0.0
  %657 = vmatprep.subr.mxu0 0.0
  %658 = vmatpush1.msra.mxu0 0.0
  %659 = vmatprep.subr.mxu0 %v136
  %660 = vmatpush1.msra.mxu0 %v133
  %661 = vmatprep.subr.mxu0 %v62
  %662 = vmatpush1.msra.mxu0 %v61
  %663 = vmatprep.subr.mxu0 %v46
  %664 = vmatpush1.msra.mxu0 %v45
  %665 = vmatprep.subr.mxu0 %v30
  %666 = vmatpush1.msra.mxu0 %v29
  %667 = vmatprep.subr.mxu0 0.0
  %668 = vmatpush2.msra.mxu0 0.0
  %669 = vmatprep.subr.mxu0 0.0
  %670 = vmatpush2.msra.mxu0 0.0
  %671 = vmatprep.subr.mxu0 0.0
  %672 = vmatpush2.msra.mxu0 0.0
  %673 = vmatprep.subr.mxu0 0.0
  %674 = vmatpush2.msra.mxu0 0.0
  %675 = vmatprep.subr.mxu0 0.0
  %676 = vmatpush2.msra.mxu0 0.0
  %677 = vmatprep.subr.mxu0 0.0
  %678 = vmatpush2.msra.mxu0 0.0
  %679 = vmatprep.subr.mxu0 0.0
  %680 = vmatpush2.msra.mxu0 0.0
  %681 = vmatprep.subr.mxu0 0.0
  %682 = vmatpush2.msra.mxu0 0.0
  %683 = vmatprep.subr.mxu0 0.0
  %684 = vmatpush2.msra.mxu0 0.0
  %685 = vmatprep.subr.mxu0 0.0
  %686 = vmatpush2.msra.mxu0 0.0
  %687 = vmatprep.subr.mxu0 0.0
  %688 = vmatpush2.msra.mxu0 0.0
  %689 = vmatprep.subr.mxu0 0.0
  %690 = vmatpush2.msra.mxu0 0.0
  %691 = vmatprep.subr.mxu0 0.0
  %692 = vmatpush2.msra.mxu0 0.0
  %693 = vmatprep.subr.mxu0 0.0
  %694 = vmatpush2.msra.mxu0 0.0
  %695 = vmatprep.subr.mxu0 0.0
  %696 = vmatpush2.msra.mxu0 0.0
  %697 = vmatprep.subr.mxu0 0.0
  %698 = vmatpush2.msra.mxu0 0.0
  %699 = vmatprep.mubr.f32.mxu0 0.0
  %700 = vmatmul.mubr.f32.gmra.mxu0 %v87
  %v701 = vpop.f32.mrf.mxu0
  %v702 = vadd.f32 %v83, %v701
  %v703 = vpop.f32.mrf.mxu0
  %v704 = vadd.f32 %v83, %v703
  %705 = vdwg.mxu0
  %v706 = vmax.f32 %v205, 0.0
  %v707 = vmax.f32 %v207, 0.0
  %v708 = vmax.f32 %v276, 0.0
  %v709 = vmax.f32 %v278, 0.0
  %v710 = vmax.f32 %v347, 0.0
  %v711 = vmax.f32 %v349, 0.0
  %v712 = vmax.f32 %v418, 0.0
  %v713 = vmax.f32 %v420, 0.0
  %v714 = vmax.f32 %v489, 0.0
  %v715 = vmax.f32 %v491, 0.0
  %v716 = vmax.f32 %v560, 0.0
  %v717 = vmax.f32 %v562, 0.0
  %v718 = vmax.f32 %v631, 0.0
  %v719 = vmax.f32 %v633, 0.0
  %v720 = vmax.f32 %v702, 0.0
  %v721 = vmax.f32 %v704, 0.0
  %v738 = vcombine.low %v706, %v707
  %v739 = vcombine.low %v708, %v709
  %v740 = vcombine.low %v710, %v711
  %v741 = vcombine.low %v712, %v713
  %v742 = vcombine.low %v714, %v715
  %v743 = vcombine.low %v716, %v717
  %v744 = vcombine.low %v718, %v719
  %v745 = vcombine.low %v720, %v721
  %754 = vst [vmem:[%s3] sm:$0xff] %v738
  %755 = vst [vmem:[%s3 + $0x8] sm:$0xff] %v739
  %756 = vst [vmem:[%s3 + $0x10] sm:$0xff] %v740
  %757 = vst [vmem:[%s3 + $0x18] sm:$0xff] %v741
  %758 = vst [vmem:[%s3 + $0x20] sm:$0xff] %v742
  %759 = vst [vmem:[%s3 + $0x28] sm:$0xff] %v743
  %760 = vst [vmem:[%s3 + $0x30] sm:$0xff] %v744
  %761 = vst [vmem:[%s3 + $0x38] sm:$0xff] %v745
  // Predicated region
  $region14: #{gh_cnn_forward.14} parent=0 // pred_check
    _
  $region15: #{gh_cnn_forward.14} parent=0 // pred_check_branch
    %763 = sbr.rel (0) target = $region17
  $region16: #{gh_cnn_forward.14} parent=0 // pred_region
    _
  $region17: #{gh_cnn_forward.14} parent=0 // pred_fallthru
    _
  // Predicated region
  $region18: #{gh_cnn_forward.14} parent=0 // pred_check
    _
  $region19: #{gh_cnn_forward.14} parent=0 // pred_check_branch
    %765 = sbr.rel (0) target = $region21
  $region20: #{gh_cnn_forward.14} parent=0 // pred_region
    _
  $region21: #{gh_cnn_forward.14} parent=0 // pred_fallthru
    _

// kernel: gh_cnn_forward.15
$region0: #{gh_cnn_forward.15}
  #allocation0 [shape = 'u32[]', space=smem, size = 0x4, offset = 0x4, fixed_abs, tag = 'smem constant byte address 0x4 - core index']
  #allocation1 [shape = 'u32[144,128]{1,0:T(1,128)}', space=vmem, size = 0x12000, scoped, tag = 'internal scratch']
  %s0 = inlined_call_operand.vmem [shape: f32[4,36,512], index: 0, kind: input, shape index: {}]
  %s1 = inlined_call_operand.vmem [shape: f32[4,36], index: 1, kind: input, shape index: {}]
  %s2 = inlined_call_operand.vmem [shape: f32[4,1], index: 2, kind: input, shape index: {}]
  %s3 = inlined_call_operand.vmem [shape: f32[4,512], index: 3, kind: output, shape index: {}]
  %s4 = sld [smem:[#allocation0]]
  $region22: #{gh_cnn_forward.15} parent=0
    _
  %s6 = ssub.s32 1, %s4
  %s7 = scalar_select 0, %s6, %s4
  // Predicated region
  $region2: #{gh_cnn_forward.15} parent=0 // pred_check
    _
  $region3: #{gh_cnn_forward.15} parent=0 // pred_check_branch
    %9 = sbr.rel (0) target = $region5
  $region4: #{gh_cnn_forward.15} parent=0 // pred_region
    _
  $region5: #{gh_cnn_forward.15} parent=0 // pred_fallthru
    _
  // Predicated region
  $region6: #{gh_cnn_forward.15} parent=0 // pred_check
    _
  $region7: #{gh_cnn_forward.15} parent=0 // pred_check_branch
    %11 = sbr.rel (0) target = $region9
  $region8: #{gh_cnn_forward.15} parent=0 // pred_region
    _
  $region9: #{gh_cnn_forward.15} parent=0 // pred_fallthru
    _
  // Predicated region
  $region10: #{gh_cnn_forward.15} parent=0 // pred_check
    _
  $region11: #{gh_cnn_forward.15} parent=0 // pred_check_branch
    %13 = sbr.rel (0) target = $region13
  $region12: #{gh_cnn_forward.15} parent=0 // pred_region
    _
  $region13: #{gh_cnn_forward.15} parent=0 // pred_fallthru
    _
  %v14 = vld [vmem:[%s1] sm:$0xf]
  %v15 = vld [vmem:[%s0] sm:$0xff]
  %v16 = vld [vmem:[%s0 + $0x8] sm:$0xff]
  %v17 = vld [vmem:[%s0 + $0x10] sm:$0xff]
  %v18 = vld [vmem:[%s0 + $0x18] sm:$0xff]
  %v19 = vld [vmem:[%s0 + $0x20] sm:$0xff]
  %v20 = vld [vmem:[%s0 + $0x28] sm:$0xff]
  %v21 = vld [vmem:[%s0 + $0x30] sm:$0xff]
  %v22 = vld [vmem:[%s0 + $0x38] sm:$0xff]
  %v23 = vld [vmem:[%s0 + $0x40] sm:$0xff]
  %v24 = vld [vmem:[%s0 + $0x48] sm:$0xff]
  %v25 = vld [vmem:[%s0 + $0x50] sm:$0xff]
  %v26 = vld [vmem:[%s0 + $0x58] sm:$0xff]
  %v27 = vld [vmem:[%s0 + $0x60] sm:$0xff]
  %v28 = vld [vmem:[%s0 + $0x68] sm:$0xff]
  %v29 = vld [vmem:[%s0 + $0x70] sm:$0xff]
  %v30 = vld [vmem:[%s0 + $0x78] sm:$0xff]
  %v31 = vld [vmem:[%s0 + $0x80] sm:$0xf]
  %v32 = vld [vmem:[%s0 + $0x88] sm:$0xf]
  %v33 = vld [vmem:[%s0 + $0x90] sm:$0xf]
  %v34 = vld [vmem:[%s0 + $0x98] sm:$0xf]
  %vm35 = vcmask 293888
  %v37 = vsel %vm35, %v14, 0
  %vm39 = vcmask 1043456
  %v41 = vsel %vm39, %v31, 0
  %v44 = vsel %vm39, %v32, 0
  %v47 = vsel %vm39, %v33, 0
  %v50 = vsel %vm39, %v34, 0
  %52 = vmatprep.subr.mxu0 0.0
  %53 = vmatpush1.msra.mxu0 0.0
  %54 = vmatprep.subr.mxu0 0.0
  %55 = vmatpush1.msra.mxu0 0.0
  %56 = vmatprep.subr.mxu0 0.0
  %57 = vmatpush1.msra.mxu0 0.0
  %58 = vmatprep.subr.mxu0 0.0
  %59 = vmatpush1.msra.mxu0 0.0
  %60 = vmatprep.subr.mxu0 0.0
  %61 = vmatpush1.msra.mxu0 0.0
  %62 = vmatprep.subr.mxu0 0.0
  %63 = vmatpush1.msra.mxu0 0.0
  %64 = vmatprep.subr.mxu0 0.0
  %65 = vmatpush1.msra.mxu0 0.0
  %66 = vmatprep.subr.mxu0 0.0
  %67 = vmatpush1.msra.mxu0 0.0
  %68 = vmatprep.subr.mxu0 0.0
  %69 = vmatpush1.msra.mxu0 0.0
  %70 = vmatprep.subr.mxu0 0.0
  %71 = vmatpush1.msra.mxu0 0.0
  %72 = vmatprep.subr.mxu0 0.0
  %73 = vmatpush1.msra.mxu0 0.0
  %74 = vmatprep.subr.mxu0 %v44
  %75 = vmatpush1.msra.mxu0 %v41
  %76 = vmatprep.subr.mxu0 %v28
  %77 = vmatpush1.msra.mxu0 %v27
  %78 = vmatprep.subr.mxu0 %v24
  %79 = vmatpush1.msra.mxu0 %v23
  %80 = vmatprep.subr.mxu0 %v20
  %81 = vmatpush1.msra.mxu0 %v19
  %82 = vmatprep.subr.mxu0 %v16
  %83 = vmatpush1.msra.mxu0 %v15
  %84 = vmatprep.subr.mxu0 0.0
  %85 = vmatpush2.msra.mxu0 0.0
  %86 = vmatprep.subr.mxu0 0.0
  %87 = vmatpush2.msra.mxu0 0.0
  %88 = vmatprep.subr.mxu0 0.0
  %89 = vmatpush2.msra.mxu0 0.0
  %90 = vmatprep.subr.mxu0 0.0
  %91 = vmatpush2.msra.mxu0 0.0
  %92 = vmatprep.subr.mxu0 0.0
  %93 = vmatpush2.msra.mxu0 0.0
  %94 = vmatprep.subr.mxu0 0.0
  %95 = vmatpush2.msra.mxu0 0.0
  %96 = vmatprep.subr.mxu0 0.0
  %97 = vmatpush2.msra.mxu0 0.0
  %98 = vmatprep.subr.mxu0 0.0
  %99 = vmatpush2.msra.mxu0 0.0
  %100 = vmatprep.subr.mxu0 0.0
  %101 = vmatpush2.msra.mxu0 0.0
  %102 = vmatprep.subr.mxu0 0.0
  %103 = vmatpush2.msra.mxu0 0.0
  %104 = vmatprep.subr.mxu0 0.0
  %105 = vmatpush2.msra.mxu0 0.0
  %106 = vmatprep.subr.mxu0 0.0
  %107 = vmatpush2.msra.mxu0 0.0
  %108 = vmatprep.subr.mxu0 0.0
  %109 = vmatpush2.msra.mxu0 0.0
  %110 = vmatprep.subr.mxu0 0.0
  %111 = vmatpush2.msra.mxu0 0.0
  %112 = vmatprep.subr.mxu0 0.0
  %113 = vmatpush2.msra.mxu0 0.0
  %114 = vmatprep.subr.mxu0 0.0
  %115 = vmatpush2.msra.mxu0 0.0
  %116 = vmatprep.mubr.f32.mxu0 0.0
  %117 = vmatmul.mubr.f32.gmra.mxu0 %v37
  %v118 = vpop.f32.mrf.mxu0
  %v119 = vadd.f32 0.0, %v118
  %v120 = vpop.f32.mrf.mxu0
  %v121 = vadd.f32 0.0, %v120
  %122 = vdwg.mxu0
  %123 = vmatprep.subr.mxu0 0.0
  %124 = vmatpush1.msra.mxu0 0.0
  %125 = vmatprep.subr.mxu0 0.0
  %126 = vmatpush1.msra.mxu0 0.0
  %127 = vmatprep.subr.mxu0 0.0
  %128 = vmatpush1.msra.mxu0 0.0
  %129 = vmatprep.subr.mxu0 0.0
  %130 = vmatpush1.msra.mxu0 0.0
  %131 = vmatprep.subr.mxu0 0.0
  %132 = vmatpush1.msra.mxu0 0.0
  %133 = vmatprep.subr.mxu0 0.0
  %134 = vmatpush1.msra.mxu0 0.0
  %135 = vmatprep.subr.mxu0 0.0
  %136 = vmatpush1.msra.mxu0 0.0
  %137 = vmatprep.subr.mxu0 0.0
  %138 = vmatpush1.msra.mxu0 0.0
  %139 = vmatprep.subr.mxu0 0.0
  %140 = vmatpush1.msra.mxu0 0.0
  %141 = vmatprep.subr.mxu0 0.0
  %142 = vmatpush1.msra.mxu0 0.0
  %143 = vmatprep.subr.mxu0 0.0
  %144 = vmatpush1.msra.mxu0 0.0
  %145 = vmatprep.subr.mxu0 %v50
  %146 = vmatpush1.msra.mxu0 %v47
  %147 = vmatprep.subr.mxu0 %v30
  %148 = vmatpush1.msra.mxu0 %v29
  %149 = vmatprep.subr.mxu0 %v26
  %150 = vmatpush1.msra.mxu0 %v25
  %151 = vmatprep.subr.mxu0 %v22
  %152 = vmatpush1.msra.mxu0 %v21
  %153 = vmatprep.subr.mxu0 %v18
  %154 = vmatpush1.msra.mxu0 %v17
  %155 = vmatprep.subr.mxu0 0.0
  %156 = vmatpush2.msra.mxu0 0.0
  %157 = vmatprep.subr.mxu0 0.0
  %158 = vmatpush2.msra.mxu0 0.0
  %159 = vmatprep.subr.mxu0 0.0
  %160 = vmatpush2.msra.mxu0 0.0
  %161 = vmatprep.subr.mxu0 0.0
  %162 = vmatpush2.msra.mxu0 0.0
  %163 = vmatprep.subr.mxu0 0.0
  %164 = vmatpush2.msra.mxu0 0.0
  %165 = vmatprep.subr.mxu0 0.0
  %166 = vmatpush2.msra.mxu0 0.0
  %167 = vmatprep.subr.mxu0 0.0
  %168 = vmatpush2.msra.mxu0 0.0
  %169 = vmatprep.subr.mxu0 0.0
  %170 = vmatpush2.msra.mxu0 0.0
  %171 = vmatprep.subr.mxu0 0.0
  %172 = vmatpush2.msra.mxu0 0.0
  %173 = vmatprep.subr.mxu0 0.0
  %174 = vmatpush2.msra.mxu0 0.0
  %175 = vmatprep.subr.mxu0 0.0
  %176 = vmatpush2.msra.mxu0 0.0
  %177 = vmatprep.subr.mxu0 0.0
  %178 = vmatpush2.msra.mxu0 0.0
  %179 = vmatprep.subr.mxu0 0.0
  %180 = vmatpush2.msra.mxu0 0.0
  %181 = vmatprep.subr.mxu0 0.0
  %182 = vmatpush2.msra.mxu0 0.0
  %183 = vmatprep.subr.mxu0 0.0
  %184 = vmatpush2.msra.mxu0 0.0
  %185 = vmatprep.subr.mxu0 0.0
  %186 = vmatpush2.msra.mxu0 0.0
  %187 = vmatprep.mubr.f32.mxu0 0.0
  %188 = vmatmul.mubr.f32.gmra.mxu0 %v37
  %v189 = vpop.f32.mrf.mxu0
  %v190 = vadd.f32 0.0, %v189
  %v191 = vpop.f32.mrf.mxu0
  %v192 = vadd.f32 0.0, %v191
  %193 = vdwg.mxu0
  %s194 = scalar_lea.vmem %s0, 160
  %v195 = vld [vmem:[%s194] sm:$0xff]
  %v196 = vld [vmem:[%s194 + $0x8] sm:$0xff]
  %v197 = vld [vmem:[%s194 + $0x10] sm:$0xff]
  %v198 = vld [vmem:[%s194 + $0x18] sm:$0xff]
  %v199 = vld [vmem:[%s194 + $0x20] sm:$0xff]
  %v200 = vld [vmem:[%s194 + $0x28] sm:$0xff]
  %v201 = vld [vmem:[%s194 + $0x30] sm:$0xff]
  %v202 = vld [vmem:[%s194 + $0x38] sm:$0xff]
  %v203 = vld [vmem:[%s194 + $0x40] sm:$0xff]
  %v204 = vld [vmem:[%s194 + $0x48] sm:$0xff]
  %v205 = vld [vmem:[%s194 + $0x50] sm:$0xff]
  %v206 = vld [vmem:[%s194 + $0x58] sm:$0xff]
  %v207 = vld [vmem:[%s194 + $0x60] sm:$0xff]
  %v208 = vld [vmem:[%s194 + $0x68] sm:$0xff]
  %v209 = vld [vmem:[%s194 + $0x70] sm:$0xff]
  %v210 = vld [vmem:[%s194 + $0x78] sm:$0xff]
  %v211 = vld [vmem:[%s194 + $0x80] sm:$0xf]
  %v212 = vld [vmem:[%s194 + $0x88] sm:$0xf]
  %v213 = vld [vmem:[%s194 + $0x90] sm:$0xf]
  %v214 = vld [vmem:[%s194 + $0x98] sm:$0xf]
  %v216 = vsel %vm39, %v211, 0
  %v219 = vsel %vm39, %v212, 0
  %v222 = vsel %vm39, %v213, 0
  %v225 = vsel %vm39, %v214, 0
  %227 = vmatprep.subr.mxu0 0.0
  %228 = vmatpush1.msra.mxu0 0.0
  %229 = vmatprep.subr.mxu0 0.0
  %230 = vmatpush1.msra.mxu0 0.0
  %231 = vmatprep.subr.mxu0 0.0
  %232 = vmatpush1.msra.mxu0 0.0
  %233 = vmatprep.subr.mxu0 0.0
  %234 = vmatpush1.msra.mxu0 0.0
  %235 = vmatprep.subr.mxu0 0.0
  %236 = vmatpush1.msra.mxu0 0.0
  %237 = vmatprep.subr.mxu0 0.0
  %238 = vmatpush1.msra.mxu0 0.0
  %239 = vmatprep.subr.mxu0 0.0
  %240 = vmatpush1.msra.mxu0 0.0
  %241 = vmatprep.subr.mxu0 0.0
  %242 = vmatpush1.msra.mxu0 0.0
  %243 = vmatprep.subr.mxu0 0.0
  %244 = vmatpush1.msra.mxu0 0.0
  %245 = vmatprep.subr.mxu0 0.0
  %246 = vmatpush1.msra.mxu0 0.0
  %247 = vmatprep.subr.mxu0 0.0
  %248 = vmatpush1.msra.mxu0 0.0
  %249 = vmatprep.subr.mxu0 %v219
  %250 = vmatpush1.msra.mxu0 %v216
  %251 = vmatprep.subr.mxu0 %v208
  %252 = vmatpush1.msra.mxu0 %v207
  %253 = vmatprep.subr.mxu0 %v204
  %254 = vmatpush1.msra.mxu0 %v203
  %255 = vmatprep.subr.mxu0 %v200
  %256 = vmatpush1.msra.mxu0 %v199
  %257 = vmatprep.subr.mxu0 %v196
  %258 = vmatpush1.msra.mxu0 %v195
  %259 = vmatprep.subr.mxu0 0.0
  %260 = vmatpush2.msra.mxu0 0.0
  %261 = vmatprep.subr.mxu0 0.0
  %262 = vmatpush2.msra.mxu0 0.0
  %263 = vmatprep.subr.mxu0 0.0
  %264 = vmatpush2.msra.mxu0 0.0
  %265 = vmatprep.subr.mxu0 0.0
  %266 = vmatpush2.msra.mxu0 0.0
  %267 = vmatprep.subr.mxu0 0.0
  %268 = vmatpush2.msra.mxu0 0.0
  %269 = vmatprep.subr.mxu0 0.0
  %270 = vmatpush2.msra.mxu0 0.0
  %271 = vmatprep.subr.mxu0 0.0
  %272 = vmatpush2.msra.mxu0 0.0
  %273 = vmatprep.subr.mxu0 0.0
  %274 = vmatpush2.msra.mxu0 0.0
  %275 = vmatprep.subr.mxu0 0.0
  %276 = vmatpush2.msra.mxu0 0.0
  %277 = vmatprep.subr.mxu0 0.0
  %278 = vmatpush2.msra.mxu0 0.0
  %279 = vmatprep.subr.mxu0 0.0
  %280 = vmatpush2.msra.mxu0 0.0
  %281 = vmatprep.subr.mxu0 0.0
  %282 = vmatpush2.msra.mxu0 0.0
  %283 = vmatprep.subr.mxu0 0.0
  %284 = vmatpush2.msra.mxu0 0.0
  %285 = vmatprep.subr.mxu0 0.0
  %286 = vmatpush2.msra.mxu0 0.0
  %287 = vmatprep.subr.mxu0 0.0
  %288 = vmatpush2.msra.mxu0 0.0
  %289 = vmatprep.subr.mxu0 0.0
  %290 = vmatpush2.msra.mxu0 0.0
  %291 = vmatprep.mubr.f32.mxu0 0.0
  %292 = vmatmul.mubr.f32.gmra.mxu0 %v37
  %v293 = vpop.f32.mrf.mxu0
  %v294 = vadd.f32 0.0, %v293
  %v295 = vpop.f32.mrf.mxu0
  %v296 = vadd.f32 0.0, %v295
  %297 = vdwg.mxu0
  %298 = vmatprep.subr.mxu0 0.0
  %299 = vmatpush1.msra.mxu0 0.0
  %300 = vmatprep.subr.mxu0 0.0
  %301 = vmatpush1.msra.mxu0 0.0
  %302 = vmatprep.subr.mxu0 0.0
  %303 = vmatpush1.msra.mxu0 0.0
  %304 = vmatprep.subr.mxu0 0.0
  %305 = vmatpush1.msra.mxu0 0.0
  %306 = vmatprep.subr.mxu0 0.0
  %307 = vmatpush1.msra.mxu0 0.0
  %308 = vmatprep.subr.mxu0 0.0
  %309 = vmatpush1.msra.mxu0 0.0
  %310 = vmatprep.subr.mxu0 0.0
  %311 = vmatpush1.msra.mxu0 0.0
  %312 = vmatprep.subr.mxu0 0.0
  %313 = vmatpush1.msra.mxu0 0.0
  %314 = vmatprep.subr.mxu0 0.0
  %315 = vmatpush1.msra.mxu0 0.0
  %316 = vmatprep.subr.mxu0 0.0
  %317 = vmatpush1.msra.mxu0 0.0
  %318 = vmatprep.subr.mxu0 0.0
  %319 = vmatpush1.msra.mxu0 0.0
  %320 = vmatprep.subr.mxu0 %v225
  %321 = vmatpush1.msra.mxu0 %v222
  %322 = vmatprep.subr.mxu0 %v210
  %323 = vmatpush1.msra.mxu0 %v209
  %324 = vmatprep.subr.mxu0 %v206
  %325 = vmatpush1.msra.mxu0 %v205
  %326 = vmatprep.subr.mxu0 %v202
  %327 = vmatpush1.msra.mxu0 %v201
  %328 = vmatprep.subr.mxu0 %v198
  %329 = vmatpush1.msra.mxu0 %v197
  %330 = vmatprep.subr.mxu0 0.0
  %331 = vmatpush2.msra.mxu0 0.0
  %332 = vmatprep.subr.mxu0 0.0
  %333 = vmatpush2.msra.mxu0 0.0
  %334 = vmatprep.subr.mxu0 0.0
  %335 = vmatpush2.msra.mxu0 0.0
  %336 = vmatprep.subr.mxu0 0.0
  %337 = vmatpush2.msra.mxu0 0.0
  %338 = vmatprep.subr.mxu0 0.0
  %339 = vmatpush2.msra.mxu0 0.0
  %340 = vmatprep.subr.mxu0 0.0
  %341 = vmatpush2.msra.mxu0 0.0
  %342 = vmatprep.subr.mxu0 0.0
  %343 = vmatpush2.msra.mxu0 0.0
  %344 = vmatprep.subr.mxu0 0.0
  %345 = vmatpush2.msra.mxu0 0.0
  %346 = vmatprep.subr.mxu0 0.0
  %347 = vmatpush2.msra.mxu0 0.0
  %348 = vmatprep.subr.mxu0 0.0
  %349 = vmatpush2.msra.mxu0 0.0
  %350 = vmatprep.subr.mxu0 0.0
  %351 = vmatpush2.msra.mxu0 0.0
  %352 = vmatprep.subr.mxu0 0.0
  %353 = vmatpush2.msra.mxu0 0.0
  %354 = vmatprep.subr.mxu0 0.0
  %355 = vmatpush2.msra.mxu0 0.0
  %356 = vmatprep.subr.mxu0 0.0
  %357 = vmatpush2.msra.mxu0 0.0
  %358 = vmatprep.subr.mxu0 0.0
  %359 = vmatpush2.msra.mxu0 0.0
  %360 = vmatprep.subr.mxu0 0.0
  %361 = vmatpush2.msra.mxu0 0.0
  %362 = vmatprep.mubr.f32.mxu0 0.0
  %363 = vmatmul.mubr.f32.gmra.mxu0 %v37
  %v364 = vpop.f32.mrf.mxu0
  %v365 = vadd.f32 0.0, %v364
  %v366 = vpop.f32.mrf.mxu0
  %v367 = vadd.f32 0.0, %v366
  %368 = vdwg.mxu0
  %v369 = vmax.f32 %v119, %v294
  %v370 = vmax.f32 %v121, %v296
  %v371 = vmax.f32 %v190, %v365
  %v372 = vmax.f32 %v192, %v367
  %s373 = scalar_lea.vmem %s0, 320
  %v374 = vld [vmem:[%s373] sm:$0xff]
  %v375 = vld [vmem:[%s373 + $0x8] sm:$0xff]
  %v376 = vld [vmem:[%s373 + $0x10] sm:$0xff]
  %v377 = vld [vmem:[%s373 + $0x18] sm:$0xff]
  %v378 = vld [vmem:[%s373 + $0x20] sm:$0xff]
  %v379 = vld [vmem:[%s373 + $0x28] sm:$0xff]
  %v380 = vld [vmem:[%s373 + $0x30] sm:$0xff]
  %v381 = vld [vmem:[%s373 + $0x38] sm:$0xff]
  %v382 = vld [vmem:[%s373 + $0x40] sm:$0xff]
  %v383 = vld [vmem:[%s373 + $0x48] sm:$0xff]
  %v384 = vld [vmem:[%s373 + $0x50] sm:$0xff]
  %v385 = vld [vmem:[%s373 + $0x58] sm:$0xff]
  %v386 = vld [vmem:[%s373 + $0x60] sm:$0xff]
  %v387 = vld [vmem:[%s373 + $0x68] sm:$0xff]
  %v388 = vld [vmem:[%s373 + $0x70] sm:$0xff]
  %v389 = vld [vmem:[%s373 + $0x78] sm:$0xff]
  %v390 = vld [vmem:[%s373 + $0x80] sm:$0xf]
  %v391 = vld [vmem:[%s373 + $0x88] sm:$0xf]
  %v392 = vld [vmem:[%s373 + $0x90] sm:$0xf]
  %v393 = vld [vmem:[%s373 + $0x98] sm:$0xf]
  %v395 = vsel %vm39, %v390, 0
  %v398 = vsel %vm39, %v391, 0
  %v401 = vsel %vm39, %v392, 0
  %v404 = vsel %vm39, %v393, 0
  %406 = vmatprep.subr.mxu0 0.0
  %407 = vmatpush1.msra.mxu0 0.0
  %408 = vmatprep.subr.mxu0 0.0
  %409 = vmatpush1.msra.mxu0 0.0
  %410 = vmatprep.subr.mxu0 0.0
  %411 = vmatpush1.msra.mxu0 0.0
  %412 = vmatprep.subr.mxu0 0.0
  %413 = vmatpush1.msra.mxu0 0.0
  %414 = vmatprep.subr.mxu0 0.0
  %415 = vmatpush1.msra.mxu0 0.0
  %416 = vmatprep.subr.mxu0 0.0
  %417 = vmatpush1.msra.mxu0 0.0
  %418 = vmatprep.subr.mxu0 0.0
  %419 = vmatpush1.msra.mxu0 0.0
  %420 = vmatprep.subr.mxu0 0.0
  %421 = vmatpush1.msra.mxu0 0.0
  %422 = vmatprep.subr.mxu0 0.0
  %423 = vmatpush1.msra.mxu0 0.0
  %424 = vmatprep.subr.mxu0 0.0
  %425 = vmatpush1.msra.mxu0 0.0
  %426 = vmatprep.subr.mxu0 0.0
  %427 = vmatpush1.msra.mxu0 0.0
  %428 = vmatprep.subr.mxu0 %v398
  %429 = vmatpush1.msra.mxu0 %v395
  %430 = vmatprep.subr.mxu0 %v387
  %431 = vmatpush1.msra.mxu0 %v386
  %432 = vmatprep.subr.mxu0 %v383
  %433 = vmatpush1.msra.mxu0 %v382
  %434 = vmatprep.subr.mxu0 %v379
  %435 = vmatpush1.msra.mxu0 %v378
  %436 = vmatprep.subr.mxu0 %v375
  %437 = vmatpush1.msra.mxu0 %v374
  %438 = vmatprep.subr.mxu0 0.0
  %439 = vmatpush2.msra.mxu0 0.0
  %440 = vmatprep.subr.mxu0 0.0
  %441 = vmatpush2.msra.mxu0 0.0
  %442 = vmatprep.subr.mxu0 0.0
  %443 = vmatpush2.msra.mxu0 0.0
  %444 = vmatprep.subr.mxu0 0.0
  %445 = vmatpush2.msra.mxu0 0.0
  %446 = vmatprep.subr.mxu0 0.0
  %447 = vmatpush2.msra.mxu0 0.0
  %448 = vmatprep.subr.mxu0 0.0
  %449 = vmatpush2.msra.mxu0 0.0
  %450 = vmatprep.subr.mxu0 0.0
  %451 = vmatpush2.msra.mxu0 0.0
  %452 = vmatprep.subr.mxu0 0.0
  %453 = vmatpush2.msra.mxu0 0.0
  %454 = vmatprep.subr.mxu0 0.0
  %455 = vmatpush2.msra.mxu0 0.0
  %456 = vmatprep.subr.mxu0 0.0
  %457 = vmatpush2.msra.mxu0 0.0
  %458 = vmatprep.subr.mxu0 0.0
  %459 = vmatpush2.msra.mxu0 0.0
  %460 = vmatprep.subr.mxu0 0.0
  %461 = vmatpush2.msra.mxu0 0.0
  %462 = vmatprep.subr.mxu0 0.0
  %463 = vmatpush2.msra.mxu0 0.0
  %464 = vmatprep.subr.mxu0 0.0
  %465 = vmatpush2.msra.mxu0 0.0
  %466 = vmatprep.subr.mxu0 0.0
  %467 = vmatpush2.msra.mxu0 0.0
  %468 = vmatprep.subr.mxu0 0.0
  %469 = vmatpush2.msra.mxu0 0.0
  %470 = vmatprep.mubr.f32.mxu0 0.0
  %471 = vmatmul.mubr.f32.gmra.mxu0 %v37
  %v472 = vpop.f32.mrf.mxu0
  %v473 = vadd.f32 0.0, %v472
  %v474 = vpop.f32.mrf.mxu0
  %v475 = vadd.f32 0.0, %v474
  %476 = vdwg.mxu0
  %477 = vmatprep.subr.mxu0 0.0
  %478 = vmatpush1.msra.mxu0 0.0
  %479 = vmatprep.subr.mxu0 0.0
  %480 = vmatpush1.msra.mxu0 0.0
  %481 = vmatprep.subr.mxu0 0.0
  %482 = vmatpush1.msra.mxu0 0.0
  %483 = vmatprep.subr.mxu0 0.0
  %484 = vmatpush1.msra.mxu0 0.0
  %485 = vmatprep.subr.mxu0 0.0
  %486 = vmatpush1.msra.mxu0 0.0
  %487 = vmatprep.subr.mxu0 0.0
  %488 = vmatpush1.msra.mxu0 0.0
  %489 = vmatprep.subr.mxu0 0.0
  %490 = vmatpush1.msra.mxu0 0.0
  %491 = vmatprep.subr.mxu0 0.0
  %492 = vmatpush1.msra.mxu0 0.0
  %493 = vmatprep.subr.mxu0 0.0
  %494 = vmatpush1.msra.mxu0 0.0
  %495 = vmatprep.subr.mxu0 0.0
  %496 = vmatpush1.msra.mxu0 0.0
  %497 = vmatprep.subr.mxu0 0.0
  %498 = vmatpush1.msra.mxu0 0.0
  %499 = vmatprep.subr.mxu0 %v404
  %500 = vmatpush1.msra.mxu0 %v401
  %501 = vmatprep.subr.mxu0 %v389
  %502 = vmatpush1.msra.mxu0 %v388
  %503 = vmatprep.subr.mxu0 %v385
  %504 = vmatpush1.msra.mxu0 %v384
  %505 = vmatprep.subr.mxu0 %v381
  %506 = vmatpush1.msra.mxu0 %v380
  %507 = vmatprep.subr.mxu0 %v377
  %508 = vmatpush1.msra.mxu0 %v376
  %509 = vmatprep.subr.mxu0 0.0
  %510 = vmatpush2.msra.mxu0 0.0
  %511 = vmatprep.subr.mxu0 0.0
  %512 = vmatpush2.msra.mxu0 0.0
  %513 = vmatprep.subr.mxu0 0.0
  %514 = vmatpush2.msra.mxu0 0.0
  %515 = vmatprep.subr.mxu0 0.0
  %516 = vmatpush2.msra.mxu0 0.0
  %517 = vmatprep.subr.mxu0 0.0
  %518 = vmatpush2.msra.mxu0 0.0
  %519 = vmatprep.subr.mxu0 0.0
  %520 = vmatpush2.msra.mxu0 0.0
  %521 = vmatprep.subr.mxu0 0.0
  %522 = vmatpush2.msra.mxu0 0.0
  %523 = vmatprep.subr.mxu0 0.0
  %524 = vmatpush2.msra.mxu0 0.0
  %525 = vmatprep.subr.mxu0 0.0
  %526 = vmatpush2.msra.mxu0 0.0
  %527 = vmatprep.subr.mxu0 0.0
  %528 = vmatpush2.msra.mxu0 0.0
  %529 = vmatprep.subr.mxu0 0.0
  %530 = vmatpush2.msra.mxu0 0.0
  %531 = vmatprep.subr.mxu0 0.0
  %532 = vmatpush2.msra.mxu0 0.0
  %533 = vmatprep.subr.mxu0 0.0
  %534 = vmatpush2.msra.mxu0 0.0
  %535 = vmatprep.subr.mxu0 0.0
  %536 = vmatpush2.msra.mxu0 0.0
  %537 = vmatprep.subr.mxu0 0.0
  %538 = vmatpush2.msra.mxu0 0.0
  %539 = vmatprep.subr.mxu0 0.0
  %540 = vmatpush2.msra.mxu0 0.0
  %541 = vmatprep.mubr.f32.mxu0 0.0
  %542 = vmatmul.mubr.f32.gmra.mxu0 %v37
  %v543 = vpop.f32.mrf.mxu0
  %v544 = vadd.f32 0.0, %v543
  %v545 = vpop.f32.mrf.mxu0
  %v546 = vadd.f32 0.0, %v545
  %547 = vdwg.mxu0
  %v548 = vmax.f32 %v369, %v473
  %v549 = vmax.f32 %v370, %v475
  %v550 = vmax.f32 %v371, %v544
  %v551 = vmax.f32 %v372, %v546
  %s552 = scalar_lea.vmem %s0, 480
  %v553 = vld [vmem:[%s552] sm:$0xff]
  %v554 = vld [vmem:[%s552 + $0x8] sm:$0xff]
  %v555 = vld [vmem:[%s552 + $0x10] sm:$0xff]
  %v556 = vld [vmem:[%s552 + $0x18] sm:$0xff]
  %v557 = vld [vmem:[%s552 + $0x20] sm:$0xff]
  %v558 = vld [vmem:[%s552 + $0x28] sm:$0xff]
  %v559 = vld [vmem:[%s552 + $0x30] sm:$0xff]
  %v560 = vld [vmem:[%s552 + $0x38] sm:$0xff]
  %v561 = vld [vmem:[%s552 + $0x40] sm:$0xff]
  %v562 = vld [vmem:[%s552 + $0x48] sm:$0xff]
  %v563 = vld [vmem:[%s552 + $0x50] sm:$0xff]
  %v564 = vld [vmem:[%s552 + $0x58] sm:$0xff]
  %v565 = vld [vmem:[%s552 + $0x60] sm:$0xff]
  %v566 = vld [vmem:[%s552 + $0x68] sm:$0xff]
  %v567 = vld [vmem:[%s552 + $0x70] sm:$0xff]
  %v568 = vld [vmem:[%s552 + $0x78] sm:$0xff]
  %v569 = vld [vmem:[%s552 + $0x80] sm:$0xf]
  %v570 = vld [vmem:[%s552 + $0x88] sm:$0xf]
  %v571 = vld [vmem:[%s552 + $0x90] sm:$0xf]
  %v572 = vld [vmem:[%s552 + $0x98] sm:$0xf]
  %v574 = vsel %vm39, %v569, 0
  %v577 = vsel %vm39, %v570, 0
  %v580 = vsel %vm39, %v571, 0
  %v583 = vsel %vm39, %v572, 0
  %585 = vmatprep.subr.mxu0 0.0
  %586 = vmatpush1.msra.mxu0 0.0
  %587 = vmatprep.subr.mxu0 0.0
  %588 = vmatpush1.msra.mxu0 0.0
  %589 = vmatprep.subr.mxu0 0.0
  %590 = vmatpush1.msra.mxu0 0.0
  %591 = vmatprep.subr.mxu0 0.0
  %592 = vmatpush1.msra.mxu0 0.0
  %593 = vmatprep.subr.mxu0 0.0
  %594 = vmatpush1.msra.mxu0 0.0
  %595 = vmatprep.subr.mxu0 0.0
  %596 = vmatpush1.msra.mxu0 0.0
  %597 = vmatprep.subr.mxu0 0.0
  %598 = vmatpush1.msra.mxu0 0.0
  %599 = vmatprep.subr.mxu0 0.0
  %600 = vmatpush1.msra.mxu0 0.0
  %601 = vmatprep.subr.mxu0 0.0
  %602 = vmatpush1.msra.mxu0 0.0
  %603 = vmatprep.subr.mxu0 0.0
  %604 = vmatpush1.msra.mxu0 0.0
  %605 = vmatprep.subr.mxu0 0.0
  %606 = vmatpush1.msra.mxu0 0.0
  %607 = vmatprep.subr.mxu0 %v577
  %608 = vmatpush1.msra.mxu0 %v574
  %609 = vmatprep.subr.mxu0 %v566
  %610 = vmatpush1.msra.mxu0 %v565
  %611 = vmatprep.subr.mxu0 %v562
  %612 = vmatpush1.msra.mxu0 %v561
  %613 = vmatprep.subr.mxu0 %v558
  %614 = vmatpush1.msra.mxu0 %v557
  %615 = vmatprep.subr.mxu0 %v554
  %616 = vmatpush1.msra.mxu0 %v553
  %617 = vmatprep.subr.mxu0 0.0
  %618 = vmatpush2.msra.mxu0 0.0
  %619 = vmatprep.subr.mxu0 0.0
  %620 = vmatpush2.msra.mxu0 0.0
  %621 = vmatprep.subr.mxu0 0.0
  %622 = vmatpush2.msra.mxu0 0.0
  %623 = vmatprep.subr.mxu0 0.0
  %624 = vmatpush2.msra.mxu0 0.0
  %625 = vmatprep.subr.mxu0 0.0
  %626 = vmatpush2.msra.mxu0 0.0
  %627 = vmatprep.subr.mxu0 0.0
  %628 = vmatpush2.msra.mxu0 0.0
  %629 = vmatprep.subr.mxu0 0.0
  %630 = vmatpush2.msra.mxu0 0.0
  %631 = vmatprep.subr.mxu0 0.0
  %632 = vmatpush2.msra.mxu0 0.0
  %633 = vmatprep.subr.mxu0 0.0
  %634 = vmatpush2.msra.mxu0 0.0
  %635 = vmatprep.subr.mxu0 0.0
  %636 = vmatpush2.msra.mxu0 0.0
  %637 = vmatprep.subr.mxu0 0.0
  %638 = vmatpush2.msra.mxu0 0.0
  %639 = vmatprep.subr.mxu0 0.0
  %640 = vmatpush2.msra.mxu0 0.0
  %641 = vmatprep.subr.mxu0 0.0
  %642 = vmatpush2.msra.mxu0 0.0
  %643 = vmatprep.subr.mxu0 0.0
  %644 = vmatpush2.msra.mxu0 0.0
  %645 = vmatprep.subr.mxu0 0.0
  %646 = vmatpush2.msra.mxu0 0.0
  %647 = vmatprep.subr.mxu0 0.0
  %648 = vmatpush2.msra.mxu0 0.0
  %649 = vmatprep.mubr.f32.mxu0 0.0
  %650 = vmatmul.mubr.f32.gmra.mxu0 %v37
  %v651 = vpop.f32.mrf.mxu0
  %v652 = vadd.f32 0.0, %v651
  %v653 = vpop.f32.mrf.mxu0
  %v654 = vadd.f32 0.0, %v653
  %655 = vdwg.mxu0
  %656 = vmatprep.subr.mxu0 0.0
  %657 = vmatpush1.msra.mxu0 0.0
  %658 = vmatprep.subr.mxu0 0.0
  %659 = vmatpush1.msra.mxu0 0.0
  %660 = vmatprep.subr.mxu0 0.0
  %661 = vmatpush1.msra.mxu0 0.0
  %662 = vmatprep.subr.mxu0 0.0
  %663 = vmatpush1.msra.mxu0 0.0
  %664 = vmatprep.subr.mxu0 0.0
  %665 = vmatpush1.msra.mxu0 0.0
  %666 = vmatprep.subr.mxu0 0.0
  %667 = vmatpush1.msra.mxu0 0.0
  %668 = vmatprep.subr.mxu0 0.0
  %669 = vmatpush1.msra.mxu0 0.0
  %670 = vmatprep.subr.mxu0 0.0
  %671 = vmatpush1.msra.mxu0 0.0
  %672 = vmatprep.subr.mxu0 0.0
  %673 = vmatpush1.msra.mxu0 0.0
  %674 = vmatprep.subr.mxu0 0.0
  %675 = vmatpush1.msra.mxu0 0.0
  %676 = vmatprep.subr.mxu0 0.0
  %677 = vmatpush1.msra.mxu0 0.0
  %678 = vmatprep.subr.mxu0 %v583
  %679 = vmatpush1.msra.mxu0 %v580
  %680 = vmatprep.subr.mxu0 %v568
  %681 = vmatpush1.msra.mxu0 %v567
  %682 = vmatprep.subr.mxu0 %v564
  %683 = vmatpush1.msra.mxu0 %v563
  %684 = vmatprep.subr.mxu0 %v560
  %685 = vmatpush1.msra.mxu0 %v559
  %686 = vmatprep.subr.mxu0 %v556
  %687 = vmatpush1.msra.mxu0 %v555
  %688 = vmatprep.subr.mxu0 0.0
  %689 = vmatpush2.msra.mxu0 0.0
  %690 = vmatprep.subr.mxu0 0.0
  %691 = vmatpush2.msra.mxu0 0.0
  %692 = vmatprep.subr.mxu0 0.0
  %693 = vmatpush2.msra.mxu0 0.0
  %694 = vmatprep.subr.mxu0 0.0
  %695 = vmatpush2.msra.mxu0 0.0
  %696 = vmatprep.subr.mxu0 0.0
  %697 = vmatpush2.msra.mxu0 0.0
  %698 = vmatprep.subr.mxu0 0.0
  %699 = vmatpush2.msra.mxu0 0.0
  %700 = vmatprep.subr.mxu0 0.0
  %701 = vmatpush2.msra.mxu0 0.0
  %702 = vmatprep.subr.mxu0 0.0
  %703 = vmatpush2.msra.mxu0 0.0
  %704 = vmatprep.subr.mxu0 0.0
  %705 = vmatpush2.msra.mxu0 0.0
  %706 = vmatprep.subr.mxu0 0.0
  %707 = vmatpush2.msra.mxu0 0.0
  %708 = vmatprep.subr.mxu0 0.0
  %709 = vmatpush2.msra.mxu0 0.0
  %710 = vmatprep.subr.mxu0 0.0
  %711 = vmatpush2.msra.mxu0 0.0
  %712 = vmatprep.subr.mxu0 0.0
  %713 = vmatpush2.msra.mxu0 0.0
  %714 = vmatprep.subr.mxu0 0.0
  %715 = vmatpush2.msra.mxu0 0.0
  %716 = vmatprep.subr.mxu0 0.0
  %717 = vmatpush2.msra.mxu0 0.0
  %718 = vmatprep.subr.mxu0 0.0
  %719 = vmatpush2.msra.mxu0 0.0
  %720 = vmatprep.mubr.f32.mxu0 0.0
  %721 = vmatmul.mubr.f32.gmra.mxu0 %v37
  %v722 = vpop.f32.mrf.mxu0
  %v723 = vadd.f32 0.0, %v722
  %v724 = vpop.f32.mrf.mxu0
  %v725 = vadd.f32 0.0, %v724
  %726 = vdwg.mxu0
  %v727 = vmax.f32 %v548, %v652
  %v728 = vmax.f32 %v549, %v654
  %v729 = vmax.f32 %v550, %v723
  %v730 = vmax.f32 %v551, %v725
  %v731 = vld [vmem:[%s2] sm:$0xf]
  %733 = vset.pattern.permute.xlu0 0
  %734 = vperm.xlu0 %733, %v731
  %v735 = vpop.permute.xlu0 %734
  %v737 = vadd.f32 %v727, %v735
  %v738 = vadd.f32 %v728, %v735
  %v739 = vadd.f32 %v729, %v735
  %v740 = vadd.f32 %v730, %v735
  %v741 = vmax.f32 %v737, 0.0
  %v742 = vmax.f32 %v738, 0.0
  %v743 = vmax.f32 %v739, 0.0
  %v744 = vmax.f32 %v740, 0.0
  %v749 = vcombine.low %v741, %v742
  %v750 = vcombine.low %v743, %v744
  %753 = vst [vmem:[%s3] sm:$0xff] %v749
  %754 = vst [vmem:[%s3 + $0x8] sm:$0xff] %v750
  // Predicated region
  $region14: #{gh_cnn_forward.15} parent=0 // pred_check
    _
  $region15: #{gh_cnn_forward.15} parent=0 // pred_check_branch
    %756 = sbr.rel (0) target = $region17
  $region16: #{gh_cnn_forward.15} parent=0 // pred_region
    _
  $region17: #{gh_cnn_forward.15} parent=0 // pred_fallthru
    _
  // Predicated region
  $region18: #{gh_cnn_forward.15} parent=0 // pred_check
    _
  $region19: #{gh_cnn_forward.15} parent=0 // pred_check_branch
    %758 = sbr.rel (0) target = $region21
  $region20: #{gh_cnn_forward.15} parent=0 // pred_region
    _
  $region21: #{gh_cnn_forward.15} parent=0 // pred_fallthru
    _

// kernel: gh_cnn_forward.16
$region0: #{gh_cnn_forward.16}
  #allocation0 [shape = 'u32[]', space=smem, size = 0x4, offset = 0x4, fixed_abs, tag = 'smem constant byte address 0x4 - core index']
  #allocation1 [shape = 'u32[144,128]{1,0:T(1,128)}', space=vmem, size = 0x12000, scoped, tag = 'internal scratch']
  %s0 = inlined_call_operand.vmem [shape: f32[36,512], index: 0, kind: input, shape index: {}]
  %s1 = inlined_call_operand.vmem [shape: f32[8,36], index: 1, kind: input, shape index: {}]
  %s2 = inlined_call_operand.vmem [shape: f32[8,1], index: 2, kind: input, shape index: {}]
  %s3 = inlined_call_operand.vmem [shape: f32[8,512], index: 3, kind: output, shape index: {}]
  %s4 = sld [smem:[#allocation0]]
  $region22: #{gh_cnn_forward.16} parent=0
    _
  %s6 = ssub.s32 1, %s4
  %s7 = scalar_select 0, %s6, %s4
  // Predicated region
  $region2: #{gh_cnn_forward.16} parent=0 // pred_check
    _
  $region3: #{gh_cnn_forward.16} parent=0 // pred_check_branch
    %9 = sbr.rel (0) target = $region5
  $region4: #{gh_cnn_forward.16} parent=0 // pred_region
    _
  $region5: #{gh_cnn_forward.16} parent=0 // pred_fallthru
    _
  // Predicated region
  $region6: #{gh_cnn_forward.16} parent=0 // pred_check
    _
  $region7: #{gh_cnn_forward.16} parent=0 // pred_check_branch
    %11 = sbr.rel (0) target = $region9
  $region8: #{gh_cnn_forward.16} parent=0 // pred_region
    _
  $region9: #{gh_cnn_forward.16} parent=0 // pred_fallthru
    _
  // Predicated region
  $region10: #{gh_cnn_forward.16} parent=0 // pred_check
    _
  $region11: #{gh_cnn_forward.16} parent=0 // pred_check_branch
    %13 = sbr.rel (0) target = $region13
  $region12: #{gh_cnn_forward.16} parent=0 // pred_region
    _
  $region13: #{gh_cnn_forward.16} parent=0 // pred_fallthru
    _
  %v14 = vld [vmem:[%s1] sm:$0xff]
  %v15 = vld [vmem:[%s0] sm:$0xff]
  %v16 = vld [vmem:[%s0 + $0x8] sm:$0xff]
  %v17 = vld [vmem:[%s0 + $0x10] sm:$0xff]
  %v18 = vld [vmem:[%s0 + $0x18] sm:$0xff]
  %v19 = vld [vmem:[%s0 + $0x20] sm:$0xff]
  %v20 = vld [vmem:[%s0 + $0x28] sm:$0xff]
  %v21 = vld [vmem:[%s0 + $0x30] sm:$0xff]
  %v22 = vld [vmem:[%s0 + $0x38] sm:$0xff]
  %v23 = vld [vmem:[%s0 + $0x40] sm:$0xff]
  %v24 = vld [vmem:[%s0 + $0x48] sm:$0xff]
  %v25 = vld [vmem:[%s0 + $0x50] sm:$0xff]
  %v26 = vld [vmem:[%s0 + $0x58] sm:$0xff]
  %v27 = vld [vmem:[%s0 + $0x60] sm:$0xff]
  %v28 = vld [vmem:[%s0 + $0x68] sm:$0xff]
  %v29 = vld [vmem:[%s0 + $0x70] sm:$0xff]
  %v30 = vld [vmem:[%s0 + $0x78] sm:$0xff]
  %v31 = vld [vmem:[%s0 + $0x80] sm:$0xf]
  %v32 = vld [vmem:[%s0 + $0x88] sm:$0xf]
  %v33 = vld [vmem:[%s0 + $0x90] sm:$0xf]
  %v34 = vld [vmem:[%s0 + $0x98] sm:$0xf]
  %v35 = vld [vmem:[%s2] sm:$0xff]
  %37 = vset.pattern.permute.xlu0 0
  %38 = vperm.xlu0 %37, %v35
  %v39 = vpop.permute.xlu0 %38
  %vm41 = vcmask 293888
  %v43 = vsel %vm41, %v14, 0
  %vm45 = vcmask 1043456
  %v47 = vsel %vm45, %v31, 0
  %v50 = vsel %vm45, %v32, 0
  %v53 = vsel %vm45, %v33, 0
  %v56 = vsel %vm45, %v34, 0
  %58 = vmatprep.subr.mxu0 0.0
  %59 = vmatpush1.msra.mxu0 0.0
  %60 = vmatprep.subr.mxu0 0.0
  %61 = vmatpush1.msra.mxu0 0.0
  %62 = vmatprep.subr.mxu0 0.0
  %63 = vmatpush1.msra.mxu0 0.0
  %64 = vmatprep.subr.mxu0 0.0
  %65 = vmatpush1.msra.mxu0 0.0
  %66 = vmatprep.subr.mxu0 0.0
  %67 = vmatpush1.msra.mxu0 0.0
  %68 = vmatprep.subr.mxu0 0.0
  %69 = vmatpush1.msra.mxu0 0.0
  %70 = vmatprep.subr.mxu0 0.0
  %71 = vmatpush1.msra.mxu0 0.0
  %72 = vmatprep.subr.mxu0 0.0
  %73 = vmatpush1.msra.mxu0 0.0
  %74 = vmatprep.subr.mxu0 0.0
  %75 = vmatpush1.msra.mxu0 0.0
  %76 = vmatprep.subr.mxu0 0.0
  %77 = vmatpush1.msra.mxu0 0.0
  %78 = vmatprep.subr.mxu0 0.0
  %79 = vmatpush1.msra.mxu0 0.0
  %80 = vmatprep.subr.mxu0 %v50
  %81 = vmatpush1.msra.mxu0 %v47
  %82 = vmatprep.subr.mxu0 %v28
  %83 = vmatpush1.msra.mxu0 %v27
  %84 = vmatprep.subr.mxu0 %v24
  %85 = vmatpush1.msra.mxu0 %v23
  %86 = vmatprep.subr.mxu0 %v20
  %87 = vmatpush1.msra.mxu0 %v19
  %88 = vmatprep.subr.mxu0 %v16
  %89 = vmatpush1.msra.mxu0 %v15
  %90 = vmatprep.subr.mxu0 0.0
  %91 = vmatpush2.msra.mxu0 0.0
  %92 = vmatprep.subr.mxu0 0.0
  %93 = vmatpush2.msra.mxu0 0.0
  %94 = vmatprep.subr.mxu0 0.0
  %95 = vmatpush2.msra.mxu0 0.0
  %96 = vmatprep.subr.mxu0 0.0
  %97 = vmatpush2.msra.mxu0 0.0
  %98 = vmatprep.subr.mxu0 0.0
  %99 = vmatpush2.msra.mxu0 0.0
  %100 = vmatprep.subr.mxu0 0.0
  %101 = vmatpush2.msra.mxu0 0.0
  %102 = vmatprep.subr.mxu0 0.0
  %103 = vmatpush2.msra.mxu0 0.0
  %104 = vmatprep.subr.mxu0 0.0
  %105 = vmatpush2.msra.mxu0 0.0
  %106 = vmatprep.subr.mxu0 0.0
  %107 = vmatpush2.msra.mxu0 0.0
  %108 = vmatprep.subr.mxu0 0.0
  %109 = vmatpush2.msra.mxu0 0.0
  %110 = vmatprep.subr.mxu0 0.0
  %111 = vmatpush2.msra.mxu0 0.0
  %112 = vmatprep.subr.mxu0 0.0
  %113 = vmatpush2.msra.mxu0 0.0
  %114 = vmatprep.subr.mxu0 0.0
  %115 = vmatpush2.msra.mxu0 0.0
  %116 = vmatprep.subr.mxu0 0.0
  %117 = vmatpush2.msra.mxu0 0.0
  %118 = vmatprep.subr.mxu0 0.0
  %119 = vmatpush2.msra.mxu0 0.0
  %120 = vmatprep.subr.mxu0 0.0
  %121 = vmatpush2.msra.mxu0 0.0
  %122 = vmatprep.mubr.f32.mxu0 0.0
  %123 = vmatmul.mubr.f32.gmra.mxu0 %v43
  %v124 = vpop.f32.mrf.mxu0
  %v125 = vadd.f32 %v39, %v124
  %v126 = vpop.f32.mrf.mxu0
  %v127 = vadd.f32 %v39, %v126
  %128 = vdwg.mxu0
  %129 = vmatprep.subr.mxu0 0.0
  %130 = vmatpush1.msra.mxu0 0.0
  %131 = vmatprep.subr.mxu0 0.0
  %132 = vmatpush1.msra.mxu0 0.0
  %133 = vmatprep.subr.mxu0 0.0
  %134 = vmatpush1.msra.mxu0 0.0
  %135 = vmatprep.subr.mxu0 0.0
  %136 = vmatpush1.msra.mxu0 0.0
  %137 = vmatprep.subr.mxu0 0.0
  %138 = vmatpush1.msra.mxu0 0.0
  %139 = vmatprep.subr.mxu0 0.0
  %140 = vmatpush1.msra.mxu0 0.0
  %141 = vmatprep.subr.mxu0 0.0
  %142 = vmatpush1.msra.mxu0 0.0
  %143 = vmatprep.subr.mxu0 0.0
  %144 = vmatpush1.msra.mxu0 0.0
  %145 = vmatprep.subr.mxu0 0.0
  %146 = vmatpush1.msra.mxu0 0.0
  %147 = vmatprep.subr.mxu0 0.0
  %148 = vmatpush1.msra.mxu0 0.0
  %149 = vmatprep.subr.mxu0 0.0
  %150 = vmatpush1.msra.mxu0 0.0
  %151 = vmatprep.subr.mxu0 %v56
  %152 = vmatpush1.msra.mxu0 %v53
  %153 = vmatprep.subr.mxu0 %v30
  %154 = vmatpush1.msra.mxu0 %v29
  %155 = vmatprep.subr.mxu0 %v26
  %156 = vmatpush1.msra.mxu0 %v25
  %157 = vmatprep.subr.mxu0 %v22
  %158 = vmatpush1.msra.mxu0 %v21
  %159 = vmatprep.subr.mxu0 %v18
  %160 = vmatpush1.msra.mxu0 %v17
  %161 = vmatprep.subr.mxu0 0.0
  %162 = vmatpush2.msra.mxu0 0.0
  %163 = vmatprep.subr.mxu0 0.0
  %164 = vmatpush2.msra.mxu0 0.0
  %165 = vmatprep.subr.mxu0 0.0
  %166 = vmatpush2.msra.mxu0 0.0
  %167 = vmatprep.subr.mxu0 0.0
  %168 = vmatpush2.msra.mxu0 0.0
  %169 = vmatprep.subr.mxu0 0.0
  %170 = vmatpush2.msra.mxu0 0.0
  %171 = vmatprep.subr.mxu0 0.0
  %172 = vmatpush2.msra.mxu0 0.0
  %173 = vmatprep.subr.mxu0 0.0
  %174 = vmatpush2.msra.mxu0 0.0
  %175 = vmatprep.subr.mxu0 0.0
  %176 = vmatpush2.msra.mxu0 0.0
  %177 = vmatprep.subr.mxu0 0.0
  %178 = vmatpush2.msra.mxu0 0.0
  %179 = vmatprep.subr.mxu0 0.0
  %180 = vmatpush2.msra.mxu0 0.0
  %181 = vmatprep.subr.mxu0 0.0
  %182 = vmatpush2.msra.mxu0 0.0
  %183 = vmatprep.subr.mxu0 0.0
  %184 = vmatpush2.msra.mxu0 0.0
  %185 = vmatprep.subr.mxu0 0.0
  %186 = vmatpush2.msra.mxu0 0.0
  %187 = vmatprep.subr.mxu0 0.0
  %188 = vmatpush2.msra.mxu0 0.0
  %189 = vmatprep.subr.mxu0 0.0
  %190 = vmatpush2.msra.mxu0 0.0
  %191 = vmatprep.subr.mxu0 0.0
  %192 = vmatpush2.msra.mxu0 0.0
  %193 = vmatprep.mubr.f32.mxu0 0.0
  %194 = vmatmul.mubr.f32.gmra.mxu0 %v43
  %v195 = vpop.f32.mrf.mxu0
  %v196 = vadd.f32 %v39, %v195
  %v197 = vpop.f32.mrf.mxu0
  %v198 = vadd.f32 %v39, %v197
  %199 = vdwg.mxu0
  %v200 = vmax.f32 %v125, 0.0
  %v201 = vmax.f32 %v127, 0.0
  %v202 = vmax.f32 %v196, 0.0
  %v203 = vmax.f32 %v198, 0.0
  %204 = vst [vmem:[%s3] sm:$0xff] %v200
  %205 = vst [vmem:[%s3 + $0x8] sm:$0xff] %v201
  %206 = vst [vmem:[%s3 + $0x10] sm:$0xff] %v202
  %207 = vst [vmem:[%s3 + $0x18] sm:$0xff] %v203
  // Predicated region
  $region14: #{gh_cnn_forward.16} parent=0 // pred_check
    _
  $region15: #{gh_cnn_forward.16} parent=0 // pred_check_branch
    %209 = sbr.rel (0) target = $region17
  $region16: #{gh_cnn_forward.16} parent=0 // pred_region
    _
  $region17: #{gh_cnn_forward.16} parent=0 // pred_fallthru
    _
  // Predicated region
  $region18: #{gh_cnn_forward.16} parent=0 // pred_check
    _
  $region19: #{gh_cnn_forward.16} parent=0 // pred_check_branch
    %211 = sbr.rel (0) target = $region21
  $region20: #{gh_cnn_forward.16} parent=0 // pred_region
    _
  $region21: #{gh_cnn_forward.16} parent=0 // pred_fallthru
    _

// kernel: gh_cnn_forward.17
$region0: #{gh_cnn_forward.17}
  #allocation0 [shape = 'u32[]', space=smem, size = 0x4, offset = 0x4, fixed_abs, tag = 'smem constant byte address 0x4 - core index']
  #allocation1 [shape = 'u32[144,128]{1,0:T(1,128)}', space=vmem, size = 0x12000, scoped, tag = 'internal scratch']
  %s0 = inlined_call_operand.vmem [shape: f32[4,72,128], index: 0, kind: input, shape index: {}]
  %s1 = inlined_call_operand.vmem [shape: f32[8,72], index: 1, kind: input, shape index: {}]
  %s2 = inlined_call_operand.vmem [shape: f32[8,1], index: 2, kind: input, shape index: {}]
  %s3 = inlined_call_operand.vmem [shape: f32[8,128], index: 3, kind: output, shape index: {}]
  %s4 = sld [smem:[#allocation0]]
  $region22: #{gh_cnn_forward.17} parent=0
    _
  %s6 = ssub.s32 1, %s4
  %s7 = scalar_select 0, %s6, %s4
  // Predicated region
  $region2: #{gh_cnn_forward.17} parent=0 // pred_check
    _
  $region3: #{gh_cnn_forward.17} parent=0 // pred_check_branch
    %9 = sbr.rel (0) target = $region5
  $region4: #{gh_cnn_forward.17} parent=0 // pred_region
    _
  $region5: #{gh_cnn_forward.17} parent=0 // pred_fallthru
    _
  // Predicated region
  $region6: #{gh_cnn_forward.17} parent=0 // pred_check
    _
  $region7: #{gh_cnn_forward.17} parent=0 // pred_check_branch
    %11 = sbr.rel (0) target = $region9
  $region8: #{gh_cnn_forward.17} parent=0 // pred_region
    _
  $region9: #{gh_cnn_forward.17} parent=0 // pred_fallthru
    _
  // Predicated region
  $region10: #{gh_cnn_forward.17} parent=0 // pred_check
    _
  $region11: #{gh_cnn_forward.17} parent=0 // pred_check_branch
    %13 = sbr.rel (0) target = $region13
  $region12: #{gh_cnn_forward.17} parent=0 // pred_region
    _
  $region13: #{gh_cnn_forward.17} parent=0 // pred_fallthru
    _
  %v14 = vld [vmem:[%s1] sm:$0xff]
  %v15 = vld [vmem:[%s0] sm:$0xff]
  %v16 = vld [vmem:[%s0 + $0x8] sm:$0xff]
  %v17 = vld [vmem:[%s0 + $0x10] sm:$0xff]
  %v18 = vld [vmem:[%s0 + $0x18] sm:$0xff]
  %v19 = vld [vmem:[%s0 + $0x20] sm:$0xff]
  %v20 = vld [vmem:[%s0 + $0x28] sm:$0xff]
  %v21 = vld [vmem:[%s0 + $0x30] sm:$0xff]
  %v22 = vld [vmem:[%s0 + $0x38] sm:$0xff]
  %v23 = vld [vmem:[%s0 + $0x40] sm:$0xff]
  %vm24 = vcmask 588800
  %v26 = vsel %vm24, %v14, 0
  %28 = vmatprep.subr.mxu0 0.0
  %29 = vmatpush1.msra.mxu0 0.0
  %30 = vmatprep.subr.mxu0 0.0
  %31 = vmatpush1.msra.mxu0 0.0
  %32 = vmatprep.subr.mxu0 0.0
  %33 = vmatpush1.msra.mxu0 0.0
  %34 = vmatprep.subr.mxu0 0.0
  %35 = vmatpush1.msra.mxu0 0.0
  %36 = vmatprep.subr.mxu0 0.0
  %37 = vmatpush1.msra.mxu0 0.0
  %38 = vmatprep.subr.mxu0 0.0
  %39 = vmatpush1.msra.mxu0 0.0
  %40 = vmatprep.subr.mxu0 0.0
  %41 = vmatpush1.msra.mxu0 0.0
  %42 = vmatprep.subr.mxu0 0.0
  %43 = vmatpush1.msra.mxu0 %v23
  %44 = vmatprep.subr.mxu0 0.0
  %45 = vmatpush1.msra.mxu0 %v22
  %46 = vmatprep.subr.mxu0 0.0
  %47 = vmatpush1.msra.mxu0 %v21
  %48 = vmatprep.subr.mxu0 0.0
  %49 = vmatpush1.msra.mxu0 %v20
  %50 = vmatprep.subr.mxu0 0.0
  %51 = vmatpush1.msra.mxu0 %v19
  %52 = vmatprep.subr.mxu0 0.0
  %53 = vmatpush1.msra.mxu0 %v18
  %54 = vmatprep.subr.mxu0 0.0
  %55 = vmatpush1.msra.mxu0 %v17
  %56 = vmatprep.subr.mxu0 0.0
  %57 = vmatpush1.msra.mxu0 %v16
  %58 = vmatprep.subr.mxu0 0.0
  %59 = vmatpush1.msra.mxu0 %v15
  %60 = vmatprep.subr.mxu0 0.0
  %61 = vmatpush2.msra.mxu0 0.0
  %62 = vmatprep.subr.mxu0 0.0
  %63 = vmatpush2.msra.mxu0 0.0
  %64 = vmatprep.subr.mxu0 0.0
  %65 = vmatpush2.msra.mxu0 0.0
  %66 = vmatprep.subr.mxu0 0.0
  %67 = vmatpush2.msra.mxu0 0.0
  %68 = vmatprep.subr.mxu0 0.0
  %69 = vmatpush2.msra.mxu0 0.0
  %70 = vmatprep.subr.mxu0 0.0
  %71 = vmatpush2.msra.mxu0 0.0
  %72 = vmatprep.subr.mxu0 0.0
  %73 = vmatpush2.msra.mxu0 0.0
  %74 = vmatprep.subr.mxu0 0.0
  %75 = vmatpush2.msra.mxu0 0.0
  %76 = vmatprep.subr.mxu0 0.0
  %77 = vmatpush2.msra.mxu0 0.0
  %78 = vmatprep.subr.mxu0 0.0
  %79 = vmatpush2.msra.mxu0 0.0
  %80 = vmatprep.subr.mxu0 0.0
  %81 = vmatpush2.msra.mxu0 0.0
  %82 = vmatprep.subr.mxu0 0.0
  %83 = vmatpush2.msra.mxu0 0.0
  %84 = vmatprep.subr.mxu0 0.0
  %85 = vmatpush2.msra.mxu0 0.0
  %86 = vmatprep.subr.mxu0 0.0
  %87 = vmatpush2.msra.mxu0 0.0
  %88 = vmatprep.subr.mxu0 0.0
  %89 = vmatpush2.msra.mxu0 0.0
  %90 = vmatprep.subr.mxu0 0.0
  %91 = vmatpush2.msra.mxu0 0.0
  %92 = vmatprep.mubr.f32.mxu0 0.0
  %93 = vmatmul.mubr.f32.gmra.mxu0 %v26
  %v94 = vpop.f32.mrf.mxu0
  %v95 = vadd.f32 0.0, %v94
  %v96 = vpop.f32.mrf.mxu0
  %97 = vdwg.mxu0
  %s98 = scalar_lea.vmem %s0, 72
  %v99 = vld [vmem:[%s98] sm:$0xff]
  %v100 = vld [vmem:[%s98 + $0x8] sm:$0xff]
  %v101 = vld [vmem:[%s98 + $0x10] sm:$0xff]
  %v102 = vld [vmem:[%s98 + $0x18] sm:$0xff]
  %v103 = vld [vmem:[%s98 + $0x20] sm:$0xff]
  %v104 = vld [vmem:[%s98 + $0x28] sm:$0xff]
  %v105 = vld [vmem:[%s98 + $0x30] sm:$0xff]
  %v106 = vld [vmem:[%s98 + $0x38] sm:$0xff]
  %v107 = vld [vmem:[%s98 + $0x40] sm:$0xff]
  %108 = vmatprep.subr.mxu0 0.0
  %109 = vmatpush1.msra.mxu0 0.0
  %110 = vmatprep.subr.mxu0 0.0
  %111 = vmatpush1.msra.mxu0 0.0
  %112 = vmatprep.subr.mxu0 0.0
  %113 = vmatpush1.msra.mxu0 0.0
  %114 = vmatprep.subr.mxu0 0.0
  %115 = vmatpush1.msra.mxu0 0.0
  %116 = vmatprep.subr.mxu0 0.0
  %117 = vmatpush1.msra.mxu0 0.0
  %118 = vmatprep.subr.mxu0 0.0
  %119 = vmatpush1.msra.mxu0 0.0
  %120 = vmatprep.subr.mxu0 0.0
  %121 = vmatpush1.msra.mxu0 0.0
  %122 = vmatprep.subr.mxu0 0.0
  %123 = vmatpush1.msra.mxu0 %v107
  %124 = vmatprep.subr.mxu0 0.0
  %125 = vmatpush1.msra.mxu0 %v106
  %126 = vmatprep.subr.mxu0 0.0
  %127 = vmatpush1.msra.mxu0 %v105
  %128 = vmatprep.subr.mxu0 0.0
  %129 = vmatpush1.msra.mxu0 %v104
  %130 = vmatprep.subr.mxu0 0.0
  %131 = vmatpush1.msra.mxu0 %v103
  %132 = vmatprep.subr.mxu0 0.0
  %133 = vmatpush1.msra.mxu0 %v102
  %134 = vmatprep.subr.mxu0 0.0
  %135 = vmatpush1.msra.mxu0 %v101
  %136 = vmatprep.subr.mxu0 0.0
  %137 = vmatpush1.msra.mxu0 %v100
  %138 = vmatprep.subr.mxu0 0.0
  %139 = vmatpush1.msra.mxu0 %v99
  %140 = vmatprep.subr.mxu0 0.0
  %141 = vmatpush2.msra.mxu0 0.0
  %142 = vmatprep.subr.mxu0 0.0
  %143 = vmatpush2.msra.mxu0 0.0
  %144 = vmatprep.subr.mxu0 0.0
  %145 = vmatpush2.msra.mxu0 0.0
  %146 = vmatprep.subr.mxu0 0.0
  %147 = vmatpush2.msra.mxu0 0.0
  %148 = vmatprep.subr.mxu0 0.0
  %149 = vmatpush2.msra.mxu0 0.0
  %150 = vmatprep.subr.mxu0 0.0
  %151 = vmatpush2.msra.mxu0 0.0
  %152 = vmatprep.subr.mxu0 0.0
  %153 = vmatpush2.msra.mxu0 0.0
  %154 = vmatprep.subr.mxu0 0.0
  %155 = vmatpush2.msra.mxu0 0.0
  %156 = vmatprep.subr.mxu0 0.0
  %157 = vmatpush2.msra.mxu0 0.0
  %158 = vmatprep.subr.mxu0 0.0
  %159 = vmatpush2.msra.mxu0 0.0
  %160 = vmatprep.subr.mxu0 0.0
  %161 = vmatpush2.msra.mxu0 0.0
  %162 = vmatprep.subr.mxu0 0.0
  %163 = vmatpush2.msra.mxu0 0.0
  %164 = vmatprep.subr.mxu0 0.0
  %165 = vmatpush2.msra.mxu0 0.0
  %166 = vmatprep.subr.mxu0 0.0
  %167 = vmatpush2.msra.mxu0 0.0
  %168 = vmatprep.subr.mxu0 0.0
  %169 = vmatpush2.msra.mxu0 0.0
  %170 = vmatprep.subr.mxu0 0.0
  %171 = vmatpush2.msra.mxu0 0.0
  %172 = vmatprep.mubr.f32.mxu0 0.0
  %173 = vmatmul.mubr.f32.gmra.mxu0 %v26
  %v174 = vpop.f32.mrf.mxu0
  %v175 = vadd.f32 0.0, %v174
  %v176 = vpop.f32.mrf.mxu0
  %177 = vdwg.mxu0
  %v178 = vmax.f32 %v95, %v175
  %s179 = scalar_lea.vmem %s0, 144
  %v180 = vld [vmem:[%s179] sm:$0xff]
  %v181 = vld [vmem:[%s179 + $0x8] sm:$0xff]
  %v182 = vld [vmem:[%s179 + $0x10] sm:$0xff]
  %v183 = vld [vmem:[%s179 + $0x18] sm:$0xff]
  %v184 = vld [vmem:[%s179 + $0x20] sm:$0xff]
  %v185 = vld [vmem:[%s179 + $0x28] sm:$0xff]
  %v186 = vld [vmem:[%s179 + $0x30] sm:$0xff]
  %v187 = vld [vmem:[%s179 + $0x38] sm:$0xff]
  %v188 = vld [vmem:[%s179 + $0x40] sm:$0xff]
  %189 = vmatprep.subr.mxu0 0.0
  %190 = vmatpush1.msra.mxu0 0.0
  %191 = vmatprep.subr.mxu0 0.0
  %192 = vmatpush1.msra.mxu0 0.0
  %193 = vmatprep.subr.mxu0 0.0
  %194 = vmatpush1.msra.mxu0 0.0
  %195 = vmatprep.subr.mxu0 0.0
  %196 = vmatpush1.msra.mxu0 0.0
  %197 = vmatprep.subr.mxu0 0.0
  %198 = vmatpush1.msra.mxu0 0.0
  %199 = vmatprep.subr.mxu0 0.0
  %200 = vmatpush1.msra.mxu0 0.0
  %201 = vmatprep.subr.mxu0 0.0
  %202 = vmatpush1.msra.mxu0 0.0
  %203 = vmatprep.subr.mxu0 0.0
  %204 = vmatpush1.msra.mxu0 %v188
  %205 = vmatprep.subr.mxu0 0.0
  %206 = vmatpush1.msra.mxu0 %v187
  %207 = vmatprep.subr.mxu0 0.0
  %208 = vmatpush1.msra.mxu0 %v186
  %209 = vmatprep.subr.mxu0 0.0
  %210 = vmatpush1.msra.mxu0 %v185
  %211 = vmatprep.subr.mxu0 0.0
  %212 = vmatpush1.msra.mxu0 %v184
  %213 = vmatprep.subr.mxu0 0.0
  %214 = vmatpush1.msra.mxu0 %v183
  %215 = vmatprep.subr.mxu0 0.0
  %216 = vmatpush1.msra.mxu0 %v182
  %217 = vmatprep.subr.mxu0 0.0
  %218 = vmatpush1.msra.mxu0 %v181
  %219 = vmatprep.subr.mxu0 0.0
  %220 = vmatpush1.msra.mxu0 %v180
  %221 = vmatprep.subr.mxu0 0.0
  %222 = vmatpush2.msra.mxu0 0.0
  %223 = vmatprep.subr.mxu0 0.0
  %224 = vmatpush2.msra.mxu0 0.0
  %225 = vmatprep.subr.mxu0 0.0
  %226 = vmatpush2.msra.mxu0 0.0
  %227 = vmatprep.subr.mxu0 0.0
  %228 = vmatpush2.msra.mxu0 0.0
  %229 = vmatprep.subr.mxu0 0.0
  %230 = vmatpush2.msra.mxu0 0.0
  %231 = vmatprep.subr.mxu0 0.0
  %232 = vmatpush2.msra.mxu0 0.0
  %233 = vmatprep.subr.mxu0 0.0
  %234 = vmatpush2.msra.mxu0 0.0
  %235 = vmatprep.subr.mxu0 0.0
  %236 = vmatpush2.msra.mxu0 0.0
  %237 = vmatprep.subr.mxu0 0.0
  %238 = vmatpush2.msra.mxu0 0.0
  %239 = vmatprep.subr.mxu0 0.0
  %240 = vmatpush2.msra.mxu0 0.0
  %241 = vmatprep.subr.mxu0 0.0
  %242 = vmatpush2.msra.mxu0 0.0
  %243 = vmatprep.subr.mxu0 0.0
  %244 = vmatpush2.msra.mxu0 0.0
  %245 = vmatprep.subr.mxu0 0.0
  %246 = vmatpush2.msra.mxu0 0.0
  %247 = vmatprep.subr.mxu0 0.0
  %248 = vmatpush2.msra.mxu0 0.0
  %249 = vmatprep.subr.mxu0 0.0
  %250 = vmatpush2.msra.mxu0 0.0
  %251 = vmatprep.subr.mxu0 0.0
  %252 = vmatpush2.msra.mxu0 0.0
  %253 = vmatprep.mubr.f32.mxu0 0.0
  %254 = vmatmul.mubr.f32.gmra.mxu0 %v26
  %v255 = vpop.f32.mrf.mxu0
  %v256 = vadd.f32 0.0, %v255
  %v257 = vpop.f32.mrf.mxu0
  %258 = vdwg.mxu0
  %v259 = vmax.f32 %v178, %v256
  %s260 = scalar_lea.vmem %s0, 216
  %v261 = vld [vmem:[%s260] sm:$0xff]
  %v262 = vld [vmem:[%s260 + $0x8] sm:$0xff]
  %v263 = vld [vmem:[%s260 + $0x10] sm:$0xff]
  %v264 = vld [vmem:[%s260 + $0x18] sm:$0xff]
  %v265 = vld [vmem:[%s260 + $0x20] sm:$0xff]
  %v266 = vld [vmem:[%s260 + $0x28] sm:$0xff]
  %v267 = vld [vmem:[%s260 + $0x30] sm:$0xff]
  %v268 = vld [vmem:[%s260 + $0x38] sm:$0xff]
  %v269 = vld [vmem:[%s260 + $0x40] sm:$0xff]
  %270 = vmatprep.subr.mxu0 0.0
  %271 = vmatpush1.msra.mxu0 0.0
  %272 = vmatprep.subr.mxu0 0.0
  %273 = vmatpush1.msra.mxu0 0.0
  %274 = vmatprep.subr.mxu0 0.0
  %275 = vmatpush1.msra.mxu0 0.0
  %276 = vmatprep.subr.mxu0 0.0
  %277 = vmatpush1.msra.mxu0 0.0
  %278 = vmatprep.subr.mxu0 0.0
  %279 = vmatpush1.msra.mxu0 0.0
  %280 = vmatprep.subr.mxu0 0.0
  %281 = vmatpush1.msra.mxu0 0.0
  %282 = vmatprep.subr.mxu0 0.0
  %283 = vmatpush1.msra.mxu0 0.0
  %284 = vmatprep.subr.mxu0 0.0
  %285 = vmatpush1.msra.mxu0 %v269
  %286 = vmatprep.subr.mxu0 0.0
  %287 = vmatpush1.msra.mxu0 %v268
  %288 = vmatprep.subr.mxu0 0.0
  %289 = vmatpush1.msra.mxu0 %v267
  %290 = vmatprep.subr.mxu0 0.0
  %291 = vmatpush1.msra.mxu0 %v266
  %292 = vmatprep.subr.mxu0 0.0
  %293 = vmatpush1.msra.mxu0 %v265
  %294 = vmatprep.subr.mxu0 0.0
  %295 = vmatpush1.msra.mxu0 %v264
  %296 = vmatprep.subr.mxu0 0.0
  %297 = vmatpush1.msra.mxu0 %v263
  %298 = vmatprep.subr.mxu0 0.0
  %299 = vmatpush1.msra.mxu0 %v262
  %300 = vmatprep.subr.mxu0 0.0
  %301 = vmatpush1.msra.mxu0 %v261
  %302 = vmatprep.subr.mxu0 0.0
  %303 = vmatpush2.msra.mxu0 0.0
  %304 = vmatprep.subr.mxu0 0.0
  %305 = vmatpush2.msra.mxu0 0.0
  %306 = vmatprep.subr.mxu0 0.0
  %307 = vmatpush2.msra.mxu0 0.0
  %308 = vmatprep.subr.mxu0 0.0
  %309 = vmatpush2.msra.mxu0 0.0
  %310 = vmatprep.subr.mxu0 0.0
  %311 = vmatpush2.msra.mxu0 0.0
  %312 = vmatprep.subr.mxu0 0.0
  %313 = vmatpush2.msra.mxu0 0.0
  %314 = vmatprep.subr.mxu0 0.0
  %315 = vmatpush2.msra.mxu0 0.0
  %316 = vmatprep.subr.mxu0 0.0
  %317 = vmatpush2.msra.mxu0 0.0
  %318 = vmatprep.subr.mxu0 0.0
  %319 = vmatpush2.msra.mxu0 0.0
  %320 = vmatprep.subr.mxu0 0.0
  %321 = vmatpush2.msra.mxu0 0.0
  %322 = vmatprep.subr.mxu0 0.0
  %323 = vmatpush2.msra.mxu0 0.0
  %324 = vmatprep.subr.mxu0 0.0
  %325 = vmatpush2.msra.mxu0 0.0
  %326 = vmatprep.subr.mxu0 0.0
  %327 = vmatpush2.msra.mxu0 0.0
  %328 = vmatprep.subr.mxu0 0.0
  %329 = vmatpush2.msra.mxu0 0.0
  %330 = vmatprep.subr.mxu0 0.0
  %331 = vmatpush2.msra.mxu0 0.0
  %332 = vmatprep.subr.mxu0 0.0
  %333 = vmatpush2.msra.mxu0 0.0
  %334 = vmatprep.mubr.f32.mxu0 0.0
  %335 = vmatmul.mubr.f32.gmra.mxu0 %v26
  %v336 = vpop.f32.mrf.mxu0
  %v337 = vadd.f32 0.0, %v336
  %v338 = vpop.f32.mrf.mxu0
  %339 = vdwg.mxu0
  %v340 = vmax.f32 %v259, %v337
  %v341 = vld [vmem:[%s2] sm:$0xff]
  %343 = vset.pattern.permute.xlu0 0
  %344 = vperm.xlu0 %343, %v341
  %v345 = vpop.permute.xlu0 %344
  %v347 = vadd.f32 %v340, %v345
  %v348 = vmax.f32 %v347, 0.0
  %349 = vst [vmem:[%s3] sm:$0xff] %v348
  // Predicated region
  $region14: #{gh_cnn_forward.17} parent=0 // pred_check
    _
  $region15: #{gh_cnn_forward.17} parent=0 // pred_check_branch
    %351 = sbr.rel (0) target = $region17
  $region16: #{gh_cnn_forward.17} parent=0 // pred_region
    _
  $region17: #{gh_cnn_forward.17} parent=0 // pred_fallthru
    _
  // Predicated region
  $region18: #{gh_cnn_forward.17} parent=0 // pred_check
    _
  $region19: #{gh_cnn_forward.17} parent=0 // pred_check_branch
    %353 = sbr.rel (0) target = $region21
  $region20: #{gh_cnn_forward.17} parent=0 // pred_region
    _
  $region21: #{gh_cnn_forward.17} parent=0 // pred_fallthru
    _

// kernel: gh_cnn_forward.18
$region0: #{gh_cnn_forward.18}
  #allocation0 [shape = 'u32[]', space=smem, size = 0x4, offset = 0x4, fixed_abs, tag = 'smem constant byte address 0x4 - core index']
  #allocation1 [shape = 'u32[144,128]{1,0:T(1,128)}', space=vmem, size = 0x12000, scoped, tag = 'internal scratch']
  %s0 = inlined_call_operand.vmem [shape: f32[72,128], index: 0, kind: input, shape index: {}]
  %s1 = inlined_call_operand.vmem [shape: f32[16,72], index: 1, kind: input, shape index: {}]
  %s2 = inlined_call_operand.vmem [shape: f32[16,1], index: 2, kind: input, shape index: {}]
  %s3 = inlined_call_operand.vmem [shape: f32[16,128], index: 3, kind: output, shape index: {}]
  %s4 = sld [smem:[#allocation0]]
  $region22: #{gh_cnn_forward.18} parent=0
    _
  %s6 = ssub.s32 1, %s4
  %s7 = scalar_select 0, %s6, %s4
  // Predicated region
  $region2: #{gh_cnn_forward.18} parent=0 // pred_check
    _
  $region3: #{gh_cnn_forward.18} parent=0 // pred_check_branch
    %9 = sbr.rel (0) target = $region5
  $region4: #{gh_cnn_forward.18} parent=0 // pred_region
    _
  $region5: #{gh_cnn_forward.18} parent=0 // pred_fallthru
    _
  // Predicated region
  $region6: #{gh_cnn_forward.18} parent=0 // pred_check
    _
  $region7: #{gh_cnn_forward.18} parent=0 // pred_check_branch
    %11 = sbr.rel (0) target = $region9
  $region8: #{gh_cnn_forward.18} parent=0 // pred_region
    _
  $region9: #{gh_cnn_forward.18} parent=0 // pred_fallthru
    _
  // Predicated region
  $region10: #{gh_cnn_forward.18} parent=0 // pred_check
    _
  $region11: #{gh_cnn_forward.18} parent=0 // pred_check_branch
    %13 = sbr.rel (0) target = $region13
  $region12: #{gh_cnn_forward.18} parent=0 // pred_region
    _
  $region13: #{gh_cnn_forward.18} parent=0 // pred_fallthru
    _
  %v14 = vld [vmem:[%s1] sm:$0xff]
  %v15 = vld [vmem:[%s1 + $0x8] sm:$0xff]
  %v16 = vld [vmem:[%s0] sm:$0xff]
  %v17 = vld [vmem:[%s0 + $0x8] sm:$0xff]
  %v18 = vld [vmem:[%s0 + $0x10] sm:$0xff]
  %v19 = vld [vmem:[%s0 + $0x18] sm:$0xff]
  %v20 = vld [vmem:[%s0 + $0x20] sm:$0xff]
  %v21 = vld [vmem:[%s0 + $0x28] sm:$0xff]
  %v22 = vld [vmem:[%s0 + $0x30] sm:$0xff]
  %v23 = vld [vmem:[%s0 + $0x38] sm:$0xff]
  %v24 = vld [vmem:[%s0 + $0x40] sm:$0xff]
  %v25 = vld [vmem:[%s2] sm:$0xff]
  %v26 = vld [vmem:[%s2 + $0x8] sm:$0xff]
  %28 = vset.pattern.permute.xlu0 0
  %29 = vperm.xlu0 %28, %v25
  %v30 = vpop.permute.xlu0 %29
  %33 = vset.pattern.permute.xlu0 0
  %34 = vperm.xlu0 %33, %v26
  %v35 = vpop.permute.xlu0 %34
  %vm37 = vcmask 588800
  %v39 = vsel %vm37, %v14, 0
  %v42 = vsel %vm37, %v15, 0
  %44 = vmatprep.subr.mxu0 0.0
  %45 = vmatpush1.msra.mxu0 0.0
  %46 = vmatprep.subr.mxu0 0.0
  %47 = vmatpush1.msra.mxu0 0.0
  %48 = vmatprep.subr.mxu0 0.0
  %49 = vmatpush1.msra.mxu0 0.0
  %50 = vmatprep.subr.mxu0 0.0
  %51 = vmatpush1.msra.mxu0 0.0
  %52 = vmatprep.subr.mxu0 0.0
  %53 = vmatpush1.msra.mxu0 0.0
  %54 = vmatprep.subr.mxu0 0.0
  %55 = vmatpush1.msra.mxu0 0.0
  %56 = vmatprep.subr.mxu0 0.0
  %57 = vmatpush1.msra.mxu0 0.0
  %58 = vmatprep.subr.mxu0 0.0
  %59 = vmatpush1.msra.mxu0 %v24
  %60 = vmatprep.subr.mxu0 0.0
  %61 = vmatpush1.msra.mxu0 %v23
  %62 = vmatprep.subr.mxu0 0.0
  %63 = vmatpush1.msra.mxu0 %v22
  %64 = vmatprep.subr.mxu0 0.0
  %65 = vmatpush1.msra.mxu0 %v21
  %66 = vmatprep.subr.mxu0 0.0
  %67 = vmatpush1.msra.mxu0 %v20
  %68 = vmatprep.subr.mxu0 0.0
  %69 = vmatpush1.msra.mxu0 %v19
  %70 = vmatprep.subr.mxu0 0.0
  %71 = vmatpush1.msra.mxu0 %v18
  %72 = vmatprep.subr.mxu0 0.0
  %73 = vmatpush1.msra.mxu0 %v17
  %74 = vmatprep.subr.mxu0 0.0
  %75 = vmatpush1.msra.mxu0 %v16
  %76 = vmatprep.subr.mxu0 0.0
  %77 = vmatpush2.msra.mxu0 0.0
  %78 = vmatprep.subr.mxu0 0.0
  %79 = vmatpush2.msra.mxu0 0.0
  %80 = vmatprep.subr.mxu0 0.0
  %81 = vmatpush2.msra.mxu0 0.0
  %82 = vmatprep.subr.mxu0 0.0
  %83 = vmatpush2.msra.mxu0 0.0
  %84 = vmatprep.subr.mxu0 0.0
  %85 = vmatpush2.msra.mxu0 0.0
  %86 = vmatprep.subr.mxu0 0.0
  %87 = vmatpush2.msra.mxu0 0.0
  %88 = vmatprep.subr.mxu0 0.0
  %89 = vmatpush2.msra.mxu0 0.0
  %90 = vmatprep.subr.mxu0 0.0
  %91 = vmatpush2.msra.mxu0 0.0
  %92 = vmatprep.subr.mxu0 0.0
  %93 = vmatpush2.msra.mxu0 0.0
  %94 = vmatprep.subr.mxu0 0.0
  %95 = vmatpush2.msra.mxu0 0.0
  %96 = vmatprep.subr.mxu0 0.0
  %97 = vmatpush2.msra.mxu0 0.0
  %98 = vmatprep.subr.mxu0 0.0
  %99 = vmatpush2.msra.mxu0 0.0
  %100 = vmatprep.subr.mxu0 0.0
  %101 = vmatpush2.msra.mxu0 0.0
  %102 = vmatprep.subr.mxu0 0.0
  %103 = vmatpush2.msra.mxu0 0.0
  %104 = vmatprep.subr.mxu0 0.0
  %105 = vmatpush2.msra.mxu0 0.0
  %106 = vmatprep.subr.mxu0 0.0
  %107 = vmatpush2.msra.mxu0 0.0
  %108 = vmatprep.mubr.f32.mxu0 0.0
  %109 = vmatmul.mubr.f32.gmra.mxu0 %v39
  %v110 = vpop.f32.mrf.mxu0
  %v111 = vadd.f32 %v30, %v110
  %v112 = vpop.f32.mrf.mxu0
  %113 = vmatprep.mubr.f32.mxu0 0.0
  %114 = vmatmul.mubr.f32.gmra.mxu0 %v42
  %v115 = vpop.f32.mrf.mxu0
  %v116 = vadd.f32 %v35, %v115
  %v117 = vpop.f32.mrf.mxu0
  %118 = vdwg.mxu0
  %v119 = vmax.f32 %v111, 0.0
  %v120 = vmax.f32 %v116, 0.0
  %121 = vst [vmem:[%s3] sm:$0xff] %v119
  %122 = vst [vmem:[%s3 + $0x8] sm:$0xff] %v120
  // Predicated region
  $region14: #{gh_cnn_forward.18} parent=0 // pred_check
    _
  $region15: #{gh_cnn_forward.18} parent=0 // pred_check_branch
    %124 = sbr.rel (0) target = $region17
  $region16: #{gh_cnn_forward.18} parent=0 // pred_region
    _
  $region17: #{gh_cnn_forward.18} parent=0 // pred_fallthru
    _
  // Predicated region
  $region18: #{gh_cnn_forward.18} parent=0 // pred_check
    _
  $region19: #{gh_cnn_forward.18} parent=0 // pred_check_branch
    %126 = sbr.rel (0) target = $region21
  $region20: #{gh_cnn_forward.18} parent=0 // pred_region
    _
  $region21: #{gh_cnn_forward.18} parent=0 // pred_fallthru
    _

// kernel: gh_cnn_forward.19
$region0: #{gh_cnn_forward.19}
  #allocation0 [shape = 'u32[]', space=smem, size = 0x4, offset = 0x4, fixed_abs, tag = 'smem constant byte address 0x4 - core index']
  #allocation1 [shape = 'u32[144,128]{1,0:T(1,128)}', space=vmem, size = 0x12000, scoped, tag = 'internal scratch']
  %s0 = inlined_call_operand.vmem [shape: f32[144,128], index: 0, kind: input, shape index: {}]
  %s1 = inlined_call_operand.vmem [shape: f32[16,144], index: 1, kind: input, shape index: {}]
  %s2 = inlined_call_operand.vmem [shape: f32[16,1], index: 2, kind: input, shape index: {}]
  %s3 = inlined_call_operand.vmem [shape: f32[16,128], index: 3, kind: output, shape index: {}]
  %s4 = sld [smem:[#allocation0]]
  $region22: #{gh_cnn_forward.19} parent=0
    _
  %s6 = ssub.s32 1, %s4
  %s7 = scalar_select 0, %s6, %s4
  // Predicated region
  $region2: #{gh_cnn_forward.19} parent=0 // pred_check
    _
  $region3: #{gh_cnn_forward.19} parent=0 // pred_check_branch
    %9 = sbr.rel (0) target = $region5
  $region4: #{gh_cnn_forward.19} parent=0 // pred_region
    _
  $region5: #{gh_cnn_forward.19} parent=0 // pred_fallthru
    _
  // Predicated region
  $region6: #{gh_cnn_forward.19} parent=0 // pred_check
    _
  $region7: #{gh_cnn_forward.19} parent=0 // pred_check_branch
    %11 = sbr.rel (0) target = $region9
  $region8: #{gh_cnn_forward.19} parent=0 // pred_region
    _
  $region9: #{gh_cnn_forward.19} parent=0 // pred_fallthru
    _
  // Predicated region
  $region10: #{gh_cnn_forward.19} parent=0 // pred_check
    _
  $region11: #{gh_cnn_forward.19} parent=0 // pred_check_branch
    %13 = sbr.rel (0) target = $region13
  $region12: #{gh_cnn_forward.19} parent=0 // pred_region
    _
  $region13: #{gh_cnn_forward.19} parent=0 // pred_fallthru
    _
  %v14 = vld [vmem:[%s1] sm:$0xff]
  %v15 = vld [vmem:[%s1 + $0x8] sm:$0xff]
  %v16 = vld [vmem:[%s1 + $0x10] sm:$0xff]
  %v17 = vld [vmem:[%s1 + $0x18] sm:$0xff]
  %v18 = vld [vmem:[%s0] sm:$0xff]
  %v19 = vld [vmem:[%s0 + $0x8] sm:$0xff]
  %v20 = vld [vmem:[%s0 + $0x10] sm:$0xff]
  %v21 = vld [vmem:[%s0 + $0x18] sm:$0xff]
  %v22 = vld [vmem:[%s0 + $0x20] sm:$0xff]
  %v23 = vld [vmem:[%s0 + $0x28] sm:$0xff]
  %v24 = vld [vmem:[%s0 + $0x30] sm:$0xff]
  %v25 = vld [vmem:[%s0 + $0x38] sm:$0xff]
  %v26 = vld [vmem:[%s0 + $0x40] sm:$0xff]
  %v27 = vld [vmem:[%s0 + $0x48] sm:$0xff]
  %v28 = vld [vmem:[%s0 + $0x50] sm:$0xff]
  %v29 = vld [vmem:[%s0 + $0x58] sm:$0xff]
  %v30 = vld [vmem:[%s0 + $0x60] sm:$0xff]
  %v31 = vld [vmem:[%s0 + $0x68] sm:$0xff]
  %v32 = vld [vmem:[%s0 + $0x70] sm:$0xff]
  %v33 = vld [vmem:[%s0 + $0x78] sm:$0xff]
  %v34 = vld [vmem:[%s0 + $0x80] sm:$0xff]
  %v35 = vld [vmem:[%s0 + $0x88] sm:$0xff]
  %v36 = vld [vmem:[%s2] sm:$0xff]
  %v37 = vld [vmem:[%s2 + $0x8] sm:$0xff]
  %39 = vset.pattern.permute.xlu0 0
  %40 = vperm.xlu0 %39, %v36
  %v41 = vpop.permute.xlu0 %40
  %44 = vset.pattern.permute.xlu0 0
  %45 = vperm.xlu0 %44, %v37
  %v46 = vpop.permute.xlu0 %45
  %vm48 = vcmask 130048
  %v50 = vsel %vm48, %v15, 0
  %v53 = vsel %vm48, %v17, 0
  %55 = vmatprep.subr.mxu0 0.0
  %56 = vmatpush1.msra.mxu0 %v33
  %57 = vmatprep.subr.mxu0 0.0
  %58 = vmatpush1.msra.mxu0 %v32
  %59 = vmatprep.subr.mxu0 0.0
  %60 = vmatpush1.msra.mxu0 %v31
  %61 = vmatprep.subr.mxu0 0.0
  %62 = vmatpush1.msra.mxu0 %v30
  %63 = vmatprep.subr.mxu0 0.0
  %64 = vmatpush1.msra.mxu0 %v29
  %65 = vmatprep.subr.mxu0 0.0
  %66 = vmatpush1.msra.mxu0 %v28
  %67 = vmatprep.subr.mxu0 0.0
  %68 = vmatpush1.msra.mxu0 %v27
  %69 = vmatprep.subr.mxu0 0.0
  %70 = vmatpush1.msra.mxu0 %v26
  %71 = vmatprep.subr.mxu0 0.0
  %72 = vmatpush1.msra.mxu0 %v25
  %73 = vmatprep.subr.mxu0 0.0
  %74 = vmatpush1.msra.mxu0 %v24
  %75 = vmatprep.subr.mxu0 0.0
  %76 = vmatpush1.msra.mxu0 %v23
  %77 = vmatprep.subr.mxu0 0.0
  %78 = vmatpush1.msra.mxu0 %v22
  %79 = vmatprep.subr.mxu0 0.0
  %80 = vmatpush1.msra.mxu0 %v21
  %81 = vmatprep.subr.mxu0 0.0
  %82 = vmatpush1.msra.mxu0 %v20
  %83 = vmatprep.subr.mxu0 0.0
  %84 = vmatpush1.msra.mxu0 %v19
  %85 = vmatprep.subr.mxu0 0.0
  %86 = vmatpush1.msra.mxu0 %v18
  %87 = vmatprep.subr.mxu0 0.0
  %88 = vmatpush2.msra.mxu0 0.0
  %89 = vmatprep.subr.mxu0 0.0
  %90 = vmatpush2.msra.mxu0 0.0
  %91 = vmatprep.subr.mxu0 0.0
  %92 = vmatpush2.msra.mxu0 0.0
  %93 = vmatprep.subr.mxu0 0.0
  %94 = vmatpush2.msra.mxu0 0.0
  %95 = vmatprep.subr.mxu0 0.0
  %96 = vmatpush2.msra.mxu0 0.0
  %97 = vmatprep.subr.mxu0 0.0
  %98 = vmatpush2.msra.mxu0 0.0
  %99 = vmatprep.subr.mxu0 0.0
  %100 = vmatpush2.msra.mxu0 0.0
  %101 = vmatprep.subr.mxu0 0.0
  %102 = vmatpush2.msra.mxu0 0.0
  %103 = vmatprep.subr.mxu0 0.0
  %104 = vmatpush2.msra.mxu0 0.0
  %105 = vmatprep.subr.mxu0 0.0
  %106 = vmatpush2.msra.mxu0 0.0
  %107 = vmatprep.subr.mxu0 0.0
  %108 = vmatpush2.msra.mxu0 0.0
  %109 = vmatprep.subr.mxu0 0.0
  %110 = vmatpush2.msra.mxu0 0.0
  %111 = vmatprep.subr.mxu0 0.0
  %112 = vmatpush2.msra.mxu0 0.0
  %113 = vmatprep.subr.mxu0 0.0
  %114 = vmatpush2.msra.mxu0 0.0
  %115 = vmatprep.subr.mxu0 0.0
  %116 = vmatpush2.msra.mxu0 %v35
  %117 = vmatprep.subr.mxu0 0.0
  %118 = vmatpush2.msra.mxu0 %v34
  %119 = vmatprep.mubr.f32.mxu0 %v50
  %120 = vmatmul.mubr.f32.gmra.mxu0 %v14
  %v121 = vpop.f32.mrf.mxu0
  %v122 = vadd.f32 %v41, %v121
  %v123 = vpop.f32.mrf.mxu0
  %124 = vmatprep.mubr.f32.mxu0 %v53
  %125 = vmatmul.mubr.f32.gmra.mxu0 %v16
  %v126 = vpop.f32.mrf.mxu0
  %v127 = vadd.f32 %v46, %v126
  %v128 = vpop.f32.mrf.mxu0
  %129 = vdwg.mxu0
  %v130 = vmax.f32 %v122, 0.0
  %v131 = vmax.f32 %v127, 0.0
  %132 = vst [vmem:[%s3] sm:$0xff] %v130
  %133 = vst [vmem:[%s3 + $0x8] sm:$0xff] %v131
  // Predicated region
  $region14: #{gh_cnn_forward.19} parent=0 // pred_check
    _
  $region15: #{gh_cnn_forward.19} parent=0 // pred_check_branch
    %135 = sbr.rel (0) target = $region17
  $region16: #{gh_cnn_forward.19} parent=0 // pred_region
    _
  $region17: #{gh_cnn_forward.19} parent=0 // pred_fallthru
    _
  // Predicated region
  $region18: #{gh_cnn_forward.19} parent=0 // pred_check
    _
  $region19: #{gh_cnn_forward.19} parent=0 // pred_check_branch
    %137 = sbr.rel (0) target = $region21
  $region20: #{gh_cnn_forward.19} parent=0 // pred_region
    _
  $region21: #{gh_cnn_forward.19} parent=0 // pred_fallthru
    _

// kernel: gh_cnn_forward.20
$region0: #{gh_cnn_forward.20}
  #allocation0 [shape = 'u32[]', space=smem, size = 0x4, offset = 0x4, fixed_abs, tag = 'smem constant byte address 0x4 - core index']
  #allocation1 [shape = 'u32[144,128]{1,0:T(1,128)}', space=vmem, size = 0x12000, scoped, tag = 'internal scratch']
  %s0 = inlined_call_operand.vmem [shape: f32[4,144,32], index: 0, kind: input, shape index: {}]
  %s1 = inlined_call_operand.vmem [shape: f32[16,144], index: 1, kind: input, shape index: {}]
  %s2 = inlined_call_operand.vmem [shape: f32[16,1], index: 2, kind: input, shape index: {}]
  %s3 = inlined_call_operand.vmem [shape: f32[16,32], index: 3, kind: output, shape index: {}]
  %s4 = sld [smem:[#allocation0]]
  $region22: #{gh_cnn_forward.20} parent=0
    _
  %s6 = ssub.s32 1, %s4
  %s7 = scalar_select 0, %s6, %s4
  // Predicated region
  $region2: #{gh_cnn_forward.20} parent=0 // pred_check
    _
  $region3: #{gh_cnn_forward.20} parent=0 // pred_check_branch
    %9 = sbr.rel (0) target = $region5
  $region4: #{gh_cnn_forward.20} parent=0 // pred_region
    _
  $region5: #{gh_cnn_forward.20} parent=0 // pred_fallthru
    _
  // Predicated region
  $region6: #{gh_cnn_forward.20} parent=0 // pred_check
    _
  $region7: #{gh_cnn_forward.20} parent=0 // pred_check_branch
    %11 = sbr.rel (0) target = $region9
  $region8: #{gh_cnn_forward.20} parent=0 // pred_region
    _
  $region9: #{gh_cnn_forward.20} parent=0 // pred_fallthru
    _
  // Predicated region
  $region10: #{gh_cnn_forward.20} parent=0 // pred_check
    _
  $region11: #{gh_cnn_forward.20} parent=0 // pred_check_branch
    %13 = sbr.rel (0) target = $region13
  $region12: #{gh_cnn_forward.20} parent=0 // pred_region
    _
  $region13: #{gh_cnn_forward.20} parent=0 // pred_fallthru
    _
  %v14 = vld [vmem:[%s1] sm:$0xff]
  %v15 = vld [vmem:[%s1 + $0x8] sm:$0xff]
  %v16 = vld [vmem:[%s1 + $0x10] sm:$0xff]
  %v17 = vld [vmem:[%s1 + $0x18] sm:$0xff]
  %v18 = vld [vmem:[%s0] sm:$0xff]
  %v19 = vld [vmem:[%s0 + $0x8] sm:$0xff]
  %v20 = vld [vmem:[%s0 + $0x10] sm:$0xff]
  %v21 = vld [vmem:[%s0 + $0x18] sm:$0xff]
  %v22 = vld [vmem:[%s0 + $0x20] sm:$0xff]
  %v23 = vld [vmem:[%s0 + $0x28] sm:$0xff]
  %v24 = vld [vmem:[%s0 + $0x30] sm:$0xff]
  %v25 = vld [vmem:[%s0 + $0x38] sm:$0xff]
  %v26 = vld [vmem:[%s0 + $0x40] sm:$0xff]
  %v27 = vld [vmem:[%s0 + $0x48] sm:$0xff]
  %v28 = vld [vmem:[%s0 + $0x50] sm:$0xff]
  %v29 = vld [vmem:[%s0 + $0x58] sm:$0xff]
  %v30 = vld [vmem:[%s0 + $0x60] sm:$0xff]
  %v31 = vld [vmem:[%s0 + $0x68] sm:$0xff]
  %v32 = vld [vmem:[%s0 + $0x70] sm:$0xff]
  %v33 = vld [vmem:[%s0 + $0x78] sm:$0xff]
  %v34 = vld [vmem:[%s0 + $0x80] sm:$0xff]
  %v35 = vld [vmem:[%s0 + $0x88] sm:$0xff]
  %vm36 = vcmask 130048
  %v38 = vsel %vm36, %v15, 0
  %v41 = vsel %vm36, %v17, 0
  %43 = vmatprep.subr.mxu0 0.0
  %44 = vmatpush1.msra.mxu0 %v33
  %45 = vmatprep.subr.mxu0 0.0
  %46 = vmatpush1.msra.mxu0 %v32
  %47 = vmatprep.subr.mxu0 0.0
  %48 = vmatpush1.msra.mxu0 %v31
  %49 = vmatprep.subr.mxu0 0.0
  %50 = vmatpush1.msra.mxu0 %v30
  %51 = vmatprep.subr.mxu0 0.0
  %52 = vmatpush1.msra.mxu0 %v29
  %53 = vmatprep.subr.mxu0 0.0
  %54 = vmatpush1.msra.mxu0 %v28
  %55 = vmatprep.subr.mxu0 0.0
  %56 = vmatpush1.msra.mxu0 %v27
  %57 = vmatprep.subr.mxu0 0.0
  %58 = vmatpush1.msra.mxu0 %v26
  %59 = vmatprep.subr.mxu0 0.0
  %60 = vmatpush1.msra.mxu0 %v25
  %61 = vmatprep.subr.mxu0 0.0
  %62 = vmatpush1.msra.mxu0 %v24
  %63 = vmatprep.subr.mxu0 0.0
  %64 = vmatpush1.msra.mxu0 %v23
  %65 = vmatprep.subr.mxu0 0.0
  %66 = vmatpush1.msra.mxu0 %v22
  %67 = vmatprep.subr.mxu0 0.0
  %68 = vmatpush1.msra.mxu0 %v21
  %69 = vmatprep.subr.mxu0 0.0
  %70 = vmatpush1.msra.mxu0 %v20
  %71 = vmatprep.subr.mxu0 0.0
  %72 = vmatpush1.msra.mxu0 %v19
  %73 = vmatprep.subr.mxu0 0.0
  %74 = vmatpush1.msra.mxu0 %v18
  %75 = vmatprep.subr.mxu0 0.0
  %76 = vmatpush2.msra.mxu0 0.0
  %77 = vmatprep.subr.mxu0 0.0
  %78 = vmatpush2.msra.mxu0 0.0
  %79 = vmatprep.subr.mxu0 0.0
  %80 = vmatpush2.msra.mxu0 0.0
  %81 = vmatprep.subr.mxu0 0.0
  %82 = vmatpush2.msra.mxu0 0.0
  %83 = vmatprep.subr.mxu0 0.0
  %84 = vmatpush2.msra.mxu0 0.0
  %85 = vmatprep.subr.mxu0 0.0
  %86 = vmatpush2.msra.mxu0 0.0
  %87 = vmatprep.subr.mxu0 0.0
  %88 = vmatpush2.msra.mxu0 0.0
  %89 = vmatprep.subr.mxu0 0.0
  %90 = vmatpush2.msra.mxu0 0.0
  %91 = vmatprep.subr.mxu0 0.0
  %92 = vmatpush2.msra.mxu0 0.0
  %93 = vmatprep.subr.mxu0 0.0
  %94 = vmatpush2.msra.mxu0 0.0
  %95 = vmatprep.subr.mxu0 0.0
  %96 = vmatpush2.msra.mxu0 0.0
  %97 = vmatprep.subr.mxu0 0.0
  %98 = vmatpush2.msra.mxu0 0.0
  %99 = vmatprep.subr.mxu0 0.0
  %100 = vmatpush2.msra.mxu0 0.0
  %101 = vmatprep.subr.mxu0 0.0
  %102 = vmatpush2.msra.mxu0 0.0
  %103 = vmatprep.subr.mxu0 0.0
  %104 = vmatpush2.msra.mxu0 %v35
  %105 = vmatprep.subr.mxu0 0.0
  %106 = vmatpush2.msra.mxu0 %v34
  %107 = vmatprep.mubr.f32.mxu0 %v38
  %108 = vmatmul.mubr.f32.gmra.mxu0 %v14
  %v109 = vpop.f32.mrf.mxu0
  %v110 = vadd.f32 0.0, %v109
  %v111 = vpop.f32.mrf.mxu0
  %112 = vmatprep.mubr.f32.mxu0 %v41
  %113 = vmatmul.mubr.f32.gmra.mxu0 %v16
  %v114 = vpop.f32.mrf.mxu0
  %v115 = vadd.f32 0.0, %v114
  %v116 = vpop.f32.mrf.mxu0
  %117 = vdwg.mxu0
  %s118 = scalar_lea.vmem %s0, 144
  %v119 = vld [vmem:[%s118] sm:$0xff]
  %v120 = vld [vmem:[%s118 + $0x8] sm:$0xff]
  %v121 = vld [vmem:[%s118 + $0x10] sm:$0xff]
  %v122 = vld [vmem:[%s118 + $0x18] sm:$0xff]
  %v123 = vld [vmem:[%s118 + $0x20] sm:$0xff]
  %v124 = vld [vmem:[%s118 + $0x28] sm:$0xff]
  %v125 = vld [vmem:[%s118 + $0x30] sm:$0xff]
  %v126 = vld [vmem:[%s118 + $0x38] sm:$0xff]
  %v127 = vld [vmem:[%s118 + $0x40] sm:$0xff]
  %v128 = vld [vmem:[%s118 + $0x48] sm:$0xff]
  %v129 = vld [vmem:[%s118 + $0x50] sm:$0xff]
  %v130 = vld [vmem:[%s118 + $0x58] sm:$0xff]
  %v131 = vld [vmem:[%s118 + $0x60] sm:$0xff]
  %v132 = vld [vmem:[%s118 + $0x68] sm:$0xff]
  %v133 = vld [vmem:[%s118 + $0x70] sm:$0xff]
  %v134 = vld [vmem:[%s118 + $0x78] sm:$0xff]
  %v135 = vld [vmem:[%s118 + $0x80] sm:$0xff]
  %v136 = vld [vmem:[%s118 + $0x88] sm:$0xff]
  %137 = vmatprep.subr.mxu0 0.0
  %138 = vmatpush1.msra.mxu0 %v134
  %139 = vmatprep.subr.mxu0 0.0
  %140 = vmatpush1.msra.mxu0 %v133
  %141 = vmatprep.subr.mxu0 0.0
  %142 = vmatpush1.msra.mxu0 %v132
  %143 = vmatprep.subr.mxu0 0.0
  %144 = vmatpush1.msra.mxu0 %v131
  %145 = vmatprep.subr.mxu0 0.0
  %146 = vmatpush1.msra.mxu0 %v130
  %147 = vmatprep.subr.mxu0 0.0
  %148 = vmatpush1.msra.mxu0 %v129
  %149 = vmatprep.subr.mxu0 0.0
  %150 = vmatpush1.msra.mxu0 %v128
  %151 = vmatprep.subr.mxu0 0.0
  %152 = vmatpush1.msra.mxu0 %v127
  %153 = vmatprep.subr.mxu0 0.0
  %154 = vmatpush1.msra.mxu0 %v126
  %155 = vmatprep.subr.mxu0 0.0
  %156 = vmatpush1.msra.mxu0 %v125
  %157 = vmatprep.subr.mxu0 0.0
  %158 = vmatpush1.msra.mxu0 %v124
  %159 = vmatprep.subr.mxu0 0.0
  %160 = vmatpush1.msra.mxu0 %v123
  %161 = vmatprep.subr.mxu0 0.0
  %162 = vmatpush1.msra.mxu0 %v122
  %163 = vmatprep.subr.mxu0 0.0
  %164 = vmatpush1.msra.mxu0 %v121
  %165 = vmatprep.subr.mxu0 0.0
  %166 = vmatpush1.msra.mxu0 %v120
  %167 = vmatprep.subr.mxu0 0.0
  %168 = vmatpush1.msra.mxu0 %v119
  %169 = vmatprep.subr.mxu0 0.0
  %170 = vmatpush2.msra.mxu0 0.0
  %171 = vmatprep.subr.mxu0 0.0
  %172 = vmatpush2.msra.mxu0 0.0
  %173 = vmatprep.subr.mxu0 0.0
  %174 = vmatpush2.msra.mxu0 0.0
  %175 = vmatprep.subr.mxu0 0.0
  %176 = vmatpush2.msra.mxu0 0.0
  %177 = vmatprep.subr.mxu0 0.0
  %178 = vmatpush2.msra.mxu0 0.0
  %179 = vmatprep.subr.mxu0 0.0
  %180 = vmatpush2.msra.mxu0 0.0
  %181 = vmatprep.subr.mxu0 0.0
  %182 = vmatpush2.msra.mxu0 0.0
  %183 = vmatprep.subr.mxu0 0.0
  %184 = vmatpush2.msra.mxu0 0.0
  %185 = vmatprep.subr.mxu0 0.0
  %186 = vmatpush2.msra.mxu0 0.0
  %187 = vmatprep.subr.mxu0 0.0
  %188 = vmatpush2.msra.mxu0 0.0
  %189 = vmatprep.subr.mxu0 0.0
  %190 = vmatpush2.msra.mxu0 0.0
  %191 = vmatprep.subr.mxu0 0.0
  %192 = vmatpush2.msra.mxu0 0.0
  %193 = vmatprep.subr.mxu0 0.0
  %194 = vmatpush2.msra.mxu0 0.0
  %195 = vmatprep.subr.mxu0 0.0
  %196 = vmatpush2.msra.mxu0 0.0
  %197 = vmatprep.subr.mxu0 0.0
  %198 = vmatpush2.msra.mxu0 %v136
  %199 = vmatprep.subr.mxu0 0.0
  %200 = vmatpush2.msra.mxu0 %v135
  %201 = vmatprep.mubr.f32.mxu0 %v38
  %202 = vmatmul.mubr.f32.gmra.mxu0 %v14
  %v203 = vpop.f32.mrf.mxu0
  %v204 = vadd.f32 0.0, %v203
  %v205 = vpop.f32.mrf.mxu0
  %206 = vmatprep.mubr.f32.mxu0 %v41
  %207 = vmatmul.mubr.f32.gmra.mxu0 %v16
  %v208 = vpop.f32.mrf.mxu0
  %v209 = vadd.f32 0.0, %v208
  %v210 = vpop.f32.mrf.mxu0
  %211 = vdwg.mxu0
  %v212 = vmax.f32 %v110, %v204
  %v213 = vmax.f32 %v115, %v209
  %s214 = scalar_lea.vmem %s0, 288
  %v215 = vld [vmem:[%s214] sm:$0xff]
  %v216 = vld [vmem:[%s214 + $0x8] sm:$0xff]
  %v217 = vld [vmem:[%s214 + $0x10] sm:$0xff]
  %v218 = vld [vmem:[%s214 + $0x18] sm:$0xff]
  %v219 = vld [vmem:[%s214 + $0x20] sm:$0xff]
  %v220 = vld [vmem:[%s214 + $0x28] sm:$0xff]
  %v221 = vld [vmem:[%s214 + $0x30] sm:$0xff]
  %v222 = vld [vmem:[%s214 + $0x38] sm:$0xff]
  %v223 = vld [vmem:[%s214 + $0x40] sm:$0xff]
  %v224 = vld [vmem:[%s214 + $0x48] sm:$0xff]
  %v225 = vld [vmem:[%s214 + $0x50] sm:$0xff]
  %v226 = vld [vmem:[%s214 + $0x58] sm:$0xff]
  %v227 = vld [vmem:[%s214 + $0x60] sm:$0xff]
  %v228 = vld [vmem:[%s214 + $0x68] sm:$0xff]
  %v229 = vld [vmem:[%s214 + $0x70] sm:$0xff]
  %v230 = vld [vmem:[%s214 + $0x78] sm:$0xff]
  %v231 = vld [vmem:[%s214 + $0x80] sm:$0xff]
  %v232 = vld [vmem:[%s214 + $0x88] sm:$0xff]
  %233 = vmatprep.subr.mxu0 0.0
  %234 = vmatpush1.msra.mxu0 %v230
  %235 = vmatprep.subr.mxu0 0.0
  %236 = vmatpush1.msra.mxu0 %v229
  %237 = vmatprep.subr.mxu0 0.0
  %238 = vmatpush1.msra.mxu0 %v228
  %239 = vmatprep.subr.mxu0 0.0
  %240 = vmatpush1.msra.mxu0 %v227
  %241 = vmatprep.subr.mxu0 0.0
  %242 = vmatpush1.msra.mxu0 %v226
  %243 = vmatprep.subr.mxu0 0.0
  %244 = vmatpush1.msra.mxu0 %v225
  %245 = vmatprep.subr.mxu0 0.0
  %246 = vmatpush1.msra.mxu0 %v224
  %247 = vmatprep.subr.mxu0 0.0
  %248 = vmatpush1.msra.mxu0 %v223
  %249 = vmatprep.subr.mxu0 0.0
  %250 = vmatpush1.msra.mxu0 %v222
  %251 = vmatprep.subr.mxu0 0.0
  %252 = vmatpush1.msra.mxu0 %v221
  %253 = vmatprep.subr.mxu0 0.0
  %254 = vmatpush1.msra.mxu0 %v220
  %255 = vmatprep.subr.mxu0 0.0
  %256 = vmatpush1.msra.mxu0 %v219
  %257 = vmatprep.subr.mxu0 0.0
  %258 = vmatpush1.msra.mxu0 %v218
  %259 = vmatprep.subr.mxu0 0.0
  %260 = vmatpush1.msra.mxu0 %v217
  %261 = vmatprep.subr.mxu0 0.0
  %262 = vmatpush1.msra.mxu0 %v216
  %263 = vmatprep.subr.mxu0 0.0
  %264 = vmatpush1.msra.mxu0 %v215
  %265 = vmatprep.subr.mxu0 0.0
  %266 = vmatpush2.msra.mxu0 0.0
  %267 = vmatprep.subr.mxu0 0.0
  %268 = vmatpush2.msra.mxu0 0.0
  %269 = vmatprep.subr.mxu0 0.0
  %270 = vmatpush2.msra.mxu0 0.0
  %271 = vmatprep.subr.mxu0 0.0
  %272 = vmatpush2.msra.mxu0 0.0
  %273 = vmatprep.subr.mxu0 0.0
  %274 = vmatpush2.msra.mxu0 0.0
  %275 = vmatprep.subr.mxu0 0.0
  %276 = vmatpush2.msra.mxu0 0.0
  %277 = vmatprep.subr.mxu0 0.0
  %278 = vmatpush2.msra.mxu0 0.0
  %279 = vmatprep.subr.mxu0 0.0
  %280 = vmatpush2.msra.mxu0 0.0
  %281 = vmatprep.subr.mxu0 0.0
  %282 = vmatpush2.msra.mxu0 0.0
  %283 = vmatprep.subr.mxu0 0.0
  %284 = vmatpush2.msra.mxu0 0.0
  %285 = vmatprep.subr.mxu0 0.0
  %286 = vmatpush2.msra.mxu0 0.0
  %287 = vmatprep.subr.mxu0 0.0
  %288 = vmatpush2.msra.mxu0 0.0
  %289 = vmatprep.subr.mxu0 0.0
  %290 = vmatpush2.msra.mxu0 0.0
  %291 = vmatprep.subr.mxu0 0.0
  %292 = vmatpush2.msra.mxu0 0.0
  %293 = vmatprep.subr.mxu0 0.0
  %294 = vmatpush2.msra.mxu0 %v232
  %295 = vmatprep.subr.mxu0 0.0
  %296 = vmatpush2.msra.mxu0 %v231
  %297 = vmatprep.mubr.f32.mxu0 %v38
  %298 = vmatmul.mubr.f32.gmra.mxu0 %v14
  %v299 = vpop.f32.mrf.mxu0
  %v300 = vadd.f32 0.0, %v299
  %v301 = vpop.f32.mrf.mxu0
  %302 = vmatprep.mubr.f32.mxu0 %v41
  %303 = vmatmul.mubr.f32.gmra.mxu0 %v16
  %v304 = vpop.f32.mrf.mxu0
  %v305 = vadd.f32 0.0, %v304
  %v306 = vpop.f32.mrf.mxu0
  %307 = vdwg.mxu0
  %v308 = vmax.f32 %v212, %v300
  %v309 = vmax.f32 %v213, %v305
  %s310 = scalar_lea.vmem %s0, 432
  %v311 = vld [vmem:[%s310] sm:$0xff]
  %v312 = vld [vmem:[%s310 + $0x8] sm:$0xff]
  %v313 = vld [vmem:[%s310 + $0x10] sm:$0xff]
  %v314 = vld [vmem:[%s310 + $0x18] sm:$0xff]
  %v315 = vld [vmem:[%s310 + $0x20] sm:$0xff]
  %v316 = vld [vmem:[%s310 + $0x28] sm:$0xff]
  %v317 = vld [vmem:[%s310 + $0x30] sm:$0xff]
  %v318 = vld [vmem:[%s310 + $0x38] sm:$0xff]
  %v319 = vld [vmem:[%s310 + $0x40] sm:$0xff]
  %v320 = vld [vmem:[%s310 + $0x48] sm:$0xff]
  %v321 = vld [vmem:[%s310 + $0x50] sm:$0xff]
  %v322 = vld [vmem:[%s310 + $0x58] sm:$0xff]
  %v323 = vld [vmem:[%s310 + $0x60] sm:$0xff]
  %v324 = vld [vmem:[%s310 + $0x68] sm:$0xff]
  %v325 = vld [vmem:[%s310 + $0x70] sm:$0xff]
  %v326 = vld [vmem:[%s310 + $0x78] sm:$0xff]
  %v327 = vld [vmem:[%s310 + $0x80] sm:$0xff]
  %v328 = vld [vmem:[%s310 + $0x88] sm:$0xff]
  %329 = vmatprep.subr.mxu0 0.0
  %330 = vmatpush1.msra.mxu0 %v326
  %331 = vmatprep.subr.mxu0 0.0
  %332 = vmatpush1.msra.mxu0 %v325
  %333 = vmatprep.subr.mxu0 0.0
  %334 = vmatpush1.msra.mxu0 %v324
  %335 = vmatprep.subr.mxu0 0.0
  %336 = vmatpush1.msra.mxu0 %v323
  %337 = vmatprep.subr.mxu0 0.0
  %338 = vmatpush1.msra.mxu0 %v322
  %339 = vmatprep.subr.mxu0 0.0
  %340 = vmatpush1.msra.mxu0 %v321
  %341 = vmatprep.subr.mxu0 0.0
  %342 = vmatpush1.msra.mxu0 %v320
  %343 = vmatprep.subr.mxu0 0.0
  %344 = vmatpush1.msra.mxu0 %v319
  %345 = vmatprep.subr.mxu0 0.0
  %346 = vmatpush1.msra.mxu0 %v318
  %347 = vmatprep.subr.mxu0 0.0
  %348 = vmatpush1.msra.mxu0 %v317
  %349 = vmatprep.subr.mxu0 0.0
  %350 = vmatpush1.msra.mxu0 %v316
  %351 = vmatprep.subr.mxu0 0.0
  %352 = vmatpush1.msra.mxu0 %v315
  %353 = vmatprep.subr.mxu0 0.0
  %354 = vmatpush1.msra.mxu0 %v314
  %355 = vmatprep.subr.mxu0 0.0
  %356 = vmatpush1.msra.mxu0 %v313
  %357 = vmatprep.subr.mxu0 0.0
  %358 = vmatpush1.msra.mxu0 %v312
  %359 = vmatprep.subr.mxu0 0.0
  %360 = vmatpush1.msra.mxu0 %v311
  %361 = vmatprep.subr.mxu0 0.0
  %362 = vmatpush2.msra.mxu0 0.0
  %363 = vmatprep.subr.mxu0 0.0
  %364 = vmatpush2.msra.mxu0 0.0
  %365 = vmatprep.subr.mxu0 0.0
  %366 = vmatpush2.msra.mxu0 0.0
  %367 = vmatprep.subr.mxu0 0.0
  %368 = vmatpush2.msra.mxu0 0.0
  %369 = vmatprep.subr.mxu0 0.0
  %370 = vmatpush2.msra.mxu0 0.0
  %371 = vmatprep.subr.mxu0 0.0
  %372 = vmatpush2.msra.mxu0 0.0
  %373 = vmatprep.subr.mxu0 0.0
  %374 = vmatpush2.msra.mxu0 0.0
  %375 = vmatprep.subr.mxu0 0.0
  %376 = vmatpush2.msra.mxu0 0.0
  %377 = vmatprep.subr.mxu0 0.0
  %378 = vmatpush2.msra.mxu0 0.0
  %379 = vmatprep.subr.mxu0 0.0
  %380 = vmatpush2.msra.mxu0 0.0
  %381 = vmatprep.subr.mxu0 0.0
  %382 = vmatpush2.msra.mxu0 0.0
  %383 = vmatprep.subr.mxu0 0.0
  %384 = vmatpush2.msra.mxu0 0.0
  %385 = vmatprep.subr.mxu0 0.0
  %386 = vmatpush2.msra.mxu0 0.0
  %387 = vmatprep.subr.mxu0 0.0
  %388 = vmatpush2.msra.mxu0 0.0
  %389 = vmatprep.subr.mxu0 0.0
  %390 = vmatpush2.msra.mxu0 %v328
  %391 = vmatprep.subr.mxu0 0.0
  %392 = vmatpush2.msra.mxu0 %v327
  %393 = vmatprep.mubr.f32.mxu0 %v38
  %394 = vmatmul.mubr.f32.gmra.mxu0 %v14
  %v395 = vpop.f32.mrf.mxu0
  %v396 = vadd.f32 0.0, %v395
  %v397 = vpop.f32.mrf.mxu0
  %398 = vmatprep.mubr.f32.mxu0 %v41
  %399 = vmatmul.mubr.f32.gmra.mxu0 %v16
  %v400 = vpop.f32.mrf.mxu0
  %v401 = vadd.f32 0.0, %v400
  %v402 = vpop.f32.mrf.mxu0
  %403 = vdwg.mxu0
  %v404 = vmax.f32 %v308, %v396
  %v405 = vmax.f32 %v309, %v401
  %v406 = vld [vmem:[%s2] sm:$0xff]
  %v407 = vld [vmem:[%s2 + $0x8] sm:$0xff]
  %409 = vset.pattern.permute.xlu0 0
  %410 = vperm.xlu0 %409, %v406
  %v411 = vpop.permute.xlu0 %410
  %414 = vset.pattern.permute.xlu0 0
  %415 = vperm.xlu0 %414, %v407
  %v416 = vpop.permute.xlu0 %415
  %v418 = vadd.f32 %v404, %v411
  %v419 = vadd.f32 %v405, %v416
  %v420 = vmax.f32 %v418, 0.0
  %v421 = vmax.f32 %v419, 0.0
  %vm422 = vcmask 261120
  %423 = vst.msk [vmem:[%s3] sm:$0xff] %vm422, %v420
  %424 = vst.msk [vmem:[%s3 + $0x8] sm:$0xff] %vm422, %v421
  // Predicated region
  $region14: #{gh_cnn_forward.20} parent=0 // pred_check
    _
  $region15: #{gh_cnn_forward.20} parent=0 // pred_check_branch
    %426 = sbr.rel (0) target = $region17
  $region16: #{gh_cnn_forward.20} parent=0 // pred_region
    _
  $region17: #{gh_cnn_forward.20} parent=0 // pred_fallthru
    _
  // Predicated region
  $region18: #{gh_cnn_forward.20} parent=0 // pred_check
    _
  $region19: #{gh_cnn_forward.20} parent=0 // pred_check_branch
    %428 = sbr.rel (0) target = $region21
  $region20: #{gh_cnn_forward.20} parent=0 // pred_region
    _
  $region21: #{gh_cnn_forward.20} parent=0 // pred_fallthru
    _

// kernel: gh_cnn_forward.21
$region0: #{gh_cnn_forward.21}
  #allocation0 [shape = 'u32[]', space=smem, size = 0x4, offset = 0x4, fixed_abs, tag = 'smem constant byte address 0x4 - core index']
  #allocation1 [shape = 'u32[144,128]{1,0:T(1,128)}', space=vmem, size = 0x12000, scoped, tag = 'internal scratch']
  %s0 = inlined_call_operand.vmem [shape: f32[144,32], index: 0, kind: input, shape index: {}]
  %s1 = inlined_call_operand.vmem [shape: f32[32,144], index: 1, kind: input, shape index: {}]
  %s2 = inlined_call_operand.vmem [shape: f32[32,1], index: 2, kind: input, shape index: {}]
  %s3 = inlined_call_operand.vmem [shape: f32[32,32], index: 3, kind: output, shape index: {}]
  %s4 = sld [smem:[#allocation0]]
  $region22: #{gh_cnn_forward.21} parent=0
    _
  %s6 = ssub.s32 1, %s4
  %s7 = scalar_select 0, %s6, %s4
  // Predicated region
  $region2: #{gh_cnn_forward.21} parent=0 // pred_check
    _
  $region3: #{gh_cnn_forward.21} parent=0 // pred_check_branch
    %9 = sbr.rel (0) target = $region5
  $region4: #{gh_cnn_forward.21} parent=0 // pred_region
    _
  $region5: #{gh_cnn_forward.21} parent=0 // pred_fallthru
    _
  // Predicated region
  $region6: #{gh_cnn_forward.21} parent=0 // pred_check
    _
  $region7: #{gh_cnn_forward.21} parent=0 // pred_check_branch
    %11 = sbr.rel (0) target = $region9
  $region8: #{gh_cnn_forward.21} parent=0 // pred_region
    _
  $region9: #{gh_cnn_forward.21} parent=0 // pred_fallthru
    _
  // Predicated region
  $region10: #{gh_cnn_forward.21} parent=0 // pred_check
    _
  $region11: #{gh_cnn_forward.21} parent=0 // pred_check_branch
    %13 = sbr.rel (0) target = $region13
  $region12: #{gh_cnn_forward.21} parent=0 // pred_region
    _
  $region13: #{gh_cnn_forward.21} parent=0 // pred_fallthru
    _
  %v14 = vld [vmem:[%s1] sm:$0xff]
  %v15 = vld [vmem:[%s1 + $0x8] sm:$0xff]
  %v16 = vld [vmem:[%s1 + $0x10] sm:$0xff]
  %v17 = vld [vmem:[%s1 + $0x18] sm:$0xff]
  %v18 = vld [vmem:[%s1 + $0x20] sm:$0xff]
  %v19 = vld [vmem:[%s1 + $0x28] sm:$0xff]
  %v20 = vld [vmem:[%s1 + $0x30] sm:$0xff]
  %v21 = vld [vmem:[%s1 + $0x38] sm:$0xff]
  %v22 = vld [vmem:[%s0] sm:$0xff]
  %v23 = vld [vmem:[%s0 + $0x8] sm:$0xff]
  %v24 = vld [vmem:[%s0 + $0x10] sm:$0xff]
  %v25 = vld [vmem:[%s0 + $0x18] sm:$0xff]
  %v26 = vld [vmem:[%s0 + $0x20] sm:$0xff]
  %v27 = vld [vmem:[%s0 + $0x28] sm:$0xff]
  %v28 = vld [vmem:[%s0 + $0x30] sm:$0xff]
  %v29 = vld [vmem:[%s0 + $0x38] sm:$0xff]
  %v30 = vld [vmem:[%s0 + $0x40] sm:$0xff]
  %v31 = vld [vmem:[%s0 + $0x48] sm:$0xff]
  %v32 = vld [vmem:[%s0 + $0x50] sm:$0xff]
  %v33 = vld [vmem:[%s0 + $0x58] sm:$0xff]
  %v34 = vld [vmem:[%s0 + $0x60] sm:$0xff]
  %v35 = vld [vmem:[%s0 + $0x68] sm:$0xff]
  %v36 = vld [vmem:[%s0 + $0x70] sm:$0xff]
  %v37 = vld [vmem:[%s0 + $0x78] sm:$0xff]
  %v38 = vld [vmem:[%s0 + $0x80] sm:$0xff]
  %v39 = vld [vmem:[%s0 + $0x88] sm:$0xff]
  %v40 = vld [vmem:[%s2] sm:$0xff]
  %v41 = vld [vmem:[%s2 + $0x8] sm:$0xff]
  %v42 = vld [vmem:[%s2 + $0x10] sm:$0xff]
  %v43 = vld [vmem:[%s2 + $0x18] sm:$0xff]
  %45 = vset.pattern.permute.xlu0 0
  %46 = vperm.xlu0 %45, %v40
  %v47 = vpop.permute.xlu0 %46
  %50 = vset.pattern.permute.xlu0 0
  %51 = vperm.xlu0 %50, %v41
  %v52 = vpop.permute.xlu0 %51
  %55 = vset.pattern.permute.xlu0 0
  %56 = vperm.xlu0 %55, %v42
  %v57 = vpop.permute.xlu0 %56
  %60 = vset.pattern.permute.xlu0 0
  %61 = vperm.xlu0 %60, %v43
  %v62 = vpop.permute.xlu0 %61
  %vm64 = vcmask 130048
  %v66 = vsel %vm64, %v15, 0
  %v69 = vsel %vm64, %v17, 0
  %v72 = vsel %vm64, %v19, 0
  %v75 = vsel %vm64, %v21, 0
  %77 = vmatprep.subr.mxu0 0.0
  %78 = vmatpush1.msra.mxu0 %v37
  %79 = vmatprep.subr.mxu0 0.0
  %80 = vmatpush1.msra.mxu0 %v36
  %81 = vmatprep.subr.mxu0 0.0
  %82 = vmatpush1.msra.mxu0 %v35
  %83 = vmatprep.subr.mxu0 0.0
  %84 = vmatpush1.msra.mxu0 %v34
  %85 = vmatprep.subr.mxu0 0.0
  %86 = vmatpush1.msra.mxu0 %v33
  %87 = vmatprep.subr.mxu0 0.0
  %88 = vmatpush1.msra.mxu0 %v32
  %89 = vmatprep.subr.mxu0 0.0
  %90 = vmatpush1.msra.mxu0 %v31
  %91 = vmatprep.subr.mxu0 0.0
  %92 = vmatpush1.msra.mxu0 %v30
  %93 = vmatprep.subr.mxu0 0.0
  %94 = vmatpush1.msra.mxu0 %v29
  %95 = vmatprep.subr.mxu0 0.0
  %96 = vmatpush1.msra.mxu0 %v28
  %97 = vmatprep.subr.mxu0 0.0
  %98 = vmatpush1.msra.mxu0 %v27
  %99 = vmatprep.subr.mxu0 0.0
  %100 = vmatpush1.msra.mxu0 %v26
  %101 = vmatprep.subr.mxu0 0.0
  %102 = vmatpush1.msra.mxu0 %v25
  %103 = vmatprep.subr.mxu0 0.0
  %104 = vmatpush1.msra.mxu0 %v24
  %105 = vmatprep.subr.mxu0 0.0
  %106 = vmatpush1.msra.mxu0 %v23
  %107 = vmatprep.subr.mxu0 0.0
  %108 = vmatpush1.msra.mxu0 %v22
  %109 = vmatprep.subr.mxu0 0.0
  %110 = vmatpush2.msra.mxu0 0.0
  %111 = vmatprep.subr.mxu0 0.0
  %112 = vmatpush2.msra.mxu0 0.0
  %113 = vmatprep.subr.mxu0 0.0
  %114 = vmatpush2.msra.mxu0 0.0
  %115 = vmatprep.subr.mxu0 0.0
  %116 = vmatpush2.msra.mxu0 0.0
  %117 = vmatprep.subr.mxu0 0.0
  %118 = vmatpush2.msra.mxu0 0.0
  %119 = vmatprep.subr.mxu0 0.0
  %120 = vmatpush2.msra.mxu0 0.0
  %121 = vmatprep.subr.mxu0 0.0
  %122 = vmatpush2.msra.mxu0 0.0
  %123 = vmatprep.subr.mxu0 0.0
  %124 = vmatpush2.msra.mxu0 0.0
  %125 = vmatprep.subr.mxu0 0.0
  %126 = vmatpush2.msra.mxu0 0.0
  %127 = vmatprep.subr.mxu0 0.0
  %128 = vmatpush2.msra.mxu0 0.0
  %129 = vmatprep.subr.mxu0 0.0
  %130 = vmatpush2.msra.mxu0 0.0
  %131 = vmatprep.subr.mxu0 0.0
  %132 = vmatpush2.msra.mxu0 0.0
  %133 = vmatprep.subr.mxu0 0.0
  %134 = vmatpush2.msra.mxu0 0.0
  %135 = vmatprep.subr.mxu0 0.0
  %136 = vmatpush2.msra.mxu0 0.0
  %137 = vmatprep.subr.mxu0 0.0
  %138 = vmatpush2.msra.mxu0 %v39
  %139 = vmatprep.subr.mxu0 0.0
  %140 = vmatpush2.msra.mxu0 %v38
  %141 = vmatprep.mubr.f32.mxu0 %v66
  %142 = vmatmul.mubr.f32.gmra.mxu0 %v14
  %v143 = vpop.f32.mrf.mxu0
  %v144 = vadd.f32 %v47, %v143
  %v145 = vpop.f32.mrf.mxu0
  %146 = vmatprep.mubr.f32.mxu0 %v69
  %147 = vmatmul.mubr.f32.gmra.mxu0 %v16
  %v148 = vpop.f32.mrf.mxu0
  %v149 = vadd.f32 %v52, %v148
  %v150 = vpop.f32.mrf.mxu0
  %151 = vmatprep.mubr.f32.mxu0 %v72
  %152 = vmatmul.mubr.f32.gmra.mxu0 %v18
  %v153 = vpop.f32.mrf.mxu0
  %v154 = vadd.f32 %v57, %v153
  %v155 = vpop.f32.mrf.mxu0
  %156 = vmatprep.mubr.f32.mxu0 %v75
  %157 = vmatmul.mubr.f32.gmra.mxu0 %v20
  %v158 = vpop.f32.mrf.mxu0
  %v159 = vadd.f32 %v62, %v158
  %v160 = vpop.f32.mrf.mxu0
  %161 = vdwg.mxu0
  %v162 = vmax.f32 %v144, 0.0
  %v163 = vmax.f32 %v149, 0.0
  %v164 = vmax.f32 %v154, 0.0
  %v165 = vmax.f32 %v159, 0.0
  %vm166 = vcmask 261120
  %167 = vst.msk [vmem:[%s3] sm:$0xff] %vm166, %v162
  %168 = vst.msk [vmem:[%s3 + $0x8] sm:$0xff] %vm166, %v163
  %169 = vst.msk [vmem:[%s3 + $0x10] sm:$0xff] %vm166, %v164
  %170 = vst.msk [vmem:[%s3 + $0x18] sm:$0xff] %vm166, %v165
  // Predicated region
  $region14: #{gh_cnn_forward.21} parent=0 // pred_check
    _
  $region15: #{gh_cnn_forward.21} parent=0 // pred_check_branch
    %172 = sbr.rel (0) target = $region17
  $region16: #{gh_cnn_forward.21} parent=0 // pred_region
    _
  $region17: #{gh_cnn_forward.21} parent=0 // pred_fallthru
    _
  // Predicated region
  $region18: #{gh_cnn_forward.21} parent=0 // pred_check
    _
  $region19: #{gh_cnn_forward.21} parent=0 // pred_check_branch
    %174 = sbr.rel (0) target = $region21
  $region20: #{gh_cnn_forward.21} parent=0 // pred_region
    _
  $region21: #{gh_cnn_forward.21} parent=0 // pred_fallthru
    _

// kernel: gh_cnn_forward.22
$region0: #{gh_cnn_forward.22}
  #allocation0 [shape = 'u32[]', space=smem, size = 0x4, offset = 0x4, fixed_abs, tag = 'smem constant byte address 0x4 - core index']
  #allocation1 [shape = 'u32[144,128]{1,0:T(1,128)}', space=vmem, size = 0x12000, scoped, tag = 'internal scratch']
  %s0 = inlined_call_operand.vmem [shape: f32[288,32], index: 0, kind: input, shape index: {}]
  %s1 = inlined_call_operand.vmem [shape: f32[32,288], index: 1, kind: input, shape index: {}]
  %s2 = inlined_call_operand.vmem [shape: f32[32,1], index: 2, kind: input, shape index: {}]
  %s3 = inlined_call_operand.vmem [shape: f32[32,32], index: 3, kind: output, shape index: {}]
  %s4 = sld [smem:[#allocation0]]
  $region22: #{gh_cnn_forward.22} parent=0
    _
  %s6 = ssub.s32 1, %s4
  %s7 = scalar_select 0, %s6, %s4
  // Predicated region
  $region2: #{gh_cnn_forward.22} parent=0 // pred_check
    _
  $region3: #{gh_cnn_forward.22} parent=0 // pred_check_branch
    %9 = sbr.rel (0) target = $region5
  $region4: #{gh_cnn_forward.22} parent=0 // pred_region
    _
  $region5: #{gh_cnn_forward.22} parent=0 // pred_fallthru
    _
  // Predicated region
  $region6: #{gh_cnn_forward.22} parent=0 // pred_check
    _
  $region7: #{gh_cnn_forward.22} parent=0 // pred_check_branch
    %11 = sbr.rel (0) target = $region9
  $region8: #{gh_cnn_forward.22} parent=0 // pred_region
    _
  $region9: #{gh_cnn_forward.22} parent=0 // pred_fallthru
    _
  // Predicated region
  $region10: #{gh_cnn_forward.22} parent=0 // pred_check
    _
  $region11: #{gh_cnn_forward.22} parent=0 // pred_check_branch
    %13 = sbr.rel (0) target = $region13
  $region12: #{gh_cnn_forward.22} parent=0 // pred_region
    _
  $region13: #{gh_cnn_forward.22} parent=0 // pred_fallthru
    _
  %v14 = vld [vmem:[%s1] sm:$0xff]
  %v15 = vld [vmem:[%s1 + $0x8] sm:$0xff]
  %v16 = vld [vmem:[%s1 + $0x10] sm:$0xff]
  %v17 = vld [vmem:[%s1 + $0x18] sm:$0xff]
  %v18 = vld [vmem:[%s1 + $0x20] sm:$0xff]
  %v19 = vld [vmem:[%s1 + $0x28] sm:$0xff]
  %v20 = vld [vmem:[%s1 + $0x30] sm:$0xff]
  %v21 = vld [vmem:[%s1 + $0x38] sm:$0xff]
  %v22 = vld [vmem:[%s1 + $0x40] sm:$0xff]
  %v23 = vld [vmem:[%s1 + $0x48] sm:$0xff]
  %v24 = vld [vmem:[%s1 + $0x50] sm:$0xff]
  %v25 = vld [vmem:[%s1 + $0x58] sm:$0xff]
  %v26 = vld [vmem:[%s0] sm:$0xff]
  %v27 = vld [vmem:[%s0 + $0x8] sm:$0xff]
  %v28 = vld [vmem:[%s0 + $0x10] sm:$0xff]
  %v29 = vld [vmem:[%s0 + $0x18] sm:$0xff]
  %v30 = vld [vmem:[%s0 + $0x20] sm:$0xff]
  %v31 = vld [vmem:[%s0 + $0x28] sm:$0xff]
  %v32 = vld [vmem:[%s0 + $0x30] sm:$0xff]
  %v33 = vld [vmem:[%s0 + $0x38] sm:$0xff]
  %v34 = vld [vmem:[%s0 + $0x40] sm:$0xff]
  %v35 = vld [vmem:[%s0 + $0x48] sm:$0xff]
  %v36 = vld [vmem:[%s0 + $0x50] sm:$0xff]
  %v37 = vld [vmem:[%s0 + $0x58] sm:$0xff]
  %v38 = vld [vmem:[%s0 + $0x60] sm:$0xff]
  %v39 = vld [vmem:[%s0 + $0x68] sm:$0xff]
  %v40 = vld [vmem:[%s0 + $0x70] sm:$0xff]
  %v41 = vld [vmem:[%s0 + $0x78] sm:$0xff]
  %v42 = vld [vmem:[%s0 + $0x80] sm:$0xff]
  %v43 = vld [vmem:[%s0 + $0x88] sm:$0xff]
  %v44 = vld [vmem:[%s0 + $0x90] sm:$0xff]
  %v45 = vld [vmem:[%s0 + $0x98] sm:$0xff]
  %v46 = vld [vmem:[%s0 + $0xa0] sm:$0xff]
  %v47 = vld [vmem:[%s0 + $0xa8] sm:$0xff]
  %v48 = vld [vmem:[%s0 + $0xb0] sm:$0xff]
  %v49 = vld [vmem:[%s0 + $0xb8] sm:$0xff]
  %v50 = vld [vmem:[%s0 + $0xc0] sm:$0xff]
  %v51 = vld [vmem:[%s0 + $0xc8] sm:$0xff]
  %v52 = vld [vmem:[%s0 + $0xd0] sm:$0xff]
  %v53 = vld [vmem:[%s0 + $0xd8] sm:$0xff]
  %v54 = vld [vmem:[%s0 + $0xe0] sm:$0xff]
  %v55 = vld [vmem:[%s0 + $0xe8] sm:$0xff]
  %v56 = vld [vmem:[%s0 + $0xf0] sm:$0xff]
  %v57 = vld [vmem:[%s0 + $0xf8] sm:$0xff]
  %v58 = vld [vmem:[%s0 + $0x100] sm:$0xff]
  %v59 = vld [vmem:[%s0 + $0x108] sm:$0xff]
  %v60 = vld [vmem:[%s0 + $0x110] sm:$0xff]
  %v61 = vld [vmem:[%s0 + $0x118] sm:$0xff]
  %v62 = vld [vmem:[%s2] sm:$0xff]
  %v63 = vld [vmem:[%s2 + $0x8] sm:$0xff]
  %v64 = vld [vmem:[%s2 + $0x10] sm:$0xff]
  %v65 = vld [vmem:[%s2 + $0x18] sm:$0xff]
  %67 = vset.pattern.permute.xlu0 0
  %68 = vperm.xlu0 %67, %v62
  %v69 = vpop.permute.xlu0 %68
  %72 = vset.pattern.permute.xlu0 0
  %73 = vperm.xlu0 %72, %v63
  %v74 = vpop.permute.xlu0 %73
  %77 = vset.pattern.permute.xlu0 0
  %78 = vperm.xlu0 %77, %v64
  %v79 = vpop.permute.xlu0 %78
  %82 = vset.pattern.permute.xlu0 0
  %83 = vperm.xlu0 %82, %v65
  %v84 = vpop.permute.xlu0 %83
  %vm86 = vcmask 261120
  %v88 = vsel %vm86, %v16, 0
  %v91 = vsel %vm86, %v19, 0
  %v94 = vsel %vm86, %v22, 0
  %v97 = vsel %vm86, %v25, 0
  %99 = vmatprep.subr.mxu0 0.0
  %100 = vmatpush1.msra.mxu0 %v41
  %101 = vmatprep.subr.mxu0 0.0
  %102 = vmatpush1.msra.mxu0 %v40
  %103 = vmatprep.subr.mxu0 0.0
  %104 = vmatpush1.msra.mxu0 %v39
  %105 = vmatprep.subr.mxu0 0.0
  %106 = vmatpush1.msra.mxu0 %v38
  %107 = vmatprep.subr.mxu0 0.0
  %108 = vmatpush1.msra.mxu0 %v37
  %109 = vmatprep.subr.mxu0 0.0
  %110 = vmatpush1.msra.mxu0 %v36
  %111 = vmatprep.subr.mxu0 0.0
  %112 = vmatpush1.msra.mxu0 %v35
  %113 = vmatprep.subr.mxu0 0.0
  %114 = vmatpush1.msra.mxu0 %v34
  %115 = vmatprep.subr.mxu0 0.0
  %116 = vmatpush1.msra.mxu0 %v33
  %117 = vmatprep.subr.mxu0 0.0
  %118 = vmatpush1.msra.mxu0 %v32
  %119 = vmatprep.subr.mxu0 0.0
  %120 = vmatpush1.msra.mxu0 %v31
  %121 = vmatprep.subr.mxu0 0.0
  %122 = vmatpush1.msra.mxu0 %v30
  %123 = vmatprep.subr.mxu0 0.0
  %124 = vmatpush1.msra.mxu0 %v29
  %125 = vmatprep.subr.mxu0 0.0
  %126 = vmatpush1.msra.mxu0 %v28
  %127 = vmatprep.subr.mxu0 0.0
  %128 = vmatpush1.msra.mxu0 %v27
  %129 = vmatprep.subr.mxu0 0.0
  %130 = vmatpush1.msra.mxu0 %v26
  %131 = vmatprep.subr.mxu0 0.0
  %132 = vmatpush2.msra.mxu0 %v57
  %133 = vmatprep.subr.mxu0 0.0
  %134 = vmatpush2.msra.mxu0 %v56
  %135 = vmatprep.subr.mxu0 0.0
  %136 = vmatpush2.msra.mxu0 %v55
  %137 = vmatprep.subr.mxu0 0.0
  %138 = vmatpush2.msra.mxu0 %v54
  %139 = vmatprep.subr.mxu0 0.0
  %140 = vmatpush2.msra.mxu0 %v53
  %141 = vmatprep.subr.mxu0 0.0
  %142 = vmatpush2.msra.mxu0 %v52
  %143 = vmatprep.subr.mxu0 0.0
  %144 = vmatpush2.msra.mxu0 %v51
  %145 = vmatprep.subr.mxu0 0.0
  %146 = vmatpush2.msra.mxu0 %v50
  %147 = vmatprep.subr.mxu0 0.0
  %148 = vmatpush2.msra.mxu0 %v49
  %149 = vmatprep.subr.mxu0 0.0
  %150 = vmatpush2.msra.mxu0 %v48
  %151 = vmatprep.subr.mxu0 0.0
  %152 = vmatpush2.msra.mxu0 %v47
  %153 = vmatprep.subr.mxu0 0.0
  %154 = vmatpush2.msra.mxu0 %v46
  %155 = vmatprep.subr.mxu0 0.0
  %156 = vmatpush2.msra.mxu0 %v45
  %157 = vmatprep.subr.mxu0 0.0
  %158 = vmatpush2.msra.mxu0 %v44
  %159 = vmatprep.subr.mxu0 0.0
  %160 = vmatpush2.msra.mxu0 %v43
  %161 = vmatprep.subr.mxu0 0.0
  %162 = vmatpush2.msra.mxu0 %v42
  %163 = vmatprep.mubr.f32.mxu0 %v15
  %164 = vmatmul.mubr.f32.gmra.mxu0 %v14
  %v165 = vpop.f32.mrf.mxu0
  %v166 = vadd.f32 %v69, %v165
  %v167 = vpop.f32.mrf.mxu0
  %168 = vmatprep.mubr.f32.mxu0 %v18
  %169 = vmatmul.mubr.f32.gmra.mxu0 %v17
  %v170 = vpop.f32.mrf.mxu0
  %v171 = vadd.f32 %v74, %v170
  %v172 = vpop.f32.mrf.mxu0
  %173 = vmatprep.mubr.f32.mxu0 %v21
  %174 = vmatmul.mubr.f32.gmra.mxu0 %v20
  %v175 = vpop.f32.mrf.mxu0
  %v176 = vadd.f32 %v79, %v175
  %v177 = vpop.f32.mrf.mxu0
  %178 = vmatprep.mubr.f32.mxu0 %v24
  %179 = vmatmul.mubr.f32.gmra.mxu0 %v23
  %v180 = vpop.f32.mrf.mxu0
  %v181 = vadd.f32 %v84, %v180
  %v182 = vpop.f32.mrf.mxu0
  %183 = vdwg.mxu0
  %184 = vmatprep.subr.mxu0 0.0
  %185 = vmatpush1.msra.mxu0 0.0
  %186 = vmatprep.subr.mxu0 0.0
  %187 = vmatpush1.msra.mxu0 0.0
  %188 = vmatprep.subr.mxu0 0.0
  %189 = vmatpush1.msra.mxu0 0.0
  %190 = vmatprep.subr.mxu0 0.0
  %191 = vmatpush1.msra.mxu0 0.0
  %192 = vmatprep.subr.mxu0 0.0
  %193 = vmatpush1.msra.mxu0 0.0
  %194 = vmatprep.subr.mxu0 0.0
  %195 = vmatpush1.msra.mxu0 0.0
  %196 = vmatprep.subr.mxu0 0.0
  %197 = vmatpush1.msra.mxu0 0.0
  %198 = vmatprep.subr.mxu0 0.0
  %199 = vmatpush1.msra.mxu0 0.0
  %200 = vmatprep.subr.mxu0 0.0
  %201 = vmatpush1.msra.mxu0 0.0
  %202 = vmatprep.subr.mxu0 0.0
  %203 = vmatpush1.msra.mxu0 0.0
  %204 = vmatprep.subr.mxu0 0.0
  %205 = vmatpush1.msra.mxu0 0.0
  %206 = vmatprep.subr.mxu0 0.0
  %207 = vmatpush1.msra.mxu0 0.0
  %208 = vmatprep.subr.mxu0 0.0
  %209 = vmatpush1.msra.mxu0 %v61
  %210 = vmatprep.subr.mxu0 0.0
  %211 = vmatpush1.msra.mxu0 %v60
  %212 = vmatprep.subr.mxu0 0.0
  %213 = vmatpush1.msra.mxu0 %v59
  %214 = vmatprep.subr.mxu0 0.0
  %215 = vmatpush1.msra.mxu0 %v58
  %216 = vmatprep.subr.mxu0 0.0
  %217 = vmatpush2.msra.mxu0 0.0
  %218 = vmatprep.subr.mxu0 0.0
  %219 = vmatpush2.msra.mxu0 0.0
  %220 = vmatprep.subr.mxu0 0.0
  %221 = vmatpush2.msra.mxu0 0.0
  %222 = vmatprep.subr.mxu0 0.0
  %223 = vmatpush2.msra.mxu0 0.0
  %224 = vmatprep.subr.mxu0 0.0
  %225 = vmatpush2.msra.mxu0 0.0
  %226 = vmatprep.subr.mxu0 0.0
  %227 = vmatpush2.msra.mxu0 0.0
  %228 = vmatprep.subr.mxu0 0.0
  %229 = vmatpush2.msra.mxu0 0.0
  %230 = vmatprep.subr.mxu0 0.0
  %231 = vmatpush2.msra.mxu0 0.0
  %232 = vmatprep.subr.mxu0 0.0
  %233 = vmatpush2.msra.mxu0 0.0
  %234 = vmatprep.subr.mxu0 0.0
  %235 = vmatpush2.msra.mxu0 0.0
  %236 = vmatprep.subr.mxu0 0.0
  %237 = vmatpush2.msra.mxu0 0.0
  %238 = vmatprep.subr.mxu0 0.0
  %239 = vmatpush2.msra.mxu0 0.0
  %240 = vmatprep.subr.mxu0 0.0
  %241 = vmatpush2.msra.mxu0 0.0
  %242 = vmatprep.subr.mxu0 0.0
  %243 = vmatpush2.msra.mxu0 0.0
  %244 = vmatprep.subr.mxu0 0.0
  %245 = vmatpush2.msra.mxu0 0.0
  %246 = vmatprep.subr.mxu0 0.0
  %247 = vmatpush2.msra.mxu0 0.0
  %248 = vmatprep.mubr.f32.mxu0 0.0
  %249 = vmatmul.mubr.f32.gmra.mxu0 %v88
  %v250 = vpop.f32.mrf.mxu0
  %v251 = vadd.f32 %v166, %v250
  %v252 = vpop.f32.mrf.mxu0
  %253 = vmatprep.mubr.f32.mxu0 0.0
  %254 = vmatmul.mubr.f32.gmra.mxu0 %v91
  %v255 = vpop.f32.mrf.mxu0
  %v256 = vadd.f32 %v171, %v255
  %v257 = vpop.f32.mrf.mxu0
  %258 = vmatprep.mubr.f32.mxu0 0.0
  %259 = vmatmul.mubr.f32.gmra.mxu0 %v94
  %v260 = vpop.f32.mrf.mxu0
  %v261 = vadd.f32 %v176, %v260
  %v262 = vpop.f32.mrf.mxu0
  %263 = vmatprep.mubr.f32.mxu0 0.0
  %264 = vmatmul.mubr.f32.gmra.mxu0 %v97
  %v265 = vpop.f32.mrf.mxu0
  %v266 = vadd.f32 %v181, %v265
  %v267 = vpop.f32.mrf.mxu0
  %268 = vdwg.mxu0
  %v269 = vmax.f32 %v251, 0.0
  %v270 = vmax.f32 %v256, 0.0
  %v271 = vmax.f32 %v261, 0.0
  %v272 = vmax.f32 %v266, 0.0
  %273 = vst.msk [vmem:[%s3] sm:$0xff] %vm86, %v269
  %274 = vst.msk [vmem:[%s3 + $0x8] sm:$0xff] %vm86, %v270
  %275 = vst.msk [vmem:[%s3 + $0x10] sm:$0xff] %vm86, %v271
  %276 = vst.msk [vmem:[%s3 + $0x18] sm:$0xff] %vm86, %v272
  // Predicated region
  $region14: #{gh_cnn_forward.22} parent=0 // pred_check
    _
  $region15: #{gh_cnn_forward.22} parent=0 // pred_check_branch
    %278 = sbr.rel (0) target = $region17
  $region16: #{gh_cnn_forward.22} parent=0 // pred_region
    _
  $region17: #{gh_cnn_forward.22} parent=0 // pred_fallthru
    _
  // Predicated region
  $region18: #{gh_cnn_forward.22} parent=0 // pred_check
    _
  $region19: #{gh_cnn_forward.22} parent=0 // pred_check_branch
    %280 = sbr.rel (0) target = $region21
  $region20: #{gh_cnn_forward.22} parent=0 // pred_region
    _
  $region21: #{gh_cnn_forward.22} parent=0 // pred_fallthru
    _

// kernel: gh_cnn_forward.24
$region0: #{gh_cnn_forward.24}
  #allocation0 [shape = 'u32[]', space=smem, size = 0x4, offset = 0x4, fixed_abs, tag = 'smem constant byte address 0x4 - core index']
  #allocation1 [shape = 'u32[144,128]{1,0:T(1,128)}', space=vmem, size = 0x12000, scoped, tag = 'internal scratch']
  %s0 = inlined_call_operand.vmem [shape: f32[288,8], index: 0, kind: input, shape index: {}]
  %s1 = inlined_call_operand.vmem [shape: f32[32,288], index: 1, kind: input, shape index: {}]
  %s2 = inlined_call_operand.vmem [shape: f32[32,1], index: 2, kind: input, shape index: {}]
  %s3 = inlined_call_operand.vmem [shape: f32[32,8], index: 3, kind: output, shape index: {}]
  %s4 = sld [smem:[#allocation0]]
  $region22: #{gh_cnn_forward.24} parent=0
    _
  %s6 = ssub.s32 1, %s4
  %s7 = scalar_select 0, %s6, %s4
  // Predicated region
  $region2: #{gh_cnn_forward.24} parent=0 // pred_check
    _
  $region3: #{gh_cnn_forward.24} parent=0 // pred_check_branch
    %9 = sbr.rel (0) target = $region5
  $region4: #{gh_cnn_forward.24} parent=0 // pred_region
    _
  $region5: #{gh_cnn_forward.24} parent=0 // pred_fallthru
    _
  // Predicated region
  $region6: #{gh_cnn_forward.24} parent=0 // pred_check
    _
  $region7: #{gh_cnn_forward.24} parent=0 // pred_check_branch
    %11 = sbr.rel (0) target = $region9
  $region8: #{gh_cnn_forward.24} parent=0 // pred_region
    _
  $region9: #{gh_cnn_forward.24} parent=0 // pred_fallthru
    _
  // Predicated region
  $region10: #{gh_cnn_forward.24} parent=0 // pred_check
    _
  $region11: #{gh_cnn_forward.24} parent=0 // pred_check_branch
    %13 = sbr.rel (0) target = $region13
  $region12: #{gh_cnn_forward.24} parent=0 // pred_region
    _
  $region13: #{gh_cnn_forward.24} parent=0 // pred_fallthru
    _
  %v14 = vld [vmem:[%s1] sm:$0xff]
  %v15 = vld [vmem:[%s1 + $0x8] sm:$0xff]
  %v16 = vld [vmem:[%s1 + $0x10] sm:$0xff]
  %v17 = vld [vmem:[%s1 + $0x18] sm:$0xff]
  %v18 = vld [vmem:[%s1 + $0x20] sm:$0xff]
  %v19 = vld [vmem:[%s1 + $0x28] sm:$0xff]
  %v20 = vld [vmem:[%s1 + $0x30] sm:$0xff]
  %v21 = vld [vmem:[%s1 + $0x38] sm:$0xff]
  %v22 = vld [vmem:[%s1 + $0x40] sm:$0xff]
  %v23 = vld [vmem:[%s1 + $0x48] sm:$0xff]
  %v24 = vld [vmem:[%s1 + $0x50] sm:$0xff]
  %v25 = vld [vmem:[%s1 + $0x58] sm:$0xff]
  %v26 = vld [vmem:[%s0] sm:$0xff]
  %v27 = vld [vmem:[%s0 + $0x8] sm:$0xff]
  %v28 = vld [vmem:[%s0 + $0x10] sm:$0xff]
  %v29 = vld [vmem:[%s0 + $0x18] sm:$0xff]
  %v30 = vld [vmem:[%s0 + $0x20] sm:$0xff]
  %v31 = vld [vmem:[%s0 + $0x28] sm:$0xff]
  %v32 = vld [vmem:[%s0 + $0x30] sm:$0xff]
  %v33 = vld [vmem:[%s0 + $0x38] sm:$0xff]
  %v34 = vld [vmem:[%s0 + $0x40] sm:$0xff]
  %v35 = vld [vmem:[%s0 + $0x48] sm:$0xff]
  %v36 = vld [vmem:[%s0 + $0x50] sm:$0xff]
  %v37 = vld [vmem:[%s0 + $0x58] sm:$0xff]
  %v38 = vld [vmem:[%s0 + $0x60] sm:$0xff]
  %v39 = vld [vmem:[%s0 + $0x68] sm:$0xff]
  %v40 = vld [vmem:[%s0 + $0x70] sm:$0xff]
  %v41 = vld [vmem:[%s0 + $0x78] sm:$0xff]
  %v42 = vld [vmem:[%s0 + $0x80] sm:$0xff]
  %v43 = vld [vmem:[%s0 + $0x88] sm:$0xff]
  %v44 = vld [vmem:[%s0 + $0x90] sm:$0xff]
  %v45 = vld [vmem:[%s0 + $0x98] sm:$0xff]
  %v46 = vld [vmem:[%s0 + $0xa0] sm:$0xff]
  %v47 = vld [vmem:[%s0 + $0xa8] sm:$0xff]
  %v48 = vld [vmem:[%s0 + $0xb0] sm:$0xff]
  %v49 = vld [vmem:[%s0 + $0xb8] sm:$0xff]
  %v50 = vld [vmem:[%s0 + $0xc0] sm:$0xff]
  %v51 = vld [vmem:[%s0 + $0xc8] sm:$0xff]
  %v52 = vld [vmem:[%s0 + $0xd0] sm:$0xff]
  %v53 = vld [vmem:[%s0 + $0xd8] sm:$0xff]
  %v54 = vld [vmem:[%s0 + $0xe0] sm:$0xff]
  %v55 = vld [vmem:[%s0 + $0xe8] sm:$0xff]
  %v56 = vld [vmem:[%s0 + $0xf0] sm:$0xff]
  %v57 = vld [vmem:[%s0 + $0xf8] sm:$0xff]
  %v58 = vld [vmem:[%s0 + $0x100] sm:$0xff]
  %v59 = vld [vmem:[%s0 + $0x108] sm:$0xff]
  %v60 = vld [vmem:[%s0 + $0x110] sm:$0xff]
  %v61 = vld [vmem:[%s0 + $0x118] sm:$0xff]
  %v62 = vld [vmem:[%s2] sm:$0xff]
  %v63 = vld [vmem:[%s2 + $0x8] sm:$0xff]
  %v64 = vld [vmem:[%s2 + $0x10] sm:$0xff]
  %v65 = vld [vmem:[%s2 + $0x18] sm:$0xff]
  %67 = vset.pattern.permute.xlu0 0
  %68 = vperm.xlu0 %67, %v62
  %v69 = vpop.permute.xlu0 %68
  %72 = vset.pattern.permute.xlu0 0
  %73 = vperm.xlu0 %72, %v63
  %v74 = vpop.permute.xlu0 %73
  %77 = vset.pattern.permute.xlu0 0
  %78 = vperm.xlu0 %77, %v64
  %v79 = vpop.permute.xlu0 %78
  %82 = vset.pattern.permute.xlu0 0
  %83 = vperm.xlu0 %82, %v65
  %v84 = vpop.permute.xlu0 %83
  %vm86 = vcmask 261120
  %v88 = vsel %vm86, %v16, 0
  %v91 = vsel %vm86, %v19, 0
  %v94 = vsel %vm86, %v22, 0
  %v97 = vsel %vm86, %v25, 0
  %99 = vmatprep.subr.mxu0 0.0
  %100 = vmatpush1.msra.mxu0 %v41
  %101 = vmatprep.subr.mxu0 0.0
  %102 = vmatpush1.msra.mxu0 %v40
  %103 = vmatprep.subr.mxu0 0.0
  %104 = vmatpush1.msra.mxu0 %v39
  %105 = vmatprep.subr.mxu0 0.0
  %106 = vmatpush1.msra.mxu0 %v38
  %107 = vmatprep.subr.mxu0 0.0
  %108 = vmatpush1.msra.mxu0 %v37
  %109 = vmatprep.subr.mxu0 0.0
  %110 = vmatpush1.msra.mxu0 %v36
  %111 = vmatprep.subr.mxu0 0.0
  %112 = vmatpush1.msra.mxu0 %v35
  %113 = vmatprep.subr.mxu0 0.0
  %114 = vmatpush1.msra.mxu0 %v34
  %115 = vmatprep.subr.mxu0 0.0
  %116 = vmatpush1.msra.mxu0 %v33
  %117 = vmatprep.subr.mxu0 0.0
  %118 = vmatpush1.msra.mxu0 %v32
  %119 = vmatprep.subr.mxu0 0.0
  %120 = vmatpush1.msra.mxu0 %v31
  %121 = vmatprep.subr.mxu0 0.0
  %122 = vmatpush1.msra.mxu0 %v30
  %123 = vmatprep.subr.mxu0 0.0
  %124 = vmatpush1.msra.mxu0 %v29
  %125 = vmatprep.subr.mxu0 0.0
  %126 = vmatpush1.msra.mxu0 %v28
  %127 = vmatprep.subr.mxu0 0.0
  %128 = vmatpush1.msra.mxu0 %v27
  %129 = vmatprep.subr.mxu0 0.0
  %130 = vmatpush1.msra.mxu0 %v26
  %131 = vmatprep.subr.mxu0 0.0
  %132 = vmatpush2.msra.mxu0 %v57
  %133 = vmatprep.subr.mxu0 0.0
  %134 = vmatpush2.msra.mxu0 %v56
  %135 = vmatprep.subr.mxu0 0.0
  %136 = vmatpush2.msra.mxu0 %v55
  %137 = vmatprep.subr.mxu0 0.0
  %138 = vmatpush2.msra.mxu0 %v54
  %139 = vmatprep.subr.mxu0 0.0
  %140 = vmatpush2.msra.mxu0 %v53
  %141 = vmatprep.subr.mxu0 0.0
  %142 = vmatpush2.msra.mxu0 %v52
  %143 = vmatprep.subr.mxu0 0.0
  %144 = vmatpush2.msra.mxu0 %v51
  %145 = vmatprep.subr.mxu0 0.0
  %146 = vmatpush2.msra.mxu0 %v50
  %147 = vmatprep.subr.mxu0 0.0
  %148 = vmatpush2.msra.mxu0 %v49
  %149 = vmatprep.subr.mxu0 0.0
  %150 = vmatpush2.msra.mxu0 %v48
  %151 = vmatprep.subr.mxu0 0.0
  %152 = vmatpush2.msra.mxu0 %v47
  %153 = vmatprep.subr.mxu0 0.0
  %154 = vmatpush2.msra.mxu0 %v46
  %155 = vmatprep.subr.mxu0 0.0
  %156 = vmatpush2.msra.mxu0 %v45
  %157 = vmatprep.subr.mxu0 0.0
  %158 = vmatpush2.msra.mxu0 %v44
  %159 = vmatprep.subr.mxu0 0.0
  %160 = vmatpush2.msra.mxu0 %v43
  %161 = vmatprep.subr.mxu0 0.0
  %162 = vmatpush2.msra.mxu0 %v42
  %163 = vmatprep.mubr.f32.mxu0 %v15
  %164 = vmatmul.mubr.f32.gmra.mxu0 %v14
  %v165 = vpop.f32.mrf.mxu0
  %v166 = vadd.f32 %v69, %v165
  %v167 = vpop.f32.mrf.mxu0
  %168 = vmatprep.mubr.f32.mxu0 %v18
  %169 = vmatmul.mubr.f32.gmra.mxu0 %v17
  %v170 = vpop.f32.mrf.mxu0
  %v171 = vadd.f32 %v74, %v170
  %v172 = vpop.f32.mrf.mxu0
  %173 = vmatprep.mubr.f32.mxu0 %v21
  %174 = vmatmul.mubr.f32.gmra.mxu0 %v20
  %v175 = vpop.f32.mrf.mxu0
  %v176 = vadd.f32 %v79, %v175
  %v177 = vpop.f32.mrf.mxu0
  %178 = vmatprep.mubr.f32.mxu0 %v24
  %179 = vmatmul.mubr.f32.gmra.mxu0 %v23
  %v180 = vpop.f32.mrf.mxu0
  %v181 = vadd.f32 %v84, %v180
  %v182 = vpop.f32.mrf.mxu0
  %183 = vdwg.mxu0
  %184 = vmatprep.subr.mxu0 0.0
  %185 = vmatpush1.msra.mxu0 0.0
  %186 = vmatprep.subr.mxu0 0.0
  %187 = vmatpush1.msra.mxu0 0.0
  %188 = vmatprep.subr.mxu0 0.0
  %189 = vmatpush1.msra.mxu0 0.0
  %190 = vmatprep.subr.mxu0 0.0
  %191 = vmatpush1.msra.mxu0 0.0
  %192 = vmatprep.subr.mxu0 0.0
  %193 = vmatpush1.msra.mxu0 0.0
  %194 = vmatprep.subr.mxu0 0.0
  %195 = vmatpush1.msra.mxu0 0.0
  %196 = vmatprep.subr.mxu0 0.0
  %197 = vmatpush1.msra.mxu0 0.0
  %198 = vmatprep.subr.mxu0 0.0
  %199 = vmatpush1.msra.mxu0 0.0
  %200 = vmatprep.subr.mxu0 0.0
  %201 = vmatpush1.msra.mxu0 0.0
  %202 = vmatprep.subr.mxu0 0.0
  %203 = vmatpush1.msra.mxu0 0.0
  %204 = vmatprep.subr.mxu0 0.0
  %205 = vmatpush1.msra.mxu0 0.0
  %206 = vmatprep.subr.mxu0 0.0
  %207 = vmatpush1.msra.mxu0 0.0
  %208 = vmatprep.subr.mxu0 0.0
  %209 = vmatpush1.msra.mxu0 %v61
  %210 = vmatprep.subr.mxu0 0.0
  %211 = vmatpush1.msra.mxu0 %v60
  %212 = vmatprep.subr.mxu0 0.0
  %213 = vmatpush1.msra.mxu0 %v59
  %214 = vmatprep.subr.mxu0 0.0
  %215 = vmatpush1.msra.mxu0 %v58
  %216 = vmatprep.subr.mxu0 0.0
  %217 = vmatpush2.msra.mxu0 0.0
  %218 = vmatprep.subr.mxu0 0.0
  %219 = vmatpush2.msra.mxu0 0.0
  %220 = vmatprep.subr.mxu0 0.0
  %221 = vmatpush2.msra.mxu0 0.0
  %222 = vmatprep.subr.mxu0 0.0
  %223 = vmatpush2.msra.mxu0 0.0
  %224 = vmatprep.subr.mxu0 0.0
  %225 = vmatpush2.msra.mxu0 0.0
  %226 = vmatprep.subr.mxu0 0.0
  %227 = vmatpush2.msra.mxu0 0.0
  %228 = vmatprep.subr.mxu0 0.0
  %229 = vmatpush2.msra.mxu0 0.0
  %230 = vmatprep.subr.mxu0 0.0
  %231 = vmatpush2.msra.mxu0 0.0
  %232 = vmatprep.subr.mxu0 0.0
  %233 = vmatpush2.msra.mxu0 0.0
  %234 = vmatprep.subr.mxu0 0.0
  %235 = vmatpush2.msra.mxu0 0.0
  %236 = vmatprep.subr.mxu0 0.0
  %237 = vmatpush2.msra.mxu0 0.0
  %238 = vmatprep.subr.mxu0 0.0
  %239 = vmatpush2.msra.mxu0 0.0
  %240 = vmatprep.subr.mxu0 0.0
  %241 = vmatpush2.msra.mxu0 0.0
  %242 = vmatprep.subr.mxu0 0.0
  %243 = vmatpush2.msra.mxu0 0.0
  %244 = vmatprep.subr.mxu0 0.0
  %245 = vmatpush2.msra.mxu0 0.0
  %246 = vmatprep.subr.mxu0 0.0
  %247 = vmatpush2.msra.mxu0 0.0
  %248 = vmatprep.mubr.f32.mxu0 0.0
  %249 = vmatmul.mubr.f32.gmra.mxu0 %v88
  %v250 = vpop.f32.mrf.mxu0
  %v251 = vadd.f32 %v166, %v250
  %v252 = vpop.f32.mrf.mxu0
  %253 = vmatprep.mubr.f32.mxu0 0.0
  %254 = vmatmul.mubr.f32.gmra.mxu0 %v91
  %v255 = vpop.f32.mrf.mxu0
  %v256 = vadd.f32 %v171, %v255
  %v257 = vpop.f32.mrf.mxu0
  %258 = vmatprep.mubr.f32.mxu0 0.0
  %259 = vmatmul.mubr.f32.gmra.mxu0 %v94
  %v260 = vpop.f32.mrf.mxu0
  %v261 = vadd.f32 %v176, %v260
  %v262 = vpop.f32.mrf.mxu0
  %263 = vmatprep.mubr.f32.mxu0 0.0
  %264 = vmatmul.mubr.f32.gmra.mxu0 %v97
  %v265 = vpop.f32.mrf.mxu0
  %v266 = vadd.f32 %v181, %v265
  %v267 = vpop.f32.mrf.mxu0
  %268 = vdwg.mxu0
  %v269 = vmax.f32 %v251, 0.0
  %v270 = vmax.f32 %v256, 0.0
  %v271 = vmax.f32 %v261, 0.0
  %v272 = vmax.f32 %v266, 0.0
  %vm273 = vcmask 64512
  %274 = vst.msk [vmem:[%s3] sm:$0xff] %vm273, %v269
  %275 = vst.msk [vmem:[%s3 + $0x8] sm:$0xff] %vm273, %v270
  %276 = vst.msk [vmem:[%s3 + $0x10] sm:$0xff] %vm273, %v271
  %277 = vst.msk [vmem:[%s3 + $0x18] sm:$0xff] %vm273, %v272
  // Predicated region
  $region14: #{gh_cnn_forward.24} parent=0 // pred_check
    _
  $region15: #{gh_cnn_forward.24} parent=0 // pred_check_branch
    %279 = sbr.rel (0) target = $region17
  $region16: #{gh_cnn_forward.24} parent=0 // pred_region
    _
  $region17: #{gh_cnn_forward.24} parent=0 // pred_fallthru
    _
  // Predicated region
  $region18: #{gh_cnn_forward.24} parent=0 // pred_check
    _
  $region19: #{gh_cnn_forward.24} parent=0 // pred_check_branch
    %281 = sbr.rel (0) target = $region21
  $region20: #{gh_cnn_forward.24} parent=0 // pred_region
    _
  $region21: #{gh_cnn_forward.24} parent=0 // pred_fallthru
    _

// kernel: gh_cnn_forward.23
$region0: #{gh_cnn_forward.23}
  #allocation0 [shape = 'u32[]', space=smem, size = 0x4, offset = 0x4, fixed_abs, tag = 'smem constant byte address 0x4 - core index']
  #allocation1 [shape = 'u32[144,128]{1,0:T(1,128)}', space=vmem, size = 0x12000, scoped, tag = 'internal scratch']
  %s0 = inlined_call_operand.vmem [shape: f32[4,288,8], index: 0, kind: input, shape index: {}]
  %s1 = inlined_call_operand.vmem [shape: f32[32,288], index: 1, kind: input, shape index: {}]
  %s2 = inlined_call_operand.vmem [shape: f32[32,1], index: 2, kind: input, shape index: {}]
  %s3 = inlined_call_operand.vmem [shape: f32[32,8], index: 3, kind: output, shape index: {}]
  %s4 = sld [smem:[#allocation0]]
  $region22: #{gh_cnn_forward.23} parent=0
    _
  %s6 = ssub.s32 1, %s4
  %s7 = scalar_select 0, %s6, %s4
  // Predicated region
  $region2: #{gh_cnn_forward.23} parent=0 // pred_check
    _
  $region3: #{gh_cnn_forward.23} parent=0 // pred_check_branch
    %9 = sbr.rel (0) target = $region5
  $region4: #{gh_cnn_forward.23} parent=0 // pred_region
    _
  $region5: #{gh_cnn_forward.23} parent=0 // pred_fallthru
    _
  // Predicated region
  $region6: #{gh_cnn_forward.23} parent=0 // pred_check
    _
  $region7: #{gh_cnn_forward.23} parent=0 // pred_check_branch
    %11 = sbr.rel (0) target = $region9
  $region8: #{gh_cnn_forward.23} parent=0 // pred_region
    _
  $region9: #{gh_cnn_forward.23} parent=0 // pred_fallthru
    _
  // Predicated region
  $region10: #{gh_cnn_forward.23} parent=0 // pred_check
    _
  $region11: #{gh_cnn_forward.23} parent=0 // pred_check_branch
    %13 = sbr.rel (0) target = $region13
  $region12: #{gh_cnn_forward.23} parent=0 // pred_region
    _
  $region13: #{gh_cnn_forward.23} parent=0 // pred_fallthru
    _
  %v14 = vld [vmem:[%s1] sm:$0xff]
  %v15 = vld [vmem:[%s1 + $0x8] sm:$0xff]
  %v16 = vld [vmem:[%s1 + $0x10] sm:$0xff]
  %v17 = vld [vmem:[%s1 + $0x18] sm:$0xff]
  %v18 = vld [vmem:[%s1 + $0x20] sm:$0xff]
  %v19 = vld [vmem:[%s1 + $0x28] sm:$0xff]
  %v20 = vld [vmem:[%s1 + $0x30] sm:$0xff]
  %v21 = vld [vmem:[%s1 + $0x38] sm:$0xff]
  %v22 = vld [vmem:[%s1 + $0x40] sm:$0xff]
  %v23 = vld [vmem:[%s1 + $0x48] sm:$0xff]
  %v24 = vld [vmem:[%s1 + $0x50] sm:$0xff]
  %v25 = vld [vmem:[%s1 + $0x58] sm:$0xff]
  %v26 = vld [vmem:[%s0] sm:$0xff]
  %v27 = vld [vmem:[%s0 + $0x8] sm:$0xff]
  %v28 = vld [vmem:[%s0 + $0x10] sm:$0xff]
  %v29 = vld [vmem:[%s0 + $0x18] sm:$0xff]
  %v30 = vld [vmem:[%s0 + $0x20] sm:$0xff]
  %v31 = vld [vmem:[%s0 + $0x28] sm:$0xff]
  %v32 = vld [vmem:[%s0 + $0x30] sm:$0xff]
  %v33 = vld [vmem:[%s0 + $0x38] sm:$0xff]
  %v34 = vld [vmem:[%s0 + $0x40] sm:$0xff]
  %v35 = vld [vmem:[%s0 + $0x48] sm:$0xff]
  %v36 = vld [vmem:[%s0 + $0x50] sm:$0xff]
  %v37 = vld [vmem:[%s0 + $0x58] sm:$0xff]
  %v38 = vld [vmem:[%s0 + $0x60] sm:$0xff]
  %v39 = vld [vmem:[%s0 + $0x68] sm:$0xff]
  %v40 = vld [vmem:[%s0 + $0x70] sm:$0xff]
  %v41 = vld [vmem:[%s0 + $0x78] sm:$0xff]
  %v42 = vld [vmem:[%s0 + $0x80] sm:$0xff]
  %v43 = vld [vmem:[%s0 + $0x88] sm:$0xff]
  %v44 = vld [vmem:[%s0 + $0x90] sm:$0xff]
  %v45 = vld [vmem:[%s0 + $0x98] sm:$0xff]
  %v46 = vld [vmem:[%s0 + $0xa0] sm:$0xff]
  %v47 = vld [vmem:[%s0 + $0xa8] sm:$0xff]
  %v48 = vld [vmem:[%s0 + $0xb0] sm:$0xff]
  %v49 = vld [vmem:[%s0 + $0xb8] sm:$0xff]
  %v50 = vld [vmem:[%s0 + $0xc0] sm:$0xff]
  %v51 = vld [vmem:[%s0 + $0xc8] sm:$0xff]
  %v52 = vld [vmem:[%s0 + $0xd0] sm:$0xff]
  %v53 = vld [vmem:[%s0 + $0xd8] sm:$0xff]
  %v54 = vld [vmem:[%s0 + $0xe0] sm:$0xff]
  %v55 = vld [vmem:[%s0 + $0xe8] sm:$0xff]
  %v56 = vld [vmem:[%s0 + $0xf0] sm:$0xff]
  %v57 = vld [vmem:[%s0 + $0xf8] sm:$0xff]
  %v58 = vld [vmem:[%s0 + $0x100] sm:$0xff]
  %v59 = vld [vmem:[%s0 + $0x108] sm:$0xff]
  %v60 = vld [vmem:[%s0 + $0x110] sm:$0xff]
  %v61 = vld [vmem:[%s0 + $0x118] sm:$0xff]
  %vm62 = vcmask 261120
  %v64 = vsel %vm62, %v16, 0
  %v67 = vsel %vm62, %v19, 0
  %v70 = vsel %vm62, %v22, 0
  %v73 = vsel %vm62, %v25, 0
  %75 = vmatprep.subr.mxu0 0.0
  %76 = vmatpush1.msra.mxu0 %v41
  %77 = vmatprep.subr.mxu0 0.0
  %78 = vmatpush1.msra.mxu0 %v40
  %79 = vmatprep.subr.mxu0 0.0
  %80 = vmatpush1.msra.mxu0 %v39
  %81 = vmatprep.subr.mxu0 0.0
  %82 = vmatpush1.msra.mxu0 %v38
  %83 = vmatprep.subr.mxu0 0.0
  %84 = vmatpush1.msra.mxu0 %v37
  %85 = vmatprep.subr.mxu0 0.0
  %86 = vmatpush1.msra.mxu0 %v36
  %87 = vmatprep.subr.mxu0 0.0
  %88 = vmatpush1.msra.mxu0 %v35
  %89 = vmatprep.subr.mxu0 0.0
  %90 = vmatpush1.msra.mxu0 %v34
  %91 = vmatprep.subr.mxu0 0.0
  %92 = vmatpush1.msra.mxu0 %v33
  %93 = vmatprep.subr.mxu0 0.0
  %94 = vmatpush1.msra.mxu0 %v32
  %95 = vmatprep.subr.mxu0 0.0
  %96 = vmatpush1.msra.mxu0 %v31
  %97 = vmatprep.subr.mxu0 0.0
  %98 = vmatpush1.msra.mxu0 %v30
  %99 = vmatprep.subr.mxu0 0.0
  %100 = vmatpush1.msra.mxu0 %v29
  %101 = vmatprep.subr.mxu0 0.0
  %102 = vmatpush1.msra.mxu0 %v28
  %103 = vmatprep.subr.mxu0 0.0
  %104 = vmatpush1.msra.mxu0 %v27
  %105 = vmatprep.subr.mxu0 0.0
  %106 = vmatpush1.msra.mxu0 %v26
  %107 = vmatprep.subr.mxu0 0.0
  %108 = vmatpush2.msra.mxu0 %v57
  %109 = vmatprep.subr.mxu0 0.0
  %110 = vmatpush2.msra.mxu0 %v56
  %111 = vmatprep.subr.mxu0 0.0
  %112 = vmatpush2.msra.mxu0 %v55
  %113 = vmatprep.subr.mxu0 0.0
  %114 = vmatpush2.msra.mxu0 %v54
  %115 = vmatprep.subr.mxu0 0.0
  %116 = vmatpush2.msra.mxu0 %v53
  %117 = vmatprep.subr.mxu0 0.0
  %118 = vmatpush2.msra.mxu0 %v52
  %119 = vmatprep.subr.mxu0 0.0
  %120 = vmatpush2.msra.mxu0 %v51
  %121 = vmatprep.subr.mxu0 0.0
  %122 = vmatpush2.msra.mxu0 %v50
  %123 = vmatprep.subr.mxu0 0.0
  %124 = vmatpush2.msra.mxu0 %v49
  %125 = vmatprep.subr.mxu0 0.0
  %126 = vmatpush2.msra.mxu0 %v48
  %127 = vmatprep.subr.mxu0 0.0
  %128 = vmatpush2.msra.mxu0 %v47
  %129 = vmatprep.subr.mxu0 0.0
  %130 = vmatpush2.msra.mxu0 %v46
  %131 = vmatprep.subr.mxu0 0.0
  %132 = vmatpush2.msra.mxu0 %v45
  %133 = vmatprep.subr.mxu0 0.0
  %134 = vmatpush2.msra.mxu0 %v44
  %135 = vmatprep.subr.mxu0 0.0
  %136 = vmatpush2.msra.mxu0 %v43
  %137 = vmatprep.subr.mxu0 0.0
  %138 = vmatpush2.msra.mxu0 %v42
  %139 = vmatprep.mubr.f32.mxu0 %v15
  %140 = vmatmul.mubr.f32.gmra.mxu0 %v14
  %v141 = vpop.f32.mrf.mxu0
  %v142 = vadd.f32 0.0, %v141
  %v143 = vpop.f32.mrf.mxu0
  %144 = vmatprep.mubr.f32.mxu0 %v18
  %145 = vmatmul.mubr.f32.gmra.mxu0 %v17
  %v146 = vpop.f32.mrf.mxu0
  %v147 = vadd.f32 0.0, %v146
  %v148 = vpop.f32.mrf.mxu0
  %149 = vmatprep.mubr.f32.mxu0 %v21
  %150 = vmatmul.mubr.f32.gmra.mxu0 %v20
  %v151 = vpop.f32.mrf.mxu0
  %v152 = vadd.f32 0.0, %v151
  %v153 = vpop.f32.mrf.mxu0
  %154 = vmatprep.mubr.f32.mxu0 %v24
  %155 = vmatmul.mubr.f32.gmra.mxu0 %v23
  %v156 = vpop.f32.mrf.mxu0
  %v157 = vadd.f32 0.0, %v156
  %v158 = vpop.f32.mrf.mxu0
  %159 = vdwg.mxu0
  %160 = vmatprep.subr.mxu0 0.0
  %161 = vmatpush1.msra.mxu0 0.0
  %162 = vmatprep.subr.mxu0 0.0
  %163 = vmatpush1.msra.mxu0 0.0
  %164 = vmatprep.subr.mxu0 0.0
  %165 = vmatpush1.msra.mxu0 0.0
  %166 = vmatprep.subr.mxu0 0.0
  %167 = vmatpush1.msra.mxu0 0.0
  %168 = vmatprep.subr.mxu0 0.0
  %169 = vmatpush1.msra.mxu0 0.0
  %170 = vmatprep.subr.mxu0 0.0
  %171 = vmatpush1.msra.mxu0 0.0
  %172 = vmatprep.subr.mxu0 0.0
  %173 = vmatpush1.msra.mxu0 0.0
  %174 = vmatprep.subr.mxu0 0.0
  %175 = vmatpush1.msra.mxu0 0.0
  %176 = vmatprep.subr.mxu0 0.0
  %177 = vmatpush1.msra.mxu0 0.0
  %178 = vmatprep.subr.mxu0 0.0
  %179 = vmatpush1.msra.mxu0 0.0
  %180 = vmatprep.subr.mxu0 0.0
  %181 = vmatpush1.msra.mxu0 0.0
  %182 = vmatprep.subr.mxu0 0.0
  %183 = vmatpush1.msra.mxu0 0.0
  %184 = vmatprep.subr.mxu0 0.0
  %185 = vmatpush1.msra.mxu0 %v61
  %186 = vmatprep.subr.mxu0 0.0
  %187 = vmatpush1.msra.mxu0 %v60
  %188 = vmatprep.subr.mxu0 0.0
  %189 = vmatpush1.msra.mxu0 %v59
  %190 = vmatprep.subr.mxu0 0.0
  %191 = vmatpush1.msra.mxu0 %v58
  %192 = vmatprep.subr.mxu0 0.0
  %193 = vmatpush2.msra.mxu0 0.0
  %194 = vmatprep.subr.mxu0 0.0
  %195 = vmatpush2.msra.mxu0 0.0
  %196 = vmatprep.subr.mxu0 0.0
  %197 = vmatpush2.msra.mxu0 0.0
  %198 = vmatprep.subr.mxu0 0.0
  %199 = vmatpush2.msra.mxu0 0.0
  %200 = vmatprep.subr.mxu0 0.0
  %201 = vmatpush2.msra.mxu0 0.0
  %202 = vmatprep.subr.mxu0 0.0
  %203 = vmatpush2.msra.mxu0 0.0
  %204 = vmatprep.subr.mxu0 0.0
  %205 = vmatpush2.msra.mxu0 0.0
  %206 = vmatprep.subr.mxu0 0.0
  %207 = vmatpush2.msra.mxu0 0.0
  %208 = vmatprep.subr.mxu0 0.0
  %209 = vmatpush2.msra.mxu0 0.0
  %210 = vmatprep.subr.mxu0 0.0
  %211 = vmatpush2.msra.mxu0 0.0
  %212 = vmatprep.subr.mxu0 0.0
  %213 = vmatpush2.msra.mxu0 0.0
  %214 = vmatprep.subr.mxu0 0.0
  %215 = vmatpush2.msra.mxu0 0.0
  %216 = vmatprep.subr.mxu0 0.0
  %217 = vmatpush2.msra.mxu0 0.0
  %218 = vmatprep.subr.mxu0 0.0
  %219 = vmatpush2.msra.mxu0 0.0
  %220 = vmatprep.subr.mxu0 0.0
  %221 = vmatpush2.msra.mxu0 0.0
  %222 = vmatprep.subr.mxu0 0.0
  %223 = vmatpush2.msra.mxu0 0.0
  %224 = vmatprep.mubr.f32.mxu0 0.0
  %225 = vmatmul.mubr.f32.gmra.mxu0 %v64
  %v226 = vpop.f32.mrf.mxu0
  %v227 = vadd.f32 %v142, %v226
  %v228 = vpop.f32.mrf.mxu0
  %229 = vmatprep.mubr.f32.mxu0 0.0
  %230 = vmatmul.mubr.f32.gmra.mxu0 %v67
  %v231 = vpop.f32.mrf.mxu0
  %v232 = vadd.f32 %v147, %v231
  %v233 = vpop.f32.mrf.mxu0
  %234 = vmatprep.mubr.f32.mxu0 0.0
  %235 = vmatmul.mubr.f32.gmra.mxu0 %v70
  %v236 = vpop.f32.mrf.mxu0
  %v237 = vadd.f32 %v152, %v236
  %v238 = vpop.f32.mrf.mxu0
  %239 = vmatprep.mubr.f32.mxu0 0.0
  %240 = vmatmul.mubr.f32.gmra.mxu0 %v73
  %v241 = vpop.f32.mrf.mxu0
  %v242 = vadd.f32 %v157, %v241
  %v243 = vpop.f32.mrf.mxu0
  %244 = vdwg.mxu0
  %s245 = scalar_lea.vmem %s0, 288
  %v246 = vld [vmem:[%s245] sm:$0xff]
  %v247 = vld [vmem:[%s245 + $0x8] sm:$0xff]
  %v248 = vld [vmem:[%s245 + $0x10] sm:$0xff]
  %v249 = vld [vmem:[%s245 + $0x18] sm:$0xff]
  %v250 = vld [vmem:[%s245 + $0x20] sm:$0xff]
  %v251 = vld [vmem:[%s245 + $0x28] sm:$0xff]
  %v252 = vld [vmem:[%s245 + $0x30] sm:$0xff]
  %v253 = vld [vmem:[%s245 + $0x38] sm:$0xff]
  %v254 = vld [vmem:[%s245 + $0x40] sm:$0xff]
  %v255 = vld [vmem:[%s245 + $0x48] sm:$0xff]
  %v256 = vld [vmem:[%s245 + $0x50] sm:$0xff]
  %v257 = vld [vmem:[%s245 + $0x58] sm:$0xff]
  %v258 = vld [vmem:[%s245 + $0x60] sm:$0xff]
  %v259 = vld [vmem:[%s245 + $0x68] sm:$0xff]
  %v260 = vld [vmem:[%s245 + $0x70] sm:$0xff]
  %v261 = vld [vmem:[%s245 + $0x78] sm:$0xff]
  %v262 = vld [vmem:[%s245 + $0x80] sm:$0xff]
  %v263 = vld [vmem:[%s245 + $0x88] sm:$0xff]
  %v264 = vld [vmem:[%s245 + $0x90] sm:$0xff]
  %v265 = vld [vmem:[%s245 + $0x98] sm:$0xff]
  %v266 = vld [vmem:[%s245 + $0xa0] sm:$0xff]
  %v267 = vld [vmem:[%s245 + $0xa8] sm:$0xff]
  %v268 = vld [vmem:[%s245 + $0xb0] sm:$0xff]
  %v269 = vld [vmem:[%s245 + $0xb8] sm:$0xff]
  %v270 = vld [vmem:[%s245 + $0xc0] sm:$0xff]
  %v271 = vld [vmem:[%s245 + $0xc8] sm:$0xff]
  %v272 = vld [vmem:[%s245 + $0xd0] sm:$0xff]
  %v273 = vld [vmem:[%s245 + $0xd8] sm:$0xff]
  %v274 = vld [vmem:[%s245 + $0xe0] sm:$0xff]
  %v275 = vld [vmem:[%s245 + $0xe8] sm:$0xff]
  %v276 = vld [vmem:[%s245 + $0xf0] sm:$0xff]
  %v277 = vld [vmem:[%s245 + $0xf8] sm:$0xff]
  %v278 = vld [vmem:[%s245 + $0x100] sm:$0xff]
  %v279 = vld [vmem:[%s245 + $0x108] sm:$0xff]
  %v280 = vld [vmem:[%s245 + $0x110] sm:$0xff]
  %v281 = vld [vmem:[%s245 + $0x118] sm:$0xff]
  %282 = vmatprep.subr.mxu0 0.0
  %283 = vmatpush1.msra.mxu0 %v261
  %284 = vmatprep.subr.mxu0 0.0
  %285 = vmatpush1.msra.mxu0 %v260
  %286 = vmatprep.subr.mxu0 0.0
  %287 = vmatpush1.msra.mxu0 %v259
  %288 = vmatprep.subr.mxu0 0.0
  %289 = vmatpush1.msra.mxu0 %v258
  %290 = vmatprep.subr.mxu0 0.0
  %291 = vmatpush1.msra.mxu0 %v257
  %292 = vmatprep.subr.mxu0 0.0
  %293 = vmatpush1.msra.mxu0 %v256
  %294 = vmatprep.subr.mxu0 0.0
  %295 = vmatpush1.msra.mxu0 %v255
  %296 = vmatprep.subr.mxu0 0.0
  %297 = vmatpush1.msra.mxu0 %v254
  %298 = vmatprep.subr.mxu0 0.0
  %299 = vmatpush1.msra.mxu0 %v253
  %300 = vmatprep.subr.mxu0 0.0
  %301 = vmatpush1.msra.mxu0 %v252
  %302 = vmatprep.subr.mxu0 0.0
  %303 = vmatpush1.msra.mxu0 %v251
  %304 = vmatprep.subr.mxu0 0.0
  %305 = vmatpush1.msra.mxu0 %v250
  %306 = vmatprep.subr.mxu0 0.0
  %307 = vmatpush1.msra.mxu0 %v249
  %308 = vmatprep.subr.mxu0 0.0
  %309 = vmatpush1.msra.mxu0 %v248
  %310 = vmatprep.subr.mxu0 0.0
  %311 = vmatpush1.msra.mxu0 %v247
  %312 = vmatprep.subr.mxu0 0.0
  %313 = vmatpush1.msra.mxu0 %v246
  %314 = vmatprep.subr.mxu0 0.0
  %315 = vmatpush2.msra.mxu0 %v277
  %316 = vmatprep.subr.mxu0 0.0
  %317 = vmatpush2.msra.mxu0 %v276
  %318 = vmatprep.subr.mxu0 0.0
  %319 = vmatpush2.msra.mxu0 %v275
  %320 = vmatprep.subr.mxu0 0.0
  %321 = vmatpush2.msra.mxu0 %v274
  %322 = vmatprep.subr.mxu0 0.0
  %323 = vmatpush2.msra.mxu0 %v273
  %324 = vmatprep.subr.mxu0 0.0
  %325 = vmatpush2.msra.mxu0 %v272
  %326 = vmatprep.subr.mxu0 0.0
  %327 = vmatpush2.msra.mxu0 %v271
  %328 = vmatprep.subr.mxu0 0.0
  %329 = vmatpush2.msra.mxu0 %v270
  %330 = vmatprep.subr.mxu0 0.0
  %331 = vmatpush2.msra.mxu0 %v269
  %332 = vmatprep.subr.mxu0 0.0
  %333 = vmatpush2.msra.mxu0 %v268
  %334 = vmatprep.subr.mxu0 0.0
  %335 = vmatpush2.msra.mxu0 %v267
  %336 = vmatprep.subr.mxu0 0.0
  %337 = vmatpush2.msra.mxu0 %v266
  %338 = vmatprep.subr.mxu0 0.0
  %339 = vmatpush2.msra.mxu0 %v265
  %340 = vmatprep.subr.mxu0 0.0
  %341 = vmatpush2.msra.mxu0 %v264
  %342 = vmatprep.subr.mxu0 0.0
  %343 = vmatpush2.msra.mxu0 %v263
  %344 = vmatprep.subr.mxu0 0.0
  %345 = vmatpush2.msra.mxu0 %v262
  %346 = vmatprep.mubr.f32.mxu0 %v15
  %347 = vmatmul.mubr.f32.gmra.mxu0 %v14
  %v348 = vpop.f32.mrf.mxu0
  %v349 = vadd.f32 0.0, %v348
  %v350 = vpop.f32.mrf.mxu0
  %351 = vmatprep.mubr.f32.mxu0 %v18
  %352 = vmatmul.mubr.f32.gmra.mxu0 %v17
  %v353 = vpop.f32.mrf.mxu0
  %v354 = vadd.f32 0.0, %v353
  %v355 = vpop.f32.mrf.mxu0
  %356 = vmatprep.mubr.f32.mxu0 %v21
  %357 = vmatmul.mubr.f32.gmra.mxu0 %v20
  %v358 = vpop.f32.mrf.mxu0
  %v359 = vadd.f32 0.0, %v358
  %v360 = vpop.f32.mrf.mxu0
  %361 = vmatprep.mubr.f32.mxu0 %v24
  %362 = vmatmul.mubr.f32.gmra.mxu0 %v23
  %v363 = vpop.f32.mrf.mxu0
  %v364 = vadd.f32 0.0, %v363
  %v365 = vpop.f32.mrf.mxu0
  %366 = vdwg.mxu0
  %367 = vmatprep.subr.mxu0 0.0
  %368 = vmatpush1.msra.mxu0 0.0
  %369 = vmatprep.subr.mxu0 0.0
  %370 = vmatpush1.msra.mxu0 0.0
  %371 = vmatprep.subr.mxu0 0.0
  %372 = vmatpush1.msra.mxu0 0.0
  %373 = vmatprep.subr.mxu0 0.0
  %374 = vmatpush1.msra.mxu0 0.0
  %375 = vmatprep.subr.mxu0 0.0
  %376 = vmatpush1.msra.mxu0 0.0
  %377 = vmatprep.subr.mxu0 0.0
  %378 = vmatpush1.msra.mxu0 0.0
  %379 = vmatprep.subr.mxu0 0.0
  %380 = vmatpush1.msra.mxu0 0.0
  %381 = vmatprep.subr.mxu0 0.0
  %382 = vmatpush1.msra.mxu0 0.0
  %383 = vmatprep.subr.mxu0 0.0
  %384 = vmatpush1.msra.mxu0 0.0
  %385 = vmatprep.subr.mxu0 0.0
  %386 = vmatpush1.msra.mxu0 0.0
  %387 = vmatprep.subr.mxu0 0.0
  %388 = vmatpush1.msra.mxu0 0.0
  %389 = vmatprep.subr.mxu0 0.0
  %390 = vmatpush1.msra.mxu0 0.0
  %391 = vmatprep.subr.mxu0 0.0
  %392 = vmatpush1.msra.mxu0 %v281
  %393 = vmatprep.subr.mxu0 0.0
  %394 = vmatpush1.msra.mxu0 %v280
  %395 = vmatprep.subr.mxu0 0.0
  %396 = vmatpush1.msra.mxu0 %v279
  %397 = vmatprep.subr.mxu0 0.0
  %398 = vmatpush1.msra.mxu0 %v278
  %399 = vmatprep.subr.mxu0 0.0
  %400 = vmatpush2.msra.mxu0 0.0
  %401 = vmatprep.subr.mxu0 0.0
  %402 = vmatpush2.msra.mxu0 0.0
  %403 = vmatprep.subr.mxu0 0.0
  %404 = vmatpush2.msra.mxu0 0.0
  %405 = vmatprep.subr.mxu0 0.0
  %406 = vmatpush2.msra.mxu0 0.0
  %407 = vmatprep.subr.mxu0 0.0
  %408 = vmatpush2.msra.mxu0 0.0
  %409 = vmatprep.subr.mxu0 0.0
  %410 = vmatpush2.msra.mxu0 0.0
  %411 = vmatprep.subr.mxu0 0.0
  %412 = vmatpush2.msra.mxu0 0.0
  %413 = vmatprep.subr.mxu0 0.0
  %414 = vmatpush2.msra.mxu0 0.0
  %415 = vmatprep.subr.mxu0 0.0
  %416 = vmatpush2.msra.mxu0 0.0
  %417 = vmatprep.subr.mxu0 0.0
  %418 = vmatpush2.msra.mxu0 0.0
  %419 = vmatprep.subr.mxu0 0.0
  %420 = vmatpush2.msra.mxu0 0.0
  %421 = vmatprep.subr.mxu0 0.0
  %422 = vmatpush2.msra.mxu0 0.0
  %423 = vmatprep.subr.mxu0 0.0
  %424 = vmatpush2.msra.mxu0 0.0
  %425 = vmatprep.subr.mxu0 0.0
  %426 = vmatpush2.msra.mxu0 0.0
  %427 = vmatprep.subr.mxu0 0.0
  %428 = vmatpush2.msra.mxu0 0.0
  %429 = vmatprep.subr.mxu0 0.0
  %430 = vmatpush2.msra.mxu0 0.0
  %431 = vmatprep.mubr.f32.mxu0 0.0
  %432 = vmatmul.mubr.f32.gmra.mxu0 %v64
  %v433 = vpop.f32.mrf.mxu0
  %v434 = vadd.f32 %v349, %v433
  %v435 = vpop.f32.mrf.mxu0
  %436 = vmatprep.mubr.f32.mxu0 0.0
  %437 = vmatmul.mubr.f32.gmra.mxu0 %v67
  %v438 = vpop.f32.mrf.mxu0
  %v439 = vadd.f32 %v354, %v438
  %v440 = vpop.f32.mrf.mxu0
  %441 = vmatprep.mubr.f32.mxu0 0.0
  %442 = vmatmul.mubr.f32.gmra.mxu0 %v70
  %v443 = vpop.f32.mrf.mxu0
  %v444 = vadd.f32 %v359, %v443
  %v445 = vpop.f32.mrf.mxu0
  %446 = vmatprep.mubr.f32.mxu0 0.0
  %447 = vmatmul.mubr.f32.gmra.mxu0 %v73
  %v448 = vpop.f32.mrf.mxu0
  %v449 = vadd.f32 %v364, %v448
  %v450 = vpop.f32.mrf.mxu0
  %451 = vdwg.mxu0
  %v452 = vmax.f32 %v227, %v434
  %v453 = vmax.f32 %v232, %v439
  %v454 = vmax.f32 %v237, %v444
  %v455 = vmax.f32 %v242, %v449
  %s456 = scalar_lea.vmem %s0, 576
  %v457 = vld [vmem:[%s456] sm:$0xff]
  %v458 = vld [vmem:[%s456 + $0x8] sm:$0xff]
  %v459 = vld [vmem:[%s456 + $0x10] sm:$0xff]
  %v460 = vld [vmem:[%s456 + $0x18] sm:$0xff]
  %v461 = vld [vmem:[%s456 + $0x20] sm:$0xff]
  %v462 = vld [vmem:[%s456 + $0x28] sm:$0xff]
  %v463 = vld [vmem:[%s456 + $0x30] sm:$0xff]
  %v464 = vld [vmem:[%s456 + $0x38] sm:$0xff]
  %v465 = vld [vmem:[%s456 + $0x40] sm:$0xff]
  %v466 = vld [vmem:[%s456 + $0x48] sm:$0xff]
  %v467 = vld [vmem:[%s456 + $0x50] sm:$0xff]
  %v468 = vld [vmem:[%s456 + $0x58] sm:$0xff]
  %v469 = vld [vmem:[%s456 + $0x60] sm:$0xff]
  %v470 = vld [vmem:[%s456 + $0x68] sm:$0xff]
  %v471 = vld [vmem:[%s456 + $0x70] sm:$0xff]
  %v472 = vld [vmem:[%s456 + $0x78] sm:$0xff]
  %v473 = vld [vmem:[%s456 + $0x80] sm:$0xff]
  %v474 = vld [vmem:[%s456 + $0x88] sm:$0xff]
  %v475 = vld [vmem:[%s456 + $0x90] sm:$0xff]
  %v476 = vld [vmem:[%s456 + $0x98] sm:$0xff]
  %v477 = vld [vmem:[%s456 + $0xa0] sm:$0xff]
  %v478 = vld [vmem:[%s456 + $0xa8] sm:$0xff]
  %v479 = vld [vmem:[%s456 + $0xb0] sm:$0xff]
  %v480 = vld [vmem:[%s456 + $0xb8] sm:$0xff]
  %v481 = vld [vmem:[%s456 + $0xc0] sm:$0xff]
  %v482 = vld [vmem:[%s456 + $0xc8] sm:$0xff]
  %v483 = vld [vmem:[%s456 + $0xd0] sm:$0xff]
  %v484 = vld [vmem:[%s456 + $0xd8] sm:$0xff]
  %v485 = vld [vmem:[%s456 + $0xe0] sm:$0xff]
  %v486 = vld [vmem:[%s456 + $0xe8] sm:$0xff]
  %v487 = vld [vmem:[%s456 + $0xf0] sm:$0xff]
  %v488 = vld [vmem:[%s456 + $0xf8] sm:$0xff]
  %v489 = vld [vmem:[%s456 + $0x100] sm:$0xff]
  %v490 = vld [vmem:[%s456 + $0x108] sm:$0xff]
  %v491 = vld [vmem:[%s456 + $0x110] sm:$0xff]
  %v492 = vld [vmem:[%s456 + $0x118] sm:$0xff]
  %493 = vmatprep.subr.mxu0 0.0
  %494 = vmatpush1.msra.mxu0 %v472
  %495 = vmatprep.subr.mxu0 0.0
  %496 = vmatpush1.msra.mxu0 %v471
  %497 = vmatprep.subr.mxu0 0.0
  %498 = vmatpush1.msra.mxu0 %v470
  %499 = vmatprep.subr.mxu0 0.0
  %500 = vmatpush1.msra.mxu0 %v469
  %501 = vmatprep.subr.mxu0 0.0
  %502 = vmatpush1.msra.mxu0 %v468
  %503 = vmatprep.subr.mxu0 0.0
  %504 = vmatpush1.msra.mxu0 %v467
  %505 = vmatprep.subr.mxu0 0.0
  %506 = vmatpush1.msra.mxu0 %v466
  %507 = vmatprep.subr.mxu0 0.0
  %508 = vmatpush1.msra.mxu0 %v465
  %509 = vmatprep.subr.mxu0 0.0
  %510 = vmatpush1.msra.mxu0 %v464
  %511 = vmatprep.subr.mxu0 0.0
  %512 = vmatpush1.msra.mxu0 %v463
  %513 = vmatprep.subr.mxu0 0.0
  %514 = vmatpush1.msra.mxu0 %v462
  %515 = vmatprep.subr.mxu0 0.0
  %516 = vmatpush1.msra.mxu0 %v461
  %517 = vmatprep.subr.mxu0 0.0
  %518 = vmatpush1.msra.mxu0 %v460
  %519 = vmatprep.subr.mxu0 0.0
  %520 = vmatpush1.msra.mxu0 %v459
  %521 = vmatprep.subr.mxu0 0.0
  %522 = vmatpush1.msra.mxu0 %v458
  %523 = vmatprep.subr.mxu0 0.0
  %524 = vmatpush1.msra.mxu0 %v457
  %525 = vmatprep.subr.mxu0 0.0
  %526 = vmatpush2.msra.mxu0 %v488
  %527 = vmatprep.subr.mxu0 0.0
  %528 = vmatpush2.msra.mxu0 %v487
  %529 = vmatprep.subr.mxu0 0.0
  %530 = vmatpush2.msra.mxu0 %v486
  %531 = vmatprep.subr.mxu0 0.0
  %532 = vmatpush2.msra.mxu0 %v485
  %533 = vmatprep.subr.mxu0 0.0
  %534 = vmatpush2.msra.mxu0 %v484
  %535 = vmatprep.subr.mxu0 0.0
  %536 = vmatpush2.msra.mxu0 %v483
  %537 = vmatprep.subr.mxu0 0.0
  %538 = vmatpush2.msra.mxu0 %v482
  %539 = vmatprep.subr.mxu0 0.0
  %540 = vmatpush2.msra.mxu0 %v481
  %541 = vmatprep.subr.mxu0 0.0
  %542 = vmatpush2.msra.mxu0 %v480
  %543 = vmatprep.subr.mxu0 0.0
  %544 = vmatpush2.msra.mxu0 %v479
  %545 = vmatprep.subr.mxu0 0.0
  %546 = vmatpush2.msra.mxu0 %v478
  %547 = vmatprep.subr.mxu0 0.0
  %548 = vmatpush2.msra.mxu0 %v477
  %549 = vmatprep.subr.mxu0 0.0
  %550 = vmatpush2.msra.mxu0 %v476
  %551 = vmatprep.subr.mxu0 0.0
  %552 = vmatpush2.msra.mxu0 %v475
  %553 = vmatprep.subr.mxu0 0.0
  %554 = vmatpush2.msra.mxu0 %v474
  %555 = vmatprep.subr.mxu0 0.0
  %556 = vmatpush2.msra.mxu0 %v473
  %557 = vmatprep.mubr.f32.mxu0 %v15
  %558 = vmatmul.mubr.f32.gmra.mxu0 %v14
  %v559 = vpop.f32.mrf.mxu0
  %v560 = vadd.f32 0.0, %v559
  %v561 = vpop.f32.mrf.mxu0
  %562 = vmatprep.mubr.f32.mxu0 %v18
  %563 = vmatmul.mubr.f32.gmra.mxu0 %v17
  %v564 = vpop.f32.mrf.mxu0
  %v565 = vadd.f32 0.0, %v564
  %v566 = vpop.f32.mrf.mxu0
  %567 = vmatprep.mubr.f32.mxu0 %v21
  %568 = vmatmul.mubr.f32.gmra.mxu0 %v20
  %v569 = vpop.f32.mrf.mxu0
  %v570 = vadd.f32 0.0, %v569
  %v571 = vpop.f32.mrf.mxu0
  %572 = vmatprep.mubr.f32.mxu0 %v24
  %573 = vmatmul.mubr.f32.gmra.mxu0 %v23
  %v574 = vpop.f32.mrf.mxu0
  %v575 = vadd.f32 0.0, %v574
  %v576 = vpop.f32.mrf.mxu0
  %577 = vdwg.mxu0
  %578 = vmatprep.subr.mxu0 0.0
  %579 = vmatpush1.msra.mxu0 0.0
  %580 = vmatprep.subr.mxu0 0.0
  %581 = vmatpush1.msra.mxu0 0.0
  %582 = vmatprep.subr.mxu0 0.0
  %583 = vmatpush1.msra.mxu0 0.0
  %584 = vmatprep.subr.mxu0 0.0
  %585 = vmatpush1.msra.mxu0 0.0
  %586 = vmatprep.subr.mxu0 0.0
  %587 = vmatpush1.msra.mxu0 0.0
  %588 = vmatprep.subr.mxu0 0.0
  %589 = vmatpush1.msra.mxu0 0.0
  %590 = vmatprep.subr.mxu0 0.0
  %591 = vmatpush1.msra.mxu0 0.0
  %592 = vmatprep.subr.mxu0 0.0
  %593 = vmatpush1.msra.mxu0 0.0
  %594 = vmatprep.subr.mxu0 0.0
  %595 = vmatpush1.msra.mxu0 0.0
  %596 = vmatprep.subr.mxu0 0.0
  %597 = vmatpush1.msra.mxu0 0.0
  %598 = vmatprep.subr.mxu0 0.0
  %599 = vmatpush1.msra.mxu0 0.0
  %600 = vmatprep.subr.mxu0 0.0
  %601 = vmatpush1.msra.mxu0 0.0
  %602 = vmatprep.subr.mxu0 0.0
  %603 = vmatpush1.msra.mxu0 %v492
  %604 = vmatprep.subr.mxu0 0.0
  %605 = vmatpush1.msra.mxu0 %v491
  %606 = vmatprep.subr.mxu0 0.0
  %607 = vmatpush1.msra.mxu0 %v490
  %608 = vmatprep.subr.mxu0 0.0
  %609 = vmatpush1.msra.mxu0 %v489
  %610 = vmatprep.subr.mxu0 0.0
  %611 = vmatpush2.msra.mxu0 0.0
  %612 = vmatprep.subr.mxu0 0.0
  %613 = vmatpush2.msra.mxu0 0.0
  %614 = vmatprep.subr.mxu0 0.0
  %615 = vmatpush2.msra.mxu0 0.0
  %616 = vmatprep.subr.mxu0 0.0
  %617 = vmatpush2.msra.mxu0 0.0
  %618 = vmatprep.subr.mxu0 0.0
  %619 = vmatpush2.msra.mxu0 0.0
  %620 = vmatprep.subr.mxu0 0.0
  %621 = vmatpush2.msra.mxu0 0.0
  %622 = vmatprep.subr.mxu0 0.0
  %623 = vmatpush2.msra.mxu0 0.0
  %624 = vmatprep.subr.mxu0 0.0
  %625 = vmatpush2.msra.mxu0 0.0
  %626 = vmatprep.subr.mxu0 0.0
  %627 = vmatpush2.msra.mxu0 0.0
  %628 = vmatprep.subr.mxu0 0.0
  %629 = vmatpush2.msra.mxu0 0.0
  %630 = vmatprep.subr.mxu0 0.0
  %631 = vmatpush2.msra.mxu0 0.0
  %632 = vmatprep.subr.mxu0 0.0
  %633 = vmatpush2.msra.mxu0 0.0
  %634 = vmatprep.subr.mxu0 0.0
  %635 = vmatpush2.msra.mxu0 0.0
  %636 = vmatprep.subr.mxu0 0.0
  %637 = vmatpush2.msra.mxu0 0.0
  %638 = vmatprep.subr.mxu0 0.0
  %639 = vmatpush2.msra.mxu0 0.0
  %640 = vmatprep.subr.mxu0 0.0
  %641 = vmatpush2.msra.mxu0 0.0
  %642 = vmatprep.mubr.f32.mxu0 0.0
  %643 = vmatmul.mubr.f32.gmra.mxu0 %v64
  %v644 = vpop.f32.mrf.mxu0
  %v645 = vadd.f32 %v560, %v644
  %v646 = vpop.f32.mrf.mxu0
  %647 = vmatprep.mubr.f32.mxu0 0.0
  %648 = vmatmul.mubr.f32.gmra.mxu0 %v67
  %v649 = vpop.f32.mrf.mxu0
  %v650 = vadd.f32 %v565, %v649
  %v651 = vpop.f32.mrf.mxu0
  %652 = vmatprep.mubr.f32.mxu0 0.0
  %653 = vmatmul.mubr.f32.gmra.mxu0 %v70
  %v654 = vpop.f32.mrf.mxu0
  %v655 = vadd.f32 %v570, %v654
  %v656 = vpop.f32.mrf.mxu0
  %657 = vmatprep.mubr.f32.mxu0 0.0
  %658 = vmatmul.mubr.f32.gmra.mxu0 %v73
  %v659 = vpop.f32.mrf.mxu0
  %v660 = vadd.f32 %v575, %v659
  %v661 = vpop.f32.mrf.mxu0
  %662 = vdwg.mxu0
  %v663 = vmax.f32 %v452, %v645
  %v664 = vmax.f32 %v453, %v650
  %v665 = vmax.f32 %v454, %v655
  %v666 = vmax.f32 %v455, %v660
  %s667 = scalar_lea.vmem %s0, 864
  %v668 = vld [vmem:[%s667] sm:$0xff]
  %v669 = vld [vmem:[%s667 + $0x8] sm:$0xff]
  %v670 = vld [vmem:[%s667 + $0x10] sm:$0xff]
  %v671 = vld [vmem:[%s667 + $0x18] sm:$0xff]
  %v672 = vld [vmem:[%s667 + $0x20] sm:$0xff]
  %v673 = vld [vmem:[%s667 + $0x28] sm:$0xff]
  %v674 = vld [vmem:[%s667 + $0x30] sm:$0xff]
  %v675 = vld [vmem:[%s667 + $0x38] sm:$0xff]
  %v676 = vld [vmem:[%s667 + $0x40] sm:$0xff]
  %v677 = vld [vmem:[%s667 + $0x48] sm:$0xff]
  %v678 = vld [vmem:[%s667 + $0x50] sm:$0xff]
  %v679 = vld [vmem:[%s667 + $0x58] sm:$0xff]
  %v680 = vld [vmem:[%s667 + $0x60] sm:$0xff]
  %v681 = vld [vmem:[%s667 + $0x68] sm:$0xff]
  %v682 = vld [vmem:[%s667 + $0x70] sm:$0xff]
  %v683 = vld [vmem:[%s667 + $0x78] sm:$0xff]
  %v684 = vld [vmem:[%s667 + $0x80] sm:$0xff]
  %v685 = vld [vmem:[%s667 + $0x88] sm:$0xff]
  %v686 = vld [vmem:[%s667 + $0x90] sm:$0xff]
  %v687 = vld [vmem:[%s667 + $0x98] sm:$0xff]
  %v688 = vld [vmem:[%s667 + $0xa0] sm:$0xff]
  %v689 = vld [vmem:[%s667 + $0xa8] sm:$0xff]
  %v690 = vld [vmem:[%s667 + $0xb0] sm:$0xff]
  %v691 = vld [vmem:[%s667 + $0xb8] sm:$0xff]
  %v692 = vld [vmem:[%s667 + $0xc0] sm:$0xff]
  %v693 = vld [vmem:[%s667 + $0xc8] sm:$0xff]
  %v694 = vld [vmem:[%s667 + $0xd0] sm:$0xff]
  %v695 = vld [vmem:[%s667 + $0xd8] sm:$0xff]
  %v696 = vld [vmem:[%s667 + $0xe0] sm:$0xff]
  %v697 = vld [vmem:[%s667 + $0xe8] sm:$0xff]
  %v698 = vld [vmem:[%s667 + $0xf0] sm:$0xff]
  %v699 = vld [vmem:[%s667 + $0xf8] sm:$0xff]
  %v700 = vld [vmem:[%s667 + $0x100] sm:$0xff]
  %v701 = vld [vmem:[%s667 + $0x108] sm:$0xff]
  %v702 = vld [vmem:[%s667 + $0x110] sm:$0xff]
  %v703 = vld [vmem:[%s667 + $0x118] sm:$0xff]
  %704 = vmatprep.subr.mxu0 0.0
  %705 = vmatpush1.msra.mxu0 %v683
  %706 = vmatprep.subr.mxu0 0.0
  %707 = vmatpush1.msra.mxu0 %v682
  %708 = vmatprep.subr.mxu0 0.0
  %709 = vmatpush1.msra.mxu0 %v681
  %710 = vmatprep.subr.mxu0 0.0
  %711 = vmatpush1.msra.mxu0 %v680
  %712 = vmatprep.subr.mxu0 0.0
  %713 = vmatpush1.msra.mxu0 %v679
  %714 = vmatprep.subr.mxu0 0.0
  %715 = vmatpush1.msra.mxu0 %v678
  %716 = vmatprep.subr.mxu0 0.0
  %717 = vmatpush1.msra.mxu0 %v677
  %718 = vmatprep.subr.mxu0 0.0
  %719 = vmatpush1.msra.mxu0 %v676
  %720 = vmatprep.subr.mxu0 0.0
  %721 = vmatpush1.msra.mxu0 %v675
  %722 = vmatprep.subr.mxu0 0.0
  %723 = vmatpush1.msra.mxu0 %v674
  %724 = vmatprep.subr.mxu0 0.0
  %725 = vmatpush1.msra.mxu0 %v673
  %726 = vmatprep.subr.mxu0 0.0
  %727 = vmatpush1.msra.mxu0 %v672
  %728 = vmatprep.subr.mxu0 0.0
  %729 = vmatpush1.msra.mxu0 %v671
  %730 = vmatprep.subr.mxu0 0.0
  %731 = vmatpush1.msra.mxu0 %v670
  %732 = vmatprep.subr.mxu0 0.0
  %733 = vmatpush1.msra.mxu0 %v669
  %734 = vmatprep.subr.mxu0 0.0
  %735 = vmatpush1.msra.mxu0 %v668
  %736 = vmatprep.subr.mxu0 0.0
  %737 = vmatpush2.msra.mxu0 %v699
  %738 = vmatprep.subr.mxu0 0.0
  %739 = vmatpush2.msra.mxu0 %v698
  %740 = vmatprep.subr.mxu0 0.0
  %741 = vmatpush2.msra.mxu0 %v697
  %742 = vmatprep.subr.mxu0 0.0
  %743 = vmatpush2.msra.mxu0 %v696
  %744 = vmatprep.subr.mxu0 0.0
  %745 = vmatpush2.msra.mxu0 %v695
  %746 = vmatprep.subr.mxu0 0.0
  %747 = vmatpush2.msra.mxu0 %v694
  %748 = vmatprep.subr.mxu0 0.0
  %749 = vmatpush2.msra.mxu0 %v693
  %750 = vmatprep.subr.mxu0 0.0
  %751 = vmatpush2.msra.mxu0 %v692
  %752 = vmatprep.subr.mxu0 0.0
  %753 = vmatpush2.msra.mxu0 %v691
  %754 = vmatprep.subr.mxu0 0.0
  %755 = vmatpush2.msra.mxu0 %v690
  %756 = vmatprep.subr.mxu0 0.0
  %757 = vmatpush2.msra.mxu0 %v689
  %758 = vmatprep.subr.mxu0 0.0
  %759 = vmatpush2.msra.mxu0 %v688
  %760 = vmatprep.subr.mxu0 0.0
  %761 = vmatpush2.msra.mxu0 %v687
  %762 = vmatprep.subr.mxu0 0.0
  %763 = vmatpush2.msra.mxu0 %v686
  %764 = vmatprep.subr.mxu0 0.0
  %765 = vmatpush2.msra.mxu0 %v685
  %766 = vmatprep.subr.mxu0 0.0
  %767 = vmatpush2.msra.mxu0 %v684
  %768 = vmatprep.mubr.f32.mxu0 %v15
  %769 = vmatmul.mubr.f32.gmra.mxu0 %v14
  %v770 = vpop.f32.mrf.mxu0
  %v771 = vadd.f32 0.0, %v770
  %v772 = vpop.f32.mrf.mxu0
  %773 = vmatprep.mubr.f32.mxu0 %v18
  %774 = vmatmul.mubr.f32.gmra.mxu0 %v17
  %v775 = vpop.f32.mrf.mxu0
  %v776 = vadd.f32 0.0, %v775
  %v777 = vpop.f32.mrf.mxu0
  %778 = vmatprep.mubr.f32.mxu0 %v21
  %779 = vmatmul.mubr.f32.gmra.mxu0 %v20
  %v780 = vpop.f32.mrf.mxu0
  %v781 = vadd.f32 0.0, %v780
  %v782 = vpop.f32.mrf.mxu0
  %783 = vmatprep.mubr.f32.mxu0 %v24
  %784 = vmatmul.mubr.f32.gmra.mxu0 %v23
  %v785 = vpop.f32.mrf.mxu0
  %v786 = vadd.f32 0.0, %v785
  %v787 = vpop.f32.mrf.mxu0
  %788 = vdwg.mxu0
  %789 = vmatprep.subr.mxu0 0.0
  %790 = vmatpush1.msra.mxu0 0.0
  %791 = vmatprep.subr.mxu0 0.0
  %792 = vmatpush1.msra.mxu0 0.0
  %793 = vmatprep.subr.mxu0 0.0
  %794 = vmatpush1.msra.mxu0 0.0
  %795 = vmatprep.subr.mxu0 0.0
  %796 = vmatpush1.msra.mxu0 0.0
  %797 = vmatprep.subr.mxu0 0.0
  %798 = vmatpush1.msra.mxu0 0.0
  %799 = vmatprep.subr.mxu0 0.0
  %800 = vmatpush1.msra.mxu0 0.0
  %801 = vmatprep.subr.mxu0 0.0
  %802 = vmatpush1.msra.mxu0 0.0
  %803 = vmatprep.subr.mxu0 0.0
  %804 = vmatpush1.msra.mxu0 0.0
  %805 = vmatprep.subr.mxu0 0.0
  %806 = vmatpush1.msra.mxu0 0.0
  %807 = vmatprep.subr.mxu0 0.0
  %808 = vmatpush1.msra.mxu0 0.0
  %809 = vmatprep.subr.mxu0 0.0
  %810 = vmatpush1.msra.mxu0 0.0
  %811 = vmatprep.subr.mxu0 0.0
  %812 = vmatpush1.msra.mxu0 0.0
  %813 = vmatprep.subr.mxu0 0.0
  %814 = vmatpush1.msra.mxu0 %v703
  %815 = vmatprep.subr.mxu0 0.0
  %816 = vmatpush1.msra.mxu0 %v702
  %817 = vmatprep.subr.mxu0 0.0
  %818 = vmatpush1.msra.mxu0 %v701
  %819 = vmatprep.subr.mxu0 0.0
  %820 = vmatpush1.msra.mxu0 %v700
  %821 = vmatprep.subr.mxu0 0.0
  %822 = vmatpush2.msra.mxu0 0.0
  %823 = vmatprep.subr.mxu0 0.0
  %824 = vmatpush2.msra.mxu0 0.0
  %825 = vmatprep.subr.mxu0 0.0
  %826 = vmatpush2.msra.mxu0 0.0
  %827 = vmatprep.subr.mxu0 0.0
  %828 = vmatpush2.msra.mxu0 0.0
  %829 = vmatprep.subr.mxu0 0.0
  %830 = vmatpush2.msra.mxu0 0.0
  %831 = vmatprep.subr.mxu0 0.0
  %832 = vmatpush2.msra.mxu0 0.0
  %833 = vmatprep.subr.mxu0 0.0
  %834 = vmatpush2.msra.mxu0 0.0
  %835 = vmatprep.subr.mxu0 0.0
  %836 = vmatpush2.msra.mxu0 0.0
  %837 = vmatprep.subr.mxu0 0.0
  %838 = vmatpush2.msra.mxu0 0.0
  %839 = vmatprep.subr.mxu0 0.0
  %840 = vmatpush2.msra.mxu0 0.0
  %841 = vmatprep.subr.mxu0 0.0
  %842 = vmatpush2.msra.mxu0 0.0
  %843 = vmatprep.subr.mxu0 0.0
  %844 = vmatpush2.msra.mxu0 0.0
  %845 = vmatprep.subr.mxu0 0.0
  %846 = vmatpush2.msra.mxu0 0.0
  %847 = vmatprep.subr.mxu0 0.0
  %848 = vmatpush2.msra.mxu0 0.0
  %849 = vmatprep.subr.mxu0 0.0
  %850 = vmatpush2.msra.mxu0 0.0
  %851 = vmatprep.subr.mxu0 0.0
  %852 = vmatpush2.msra.mxu0 0.0
  %853 = vmatprep.mubr.f32.mxu0 0.0
  %854 = vmatmul.mubr.f32.gmra.mxu0 %v64
  %v855 = vpop.f32.mrf.mxu0
  %v856 = vadd.f32 %v771, %v855
  %v857 = vpop.f32.mrf.mxu0
  %858 = vmatprep.mubr.f32.mxu0 0.0
  %859 = vmatmul.mubr.f32.gmra.mxu0 %v67
  %v860 = vpop.f32.mrf.mxu0
  %v861 = vadd.f32 %v776, %v860
  %v862 = vpop.f32.mrf.mxu0
  %863 = vmatprep.mubr.f32.mxu0 0.0
  %864 = vmatmul.mubr.f32.gmra.mxu0 %v70
  %v865 = vpop.f32.mrf.mxu0
  %v866 = vadd.f32 %v781, %v865
  %v867 = vpop.f32.mrf.mxu0
  %868 = vmatprep.mubr.f32.mxu0 0.0
  %869 = vmatmul.mubr.f32.gmra.mxu0 %v73
  %v870 = vpop.f32.mrf.mxu0
  %v871 = vadd.f32 %v786, %v870
  %v872 = vpop.f32.mrf.mxu0
  %873 = vdwg.mxu0
  %v874 = vmax.f32 %v663, %v856
  %v875 = vmax.f32 %v664, %v861
  %v876 = vmax.f32 %v665, %v866
  %v877 = vmax.f32 %v666, %v871
  %v878 = vld [vmem:[%s2] sm:$0xff]
  %v879 = vld [vmem:[%s2 + $0x8] sm:$0xff]
  %v880 = vld [vmem:[%s2 + $0x10] sm:$0xff]
  %v881 = vld [vmem:[%s2 + $0x18] sm:$0xff]
  %883 = vset.pattern.permute.xlu0 0
  %884 = vperm.xlu0 %883, %v878
  %v885 = vpop.permute.xlu0 %884
  %888 = vset.pattern.permute.xlu0 0
  %889 = vperm.xlu0 %888, %v879
  %v890 = vpop.permute.xlu0 %889
  %893 = vset.pattern.permute.xlu0 0
  %894 = vperm.xlu0 %893, %v880
  %v895 = vpop.permute.xlu0 %894
  %898 = vset.pattern.permute.xlu0 0
  %899 = vperm.xlu0 %898, %v881
  %v900 = vpop.permute.xlu0 %899
  %v902 = vadd.f32 %v874, %v885
  %v903 = vadd.f32 %v875, %v890
  %v904 = vadd.f32 %v876, %v895
  %v905 = vadd.f32 %v877, %v900
  %v906 = vmax.f32 %v902, 0.0
  %v907 = vmax.f32 %v903, 0.0
  %v908 = vmax.f32 %v904, 0.0
  %v909 = vmax.f32 %v905, 0.0
  %vm910 = vcmask 64512
  %911 = vst.msk [vmem:[%s3] sm:$0xff] %vm910, %v906
  %912 = vst.msk [vmem:[%s3 + $0x8] sm:$0xff] %vm910, %v907
  %913 = vst.msk [vmem:[%s3 + $0x10] sm:$0xff] %vm910, %v908
  %914 = vst.msk [vmem:[%s3 + $0x18] sm:$0xff] %vm910, %v909
  // Predicated region
  $region14: #{gh_cnn_forward.23} parent=0 // pred_check
    _
  $region15: #{gh_cnn_forward.23} parent=0 // pred_check_branch
    %916 = sbr.rel (0) target = $region17
  $region16: #{gh_cnn_forward.23} parent=0 // pred_region
    _
  $region17: #{gh_cnn_forward.23} parent=0 // pred_fallthru
    _
  // Predicated region
  $region18: #{gh_cnn_forward.23} parent=0 // pred_check
    _
  $region19: #{gh_cnn_forward.23} parent=0 // pred_check_branch
    %918 = sbr.rel (0) target = $region21
  $region20: #{gh_cnn_forward.23} parent=0 // pred_region
    _
  $region21: #{gh_cnn_forward.23} parent=0 // pred_fallthru
    _

// kernel: gh_cnn_forward.27
$region0: #{gh_cnn_forward.27}
  #allocation0 [shape = 'u32[]', space=smem, size = 0x4, offset = 0x4, fixed_abs, tag = 'smem constant byte address 0x4 - core index']
  #allocation1 [shape = 'u32[144,128]{1,0:T(1,128)}', space=vmem, size = 0x12000, scoped, tag = 'internal scratch']
  %s0 = inlined_call_operand.vmem [shape: f32[2,32], index: 0, kind: input, shape index: {}]
  %s1 = inlined_call_operand.vmem [shape: f32[32,64], index: 1, kind: input, shape index: {}]
  %s2 = inlined_call_operand.vmem [shape: f32[1,64], index: 2, kind: input, shape index: {}]
  %s3 = inlined_call_operand.vmem [shape: f32[64,64], index: 3, kind: input, shape index: {}]
  %s4 = inlined_call_operand.vmem [shape: f32[1,64], index: 4, kind: input, shape index: {}]
  %s5 = inlined_call_operand.vmem [shape: f32[64,5], index: 5, kind: input, shape index: {}]
  %s6 = inlined_call_operand.vmem [shape: f32[1,5], index: 6, kind: input, shape index: {}]
  %s7 = inlined_call_operand.vmem [shape: f32[32,128], index: 7, kind: input, shape index: {}]
  %s8 = inlined_call_operand.vmem [shape: f32[1,128], index: 8, kind: input, shape index: {}]
  %s9 = inlined_call_operand.vmem [shape: f32[128,128], index: 9, kind: input, shape index: {}]
  %s10 = inlined_call_operand.vmem [shape: f32[1,128], index: 10, kind: input, shape index: {}]
  %s11 = inlined_call_operand.vmem [shape: f32[128,18], index: 11, kind: input, shape index: {}]
  %s12 = inlined_call_operand.vmem [shape: f32[1,18], index: 12, kind: input, shape index: {}]
  %s13 = inlined_call_operand.hbm [shape: f32[2,5], index: 13, kind: output, shape index: {0}]
  %s14 = inlined_call_operand.hbm [shape: f32[2,18], index: 14, kind: output, shape index: {1}]
  %15 = xla_tuple %s13, %s14
  %s16 = sld [smem:[#allocation0]]
  $region70: #{gh_cnn_forward.27} parent=0
    _
  %s18 = ssub.s32 1, %s16
  %s19 = scalar_select 0, %s18, %s16
  $region1: #{gh_cnn_forward.27} parent=0
    #allocation2 [shape = 'u8[1024]{0}', space=vmem, size = 0x400, scoped, tag = 'output window, operand 0, single buffered']
    #allocation3 [shape = 's32[1]{0}', space=sflag, size = 0x4, scoped, tag = 'scoped memory for gh_cnn_forward.27']
    #allocation4 [shape = 'u8[1024]{0}', space=vmem, size = 0x400, scoped, tag = 'output window, operand 1, single buffered']
    #allocation5 [shape = 's32[1]{0}', space=sflag, size = 0x4, scoped, tag = 'scoped memory for gh_cnn_forward.27']
    %20 = vsyncpa [#allocation3], 0
    %21 = vsyncpa [#allocation5], 0
    // Predicated region
    $region2: #{gh_cnn_forward.27} parent=1 // pred_check
      _
    $region3: #{gh_cnn_forward.27} parent=1 // pred_check_branch
      %23 = sbr.rel (0) target = $region5
    $region4: #{gh_cnn_forward.27} parent=1 // pred_region
      _
    $region5: #{gh_cnn_forward.27} parent=1 // pred_fallthru
      _
    // Predicated region
    $region6: #{gh_cnn_forward.27} parent=1 // pred_check
      _
    $region7: #{gh_cnn_forward.27} parent=1 // pred_check_branch
      %25 = sbr.rel (0) target = $region9
    $region8: #{gh_cnn_forward.27} parent=1 // pred_region
      _
    $region9: #{gh_cnn_forward.27} parent=1 // pred_fallthru
      _
    // Predicated region
    $region10: #{gh_cnn_forward.27} parent=1 // pred_check
      _
    $region11: #{gh_cnn_forward.27} parent=1 // pred_check_branch
      %27 = sbr.rel (0) target = $region13
    $region12: #{gh_cnn_forward.27} parent=1 // pred_region
      _
    $region13: #{gh_cnn_forward.27} parent=1 // pred_fallthru
      _
    // Predicated region
    $region14: #{gh_cnn_forward.27} parent=1 // pred_check
      _
    $region15: #{gh_cnn_forward.27} parent=1 // pred_check_branch
      %29 = sbr.rel (0) target = $region17
    $region16: #{gh_cnn_forward.27} parent=1 // pred_region
      _
    $region17: #{gh_cnn_forward.27} parent=1 // pred_fallthru
      _
    // Predicated region
    $region18: #{gh_cnn_forward.27} parent=1 // pred_check
      _
    $region19: #{gh_cnn_forward.27} parent=1 // pred_check_branch
      %31 = sbr.rel (0) target = $region21
    $region20: #{gh_cnn_forward.27} parent=1 // pred_region
      _
    $region21: #{gh_cnn_forward.27} parent=1 // pred_fallthru
      _
    // Predicated region
    $region22: #{gh_cnn_forward.27} parent=1 // pred_check
      _
    $region23: #{gh_cnn_forward.27} parent=1 // pred_check_branch
      %33 = sbr.rel (0) target = $region25
    $region24: #{gh_cnn_forward.27} parent=1 // pred_region
      _
    $region25: #{gh_cnn_forward.27} parent=1 // pred_fallthru
      _
    // Predicated region
    $region26: #{gh_cnn_forward.27} parent=1 // pred_check
      _
    $region27: #{gh_cnn_forward.27} parent=1 // pred_check_branch
      %35 = sbr.rel (0) target = $region29
    $region28: #{gh_cnn_forward.27} parent=1 // pred_region
      _
    $region29: #{gh_cnn_forward.27} parent=1 // pred_fallthru
      _
    // Predicated region
    $region30: #{gh_cnn_forward.27} parent=1 // pred_check
      _
    $region31: #{gh_cnn_forward.27} parent=1 // pred_check_branch
      %37 = sbr.rel (0) target = $region33
    $region32: #{gh_cnn_forward.27} parent=1 // pred_region
      _
    $region33: #{gh_cnn_forward.27} parent=1 // pred_fallthru
      _
    // Predicated region
    $region34: #{gh_cnn_forward.27} parent=1 // pred_check
      _
    $region35: #{gh_cnn_forward.27} parent=1 // pred_check_branch
      %39 = sbr.rel (0) target = $region37
    $region36: #{gh_cnn_forward.27} parent=1 // pred_region
      _
    $region37: #{gh_cnn_forward.27} parent=1 // pred_fallthru
      _
    // Predicated region
    $region38: #{gh_cnn_forward.27} parent=1 // pred_check
      _
    $region39: #{gh_cnn_forward.27} parent=1 // pred_check_branch
      %41 = sbr.rel (0) target = $region41
    $region40: #{gh_cnn_forward.27} parent=1 // pred_region
      _
    $region41: #{gh_cnn_forward.27} parent=1 // pred_fallthru
      _
    // Predicated region
    $region42: #{gh_cnn_forward.27} parent=1 // pred_check
      _
    $region43: #{gh_cnn_forward.27} parent=1 // pred_check_branch
      %43 = sbr.rel (0) target = $region45
    $region44: #{gh_cnn_forward.27} parent=1 // pred_region
      _
    $region45: #{gh_cnn_forward.27} parent=1 // pred_fallthru
      _
    // Predicated region
    $region46: #{gh_cnn_forward.27} parent=1 // pred_check
      _
    $region47: #{gh_cnn_forward.27} parent=1 // pred_check_branch
      %45 = sbr.rel (0) target = $region49
    $region48: #{gh_cnn_forward.27} parent=1 // pred_region
      _
    $region49: #{gh_cnn_forward.27} parent=1 // pred_fallthru
      _
    // Predicated region
    $region50: #{gh_cnn_forward.27} parent=1 // pred_check
      _
    $region51: #{gh_cnn_forward.27} parent=1 // pred_check_branch
      %47 = sbr.rel (0) target = $region53
    $region52: #{gh_cnn_forward.27} parent=1 // pred_region
      _
    $region53: #{gh_cnn_forward.27} parent=1 // pred_fallthru
      _
    %v48 = vld [vmem:[%s0] sm:$0x3]
    %v49 = vld [vmem:[%s1] sm:$0xff]
    %v50 = vld [vmem:[%s1 + $0x8] sm:$0xff]
    %v51 = vld [vmem:[%s1 + $0x10] sm:$0xff]
    %v52 = vld [vmem:[%s1 + $0x18] sm:$0xff]
    %v53 = vld [vmem:[%s2] sm:$0x1]
    %v55 = vlaneseq
    %v56 = vshrl.u32 %v55, 7
    %v57 = vsub.s32 0, %v56
    %v58 = vrot.slane %v53, %v57
    %vm60 = vcmask 261120
    %v62 = vsel %vm60, %v48, 0
    %64 = vmatprep.subr.mxu0 0.0
    %65 = vmatpush1.msra.mxu0 0.0
    %66 = vmatprep.subr.mxu0 0.0
    %67 = vmatpush1.msra.mxu0 0.0
    %68 = vmatprep.subr.mxu0 0.0
    %69 = vmatpush1.msra.mxu0 0.0
    %70 = vmatprep.subr.mxu0 0.0
    %71 = vmatpush1.msra.mxu0 0.0
    %72 = vmatprep.subr.mxu0 0.0
    %73 = vmatpush1.msra.mxu0 0.0
    %74 = vmatprep.subr.mxu0 0.0
    %75 = vmatpush1.msra.mxu0 0.0
    %76 = vmatprep.subr.mxu0 0.0
    %77 = vmatpush1.msra.mxu0 0.0
    %78 = vmatprep.subr.mxu0 0.0
    %79 = vmatpush1.msra.mxu0 0.0
    %80 = vmatprep.subr.mxu0 0.0
    %81 = vmatpush1.msra.mxu0 0.0
    %82 = vmatprep.subr.mxu0 0.0
    %83 = vmatpush1.msra.mxu0 0.0
    %84 = vmatprep.subr.mxu0 0.0
    %85 = vmatpush1.msra.mxu0 0.0
    %86 = vmatprep.subr.mxu0 0.0
    %87 = vmatpush1.msra.mxu0 0.0
    %88 = vmatprep.subr.mxu0 0.0
    %89 = vmatpush1.msra.mxu0 %v52
    %90 = vmatprep.subr.mxu0 0.0
    %91 = vmatpush1.msra.mxu0 %v51
    %92 = vmatprep.subr.mxu0 0.0
    %93 = vmatpush1.msra.mxu0 %v50
    %94 = vmatprep.subr.mxu0 0.0
    %95 = vmatpush1.msra.mxu0 %v49
    %96 = vmatprep.subr.mxu0 0.0
    %97 = vmatpush2.msra.mxu0 0.0
    %98 = vmatprep.subr.mxu0 0.0
    %99 = vmatpush2.msra.mxu0 0.0
    %100 = vmatprep.subr.mxu0 0.0
    %101 = vmatpush2.msra.mxu0 0.0
    %102 = vmatprep.subr.mxu0 0.0
    %103 = vmatpush2.msra.mxu0 0.0
    %104 = vmatprep.subr.mxu0 0.0
    %105 = vmatpush2.msra.mxu0 0.0
    %106 = vmatprep.subr.mxu0 0.0
    %107 = vmatpush2.msra.mxu0 0.0
    %108 = vmatprep.subr.mxu0 0.0
    %109 = vmatpush2.msra.mxu0 0.0
    %110 = vmatprep.subr.mxu0 0.0
    %111 = vmatpush2.msra.mxu0 0.0
    %112 = vmatprep.subr.mxu0 0.0
    %113 = vmatpush2.msra.mxu0 0.0
    %114 = vmatprep.subr.mxu0 0.0
    %115 = vmatpush2.msra.mxu0 0.0
    %116 = vmatprep.subr.mxu0 0.0
    %117 = vmatpush2.msra.mxu0 0.0
    %118 = vmatprep.subr.mxu0 0.0
    %119 = vmatpush2.msra.mxu0 0.0
    %120 = vmatprep.subr.mxu0 0.0
    %121 = vmatpush2.msra.mxu0 0.0
    %122 = vmatprep.subr.mxu0 0.0
    %123 = vmatpush2.msra.mxu0 0.0
    %124 = vmatprep.subr.mxu0 0.0
    %125 = vmatpush2.msra.mxu0 0.0
    %126 = vmatprep.subr.mxu0 0.0
    %127 = vmatpush2.msra.mxu0 0.0
    %128 = vmatprep.mubr.f32.mxu0 0.0
    %129 = vmatmul.mubr.f32.gmra.mxu0 %v62
    %v130 = vpop.f32.mrf.mxu0
    %v131 = vadd.f32 %v58, %v130
    %v132 = vpop.f32.mrf.mxu0
    %133 = vdwg.mxu0
    %v134 = vmax.f32 %v131, 0.0
    %v135 = vld [vmem:[%s3] sm:$0xff]
    %v136 = vld [vmem:[%s3 + $0x8] sm:$0xff]
    %v137 = vld [vmem:[%s3 + $0x10] sm:$0xff]
    %v138 = vld [vmem:[%s3 + $0x18] sm:$0xff]
    %v139 = vld [vmem:[%s3 + $0x20] sm:$0xff]
    %v140 = vld [vmem:[%s3 + $0x28] sm:$0xff]
    %v141 = vld [vmem:[%s3 + $0x30] sm:$0xff]
    %v142 = vld [vmem:[%s3 + $0x38] sm:$0xff]
    %v143 = vld [vmem:[%s4] sm:$0x1]
    %v145 = vlaneseq
    %v146 = vshrl.u32 %v145, 7
    %v147 = vsub.s32 0, %v146
    %v148 = vrot.slane %v143, %v147
    %vm150 = vcmask 523264
    %v152 = vsel %vm150, %v134, 0
    %154 = vmatprep.subr.mxu0 0.0
    %155 = vmatpush1.msra.mxu0 0.0
    %156 = vmatprep.subr.mxu0 0.0
    %157 = vmatpush1.msra.mxu0 0.0
    %158 = vmatprep.subr.mxu0 0.0
    %159 = vmatpush1.msra.mxu0 0.0
    %160 = vmatprep.subr.mxu0 0.0
    %161 = vmatpush1.msra.mxu0 0.0
    %162 = vmatprep.subr.mxu0 0.0
    %163 = vmatpush1.msra.mxu0 0.0
    %164 = vmatprep.subr.mxu0 0.0
    %165 = vmatpush1.msra.mxu0 0.0
    %166 = vmatprep.subr.mxu0 0.0
    %167 = vmatpush1.msra.mxu0 0.0
    %168 = vmatprep.subr.mxu0 0.0
    %169 = vmatpush1.msra.mxu0 0.0
    %170 = vmatprep.subr.mxu0 0.0
    %171 = vmatpush1.msra.mxu0 %v142
    %172 = vmatprep.subr.mxu0 0.0
    %173 = vmatpush1.msra.mxu0 %v141
    %174 = vmatprep.subr.mxu0 0.0
    %175 = vmatpush1.msra.mxu0 %v140
    %176 = vmatprep.subr.mxu0 0.0
    %177 = vmatpush1.msra.mxu0 %v139
    %178 = vmatprep.subr.mxu0 0.0
    %179 = vmatpush1.msra.mxu0 %v138
    %180 = vmatprep.subr.mxu0 0.0
    %181 = vmatpush1.msra.mxu0 %v137
    %182 = vmatprep.subr.mxu0 0.0
    %183 = vmatpush1.msra.mxu0 %v136
    %184 = vmatprep.subr.mxu0 0.0
    %185 = vmatpush1.msra.mxu0 %v135
    %186 = vmatprep.subr.mxu0 0.0
    %187 = vmatpush2.msra.mxu0 0.0
    %188 = vmatprep.subr.mxu0 0.0
    %189 = vmatpush2.msra.mxu0 0.0
    %190 = vmatprep.subr.mxu0 0.0
    %191 = vmatpush2.msra.mxu0 0.0
    %192 = vmatprep.subr.mxu0 0.0
    %193 = vmatpush2.msra.mxu0 0.0
    %194 = vmatprep.subr.mxu0 0.0
    %195 = vmatpush2.msra.mxu0 0.0
    %196 = vmatprep.subr.mxu0 0.0
    %197 = vmatpush2.msra.mxu0 0.0
    %198 = vmatprep.subr.mxu0 0.0
    %199 = vmatpush2.msra.mxu0 0.0
    %200 = vmatprep.subr.mxu0 0.0
    %201 = vmatpush2.msra.mxu0 0.0
    %202 = vmatprep.subr.mxu0 0.0
    %203 = vmatpush2.msra.mxu0 0.0
    %204 = vmatprep.subr.mxu0 0.0
    %205 = vmatpush2.msra.mxu0 0.0
    %206 = vmatprep.subr.mxu0 0.0
    %207 = vmatpush2.msra.mxu0 0.0
    %208 = vmatprep.subr.mxu0 0.0
    %209 = vmatpush2.msra.mxu0 0.0
    %210 = vmatprep.subr.mxu0 0.0
    %211 = vmatpush2.msra.mxu0 0.0
    %212 = vmatprep.subr.mxu0 0.0
    %213 = vmatpush2.msra.mxu0 0.0
    %214 = vmatprep.subr.mxu0 0.0
    %215 = vmatpush2.msra.mxu0 0.0
    %216 = vmatprep.subr.mxu0 0.0
    %217 = vmatpush2.msra.mxu0 0.0
    %218 = vmatprep.mubr.f32.mxu0 0.0
    %219 = vmatmul.mubr.f32.gmra.mxu0 %v152
    %v220 = vpop.f32.mrf.mxu0
    %v221 = vadd.f32 %v148, %v220
    %v222 = vpop.f32.mrf.mxu0
    %223 = vdwg.mxu0
    %v224 = vmax.f32 %v221, 0.0
    %v225 = vld [vmem:[%s5] sm:$0xff]
    %v226 = vld [vmem:[%s5 + $0x8] sm:$0xff]
    %v227 = vld [vmem:[%s5 + $0x10] sm:$0xff]
    %v228 = vld [vmem:[%s5 + $0x18] sm:$0xff]
    %v229 = vld [vmem:[%s5 + $0x20] sm:$0xff]
    %v230 = vld [vmem:[%s5 + $0x28] sm:$0xff]
    %v231 = vld [vmem:[%s5 + $0x30] sm:$0xff]
    %v232 = vld [vmem:[%s5 + $0x38] sm:$0xff]
    %v233 = vld [vmem:[%s6] sm:$0x1]
    %v235 = vlaneseq
    %v236 = vshrl.u32 %v235, 7
    %v237 = vsub.s32 0, %v236
    %v238 = vrot.slane %v233, %v237
    %v241 = vsel %vm150, %v224, 0
    %243 = vmatprep.subr.mxu0 0.0
    %244 = vmatpush1.msra.mxu0 0.0
    %245 = vmatprep.subr.mxu0 0.0
    %246 = vmatpush1.msra.mxu0 0.0
    %247 = vmatprep.subr.mxu0 0.0
    %248 = vmatpush1.msra.mxu0 0.0
    %249 = vmatprep.subr.mxu0 0.0
    %250 = vmatpush1.msra.mxu0 0.0
    %251 = vmatprep.subr.mxu0 0.0
    %252 = vmatpush1.msra.mxu0 0.0
    %253 = vmatprep.subr.mxu0 0.0
    %254 = vmatpush1.msra.mxu0 0.0
    %255 = vmatprep.subr.mxu0 0.0
    %256 = vmatpush1.msra.mxu0 0.0
    %257 = vmatprep.subr.mxu0 0.0
    %258 = vmatpush1.msra.mxu0 0.0
    %259 = vmatprep.subr.mxu0 0.0
    %260 = vmatpush1.msra.mxu0 %v232
    %261 = vmatprep.subr.mxu0 0.0
    %262 = vmatpush1.msra.mxu0 %v231
    %263 = vmatprep.subr.mxu0 0.0
    %264 = vmatpush1.msra.mxu0 %v230
    %265 = vmatprep.subr.mxu0 0.0
    %266 = vmatpush1.msra.mxu0 %v229
    %267 = vmatprep.subr.mxu0 0.0
    %268 = vmatpush1.msra.mxu0 %v228
    %269 = vmatprep.subr.mxu0 0.0
    %270 = vmatpush1.msra.mxu0 %v227
    %271 = vmatprep.subr.mxu0 0.0
    %272 = vmatpush1.msra.mxu0 %v226
    %273 = vmatprep.subr.mxu0 0.0
    %274 = vmatpush1.msra.mxu0 %v225
    %275 = vmatprep.subr.mxu0 0.0
    %276 = vmatpush2.msra.mxu0 0.0
    %277 = vmatprep.subr.mxu0 0.0
    %278 = vmatpush2.msra.mxu0 0.0
    %279 = vmatprep.subr.mxu0 0.0
    %280 = vmatpush2.msra.mxu0 0.0
    %281 = vmatprep.subr.mxu0 0.0
    %282 = vmatpush2.msra.mxu0 0.0
    %283 = vmatprep.subr.mxu0 0.0
    %284 = vmatpush2.msra.mxu0 0.0
    %285 = vmatprep.subr.mxu0 0.0
    %286 = vmatpush2.msra.mxu0 0.0
    %287 = vmatprep.subr.mxu0 0.0
    %288 = vmatpush2.msra.mxu0 0.0
    %289 = vmatprep.subr.mxu0 0.0
    %290 = vmatpush2.msra.mxu0 0.0
    %291 = vmatprep.subr.mxu0 0.0
    %292 = vmatpush2.msra.mxu0 0.0
    %293 = vmatprep.subr.mxu0 0.0
    %294 = vmatpush2.msra.mxu0 0.0
    %295 = vmatprep.subr.mxu0 0.0
    %296 = vmatpush2.msra.mxu0 0.0
    %297 = vmatprep.subr.mxu0 0.0
    %298 = vmatpush2.msra.mxu0 0.0
    %299 = vmatprep.subr.mxu0 0.0
    %300 = vmatpush2.msra.mxu0 0.0
    %301 = vmatprep.subr.mxu0 0.0
    %302 = vmatpush2.msra.mxu0 0.0
    %303 = vmatprep.subr.mxu0 0.0
    %304 = vmatpush2.msra.mxu0 0.0
    %305 = vmatprep.subr.mxu0 0.0
    %306 = vmatpush2.msra.mxu0 0.0
    %307 = vmatprep.mubr.f32.mxu0 0.0
    %308 = vmatmul.mubr.f32.gmra.mxu0 %v241
    %v309 = vpop.f32.mrf.mxu0
    %v310 = vadd.f32 %v238, %v309
    %v311 = vpop.f32.mrf.mxu0
    %312 = vdwg.mxu0
    %vm313 = vcmask 33792
    %314 = vst.msk [vmem:[#allocation2] sm:$0x3] %vm313, %v310
    %v315 = vld [vmem:[%s7] sm:$0xff]
    %v316 = vld [vmem:[%s7 + $0x8] sm:$0xff]
    %v317 = vld [vmem:[%s7 + $0x10] sm:$0xff]
    %v318 = vld [vmem:[%s7 + $0x18] sm:$0xff]
    %v319 = vld [vmem:[%s8] sm:$0x1]
    %v321 = vlaneseq
    %v322 = vshrl.u32 %v321, 7
    %v323 = vsub.s32 0, %v322
    %v324 = vrot.slane %v319, %v323
    %326 = vmatprep.subr.mxu0 0.0
    %327 = vmatpush1.msra.mxu0 0.0
    %328 = vmatprep.subr.mxu0 0.0
    %329 = vmatpush1.msra.mxu0 0.0
    %330 = vmatprep.subr.mxu0 0.0
    %331 = vmatpush1.msra.mxu0 0.0
    %332 = vmatprep.subr.mxu0 0.0
    %333 = vmatpush1.msra.mxu0 0.0
    %334 = vmatprep.subr.mxu0 0.0
    %335 = vmatpush1.msra.mxu0 0.0
    %336 = vmatprep.subr.mxu0 0.0
    %337 = vmatpush1.msra.mxu0 0.0
    %338 = vmatprep.subr.mxu0 0.0
    %339 = vmatpush1.msra.mxu0 0.0
    %340 = vmatprep.subr.mxu0 0.0
    %341 = vmatpush1.msra.mxu0 0.0
    %342 = vmatprep.subr.mxu0 0.0
    %343 = vmatpush1.msra.mxu0 0.0
    %344 = vmatprep.subr.mxu0 0.0
    %345 = vmatpush1.msra.mxu0 0.0
    %346 = vmatprep.subr.mxu0 0.0
    %347 = vmatpush1.msra.mxu0 0.0
    %348 = vmatprep.subr.mxu0 0.0
    %349 = vmatpush1.msra.mxu0 0.0
    %350 = vmatprep.subr.mxu0 0.0
    %351 = vmatpush1.msra.mxu0 %v318
    %352 = vmatprep.subr.mxu0 0.0
    %353 = vmatpush1.msra.mxu0 %v317
    %354 = vmatprep.subr.mxu0 0.0
    %355 = vmatpush1.msra.mxu0 %v316
    %356 = vmatprep.subr.mxu0 0.0
    %357 = vmatpush1.msra.mxu0 %v315
    %358 = vmatprep.subr.mxu0 0.0
    %359 = vmatpush2.msra.mxu0 0.0
    %360 = vmatprep.subr.mxu0 0.0
    %361 = vmatpush2.msra.mxu0 0.0
    %362 = vmatprep.subr.mxu0 0.0
    %363 = vmatpush2.msra.mxu0 0.0
    %364 = vmatprep.subr.mxu0 0.0
    %365 = vmatpush2.msra.mxu0 0.0
    %366 = vmatprep.subr.mxu0 0.0
    %367 = vmatpush2.msra.mxu0 0.0
    %368 = vmatprep.subr.mxu0 0.0
    %369 = vmatpush2.msra.mxu0 0.0
    %370 = vmatprep.subr.mxu0 0.0
    %371 = vmatpush2.msra.mxu0 0.0
    %372 = vmatprep.subr.mxu0 0.0
    %373 = vmatpush2.msra.mxu0 0.0
    %374 = vmatprep.subr.mxu0 0.0
    %375 = vmatpush2.msra.mxu0 0.0
    %376 = vmatprep.subr.mxu0 0.0
    %377 = vmatpush2.msra.mxu0 0.0
    %378 = vmatprep.subr.mxu0 0.0
    %379 = vmatpush2.msra.mxu0 0.0
    %380 = vmatprep.subr.mxu0 0.0
    %381 = vmatpush2.msra.mxu0 0.0
    %382 = vmatprep.subr.mxu0 0.0
    %383 = vmatpush2.msra.mxu0 0.0
    %384 = vmatprep.subr.mxu0 0.0
    %385 = vmatpush2.msra.mxu0 0.0
    %386 = vmatprep.subr.mxu0 0.0
    %387 = vmatpush2.msra.mxu0 0.0
    %388 = vmatprep.subr.mxu0 0.0
    %389 = vmatpush2.msra.mxu0 0.0
    %390 = vmatprep.mubr.f32.mxu0 0.0
    %391 = vmatmul.mubr.f32.gmra.mxu0 %v62
    %v392 = vpop.f32.mrf.mxu0
    %v393 = vadd.f32 %v324, %v392
    %v394 = vpop.f32.mrf.mxu0
    %395 = vdwg.mxu0
    %v396 = vmax.f32 %v393, 0.0
    %v397 = vld [vmem:[%s9] sm:$0xff]
    %v398 = vld [vmem:[%s9 + $0x8] sm:$0xff]
    %v399 = vld [vmem:[%s9 + $0x10] sm:$0xff]
    %v400 = vld [vmem:[%s9 + $0x18] sm:$0xff]
    %v401 = vld [vmem:[%s9 + $0x20] sm:$0xff]
    %v402 = vld [vmem:[%s9 + $0x28] sm:$0xff]
    %v403 = vld [vmem:[%s9 + $0x30] sm:$0xff]
    %v404 = vld [vmem:[%s9 + $0x38] sm:$0xff]
    %v405 = vld [vmem:[%s9 + $0x40] sm:$0xff]
    %v406 = vld [vmem:[%s9 + $0x48] sm:$0xff]
    %v407 = vld [vmem:[%s9 + $0x50] sm:$0xff]
    %v408 = vld [vmem:[%s9 + $0x58] sm:$0xff]
    %v409 = vld [vmem:[%s9 + $0x60] sm:$0xff]
    %v410 = vld [vmem:[%s9 + $0x68] sm:$0xff]
    %v411 = vld [vmem:[%s9 + $0x70] sm:$0xff]
    %v412 = vld [vmem:[%s9 + $0x78] sm:$0xff]
    %v413 = vld [vmem:[%s10] sm:$0x1]
    %v415 = vlaneseq
    %v416 = vshrl.u32 %v415, 7
    %v417 = vsub.s32 0, %v416
    %v418 = vrot.slane %v413, %v417
    %420 = vmatprep.subr.mxu0 0.0
    %421 = vmatpush1.msra.mxu0 %v412
    %422 = vmatprep.subr.mxu0 0.0
    %423 = vmatpush1.msra.mxu0 %v411
    %424 = vmatprep.subr.mxu0 0.0
    %425 = vmatpush1.msra.mxu0 %v410
    %426 = vmatprep.subr.mxu0 0.0
    %427 = vmatpush1.msra.mxu0 %v409
    %428 = vmatprep.subr.mxu0 0.0
    %429 = vmatpush1.msra.mxu0 %v408
    %430 = vmatprep.subr.mxu0 0.0
    %431 = vmatpush1.msra.mxu0 %v407
    %432 = vmatprep.subr.mxu0 0.0
    %433 = vmatpush1.msra.mxu0 %v406
    %434 = vmatprep.subr.mxu0 0.0
    %435 = vmatpush1.msra.mxu0 %v405
    %436 = vmatprep.subr.mxu0 0.0
    %437 = vmatpush1.msra.mxu0 %v404
    %438 = vmatprep.subr.mxu0 0.0
    %439 = vmatpush1.msra.mxu0 %v403
    %440 = vmatprep.subr.mxu0 0.0
    %441 = vmatpush1.msra.mxu0 %v402
    %442 = vmatprep.subr.mxu0 0.0
    %443 = vmatpush1.msra.mxu0 %v401
    %444 = vmatprep.subr.mxu0 0.0
    %445 = vmatpush1.msra.mxu0 %v400
    %446 = vmatprep.subr.mxu0 0.0
    %447 = vmatpush1.msra.mxu0 %v399
    %448 = vmatprep.subr.mxu0 0.0
    %449 = vmatpush1.msra.mxu0 %v398
    %450 = vmatprep.subr.mxu0 0.0
    %451 = vmatpush1.msra.mxu0 %v397
    %452 = vmatprep.subr.mxu0 0.0
    %453 = vmatpush2.msra.mxu0 0.0
    %454 = vmatprep.subr.mxu0 0.0
    %455 = vmatpush2.msra.mxu0 0.0
    %456 = vmatprep.subr.mxu0 0.0
    %457 = vmatpush2.msra.mxu0 0.0
    %458 = vmatprep.subr.mxu0 0.0
    %459 = vmatpush2.msra.mxu0 0.0
    %460 = vmatprep.subr.mxu0 0.0
    %461 = vmatpush2.msra.mxu0 0.0
    %462 = vmatprep.subr.mxu0 0.0
    %463 = vmatpush2.msra.mxu0 0.0
    %464 = vmatprep.subr.mxu0 0.0
    %465 = vmatpush2.msra.mxu0 0.0
    %466 = vmatprep.subr.mxu0 0.0
    %467 = vmatpush2.msra.mxu0 0.0
    %468 = vmatprep.subr.mxu0 0.0
    %469 = vmatpush2.msra.mxu0 0.0
    %470 = vmatprep.subr.mxu0 0.0
    %471 = vmatpush2.msra.mxu0 0.0
    %472 = vmatprep.subr.mxu0 0.0
    %473 = vmatpush2.msra.mxu0 0.0
    %474 = vmatprep.subr.mxu0 0.0
    %475 = vmatpush2.msra.mxu0 0.0
    %476 = vmatprep.subr.mxu0 0.0
    %477 = vmatpush2.msra.mxu0 0.0
    %478 = vmatprep.subr.mxu0 0.0
    %479 = vmatpush2.msra.mxu0 0.0
    %480 = vmatprep.subr.mxu0 0.0
    %481 = vmatpush2.msra.mxu0 0.0
    %482 = vmatprep.subr.mxu0 0.0
    %483 = vmatpush2.msra.mxu0 0.0
    %484 = vmatprep.mubr.f32.mxu0 0.0
    %485 = vmatmul.mubr.f32.gmra.mxu0 %v396
    %v486 = vpop.f32.mrf.mxu0
    %v487 = vadd.f32 %v418, %v486
    %v488 = vpop.f32.mrf.mxu0
    %489 = vdwg.mxu0
    %v490 = vmax.f32 %v487, 0.0
    %v491 = vld [vmem:[%s11] sm:$0xff]
    %v492 = vld [vmem:[%s11 + $0x8] sm:$0xff]
    %v493 = vld [vmem:[%s11 + $0x10] sm:$0xff]
    %v494 = vld [vmem:[%s11 + $0x18] sm:$0xff]
    %v495 = vld [vmem:[%s11 + $0x20] sm:$0xff]
    %v496 = vld [vmem:[%s11 + $0x28] sm:$0xff]
    %v497 = vld [vmem:[%s11 + $0x30] sm:$0xff]
    %v498 = vld [vmem:[%s11 + $0x38] sm:$0xff]
    %v499 = vld [vmem:[%s11 + $0x40] sm:$0xff]
    %v500 = vld [vmem:[%s11 + $0x48] sm:$0xff]
    %v501 = vld [vmem:[%s11 + $0x50] sm:$0xff]
    %v502 = vld [vmem:[%s11 + $0x58] sm:$0xff]
    %v503 = vld [vmem:[%s11 + $0x60] sm:$0xff]
    %v504 = vld [vmem:[%s11 + $0x68] sm:$0xff]
    %v505 = vld [vmem:[%s11 + $0x70] sm:$0xff]
    %v506 = vld [vmem:[%s11 + $0x78] sm:$0xff]
    %v507 = vld [vmem:[%s12] sm:$0x1]
    %v509 = vlaneseq
    %v510 = vshrl.u32 %v509, 7
    %v511 = vsub.s32 0, %v510
    %v512 = vrot.slane %v507, %v511
    %514 = vmatprep.subr.mxu0 0.0
    %515 = vmatpush1.msra.mxu0 %v506
    %516 = vmatprep.subr.mxu0 0.0
    %517 = vmatpush1.msra.mxu0 %v505
    %518 = vmatprep.subr.mxu0 0.0
    %519 = vmatpush1.msra.mxu0 %v504
    %520 = vmatprep.subr.mxu0 0.0
    %521 = vmatpush1.msra.mxu0 %v503
    %522 = vmatprep.subr.mxu0 0.0
    %523 = vmatpush1.msra.mxu0 %v502
    %524 = vmatprep.subr.mxu0 0.0
    %525 = vmatpush1.msra.mxu0 %v501
    %526 = vmatprep.subr.mxu0 0.0
    %527 = vmatpush1.msra.mxu0 %v500
    %528 = vmatprep.subr.mxu0 0.0
    %529 = vmatpush1.msra.mxu0 %v499
    %530 = vmatprep.subr.mxu0 0.0
    %531 = vmatpush1.msra.mxu0 %v498
    %532 = vmatprep.subr.mxu0 0.0
    %533 = vmatpush1.msra.mxu0 %v497
    %534 = vmatprep.subr.mxu0 0.0
    %535 = vmatpush1.msra.mxu0 %v496
    %536 = vmatprep.subr.mxu0 0.0
    %537 = vmatpush1.msra.mxu0 %v495
    %538 = vmatprep.subr.mxu0 0.0
    %539 = vmatpush1.msra.mxu0 %v494
    %540 = vmatprep.subr.mxu0 0.0
    %541 = vmatpush1.msra.mxu0 %v493
    %542 = vmatprep.subr.mxu0 0.0
    %543 = vmatpush1.msra.mxu0 %v492
    %544 = vmatprep.subr.mxu0 0.0
    %545 = vmatpush1.msra.mxu0 %v491
    %546 = vmatprep.subr.mxu0 0.0
    %547 = vmatpush2.msra.mxu0 0.0
    %548 = vmatprep.subr.mxu0 0.0
    %549 = vmatpush2.msra.mxu0 0.0
    %550 = vmatprep.subr.mxu0 0.0
    %551 = vmatpush2.msra.mxu0 0.0
    %552 = vmatprep.subr.mxu0 0.0
    %553 = vmatpush2.msra.mxu0 0.0
    %554 = vmatprep.subr.mxu0 0.0
    %555 = vmatpush2.msra.mxu0 0.0
    %556 = vmatprep.subr.mxu0 0.0
    %557 = vmatpush2.msra.mxu0 0.0
    %558 = vmatprep.subr.mxu0 0.0
    %559 = vmatpush2.msra.mxu0 0.0
    %560 = vmatprep.subr.mxu0 0.0
    %561 = vmatpush2.msra.mxu0 0.0
    %562 = vmatprep.subr.mxu0 0.0
    %563 = vmatpush2.msra.mxu0 0.0
    %564 = vmatprep.subr.mxu0 0.0
    %565 = vmatpush2.msra.mxu0 0.0
    %566 = vmatprep.subr.mxu0 0.0
    %567 = vmatpush2.msra.mxu0 0.0
    %568 = vmatprep.subr.mxu0 0.0
    %569 = vmatpush2.msra.mxu0 0.0
    %570 = vmatprep.subr.mxu0 0.0
    %571 = vmatpush2.msra.mxu0 0.0
    %572 = vmatprep.subr.mxu0 0.0
    %573 = vmatpush2.msra.mxu0 0.0
    %574 = vmatprep.subr.mxu0 0.0
    %575 = vmatpush2.msra.mxu0 0.0
    %576 = vmatprep.subr.mxu0 0.0
    %577 = vmatpush2.msra.mxu0 0.0
    %578 = vmatprep.mubr.f32.mxu0 0.0
    %579 = vmatmul.mubr.f32.gmra.mxu0 %v490
    %v580 = vpop.f32.mrf.mxu0
    %v581 = vadd.f32 %v512, %v580
    %v582 = vpop.f32.mrf.mxu0
    %583 = vdwg.mxu0
    %vm584 = vcmask 140288
    %585 = vst.msk [vmem:[#allocation4] sm:$0x3] %vm584, %v581
    // Predicated region
    $region54: #{gh_cnn_forward.27} parent=1 // pred_check
      _
    $region55: #{gh_cnn_forward.27} parent=1 // pred_check_branch
      %587 = sbr.rel (0) target = $region57
    $region56: #{gh_cnn_forward.27} parent=1 // pred_region
      %s589 = ssub.s32 32, 32
      %590 = vsyncadd [#allocation3], %s589
      %s592 = sshll.u32 [#allocation2], 4
      %s593 = int_to_ptr.vmem [resolvable:$true] %s592
      %595 = dma.vmem_to_hbm [thread:$0]  %s593, 32, %s13, [#allocation3]
    $region57: #{gh_cnn_forward.27} parent=1 // pred_fallthru
      _
    // Predicated region
    $region58: #{gh_cnn_forward.27} parent=1 // pred_check
      _
    $region59: #{gh_cnn_forward.27} parent=1 // pred_check_branch
      %597 = sbr.rel (0) target = $region61
    $region60: #{gh_cnn_forward.27} parent=1 // pred_region
      %s599 = ssub.s32 32, 32
      %600 = vsyncadd [#allocation5], %s599
      %s602 = sshll.u32 [#allocation4], 4
      %s603 = int_to_ptr.vmem [resolvable:$true] %s602
      %605 = dma.vmem_to_hbm [thread:$0]  %s603, 32, %s14, [#allocation5]
    $region61: #{gh_cnn_forward.27} parent=1 // pred_fallthru
      _
    // Predicated region
    $region62: #{gh_cnn_forward.27} parent=1 // pred_check
      _
    $region63: #{gh_cnn_forward.27} parent=1 // pred_check_branch
      %607 = sbr.rel (0) target = $region65
    $region64: #{gh_cnn_forward.27} parent=1 // pred_region
      %608 = dma.done [#allocation3], 32
    $region65: #{gh_cnn_forward.27} parent=1 // pred_fallthru
      _
    // Predicated region
    $region66: #{gh_cnn_forward.27} parent=1 // pred_check
      _
    $region67: #{gh_cnn_forward.27} parent=1 // pred_check_branch
      %610 = sbr.rel (0) target = $region69
    $region68: #{gh_cnn_forward.27} parent=1 // pred_region
      %611 = dma.done [#allocation5], 32
    $region69: #{gh_cnn_forward.27} parent=1 // pred_fallthru
      _
    %612 = vsyncpa [#allocation3], 1
    %613 = vsyncpa [#allocation5], 1

// kernel: gh_cnn_forward.26
$region0: #{gh_cnn_forward.26}
  #allocation0 [shape = 'u32[]', space=smem, size = 0x4, offset = 0x4, fixed_abs, tag = 'smem constant byte address 0x4 - core index']
  #allocation1 [shape = 'u32[144,128]{1,0:T(1,128)}', space=vmem, size = 0x12000, scoped, tag = 'internal scratch']
  %s0 = inlined_call_operand.vmem [shape: f32[4,288,2], index: 0, kind: input, shape index: {}]
  %s1 = inlined_call_operand.vmem [shape: f32[32,288], index: 1, kind: input, shape index: {}]
  %s2 = inlined_call_operand.vmem [shape: f32[32,1], index: 2, kind: input, shape index: {}]
  %s3 = inlined_call_operand.vmem [shape: f32[32,2], index: 3, kind: output, shape index: {}]
  %s4 = sld [smem:[#allocation0]]
  $region22: #{gh_cnn_forward.26} parent=0
    _
  %s6 = ssub.s32 1, %s4
  %s7 = scalar_select 0, %s6, %s4
  // Predicated region
  $region2: #{gh_cnn_forward.26} parent=0 // pred_check
    _
  $region3: #{gh_cnn_forward.26} parent=0 // pred_check_branch
    %9 = sbr.rel (0) target = $region5
  $region4: #{gh_cnn_forward.26} parent=0 // pred_region
    _
  $region5: #{gh_cnn_forward.26} parent=0 // pred_fallthru
    _
  // Predicated region
  $region6: #{gh_cnn_forward.26} parent=0 // pred_check
    _
  $region7: #{gh_cnn_forward.26} parent=0 // pred_check_branch
    %11 = sbr.rel (0) target = $region9
  $region8: #{gh_cnn_forward.26} parent=0 // pred_region
    _
  $region9: #{gh_cnn_forward.26} parent=0 // pred_fallthru
    _
  // Predicated region
  $region10: #{gh_cnn_forward.26} parent=0 // pred_check
    _
  $region11: #{gh_cnn_forward.26} parent=0 // pred_check_branch
    %13 = sbr.rel (0) target = $region13
  $region12: #{gh_cnn_forward.26} parent=0 // pred_region
    _
  $region13: #{gh_cnn_forward.26} parent=0 // pred_fallthru
    _
  %v14 = vld [vmem:[%s1] sm:$0xff]
  %v15 = vld [vmem:[%s1 + $0x8] sm:$0xff]
  %v16 = vld [vmem:[%s1 + $0x10] sm:$0xff]
  %v17 = vld [vmem:[%s1 + $0x18] sm:$0xff]
  %v18 = vld [vmem:[%s1 + $0x20] sm:$0xff]
  %v19 = vld [vmem:[%s1 + $0x28] sm:$0xff]
  %v20 = vld [vmem:[%s1 + $0x30] sm:$0xff]
  %v21 = vld [vmem:[%s1 + $0x38] sm:$0xff]
  %v22 = vld [vmem:[%s1 + $0x40] sm:$0xff]
  %v23 = vld [vmem:[%s1 + $0x48] sm:$0xff]
  %v24 = vld [vmem:[%s1 + $0x50] sm:$0xff]
  %v25 = vld [vmem:[%s1 + $0x58] sm:$0xff]
  %v26 = vld [vmem:[%s0] sm:$0xff]
  %v27 = vld [vmem:[%s0 + $0x8] sm:$0xff]
  %v28 = vld [vmem:[%s0 + $0x10] sm:$0xff]
  %v29 = vld [vmem:[%s0 + $0x18] sm:$0xff]
  %v30 = vld [vmem:[%s0 + $0x20] sm:$0xff]
  %v31 = vld [vmem:[%s0 + $0x28] sm:$0xff]
  %v32 = vld [vmem:[%s0 + $0x30] sm:$0xff]
  %v33 = vld [vmem:[%s0 + $0x38] sm:$0xff]
  %v34 = vld [vmem:[%s0 + $0x40] sm:$0xff]
  %v35 = vld [vmem:[%s0 + $0x48] sm:$0xff]
  %v36 = vld [vmem:[%s0 + $0x50] sm:$0xff]
  %v37 = vld [vmem:[%s0 + $0x58] sm:$0xff]
  %v38 = vld [vmem:[%s0 + $0x60] sm:$0xff]
  %v39 = vld [vmem:[%s0 + $0x68] sm:$0xff]
  %v40 = vld [vmem:[%s0 + $0x70] sm:$0xff]
  %v41 = vld [vmem:[%s0 + $0x78] sm:$0xff]
  %v42 = vld [vmem:[%s0 + $0x80] sm:$0xff]
  %v43 = vld [vmem:[%s0 + $0x88] sm:$0xff]
  %v44 = vld [vmem:[%s0 + $0x90] sm:$0xff]
  %v45 = vld [vmem:[%s0 + $0x98] sm:$0xff]
  %v46 = vld [vmem:[%s0 + $0xa0] sm:$0xff]
  %v47 = vld [vmem:[%s0 + $0xa8] sm:$0xff]
  %v48 = vld [vmem:[%s0 + $0xb0] sm:$0xff]
  %v49 = vld [vmem:[%s0 + $0xb8] sm:$0xff]
  %v50 = vld [vmem:[%s0 + $0xc0] sm:$0xff]
  %v51 = vld [vmem:[%s0 + $0xc8] sm:$0xff]
  %v52 = vld [vmem:[%s0 + $0xd0] sm:$0xff]
  %v53 = vld [vmem:[%s0 + $0xd8] sm:$0xff]
  %v54 = vld [vmem:[%s0 + $0xe0] sm:$0xff]
  %v55 = vld [vmem:[%s0 + $0xe8] sm:$0xff]
  %v56 = vld [vmem:[%s0 + $0xf0] sm:$0xff]
  %v57 = vld [vmem:[%s0 + $0xf8] sm:$0xff]
  %v58 = vld [vmem:[%s0 + $0x100] sm:$0xff]
  %v59 = vld [vmem:[%s0 + $0x108] sm:$0xff]
  %v60 = vld [vmem:[%s0 + $0x110] sm:$0xff]
  %v61 = vld [vmem:[%s0 + $0x118] sm:$0xff]
  %vm62 = vcmask 261120
  %v64 = vsel %vm62, %v16, 0
  %v67 = vsel %vm62, %v19, 0
  %v70 = vsel %vm62, %v22, 0
  %v73 = vsel %vm62, %v25, 0
  %75 = vmatprep.subr.mxu0 0.0
  %76 = vmatpush1.msra.mxu0 %v41
  %77 = vmatprep.subr.mxu0 0.0
  %78 = vmatpush1.msra.mxu0 %v40
  %79 = vmatprep.subr.mxu0 0.0
  %80 = vmatpush1.msra.mxu0 %v39
  %81 = vmatprep.subr.mxu0 0.0
  %82 = vmatpush1.msra.mxu0 %v38
  %83 = vmatprep.subr.mxu0 0.0
  %84 = vmatpush1.msra.mxu0 %v37
  %85 = vmatprep.subr.mxu0 0.0
  %86 = vmatpush1.msra.mxu0 %v36
  %87 = vmatprep.subr.mxu0 0.0
  %88 = vmatpush1.msra.mxu0 %v35
  %89 = vmatprep.subr.mxu0 0.0
  %90 = vmatpush1.msra.mxu0 %v34
  %91 = vmatprep.subr.mxu0 0.0
  %92 = vmatpush1.msra.mxu0 %v33
  %93 = vmatprep.subr.mxu0 0.0
  %94 = vmatpush1.msra.mxu0 %v32
  %95 = vmatprep.subr.mxu0 0.0
  %96 = vmatpush1.msra.mxu0 %v31
  %97 = vmatprep.subr.mxu0 0.0
  %98 = vmatpush1.msra.mxu0 %v30
  %99 = vmatprep.subr.mxu0 0.0
  %100 = vmatpush1.msra.mxu0 %v29
  %101 = vmatprep.subr.mxu0 0.0
  %102 = vmatpush1.msra.mxu0 %v28
  %103 = vmatprep.subr.mxu0 0.0
  %104 = vmatpush1.msra.mxu0 %v27
  %105 = vmatprep.subr.mxu0 0.0
  %106 = vmatpush1.msra.mxu0 %v26
  %107 = vmatprep.subr.mxu0 0.0
  %108 = vmatpush2.msra.mxu0 %v57
  %109 = vmatprep.subr.mxu0 0.0
  %110 = vmatpush2.msra.mxu0 %v56
  %111 = vmatprep.subr.mxu0 0.0
  %112 = vmatpush2.msra.mxu0 %v55
  %113 = vmatprep.subr.mxu0 0.0
  %114 = vmatpush2.msra.mxu0 %v54
  %115 = vmatprep.subr.mxu0 0.0
  %116 = vmatpush2.msra.mxu0 %v53
  %117 = vmatprep.subr.mxu0 0.0
  %118 = vmatpush2.msra.mxu0 %v52
  %119 = vmatprep.subr.mxu0 0.0
  %120 = vmatpush2.msra.mxu0 %v51
  %121 = vmatprep.subr.mxu0 0.0
  %122 = vmatpush2.msra.mxu0 %v50
  %123 = vmatprep.subr.mxu0 0.0
  %124 = vmatpush2.msra.mxu0 %v49
  %125 = vmatprep.subr.mxu0 0.0
  %126 = vmatpush2.msra.mxu0 %v48
  %127 = vmatprep.subr.mxu0 0.0
  %128 = vmatpush2.msra.mxu0 %v47
  %129 = vmatprep.subr.mxu0 0.0
  %130 = vmatpush2.msra.mxu0 %v46
  %131 = vmatprep.subr.mxu0 0.0
  %132 = vmatpush2.msra.mxu0 %v45
  %133 = vmatprep.subr.mxu0 0.0
  %134 = vmatpush2.msra.mxu0 %v44
  %135 = vmatprep.subr.mxu0 0.0
  %136 = vmatpush2.msra.mxu0 %v43
  %137 = vmatprep.subr.mxu0 0.0
  %138 = vmatpush2.msra.mxu0 %v42
  %139 = vmatprep.mubr.f32.mxu0 %v15
  %140 = vmatmul.mubr.f32.gmra.mxu0 %v14
  %v141 = vpop.f32.mrf.mxu0
  %v142 = vadd.f32 0.0, %v141
  %v143 = vpop.f32.mrf.mxu0
  %144 = vmatprep.mubr.f32.mxu0 %v18
  %145 = vmatmul.mubr.f32.gmra.mxu0 %v17
  %v146 = vpop.f32.mrf.mxu0
  %v147 = vadd.f32 0.0, %v146
  %v148 = vpop.f32.mrf.mxu0
  %149 = vmatprep.mubr.f32.mxu0 %v21
  %150 = vmatmul.mubr.f32.gmra.mxu0 %v20
  %v151 = vpop.f32.mrf.mxu0
  %v152 = vadd.f32 0.0, %v151
  %v153 = vpop.f32.mrf.mxu0
  %154 = vmatprep.mubr.f32.mxu0 %v24
  %155 = vmatmul.mubr.f32.gmra.mxu0 %v23
  %v156 = vpop.f32.mrf.mxu0
  %v157 = vadd.f32 0.0, %v156
  %v158 = vpop.f32.mrf.mxu0
  %159 = vdwg.mxu0
  %160 = vmatprep.subr.mxu0 0.0
  %161 = vmatpush1.msra.mxu0 0.0
  %162 = vmatprep.subr.mxu0 0.0
  %163 = vmatpush1.msra.mxu0 0.0
  %164 = vmatprep.subr.mxu0 0.0
  %165 = vmatpush1.msra.mxu0 0.0
  %166 = vmatprep.subr.mxu0 0.0
  %167 = vmatpush1.msra.mxu0 0.0
  %168 = vmatprep.subr.mxu0 0.0
  %169 = vmatpush1.msra.mxu0 0.0
  %170 = vmatprep.subr.mxu0 0.0
  %171 = vmatpush1.msra.mxu0 0.0
  %172 = vmatprep.subr.mxu0 0.0
  %173 = vmatpush1.msra.mxu0 0.0
  %174 = vmatprep.subr.mxu0 0.0
  %175 = vmatpush1.msra.mxu0 0.0
  %176 = vmatprep.subr.mxu0 0.0
  %177 = vmatpush1.msra.mxu0 0.0
  %178 = vmatprep.subr.mxu0 0.0
  %179 = vmatpush1.msra.mxu0 0.0
  %180 = vmatprep.subr.mxu0 0.0
  %181 = vmatpush1.msra.mxu0 0.0
  %182 = vmatprep.subr.mxu0 0.0
  %183 = vmatpush1.msra.mxu0 0.0
  %184 = vmatprep.subr.mxu0 0.0
  %185 = vmatpush1.msra.mxu0 %v61
  %186 = vmatprep.subr.mxu0 0.0
  %187 = vmatpush1.msra.mxu0 %v60
  %188 = vmatprep.subr.mxu0 0.0
  %189 = vmatpush1.msra.mxu0 %v59
  %190 = vmatprep.subr.mxu0 0.0
  %191 = vmatpush1.msra.mxu0 %v58
  %192 = vmatprep.subr.mxu0 0.0
  %193 = vmatpush2.msra.mxu0 0.0
  %194 = vmatprep.subr.mxu0 0.0
  %195 = vmatpush2.msra.mxu0 0.0
  %196 = vmatprep.subr.mxu0 0.0
  %197 = vmatpush2.msra.mxu0 0.0
  %198 = vmatprep.subr.mxu0 0.0
  %199 = vmatpush2.msra.mxu0 0.0
  %200 = vmatprep.subr.mxu0 0.0
  %201 = vmatpush2.msra.mxu0 0.0
  %202 = vmatprep.subr.mxu0 0.0
  %203 = vmatpush2.msra.mxu0 0.0
  %204 = vmatprep.subr.mxu0 0.0
  %205 = vmatpush2.msra.mxu0 0.0
  %206 = vmatprep.subr.mxu0 0.0
  %207 = vmatpush2.msra.mxu0 0.0
  %208 = vmatprep.subr.mxu0 0.0
  %209 = vmatpush2.msra.mxu0 0.0
  %210 = vmatprep.subr.mxu0 0.0
  %211 = vmatpush2.msra.mxu0 0.0
  %212 = vmatprep.subr.mxu0 0.0
  %213 = vmatpush2.msra.mxu0 0.0
  %214 = vmatprep.subr.mxu0 0.0
  %215 = vmatpush2.msra.mxu0 0.0
  %216 = vmatprep.subr.mxu0 0.0
  %217 = vmatpush2.msra.mxu0 0.0
  %218 = vmatprep.subr.mxu0 0.0
  %219 = vmatpush2.msra.mxu0 0.0
  %220 = vmatprep.subr.mxu0 0.0
  %221 = vmatpush2.msra.mxu0 0.0
  %222 = vmatprep.subr.mxu0 0.0
  %223 = vmatpush2.msra.mxu0 0.0
  %224 = vmatprep.mubr.f32.mxu0 0.0
  %225 = vmatmul.mubr.f32.gmra.mxu0 %v64
  %v226 = vpop.f32.mrf.mxu0
  %v227 = vadd.f32 %v142, %v226
  %v228 = vpop.f32.mrf.mxu0
  %229 = vmatprep.mubr.f32.mxu0 0.0
  %230 = vmatmul.mubr.f32.gmra.mxu0 %v67
  %v231 = vpop.f32.mrf.mxu0
  %v232 = vadd.f32 %v147, %v231
  %v233 = vpop.f32.mrf.mxu0
  %234 = vmatprep.mubr.f32.mxu0 0.0
  %235 = vmatmul.mubr.f32.gmra.mxu0 %v70
  %v236 = vpop.f32.mrf.mxu0
  %v237 = vadd.f32 %v152, %v236
  %v238 = vpop.f32.mrf.mxu0
  %239 = vmatprep.mubr.f32.mxu0 0.0
  %240 = vmatmul.mubr.f32.gmra.mxu0 %v73
  %v241 = vpop.f32.mrf.mxu0
  %v242 = vadd.f32 %v157, %v241
  %v243 = vpop.f32.mrf.mxu0
  %244 = vdwg.mxu0
  %s245 = scalar_lea.vmem %s0, 288
  %v246 = vld [vmem:[%s245] sm:$0xff]
  %v247 = vld [vmem:[%s245 + $0x8] sm:$0xff]
  %v248 = vld [vmem:[%s245 + $0x10] sm:$0xff]
  %v249 = vld [vmem:[%s245 + $0x18] sm:$0xff]
  %v250 = vld [vmem:[%s245 + $0x20] sm:$0xff]
  %v251 = vld [vmem:[%s245 + $0x28] sm:$0xff]
  %v252 = vld [vmem:[%s245 + $0x30] sm:$0xff]
  %v253 = vld [vmem:[%s245 + $0x38] sm:$0xff]
  %v254 = vld [vmem:[%s245 + $0x40] sm:$0xff]
  %v255 = vld [vmem:[%s245 + $0x48] sm:$0xff]
  %v256 = vld [vmem:[%s245 + $0x50] sm:$0xff]
  %v257 = vld [vmem:[%s245 + $0x58] sm:$0xff]
  %v258 = vld [vmem:[%s245 + $0x60] sm:$0xff]
  %v259 = vld [vmem:[%s245 + $0x68] sm:$0xff]
  %v260 = vld [vmem:[%s245 + $0x70] sm:$0xff]
  %v261 = vld [vmem:[%s245 + $0x78] sm:$0xff]
  %v262 = vld [vmem:[%s245 + $0x80] sm:$0xff]
  %v263 = vld [vmem:[%s245 + $0x88] sm:$0xff]
  %v264 = vld [vmem:[%s245 + $0x90] sm:$0xff]
  %v265 = vld [vmem:[%s245 + $0x98] sm:$0xff]
  %v266 = vld [vmem:[%s245 + $0xa0] sm:$0xff]
  %v267 = vld [vmem:[%s245 + $0xa8] sm:$0xff]
  %v268 = vld [vmem:[%s245 + $0xb0] sm:$0xff]
  %v269 = vld [vmem:[%s245 + $0xb8] sm:$0xff]
  %v270 = vld [vmem:[%s245 + $0xc0] sm:$0xff]
  %v271 = vld [vmem:[%s245 + $0xc8] sm:$0xff]
  %v272 = vld [vmem:[%s245 + $0xd0] sm:$0xff]
  %v273 = vld [vmem:[%s245 + $0xd8] sm:$0xff]
  %v274 = vld [vmem:[%s245 + $0xe0] sm:$0xff]
  %v275 = vld [vmem:[%s245 + $0xe8] sm:$0xff]
  %v276 = vld [vmem:[%s245 + $0xf0] sm:$0xff]
  %v277 = vld [vmem:[%s245 + $0xf8] sm:$0xff]
  %v278 = vld [vmem:[%s245 + $0x100] sm:$0xff]
  %v279 = vld [vmem:[%s245 + $0x108] sm:$0xff]
  %v280 = vld [vmem:[%s245 + $0x110] sm:$0xff]
  %v281 = vld [vmem:[%s245 + $0x118] sm:$0xff]
  %282 = vmatprep.subr.mxu0 0.0
  %283 = vmatpush1.msra.mxu0 %v261
  %284 = vmatprep.subr.mxu0 0.0
  %285 = vmatpush1.msra.mxu0 %v260
  %286 = vmatprep.subr.mxu0 0.0
  %287 = vmatpush1.msra.mxu0 %v259
  %288 = vmatprep.subr.mxu0 0.0
  %289 = vmatpush1.msra.mxu0 %v258
  %290 = vmatprep.subr.mxu0 0.0
  %291 = vmatpush1.msra.mxu0 %v257
  %292 = vmatprep.subr.mxu0 0.0
  %293 = vmatpush1.msra.mxu0 %v256
  %294 = vmatprep.subr.mxu0 0.0
  %295 = vmatpush1.msra.mxu0 %v255
  %296 = vmatprep.subr.mxu0 0.0
  %297 = vmatpush1.msra.mxu0 %v254
  %298 = vmatprep.subr.mxu0 0.0
  %299 = vmatpush1.msra.mxu0 %v253
  %300 = vmatprep.subr.mxu0 0.0
  %301 = vmatpush1.msra.mxu0 %v252
  %302 = vmatprep.subr.mxu0 0.0
  %303 = vmatpush1.msra.mxu0 %v251
  %304 = vmatprep.subr.mxu0 0.0
  %305 = vmatpush1.msra.mxu0 %v250
  %306 = vmatprep.subr.mxu0 0.0
  %307 = vmatpush1.msra.mxu0 %v249
  %308 = vmatprep.subr.mxu0 0.0
  %309 = vmatpush1.msra.mxu0 %v248
  %310 = vmatprep.subr.mxu0 0.0
  %311 = vmatpush1.msra.mxu0 %v247
  %312 = vmatprep.subr.mxu0 0.0
  %313 = vmatpush1.msra.mxu0 %v246
  %314 = vmatprep.subr.mxu0 0.0
  %315 = vmatpush2.msra.mxu0 %v277
  %316 = vmatprep.subr.mxu0 0.0
  %317 = vmatpush2.msra.mxu0 %v276
  %318 = vmatprep.subr.mxu0 0.0
  %319 = vmatpush2.msra.mxu0 %v275
  %320 = vmatprep.subr.mxu0 0.0
  %321 = vmatpush2.msra.mxu0 %v274
  %322 = vmatprep.subr.mxu0 0.0
  %323 = vmatpush2.msra.mxu0 %v273
  %324 = vmatprep.subr.mxu0 0.0
  %325 = vmatpush2.msra.mxu0 %v272
  %326 = vmatprep.subr.mxu0 0.0
  %327 = vmatpush2.msra.mxu0 %v271
  %328 = vmatprep.subr.mxu0 0.0
  %329 = vmatpush2.msra.mxu0 %v270
  %330 = vmatprep.subr.mxu0 0.0
  %331 = vmatpush2.msra.mxu0 %v269
  %332 = vmatprep.subr.mxu0 0.0
  %333 = vmatpush2.msra.mxu0 %v268
  %334 = vmatprep.subr.mxu0 0.0
  %335 = vmatpush2.msra.mxu0 %v267
  %336 = vmatprep.subr.mxu0 0.0
  %337 = vmatpush2.msra.mxu0 %v266
  %338 = vmatprep.subr.mxu0 0.0
  %339 = vmatpush2.msra.mxu0 %v265
  %340 = vmatprep.subr.mxu0 0.0
  %341 = vmatpush2.msra.mxu0 %v264
  %342 = vmatprep.subr.mxu0 0.0
  %343 = vmatpush2.msra.mxu0 %v263
  %344 = vmatprep.subr.mxu0 0.0
  %345 = vmatpush2.msra.mxu0 %v262
  %346 = vmatprep.mubr.f32.mxu0 %v15
  %347 = vmatmul.mubr.f32.gmra.mxu0 %v14
  %v348 = vpop.f32.mrf.mxu0
  %v349 = vadd.f32 0.0, %v348
  %v350 = vpop.f32.mrf.mxu0
  %351 = vmatprep.mubr.f32.mxu0 %v18
  %352 = vmatmul.mubr.f32.gmra.mxu0 %v17
  %v353 = vpop.f32.mrf.mxu0
  %v354 = vadd.f32 0.0, %v353
  %v355 = vpop.f32.mrf.mxu0
  %356 = vmatprep.mubr.f32.mxu0 %v21
  %357 = vmatmul.mubr.f32.gmra.mxu0 %v20
  %v358 = vpop.f32.mrf.mxu0
  %v359 = vadd.f32 0.0, %v358
  %v360 = vpop.f32.mrf.mxu0
  %361 = vmatprep.mubr.f32.mxu0 %v24
  %362 = vmatmul.mubr.f32.gmra.mxu0 %v23
  %v363 = vpop.f32.mrf.mxu0
  %v364 = vadd.f32 0.0, %v363
  %v365 = vpop.f32.mrf.mxu0
  %366 = vdwg.mxu0
  %367 = vmatprep.subr.mxu0 0.0
  %368 = vmatpush1.msra.mxu0 0.0
  %369 = vmatprep.subr.mxu0 0.0
  %370 = vmatpush1.msra.mxu0 0.0
  %371 = vmatprep.subr.mxu0 0.0
  %372 = vmatpush1.msra.mxu0 0.0
  %373 = vmatprep.subr.mxu0 0.0
  %374 = vmatpush1.msra.mxu0 0.0
  %375 = vmatprep.subr.mxu0 0.0
  %376 = vmatpush1.msra.mxu0 0.0
  %377 = vmatprep.subr.mxu0 0.0
  %378 = vmatpush1.msra.mxu0 0.0
  %379 = vmatprep.subr.mxu0 0.0
  %380 = vmatpush1.msra.mxu0 0.0
  %381 = vmatprep.subr.mxu0 0.0
  %382 = vmatpush1.msra.mxu0 0.0
  %383 = vmatprep.subr.mxu0 0.0
  %384 = vmatpush1.msra.mxu0 0.0
  %385 = vmatprep.subr.mxu0 0.0
  %386 = vmatpush1.msra.mxu0 0.0
  %387 = vmatprep.subr.mxu0 0.0
  %388 = vmatpush1.msra.mxu0 0.0
  %389 = vmatprep.subr.mxu0 0.0
  %390 = vmatpush1.msra.mxu0 0.0
  %391 = vmatprep.subr.mxu0 0.0
  %392 = vmatpush1.msra.mxu0 %v281
  %393 = vmatprep.subr.mxu0 0.0
  %394 = vmatpush1.msra.mxu0 %v280
  %395 = vmatprep.subr.mxu0 0.0
  %396 = vmatpush1.msra.mxu0 %v279
  %397 = vmatprep.subr.mxu0 0.0
  %398 = vmatpush1.msra.mxu0 %v278
  %399 = vmatprep.subr.mxu0 0.0
  %400 = vmatpush2.msra.mxu0 0.0
  %401 = vmatprep.subr.mxu0 0.0
  %402 = vmatpush2.msra.mxu0 0.0
  %403 = vmatprep.subr.mxu0 0.0
  %404 = vmatpush2.msra.mxu0 0.0
  %405 = vmatprep.subr.mxu0 0.0
  %406 = vmatpush2.msra.mxu0 0.0
  %407 = vmatprep.subr.mxu0 0.0
  %408 = vmatpush2.msra.mxu0 0.0
  %409 = vmatprep.subr.mxu0 0.0
  %410 = vmatpush2.msra.mxu0 0.0
  %411 = vmatprep.subr.mxu0 0.0
  %412 = vmatpush2.msra.mxu0 0.0
  %413 = vmatprep.subr.mxu0 0.0
  %414 = vmatpush2.msra.mxu0 0.0
  %415 = vmatprep.subr.mxu0 0.0
  %416 = vmatpush2.msra.mxu0 0.0
  %417 = vmatprep.subr.mxu0 0.0
  %418 = vmatpush2.msra.mxu0 0.0
  %419 = vmatprep.subr.mxu0 0.0
  %420 = vmatpush2.msra.mxu0 0.0
  %421 = vmatprep.subr.mxu0 0.0
  %422 = vmatpush2.msra.mxu0 0.0
  %423 = vmatprep.subr.mxu0 0.0
  %424 = vmatpush2.msra.mxu0 0.0
  %425 = vmatprep.subr.mxu0 0.0
  %426 = vmatpush2.msra.mxu0 0.0
  %427 = vmatprep.subr.mxu0 0.0
  %428 = vmatpush2.msra.mxu0 0.0
  %429 = vmatprep.subr.mxu0 0.0
  %430 = vmatpush2.msra.mxu0 0.0
  %431 = vmatprep.mubr.f32.mxu0 0.0
  %432 = vmatmul.mubr.f32.gmra.mxu0 %v64
  %v433 = vpop.f32.mrf.mxu0
  %v434 = vadd.f32 %v349, %v433
  %v435 = vpop.f32.mrf.mxu0
  %436 = vmatprep.mubr.f32.mxu0 0.0
  %437 = vmatmul.mubr.f32.gmra.mxu0 %v67
  %v438 = vpop.f32.mrf.mxu0
  %v439 = vadd.f32 %v354, %v438
  %v440 = vpop.f32.mrf.mxu0
  %441 = vmatprep.mubr.f32.mxu0 0.0
  %442 = vmatmul.mubr.f32.gmra.mxu0 %v70
  %v443 = vpop.f32.mrf.mxu0
  %v444 = vadd.f32 %v359, %v443
  %v445 = vpop.f32.mrf.mxu0
  %446 = vmatprep.mubr.f32.mxu0 0.0
  %447 = vmatmul.mubr.f32.gmra.mxu0 %v73
  %v448 = vpop.f32.mrf.mxu0
  %v449 = vadd.f32 %v364, %v448
  %v450 = vpop.f32.mrf.mxu0
  %451 = vdwg.mxu0
  %v452 = vmax.f32 %v227, %v434
  %v453 = vmax.f32 %v232, %v439
  %v454 = vmax.f32 %v237, %v444
  %v455 = vmax.f32 %v242, %v449
  %s456 = scalar_lea.vmem %s0, 576
  %v457 = vld [vmem:[%s456] sm:$0xff]
  %v458 = vld [vmem:[%s456 + $0x8] sm:$0xff]
  %v459 = vld [vmem:[%s456 + $0x10] sm:$0xff]
  %v460 = vld [vmem:[%s456 + $0x18] sm:$0xff]
  %v461 = vld [vmem:[%s456 + $0x20] sm:$0xff]
  %v462 = vld [vmem:[%s456 + $0x28] sm:$0xff]
  %v463 = vld [vmem:[%s456 + $0x30] sm:$0xff]
  %v464 = vld [vmem:[%s456 + $0x38] sm:$0xff]
  %v465 = vld [vmem:[%s456 + $0x40] sm:$0xff]
  %v466 = vld [vmem:[%s456 + $0x48] sm:$0xff]
  %v467 = vld [vmem:[%s456 + $0x50] sm:$0xff]
  %v468 = vld [vmem:[%s456 + $0x58] sm:$0xff]
  %v469 = vld [vmem:[%s456 + $0x60] sm:$0xff]
  %v470 = vld [vmem:[%s456 + $0x68] sm:$0xff]
  %v471 = vld [vmem:[%s456 + $0x70] sm:$0xff]
  %v472 = vld [vmem:[%s456 + $0x78] sm:$0xff]
  %v473 = vld [vmem:[%s456 + $0x80] sm:$0xff]
  %v474 = vld [vmem:[%s456 + $0x88] sm:$0xff]
  %v475 = vld [vmem:[%s456 + $0x90] sm:$0xff]
  %v476 = vld [vmem:[%s456 + $0x98] sm:$0xff]
  %v477 = vld [vmem:[%s456 + $0xa0] sm:$0xff]
  %v478 = vld [vmem:[%s456 + $0xa8] sm:$0xff]
  %v479 = vld [vmem:[%s456 + $0xb0] sm:$0xff]
  %v480 = vld [vmem:[%s456 + $0xb8] sm:$0xff]
  %v481 = vld [vmem:[%s456 + $0xc0] sm:$0xff]
  %v482 = vld [vmem:[%s456 + $0xc8] sm:$0xff]
  %v483 = vld [vmem:[%s456 + $0xd0] sm:$0xff]
  %v484 = vld [vmem:[%s456 + $0xd8] sm:$0xff]
  %v485 = vld [vmem:[%s456 + $0xe0] sm:$0xff]
  %v486 = vld [vmem:[%s456 + $0xe8] sm:$0xff]
  %v487 = vld [vmem:[%s456 + $0xf0] sm:$0xff]
  %v488 = vld [vmem:[%s456 + $0xf8] sm:$0xff]
  %v489 = vld [vmem:[%s456 + $0x100] sm:$0xff]
  %v490 = vld [vmem:[%s456 + $0x108] sm:$0xff]
  %v491 = vld [vmem:[%s456 + $0x110] sm:$0xff]
  %v492 = vld [vmem:[%s456 + $0x118] sm:$0xff]
  %493 = vmatprep.subr.mxu0 0.0
  %494 = vmatpush1.msra.mxu0 %v472
  %495 = vmatprep.subr.mxu0 0.0
  %496 = vmatpush1.msra.mxu0 %v471
  %497 = vmatprep.subr.mxu0 0.0
  %498 = vmatpush1.msra.mxu0 %v470
  %499 = vmatprep.subr.mxu0 0.0
  %500 = vmatpush1.msra.mxu0 %v469
  %501 = vmatprep.subr.mxu0 0.0
  %502 = vmatpush1.msra.mxu0 %v468
  %503 = vmatprep.subr.mxu0 0.0
  %504 = vmatpush1.msra.mxu0 %v467
  %505 = vmatprep.subr.mxu0 0.0
  %506 = vmatpush1.msra.mxu0 %v466
  %507 = vmatprep.subr.mxu0 0.0
  %508 = vmatpush1.msra.mxu0 %v465
  %509 = vmatprep.subr.mxu0 0.0
  %510 = vmatpush1.msra.mxu0 %v464
  %511 = vmatprep.subr.mxu0 0.0
  %512 = vmatpush1.msra.mxu0 %v463
  %513 = vmatprep.subr.mxu0 0.0
  %514 = vmatpush1.msra.mxu0 %v462
  %515 = vmatprep.subr.mxu0 0.0
  %516 = vmatpush1.msra.mxu0 %v461
  %517 = vmatprep.subr.mxu0 0.0
  %518 = vmatpush1.msra.mxu0 %v460
  %519 = vmatprep.subr.mxu0 0.0
  %520 = vmatpush1.msra.mxu0 %v459
  %521 = vmatprep.subr.mxu0 0.0
  %522 = vmatpush1.msra.mxu0 %v458
  %523 = vmatprep.subr.mxu0 0.0
  %524 = vmatpush1.msra.mxu0 %v457
  %525 = vmatprep.subr.mxu0 0.0
  %526 = vmatpush2.msra.mxu0 %v488
  %527 = vmatprep.subr.mxu0 0.0
  %528 = vmatpush2.msra.mxu0 %v487
  %529 = vmatprep.subr.mxu0 0.0
  %530 = vmatpush2.msra.mxu0 %v486
  %531 = vmatprep.subr.mxu0 0.0
  %532 = vmatpush2.msra.mxu0 %v485
  %533 = vmatprep.subr.mxu0 0.0
  %534 = vmatpush2.msra.mxu0 %v484
  %535 = vmatprep.subr.mxu0 0.0
  %536 = vmatpush2.msra.mxu0 %v483
  %537 = vmatprep.subr.mxu0 0.0
  %538 = vmatpush2.msra.mxu0 %v482
  %539 = vmatprep.subr.mxu0 0.0
  %540 = vmatpush2.msra.mxu0 %v481
  %541 = vmatprep.subr.mxu0 0.0
  %542 = vmatpush2.msra.mxu0 %v480
  %543 = vmatprep.subr.mxu0 0.0
  %544 = vmatpush2.msra.mxu0 %v479
  %545 = vmatprep.subr.mxu0 0.0
  %546 = vmatpush2.msra.mxu0 %v478
  %547 = vmatprep.subr.mxu0 0.0
  %548 = vmatpush2.msra.mxu0 %v477
  %549 = vmatprep.subr.mxu0 0.0
  %550 = vmatpush2.msra.mxu0 %v476
  %551 = vmatprep.subr.mxu0 0.0
  %552 = vmatpush2.msra.mxu0 %v475
  %553 = vmatprep.subr.mxu0 0.0
  %554 = vmatpush2.msra.mxu0 %v474
  %555 = vmatprep.subr.mxu0 0.0
  %556 = vmatpush2.msra.mxu0 %v473
  %557 = vmatprep.mubr.f32.mxu0 %v15
  %558 = vmatmul.mubr.f32.gmra.mxu0 %v14
  %v559 = vpop.f32.mrf.mxu0
  %v560 = vadd.f32 0.0, %v559
  %v561 = vpop.f32.mrf.mxu0
  %562 = vmatprep.mubr.f32.mxu0 %v18
  %563 = vmatmul.mubr.f32.gmra.mxu0 %v17
  %v564 = vpop.f32.mrf.mxu0
  %v565 = vadd.f32 0.0, %v564
  %v566 = vpop.f32.mrf.mxu0
  %567 = vmatprep.mubr.f32.mxu0 %v21
  %568 = vmatmul.mubr.f32.gmra.mxu0 %v20
  %v569 = vpop.f32.mrf.mxu0
  %v570 = vadd.f32 0.0, %v569
  %v571 = vpop.f32.mrf.mxu0
  %572 = vmatprep.mubr.f32.mxu0 %v24
  %573 = vmatmul.mubr.f32.gmra.mxu0 %v23
  %v574 = vpop.f32.mrf.mxu0
  %v575 = vadd.f32 0.0, %v574
  %v576 = vpop.f32.mrf.mxu0
  %577 = vdwg.mxu0
  %578 = vmatprep.subr.mxu0 0.0
  %579 = vmatpush1.msra.mxu0 0.0
  %580 = vmatprep.subr.mxu0 0.0
  %581 = vmatpush1.msra.mxu0 0.0
  %582 = vmatprep.subr.mxu0 0.0
  %583 = vmatpush1.msra.mxu0 0.0
  %584 = vmatprep.subr.mxu0 0.0
  %585 = vmatpush1.msra.mxu0 0.0
  %586 = vmatprep.subr.mxu0 0.0
  %587 = vmatpush1.msra.mxu0 0.0
  %588 = vmatprep.subr.mxu0 0.0
  %589 = vmatpush1.msra.mxu0 0.0
  %590 = vmatprep.subr.mxu0 0.0
  %591 = vmatpush1.msra.mxu0 0.0
  %592 = vmatprep.subr.mxu0 0.0
  %593 = vmatpush1.msra.mxu0 0.0
  %594 = vmatprep.subr.mxu0 0.0
  %595 = vmatpush1.msra.mxu0 0.0
  %596 = vmatprep.subr.mxu0 0.0
  %597 = vmatpush1.msra.mxu0 0.0
  %598 = vmatprep.subr.mxu0 0.0
  %599 = vmatpush1.msra.mxu0 0.0
  %600 = vmatprep.subr.mxu0 0.0
  %601 = vmatpush1.msra.mxu0 0.0
  %602 = vmatprep.subr.mxu0 0.0
  %603 = vmatpush1.msra.mxu0 %v492
  %604 = vmatprep.subr.mxu0 0.0
  %605 = vmatpush1.msra.mxu0 %v491
  %606 = vmatprep.subr.mxu0 0.0
  %607 = vmatpush1.msra.mxu0 %v490
  %608 = vmatprep.subr.mxu0 0.0
  %609 = vmatpush1.msra.mxu0 %v489
  %610 = vmatprep.subr.mxu0 0.0
  %611 = vmatpush2.msra.mxu0 0.0
  %612 = vmatprep.subr.mxu0 0.0
  %613 = vmatpush2.msra.mxu0 0.0
  %614 = vmatprep.subr.mxu0 0.0
  %615 = vmatpush2.msra.mxu0 0.0
  %616 = vmatprep.subr.mxu0 0.0
  %617 = vmatpush2.msra.mxu0 0.0
  %618 = vmatprep.subr.mxu0 0.0
  %619 = vmatpush2.msra.mxu0 0.0
  %620 = vmatprep.subr.mxu0 0.0
  %621 = vmatpush2.msra.mxu0 0.0
  %622 = vmatprep.subr.mxu0 0.0
  %623 = vmatpush2.msra.mxu0 0.0
  %624 = vmatprep.subr.mxu0 0.0
  %625 = vmatpush2.msra.mxu0 0.0
  %626 = vmatprep.subr.mxu0 0.0
  %627 = vmatpush2.msra.mxu0 0.0
  %628 = vmatprep.subr.mxu0 0.0
  %629 = vmatpush2.msra.mxu0 0.0
  %630 = vmatprep.subr.mxu0 0.0
  %631 = vmatpush2.msra.mxu0 0.0
  %632 = vmatprep.subr.mxu0 0.0
  %633 = vmatpush2.msra.mxu0 0.0
  %634 = vmatprep.subr.mxu0 0.0
  %635 = vmatpush2.msra.mxu0 0.0
  %636 = vmatprep.subr.mxu0 0.0
  %637 = vmatpush2.msra.mxu0 0.0
  %638 = vmatprep.subr.mxu0 0.0
  %639 = vmatpush2.msra.mxu0 0.0
  %640 = vmatprep.subr.mxu0 0.0
  %641 = vmatpush2.msra.mxu0 0.0
  %642 = vmatprep.mubr.f32.mxu0 0.0
  %643 = vmatmul.mubr.f32.gmra.mxu0 %v64
  %v644 = vpop.f32.mrf.mxu0
  %v645 = vadd.f32 %v560, %v644
  %v646 = vpop.f32.mrf.mxu0
  %647 = vmatprep.mubr.f32.mxu0 0.0
  %648 = vmatmul.mubr.f32.gmra.mxu0 %v67
  %v649 = vpop.f32.mrf.mxu0
  %v650 = vadd.f32 %v565, %v649
  %v651 = vpop.f32.mrf.mxu0
  %652 = vmatprep.mubr.f32.mxu0 0.0
  %653 = vmatmul.mubr.f32.gmra.mxu0 %v70
  %v654 = vpop.f32.mrf.mxu0
  %v655 = vadd.f32 %v570, %v654
  %v656 = vpop.f32.mrf.mxu0
  %657 = vmatprep.mubr.f32.mxu0 0.0
  %658 = vmatmul.mubr.f32.gmra.mxu0 %v73
  %v659 = vpop.f32.mrf.mxu0
  %v660 = vadd.f32 %v575, %v659
  %v661 = vpop.f32.mrf.mxu0
  %662 = vdwg.mxu0
  %v663 = vmax.f32 %v452, %v645
  %v664 = vmax.f32 %v453, %v650
  %v665 = vmax.f32 %v454, %v655
  %v666 = vmax.f32 %v455, %v660
  %s667 = scalar_lea.vmem %s0, 864
  %v668 = vld [vmem:[%s667] sm:$0xff]
  %v669 = vld [vmem:[%s667 + $0x8] sm:$0xff]
  %v670 = vld [vmem:[%s667 + $0x10] sm:$0xff]
  %v671 = vld [vmem:[%s667 + $0x18] sm:$0xff]
  %v672 = vld [vmem:[%s667 + $0x20] sm:$0xff]
  %v673 = vld [vmem:[%s667 + $0x28] sm:$0xff]
  %v674 = vld [vmem:[%s667 + $0x30] sm:$0xff]
  %v675 = vld [vmem:[%s667 + $0x38] sm:$0xff]
  %v676 = vld [vmem:[%s667 + $0x40] sm:$0xff]
  %v677 = vld [vmem:[%s667 + $0x48] sm:$0xff]
  %v678 = vld [vmem:[%s667 + $0x50] sm:$0xff]
  %v679 = vld [vmem:[%s667 + $0x58] sm:$0xff]
  %v680 = vld [vmem:[%s667 + $0x60] sm:$0xff]
  %v681 = vld [vmem:[%s667 + $0x68] sm:$0xff]
  %v682 = vld [vmem:[%s667 + $0x70] sm:$0xff]
  %v683 = vld [vmem:[%s667 + $0x78] sm:$0xff]
  %v684 = vld [vmem:[%s667 + $0x80] sm:$0xff]
  %v685 = vld [vmem:[%s667 + $0x88] sm:$0xff]
  %v686 = vld [vmem:[%s667 + $0x90] sm:$0xff]
  %v687 = vld [vmem:[%s667 + $0x98] sm:$0xff]
  %v688 = vld [vmem:[%s667 + $0xa0] sm:$0xff]
  %v689 = vld [vmem:[%s667 + $0xa8] sm:$0xff]
  %v690 = vld [vmem:[%s667 + $0xb0] sm:$0xff]
  %v691 = vld [vmem:[%s667 + $0xb8] sm:$0xff]
  %v692 = vld [vmem:[%s667 + $0xc0] sm:$0xff]
  %v693 = vld [vmem:[%s667 + $0xc8] sm:$0xff]
  %v694 = vld [vmem:[%s667 + $0xd0] sm:$0xff]
  %v695 = vld [vmem:[%s667 + $0xd8] sm:$0xff]
  %v696 = vld [vmem:[%s667 + $0xe0] sm:$0xff]
  %v697 = vld [vmem:[%s667 + $0xe8] sm:$0xff]
  %v698 = vld [vmem:[%s667 + $0xf0] sm:$0xff]
  %v699 = vld [vmem:[%s667 + $0xf8] sm:$0xff]
  %v700 = vld [vmem:[%s667 + $0x100] sm:$0xff]
  %v701 = vld [vmem:[%s667 + $0x108] sm:$0xff]
  %v702 = vld [vmem:[%s667 + $0x110] sm:$0xff]
  %v703 = vld [vmem:[%s667 + $0x118] sm:$0xff]
  %704 = vmatprep.subr.mxu0 0.0
  %705 = vmatpush1.msra.mxu0 %v683
  %706 = vmatprep.subr.mxu0 0.0
  %707 = vmatpush1.msra.mxu0 %v682
  %708 = vmatprep.subr.mxu0 0.0
  %709 = vmatpush1.msra.mxu0 %v681
  %710 = vmatprep.subr.mxu0 0.0
  %711 = vmatpush1.msra.mxu0 %v680
  %712 = vmatprep.subr.mxu0 0.0
  %713 = vmatpush1.msra.mxu0 %v679
  %714 = vmatprep.subr.mxu0 0.0
  %715 = vmatpush1.msra.mxu0 %v678
  %716 = vmatprep.subr.mxu0 0.0
  %717 = vmatpush1.msra.mxu0 %v677
  %718 = vmatprep.subr.mxu0 0.0
  %719 = vmatpush1.msra.mxu0 %v676
  %720 = vmatprep.subr.mxu0 0.0
  %721 = vmatpush1.msra.mxu0 %v675
  %722 = vmatprep.subr.mxu0 0.0
  %723 = vmatpush1.msra.mxu0 %v674
  %724 = vmatprep.subr.mxu0 0.0
  %725 = vmatpush1.msra.mxu0 %v673
  %726 = vmatprep.subr.mxu0 0.0
  %727 = vmatpush1.msra.mxu0 %v672
  %728 = vmatprep.subr.mxu0 0.0
  %729 = vmatpush1.msra.mxu0 %v671
  %730 = vmatprep.subr.mxu0 0.0
  %731 = vmatpush1.msra.mxu0 %v670
  %732 = vmatprep.subr.mxu0 0.0
  %733 = vmatpush1.msra.mxu0 %v669
  %734 = vmatprep.subr.mxu0 0.0
  %735 = vmatpush1.msra.mxu0 %v668
  %736 = vmatprep.subr.mxu0 0.0
  %737 = vmatpush2.msra.mxu0 %v699
  %738 = vmatprep.subr.mxu0 0.0
  %739 = vmatpush2.msra.mxu0 %v698
  %740 = vmatprep.subr.mxu0 0.0
  %741 = vmatpush2.msra.mxu0 %v697
  %742 = vmatprep.subr.mxu0 0.0
  %743 = vmatpush2.msra.mxu0 %v696
  %744 = vmatprep.subr.mxu0 0.0
  %745 = vmatpush2.msra.mxu0 %v695
  %746 = vmatprep.subr.mxu0 0.0
  %747 = vmatpush2.msra.mxu0 %v694
  %748 = vmatprep.subr.mxu0 0.0
  %749 = vmatpush2.msra.mxu0 %v693
  %750 = vmatprep.subr.mxu0 0.0
  %751 = vmatpush2.msra.mxu0 %v692
  %752 = vmatprep.subr.mxu0 0.0
  %753 = vmatpush2.msra.mxu0 %v691
  %754 = vmatprep.subr.mxu0 0.0
  %755 = vmatpush2.msra.mxu0 %v690
  %756 = vmatprep.subr.mxu0 0.0
  %757 = vmatpush2.msra.mxu0 %v689
  %758 = vmatprep.subr.mxu0 0.0
  %759 = vmatpush2.msra.mxu0 %v688
  %760 = vmatprep.subr.mxu0 0.0
  %761 = vmatpush2.msra.mxu0 %v687
  %762 = vmatprep.subr.mxu0 0.0
  %763 = vmatpush2.msra.mxu0 %v686
  %764 = vmatprep.subr.mxu0 0.0
  %765 = vmatpush2.msra.mxu0 %v685
  %766 = vmatprep.subr.mxu0 0.0
  %767 = vmatpush2.msra.mxu0 %v684
  %768 = vmatprep.mubr.f32.mxu0 %v15
  %769 = vmatmul.mubr.f32.gmra.mxu0 %v14
  %v770 = vpop.f32.mrf.mxu0
  %v771 = vadd.f32 0.0, %v770
  %v772 = vpop.f32.mrf.mxu0
  %773 = vmatprep.mubr.f32.mxu0 %v18
  %774 = vmatmul.mubr.f32.gmra.mxu0 %v17
  %v775 = vpop.f32.mrf.mxu0
  %v776 = vadd.f32 0.0, %v775
  %v777 = vpop.f32.mrf.mxu0
  %778 = vmatprep.mubr.f32.mxu0 %v21
  %779 = vmatmul.mubr.f32.gmra.mxu0 %v20
  %v780 = vpop.f32.mrf.mxu0
  %v781 = vadd.f32 0.0, %v780
  %v782 = vpop.f32.mrf.mxu0
  %783 = vmatprep.mubr.f32.mxu0 %v24
  %784 = vmatmul.mubr.f32.gmra.mxu0 %v23
  %v785 = vpop.f32.mrf.mxu0
  %v786 = vadd.f32 0.0, %v785
  %v787 = vpop.f32.mrf.mxu0
  %788 = vdwg.mxu0
  %789 = vmatprep.subr.mxu0 0.0
  %790 = vmatpush1.msra.mxu0 0.0
  %791 = vmatprep.subr.mxu0 0.0
  %792 = vmatpush1.msra.mxu0 0.0
  %793 = vmatprep.subr.mxu0 0.0
  %794 = vmatpush1.msra.mxu0 0.0
  %795 = vmatprep.subr.mxu0 0.0
  %796 = vmatpush1.msra.mxu0 0.0
  %797 = vmatprep.subr.mxu0 0.0
  %798 = vmatpush1.msra.mxu0 0.0
  %799 = vmatprep.subr.mxu0 0.0
  %800 = vmatpush1.msra.mxu0 0.0
  %801 = vmatprep.subr.mxu0 0.0
  %802 = vmatpush1.msra.mxu0 0.0
  %803 = vmatprep.subr.mxu0 0.0
  %804 = vmatpush1.msra.mxu0 0.0
  %805 = vmatprep.subr.mxu0 0.0
  %806 = vmatpush1.msra.mxu0 0.0
  %807 = vmatprep.subr.mxu0 0.0
  %808 = vmatpush1.msra.mxu0 0.0
  %809 = vmatprep.subr.mxu0 0.0
  %810 = vmatpush1.msra.mxu0 0.0
  %811 = vmatprep.subr.mxu0 0.0
  %812 = vmatpush1.msra.mxu0 0.0
  %813 = vmatprep.subr.mxu0 0.0
  %814 = vmatpush1.msra.mxu0 %v703
  %815 = vmatprep.subr.mxu0 0.0
  %816 = vmatpush1.msra.mxu0 %v702
  %817 = vmatprep.subr.mxu0 0.0
  %818 = vmatpush1.msra.mxu0 %v701
  %819 = vmatprep.subr.mxu0 0.0
  %820 = vmatpush1.msra.mxu0 %v700
  %821 = vmatprep.subr.mxu0 0.0
  %822 = vmatpush2.msra.mxu0 0.0
  %823 = vmatprep.subr.mxu0 0.0
  %824 = vmatpush2.msra.mxu0 0.0
  %825 = vmatprep.subr.mxu0 0.0
  %826 = vmatpush2.msra.mxu0 0.0
  %827 = vmatprep.subr.mxu0 0.0
  %828 = vmatpush2.msra.mxu0 0.0
  %829 = vmatprep.subr.mxu0 0.0
  %830 = vmatpush2.msra.mxu0 0.0
  %831 = vmatprep.subr.mxu0 0.0
  %832 = vmatpush2.msra.mxu0 0.0
  %833 = vmatprep.subr.mxu0 0.0
  %834 = vmatpush2.msra.mxu0 0.0
  %835 = vmatprep.subr.mxu0 0.0
  %836 = vmatpush2.msra.mxu0 0.0
  %837 = vmatprep.subr.mxu0 0.0
  %838 = vmatpush2.msra.mxu0 0.0
  %839 = vmatprep.subr.mxu0 0.0
  %840 = vmatpush2.msra.mxu0 0.0
  %841 = vmatprep.subr.mxu0 0.0
  %842 = vmatpush2.msra.mxu0 0.0
  %843 = vmatprep.subr.mxu0 0.0
  %844 = vmatpush2.msra.mxu0 0.0
  %845 = vmatprep.subr.mxu0 0.0
  %846 = vmatpush2.msra.mxu0 0.0
  %847 = vmatprep.subr.mxu0 0.0
  %848 = vmatpush2.msra.mxu0 0.0
  %849 = vmatprep.subr.mxu0 0.0
  %850 = vmatpush2.msra.mxu0 0.0
  %851 = vmatprep.subr.mxu0 0.0
  %852 = vmatpush2.msra.mxu0 0.0
  %853 = vmatprep.mubr.f32.mxu0 0.0
  %854 = vmatmul.mubr.f32.gmra.mxu0 %v64
  %v855 = vpop.f32.mrf.mxu0
  %v856 = vadd.f32 %v771, %v855
  %v857 = vpop.f32.mrf.mxu0
  %858 = vmatprep.mubr.f32.mxu0 0.0
  %859 = vmatmul.mubr.f32.gmra.mxu0 %v67
  %v860 = vpop.f32.mrf.mxu0
  %v861 = vadd.f32 %v776, %v860
  %v862 = vpop.f32.mrf.mxu0
  %863 = vmatprep.mubr.f32.mxu0 0.0
  %864 = vmatmul.mubr.f32.gmra.mxu0 %v70
  %v865 = vpop.f32.mrf.mxu0
  %v866 = vadd.f32 %v781, %v865
  %v867 = vpop.f32.mrf.mxu0
  %868 = vmatprep.mubr.f32.mxu0 0.0
  %869 = vmatmul.mubr.f32.gmra.mxu0 %v73
  %v870 = vpop.f32.mrf.mxu0
  %v871 = vadd.f32 %v786, %v870
  %v872 = vpop.f32.mrf.mxu0
  %873 = vdwg.mxu0
  %v874 = vmax.f32 %v663, %v856
  %v875 = vmax.f32 %v664, %v861
  %v876 = vmax.f32 %v665, %v866
  %v877 = vmax.f32 %v666, %v871
  %v878 = vld [vmem:[%s2] sm:$0xff]
  %v879 = vld [vmem:[%s2 + $0x8] sm:$0xff]
  %v880 = vld [vmem:[%s2 + $0x10] sm:$0xff]
  %v881 = vld [vmem:[%s2 + $0x18] sm:$0xff]
  %883 = vset.pattern.permute.xlu0 0
  %884 = vperm.xlu0 %883, %v878
  %v885 = vpop.permute.xlu0 %884
  %888 = vset.pattern.permute.xlu0 0
  %889 = vperm.xlu0 %888, %v879
  %v890 = vpop.permute.xlu0 %889
  %893 = vset.pattern.permute.xlu0 0
  %894 = vperm.xlu0 %893, %v880
  %v895 = vpop.permute.xlu0 %894
  %898 = vset.pattern.permute.xlu0 0
  %899 = vperm.xlu0 %898, %v881
  %v900 = vpop.permute.xlu0 %899
  %v902 = vadd.f32 %v874, %v885
  %v903 = vadd.f32 %v875, %v890
  %v904 = vadd.f32 %v876, %v895
  %v905 = vadd.f32 %v877, %v900
  %v906 = vmax.f32 %v902, 0.0
  %v907 = vmax.f32 %v903, 0.0
  %v908 = vmax.f32 %v904, 0.0
  %v909 = vmax.f32 %v905, 0.0
  %vm910 = vcmask 15360
  %911 = vst.msk [vmem:[%s3] sm:$0xff] %vm910, %v906
  %912 = vst.msk [vmem:[%s3 + $0x8] sm:$0xff] %vm910, %v907
  %913 = vst.msk [vmem:[%s3 + $0x10] sm:$0xff] %vm910, %v908
  %914 = vst.msk [vmem:[%s3 + $0x18] sm:$0xff] %vm910, %v909
  // Predicated region
  $region14: #{gh_cnn_forward.26} parent=0 // pred_check
    _
  $region15: #{gh_cnn_forward.26} parent=0 // pred_check_branch
    %916 = sbr.rel (0) target = $region17
  $region16: #{gh_cnn_forward.26} parent=0 // pred_region
    _
  $region17: #{gh_cnn_forward.26} parent=0 // pred_fallthru
    _
  // Predicated region
  $region18: #{gh_cnn_forward.26} parent=0 // pred_check
    _
  $region19: #{gh_cnn_forward.26} parent=0 // pred_check_branch
    %918 = sbr.rel (0) target = $region21
  $region20: #{gh_cnn_forward.26} parent=0 // pred_region
    _
  $region21: #{gh_cnn_forward.26} parent=0 // pred_fallthru
    _

</llo_original>
